<compile_context>
chip_gen: v7x
topology: tpu7x:2x2x1
jax: 0.10.0
libtpu: 0.0.40
codegen_flags: <defaults>
</compile_context>

<pallas_src>
import jax
import jax.numpy as jnp
from jax.experimental import pallas as pl
from jax.experimental.pallas import tpu as pltpu


def _gru2_kernel(x_ref, h00_ref, h01_ref,
                 wih0_ref, whh0_ref, bih0_ref, bhh0_ref,
                 wih1_ref, whh1_ref, bih1_ref, bhh1_ref,
                 y_ref, xp_ref):
    """Two stacked GRU layers, wavefront-pipelined, over time-major padded input.

    x_ref : (T*Bp, D)   time-major flattened input, row index = t*Bp + b
    y_ref : (T*Bp, H)   layer-1 hidden states, same row layout
    xp_ref: (T*Bp, 3H)  scratch: fused layer-0 input-gate pre-activations
    """
    Bp, H = h00_ref.shape
    T = x_ref.shape[0] // Bp
    H3 = 3 * H

    # Mask selecting the r,z gate columns (first 2H lanes) of a (1, 3H) bias.
    lane = jax.lax.broadcasted_iota(jnp.int32, (1, H3), 1)
    rz_mask = lane < 2 * H

    # ---- Layer 0: fused input projection over ALL timesteps (one big MXU matmul).
    # Fold b_ih and the r/z columns of b_hh into the precompute.
    b0 = bih0_ref[...] + jnp.where(rz_mask, bhh0_ref[...], 0.0)
    xp_ref[...] = (
        jnp.dot(x_ref[...], wih0_ref[...], preferred_element_type=jnp.float32) + b0
    )

    # ---- Hoisted per-layer constants (outside the serial recurrence).
    b1 = bih1_ref[...] + jnp.where(rz_mask, bhh1_ref[...], 0.0)   # layer-1 x-side bias
    bhh0n = jnp.broadcast_to(bhh0_ref[0:1, 2 * H:], (Bp, H))      # layer-0 b_hn
    bhh1n = jnp.broadcast_to(bhh1_ref[0:1, 2 * H:], (Bp, H))      # layer-1 b_hn
    whh0 = whh0_ref[...]
    wih1 = wih1_ref[...]
    whh1 = whh1_ref[...]

    def sig(v):                       # sigmoid via one EUP tanh, not exp + divide
        return 0.5 * (1.0 + jnp.tanh(0.5 * v))

    def cell(gx, gh, bhn, h_prev):
        # PyTorch GRU gate order [r, z, n]; b_hn stays inside r*(.).
        r = sig(gx[:, 0:H] + gh[:, 0:H])
        z = sig(gx[:, H:2 * H] + gh[:, H:2 * H])
        n = jnp.tanh(gx[:, 2 * H:] + r * (gh[:, 2 * H:] + bhn))
        return (1.0 - z) * n + z * h_prev

    def step0(t, h):                  # layer-0 timestep t (input gates precomputed)
        gx = xp_ref[pl.ds(t * Bp, Bp), :]
        gh = jnp.dot(h, whh0, preferred_element_type=jnp.float32)
        return cell(gx, gh, bhh0n, h)

    def step1(x1, h):                 # layer-1 timestep (input = layer-0 hidden)
        gx = jnp.dot(x1, wih1, preferred_element_type=jnp.float32) + b1
        gh = jnp.dot(h, whh1, preferred_element_type=jnp.float32)
        return cell(gx, gh, bhh1n, h)

    # ---- Wavefront recurrence: iteration t runs layer-0 step t and layer-1
    # step t-1.  Both only READ h0, so the two chains are independent and the
    # (fully unrolled, static-index) loop lets the scheduler interleave them.
    h0 = h00_ref[...]
    h1 = h01_ref[...]
    h0 = step0(0, h0)                                  # prologue: layer-0 step 0
    for t in range(1, T):
        h0_next = step0(t, h0)                         # layer-0 step t
        h1 = step1(h0, h1)                             # layer-1 step t-1
        y_ref[pl.ds((t - 1) * Bp, Bp), :] = h1
        h0 = h0_next
    h1 = step1(h0, h1)                                 # epilogue: layer-1 step T-1
    y_ref[pl.ds((T - 1) * Bp, Bp), :] = h1


def gru_forward(feats, h0, params):
    """feats: (B, T, D) batch-first; h0: (2, B, H). Returns (B, T, H) like nn.GRU."""
    B, T, D = feats.shape
    H = h0.shape[-1]
    Bp = ((B + 7) // 8) * 8                 # pad batch to a sublane multiple

    # One fused pad + transpose to time-major; the trailing reshape is free.
    x_tm = jnp.pad(feats, ((0, Bp - B), (0, 0), (0, 0))) \
              .transpose(1, 0, 2).reshape(T * Bp, D)
    h0_pad = jnp.pad(h0, ((0, 0), (0, Bp - B), (0, 0)))

    (wih0, whh0, bih0, bhh0), (wih1, whh1, bih1, bhh1) = params

    # All activations + weights stay VMEM-resident (~2 MiB at these shapes);
    # if T grows large, raise pltpu.CompilerParams(vmem_limit_bytes=...) and/or
    # tile xp over time before the x buffer approaches the scoped VMEM limit.
    y_flat = pl.pallas_call(
        _gru2_kernel,
        out_shape=jax.ShapeDtypeStruct((T * Bp, H), jnp.float32),
        scratch_shapes=[
            pltpu.VMEM((T * Bp, 3 * H), jnp.float32),   # fused layer-0 gate pre-acts
        ],
    )(x_tm, h0_pad[0], h0_pad[1],
      wih0, whh0, bih0, bhh0,
      wih1, whh1, bih1, bhh1)

    return y_flat.reshape(T, Bp, H).transpose(1, 0, 2)[:B]


def gru_ref(feats, h0, params):
    """Pure-JAX reference (PyTorch GRU math, gate order [r, z, n])."""
    B, T, _ = feats.shape
    H = h0.shape[-1]
    out = feats
    for li, (wih, whh, bih, bhh) in enumerate(params):
        h = h0[li]
        ys = []
        for t in range(T):
            gi = out[:, t, :] @ wih + bih
            gh = h @ whh + bhh
            r = 1.0 / (1.0 + jnp.exp(-(gi[:, :H] + gh[:, :H])))
            z = 1.0 / (1.0 + jnp.exp(-(gi[:, H:2 * H] + gh[:, H:2 * H])))
            n = jnp.tanh(gi[:, 2 * H:] + r * gh[:, 2 * H:])
            h = (1.0 - z) * n + z * h
            ys.append(h)
        out = jnp.stack(ys, axis=1)
    return out


if __name__ == "__main__":
    key = jax.random.PRNGKey(0)
    B, T = 2, 8
    D, H, LAYERS = 1024, 128, 2     # nn.GRU(input_size=1024, hidden_size=128, cell_num=2)

    keys = jax.random.split(key, 2 + 4 * LAYERS)
    feats = jax.random.normal(keys[0], (B, T, D), jnp.float32)
    # forward() draws h0 = torch.randn(cell_num, B, H); generated host-side here.
    h0 = jax.random.normal(keys[1], (LAYERS, B, H), jnp.float32)

    bound = 1.0 / (H ** 0.5)        # PyTorch GRU default init: U(-1/sqrt(H), 1/sqrt(H))

    def u(k, shape):
        return jax.random.uniform(k, shape, jnp.float32, -bound, bound)

    params = []
    kc = 2
    for li in range(LAYERS):
        d_in = D if li == 0 else H
        params.append((u(keys[kc + 0], (d_in, 3 * H)),   # W_ih^T   (gate order r,z,n)
                       u(keys[kc + 1], (H, 3 * H)),      # W_hh^T
                       u(keys[kc + 2], (1, 3 * H)),      # b_ih
                       u(keys[kc + 3], (1, 3 * H))))     # b_hh
        kc += 4

    gru_fn = jax.jit(gru_forward)
    y = gru_fn(feats, h0, params)
    jax.block_until_ready(y)

    y_ref = gru_ref(feats, h0, params)
    assert y.shape == (B, T, H)
    err = float(jnp.max(jnp.abs(y - y_ref)))
    assert jnp.allclose(y, y_ref, atol=1e-3, rtol=1e-3), err
    print("KERNEL_OK")
</pallas_src>

<mosaic_0001>
module attributes {stable_mosaic.version = 11 : i64} {
  func.func @_gru2_kernel(%arg0: memref<64x1024xf32, #tpu.memory_space<vmem>>, %arg1: memref<8x128xf32, #tpu.memory_space<vmem>>, %arg2: memref<8x128xf32, #tpu.memory_space<vmem>>, %arg3: memref<1024x384xf32, #tpu.memory_space<vmem>>, %arg4: memref<128x384xf32, #tpu.memory_space<vmem>>, %arg5: memref<1x384xf32, #tpu.memory_space<vmem>>, %arg6: memref<1x384xf32, #tpu.memory_space<vmem>>, %arg7: memref<128x384xf32, #tpu.memory_space<vmem>>, %arg8: memref<128x384xf32, #tpu.memory_space<vmem>>, %arg9: memref<1x384xf32, #tpu.memory_space<vmem>>, %arg10: memref<1x384xf32, #tpu.memory_space<vmem>>, %arg11: memref<64x128xf32, #tpu.memory_space<vmem>>, %arg12: memref<64x384xf32, #tpu.memory_space<vmem>>) attributes {dimension_semantics = [], scalar_prefetch = 0 : i64, scratch_operands = 1 : i64, tpu.core_type = #tpu.core_type<tc>} {
    %0 = tpu.iota {dimensions = array<i32: 1>} : vector<1x384xi32>
    %c256_i32 = arith.constant 256 : i32
    %1 = vector.broadcast %c256_i32 : i32 to vector<1x384xi32>
    %2 = arith.cmpi slt, %0, %1 : vector<1x384xi32>
    %c0 = arith.constant 0 : index
    %c0_0 = arith.constant 0 : index
    %3 = vector.load %arg5[%c0, %c0_0] : memref<1x384xf32, #tpu.memory_space<vmem>>, vector<1x384xf32>
    %c0_1 = arith.constant 0 : index
    %c0_2 = arith.constant 0 : index
    %4 = vector.load %arg6[%c0_1, %c0_2] : memref<1x384xf32, #tpu.memory_space<vmem>>, vector<1x384xf32>
    %cst = arith.constant 0.000000e+00 : f32
    %5 = vector.broadcast %cst : f32 to vector<1x384xf32>
    %6 = arith.select %2, %4, %5 : vector<1x384xi1>, vector<1x384xf32>
    %7 = arith.addf %3, %6 : vector<1x384xf32>
    %c0_3 = arith.constant 0 : index
    %c0_4 = arith.constant 0 : index
    %8 = vector.load %arg0[%c0_3, %c0_4] : memref<64x1024xf32, #tpu.memory_space<vmem>>, vector<64x1024xf32>
    %c0_5 = arith.constant 0 : index
    %c0_6 = arith.constant 0 : index
    %9 = vector.load %arg3[%c0_5, %c0_6] : memref<1024x384xf32, #tpu.memory_space<vmem>>, vector<1024x384xf32>
    %cst_7 = arith.constant dense<0.000000e+00> : vector<64x384xf32>
    %10 = tpu.matmul %8, %9, %cst_7 {dimension_numbers = #tpu.dot_dimension_numbers<[1], [0], [0], [1], [0, 0, 1, 1], [], []>} : vector<64x1024xf32>, vector<1024x384xf32>, vector<64x384xf32> -> vector<64x384xf32>
    %11 = vector.broadcast %7 : vector<1x384xf32> to vector<64x384xf32>
    %12 = arith.addf %10, %11 : vector<64x384xf32>
    %c0_8 = arith.constant 0 : index
    %c0_9 = arith.constant 0 : index
    %13 = vector.load %arg12[%c0_8, %c0_9] : memref<64x384xf32, #tpu.memory_space<vmem>>, vector<64x384xf32>
    tpu.vector_store %arg12[%c0_8, %c0_9], %12 {strides = array<i32>} : memref<64x384xf32, #tpu.memory_space<vmem>>, vector<64x384xf32>,
    %c0_10 = arith.constant 0 : index
    %c0_11 = arith.constant 0 : index
    %14 = vector.load %arg9[%c0_10, %c0_11] : memref<1x384xf32, #tpu.memory_space<vmem>>, vector<1x384xf32>
    %c0_12 = arith.constant 0 : index
    %c0_13 = arith.constant 0 : index
    %15 = vector.load %arg10[%c0_12, %c0_13] : memref<1x384xf32, #tpu.memory_space<vmem>>, vector<1x384xf32>
    %cst_14 = arith.constant 0.000000e+00 : f32
    %16 = vector.broadcast %cst_14 : f32 to vector<1x384xf32>
    %17 = arith.select %2, %15, %16 : vector<1x384xi1>, vector<1x384xf32>
    %18 = arith.addf %14, %17 : vector<1x384xf32>
    %c0_15 = arith.constant 0 : index
    %c256 = arith.constant 256 : index
    %19 = vector.load %arg6[%c0_15, %c256] : memref<1x384xf32, #tpu.memory_space<vmem>>, vector<1x128xf32>
    %20 = vector.shape_cast %19 : vector<1x128xf32> to vector<1x128xf32>
    %21 = vector.broadcast %20 : vector<1x128xf32> to vector<8x128xf32>
    %c0_16 = arith.constant 0 : index
    %c256_17 = arith.constant 256 : index
    %22 = vector.load %arg10[%c0_16, %c256_17] : memref<1x384xf32, #tpu.memory_space<vmem>>, vector<1x128xf32>
    %23 = vector.shape_cast %22 : vector<1x128xf32> to vector<1x128xf32>
    %24 = vector.broadcast %23 : vector<1x128xf32> to vector<8x128xf32>
    %c0_18 = arith.constant 0 : index
    %c0_19 = arith.constant 0 : index
    %25 = vector.load %arg4[%c0_18, %c0_19] : memref<128x384xf32, #tpu.memory_space<vmem>>, vector<128x384xf32>
    %c0_20 = arith.constant 0 : index
    %c0_21 = arith.constant 0 : index
    %26 = vector.load %arg7[%c0_20, %c0_21] : memref<128x384xf32, #tpu.memory_space<vmem>>, vector<128x384xf32>
    %c0_22 = arith.constant 0 : index
    %c0_23 = arith.constant 0 : index
    %27 = vector.load %arg8[%c0_22, %c0_23] : memref<128x384xf32, #tpu.memory_space<vmem>>, vector<128x384xf32>
    %c0_24 = arith.constant 0 : index
    %c0_25 = arith.constant 0 : index
    %28 = vector.load %arg1[%c0_24, %c0_25] : memref<8x128xf32, #tpu.memory_space<vmem>>, vector<8x128xf32>
    %c0_26 = arith.constant 0 : index
    %c0_27 = arith.constant 0 : index
    %29 = vector.load %arg2[%c0_26, %c0_27] : memref<8x128xf32, #tpu.memory_space<vmem>>, vector<8x128xf32>
    %c0_28 = arith.constant 0 : index
    %c0_29 = arith.constant 0 : index
    %30 = vector.load %arg12[%c0_28, %c0_29] : memref<64x384xf32, #tpu.memory_space<vmem>>, vector<8x384xf32>
    %cst_30 = arith.constant dense<0.000000e+00> : vector<8x384xf32>
    %31 = tpu.matmul %28, %25, %cst_30 {dimension_numbers = #tpu.dot_dimension_numbers<[1], [0], [0], [1], [0, 0, 1, 1], [], []>} : vector<8x128xf32>, vector<128x384xf32>, vector<8x384xf32> -> vector<8x384xf32>
    %32 = vector.extract_strided_slice %30 {offsets = [0, 0], sizes = [8, 128], strides = [1, 1]} : vector<8x384xf32> to vector<8x128xf32>
    %33 = vector.extract_strided_slice %31 {offsets = [0, 0], sizes = [8, 128], strides = [1, 1]} : vector<8x384xf32> to vector<8x128xf32>
    %34 = arith.addf %32, %33 : vector<8x128xf32>
    %cst_31 = arith.constant 5.000000e-01 : f32
    %35 = vector.broadcast %cst_31 : f32 to vector<8x128xf32>
    %36 = arith.mulf %35, %34 : vector<8x128xf32>
    %37 = math.tanh %36 : vector<8x128xf32>
    %cst_32 = arith.constant 1.000000e+00 : f32
    %38 = vector.broadcast %cst_32 : f32 to vector<8x128xf32>
    %39 = arith.addf %38, %37 : vector<8x128xf32>
    %cst_33 = arith.constant 5.000000e-01 : f32
    %40 = vector.broadcast %cst_33 : f32 to vector<8x128xf32>
    %41 = arith.mulf %40, %39 : vector<8x128xf32>
    %42 = vector.extract_strided_slice %30 {offsets = [0, 128], sizes = [8, 128], strides = [1, 1]} : vector<8x384xf32> to vector<8x128xf32>
    %43 = vector.extract_strided_slice %31 {offsets = [0, 128], sizes = [8, 128], strides = [1, 1]} : vector<8x384xf32> to vector<8x128xf32>
    %44 = arith.addf %42, %43 : vector<8x128xf32>
    %cst_34 = arith.constant 5.000000e-01 : f32
    %45 = vector.broadcast %cst_34 : f32 to vector<8x128xf32>
    %46 = arith.mulf %45, %44 : vector<8x128xf32>
    %47 = math.tanh %46 : vector<8x128xf32>
    %cst_35 = arith.constant 1.000000e+00 : f32
    %48 = vector.broadcast %cst_35 : f32 to vector<8x128xf32>
    %49 = arith.addf %48, %47 : vector<8x128xf32>
    %cst_36 = arith.constant 5.000000e-01 : f32
    %50 = vector.broadcast %cst_36 : f32 to vector<8x128xf32>
    %51 = arith.mulf %50, %49 : vector<8x128xf32>
    %52 = vector.extract_strided_slice %30 {offsets = [0, 256], sizes = [8, 128], strides = [1, 1]} : vector<8x384xf32> to vector<8x128xf32>
    %53 = vector.extract_strided_slice %31 {offsets = [0, 256], sizes = [8, 128], strides = [1, 1]} : vector<8x384xf32> to vector<8x128xf32>
    %54 = arith.addf %53, %21 : vector<8x128xf32>
    %55 = arith.mulf %41, %54 : vector<8x128xf32>
    %56 = arith.addf %52, %55 : vector<8x128xf32>
    %57 = math.tanh %56 : vector<8x128xf32>
    %cst_37 = arith.constant 1.000000e+00 : f32
    %58 = vector.broadcast %cst_37 : f32 to vector<8x128xf32>
    %59 = arith.subf %58, %51 : vector<8x128xf32>
    %60 = arith.mulf %59, %57 : vector<8x128xf32>
    %61 = arith.mulf %51, %28 : vector<8x128xf32>
    %62 = arith.addf %60, %61 : vector<8x128xf32>
    %c8 = arith.constant 8 : index
    %c0_38 = arith.constant 0 : index
    %63 = vector.load %arg12[%c8, %c0_38] : memref<64x384xf32, #tpu.memory_space<vmem>>, vector<8x384xf32>
    %cst_39 = arith.constant dense<0.000000e+00> : vector<8x384xf32>
    %64 = tpu.matmul %62, %25, %cst_39 {dimension_numbers = #tpu.dot_dimension_numbers<[1], [0], [0], [1], [0, 0, 1, 1], [], []>} : vector<8x128xf32>, vector<128x384xf32>, vector<8x384xf32> -> vector<8x384xf32>
    %65 = vector.extract_strided_slice %63 {offsets = [0, 0], sizes = [8, 128], strides = [1, 1]} : vector<8x384xf32> to vector<8x128xf32>
    %66 = vector.extract_strided_slice %64 {offsets = [0, 0], sizes = [8, 128], strides = [1, 1]} : vector<8x384xf32> to vector<8x128xf32>
    %67 = arith.addf %65, %66 : vector<8x128xf32>
    %cst_40 = arith.constant 5.000000e-01 : f32
    %68 = vector.broadcast %cst_40 : f32 to vector<8x128xf32>
    %69 = arith.mulf %68, %67 : vector<8x128xf32>
    %70 = math.tanh %69 : vector<8x128xf32>
    %cst_41 = arith.constant 1.000000e+00 : f32
    %71 = vector.broadcast %cst_41 : f32 to vector<8x128xf32>
    %72 = arith.addf %71, %70 : vector<8x128xf32>
    %cst_42 = arith.constant 5.000000e-01 : f32
    %73 = vector.broadcast %cst_42 : f32 to vector<8x128xf32>
    %74 = arith.mulf %73, %72 : vector<8x128xf32>
    %75 = vector.extract_strided_slice %63 {offsets = [0, 128], sizes = [8, 128], strides = [1, 1]} : vector<8x384xf32> to vector<8x128xf32>
    %76 = vector.extract_strided_slice %64 {offsets = [0, 128], sizes = [8, 128], strides = [1, 1]} : vector<8x384xf32> to vector<8x128xf32>
    %77 = arith.addf %75, %76 : vector<8x128xf32>
    %cst_43 = arith.constant 5.000000e-01 : f32
    %78 = vector.broadcast %cst_43 : f32 to vector<8x128xf32>
    %79 = arith.mulf %78, %77 : vector<8x128xf32>
    %80 = math.tanh %79 : vector<8x128xf32>
    %cst_44 = arith.constant 1.000000e+00 : f32
    %81 = vector.broadcast %cst_44 : f32 to vector<8x128xf32>
    %82 = arith.addf %81, %80 : vector<8x128xf32>
    %cst_45 = arith.constant 5.000000e-01 : f32
    %83 = vector.broadcast %cst_45 : f32 to vector<8x128xf32>
    %84 = arith.mulf %83, %82 : vector<8x128xf32>
    %85 = vector.extract_strided_slice %63 {offsets = [0, 256], sizes = [8, 128], strides = [1, 1]} : vector<8x384xf32> to vector<8x128xf32>
    %86 = vector.extract_strided_slice %64 {offsets = [0, 256], sizes = [8, 128], strides = [1, 1]} : vector<8x384xf32> to vector<8x128xf32>
    %87 = arith.addf %86, %21 : vector<8x128xf32>
    %88 = arith.mulf %74, %87 : vector<8x128xf32>
    %89 = arith.addf %85, %88 : vector<8x128xf32>
    %90 = math.tanh %89 : vector<8x128xf32>
    %cst_46 = arith.constant 1.000000e+00 : f32
    %91 = vector.broadcast %cst_46 : f32 to vector<8x128xf32>
    %92 = arith.subf %91, %84 : vector<8x128xf32>
    %93 = arith.mulf %92, %90 : vector<8x128xf32>
    %94 = arith.mulf %84, %62 : vector<8x128xf32>
    %95 = arith.addf %93, %94 : vector<8x128xf32>
    %cst_47 = arith.constant dense<0.000000e+00> : vector<8x384xf32>
    %96 = tpu.matmul %62, %26, %cst_47 {dimension_numbers = #tpu.dot_dimension_numbers<[1], [0], [0], [1], [0, 0, 1, 1], [], []>} : vector<8x128xf32>, vector<128x384xf32>, vector<8x384xf32> -> vector<8x384xf32>
    %97 = vector.broadcast %18 : vector<1x384xf32> to vector<8x384xf32>
    %98 = arith.addf %96, %97 : vector<8x384xf32>
    %cst_48 = arith.constant dense<0.000000e+00> : vector<8x384xf32>
    %99 = tpu.matmul %29, %27, %cst_48 {dimension_numbers = #tpu.dot_dimension_numbers<[1], [0], [0], [1], [0, 0, 1, 1], [], []>} : vector<8x128xf32>, vector<128x384xf32>, vector<8x384xf32> -> vector<8x384xf32>
    %100 = vector.extract_strided_slice %98 {offsets = [0, 0], sizes = [8, 128], strides = [1, 1]} : vector<8x384xf32> to vector<8x128xf32>
    %101 = vector.extract_strided_slice %99 {offsets = [0, 0], sizes = [8, 128], strides = [1, 1]} : vector<8x384xf32> to vector<8x128xf32>
    %102 = arith.addf %100, %101 : vector<8x128xf32>
    %cst_49 = arith.constant 5.000000e-01 : f32
    %103 = vector.broadcast %cst_49 : f32 to vector<8x128xf32>
    %104 = arith.mulf %103, %102 : vector<8x128xf32>
    %105 = math.tanh %104 : vector<8x128xf32>
    %cst_50 = arith.constant 1.000000e+00 : f32
    %106 = vector.broadcast %cst_50 : f32 to vector<8x128xf32>
    %107 = arith.addf %106, %105 : vector<8x128xf32>
    %cst_51 = arith.constant 5.000000e-01 : f32
    %108 = vector.broadcast %cst_51 : f32 to vector<8x128xf32>
    %109 = arith.mulf %108, %107 : vector<8x128xf32>
    %110 = vector.extract_strided_slice %98 {offsets = [0, 128], sizes = [8, 128], strides = [1, 1]} : vector<8x384xf32> to vector<8x128xf32>
    %111 = vector.extract_strided_slice %99 {offsets = [0, 128], sizes = [8, 128], strides = [1, 1]} : vector<8x384xf32> to vector<8x128xf32>
    %112 = arith.addf %110, %111 : vector<8x128xf32>
    %cst_52 = arith.constant 5.000000e-01 : f32
    %113 = vector.broadcast %cst_52 : f32 to vector<8x128xf32>
    %114 = arith.mulf %113, %112 : vector<8x128xf32>
    %115 = math.tanh %114 : vector<8x128xf32>
    %cst_53 = arith.constant 1.000000e+00 : f32
    %116 = vector.broadcast %cst_53 : f32 to vector<8x128xf32>
    %117 = arith.addf %116, %115 : vector<8x128xf32>
    %cst_54 = arith.constant 5.000000e-01 : f32
    %118 = vector.broadcast %cst_54 : f32 to vector<8x128xf32>
    %119 = arith.mulf %118, %117 : vector<8x128xf32>
    %120 = vector.extract_strided_slice %98 {offsets = [0, 256], sizes = [8, 128], strides = [1, 1]} : vector<8x384xf32> to vector<8x128xf32>
    %121 = vector.extract_strided_slice %99 {offsets = [0, 256], sizes = [8, 128], strides = [1, 1]} : vector<8x384xf32> to vector<8x128xf32>
    %122 = arith.addf %121, %24 : vector<8x128xf32>
    %123 = arith.mulf %109, %122 : vector<8x128xf32>
    %124 = arith.addf %120, %123 : vector<8x128xf32>
    %125 = math.tanh %124 : vector<8x128xf32>
    %cst_55 = arith.constant 1.000000e+00 : f32
    %126 = vector.broadcast %cst_55 : f32 to vector<8x128xf32>
    %127 = arith.subf %126, %119 : vector<8x128xf32>
    %128 = arith.mulf %127, %125 : vector<8x128xf32>
    %129 = arith.mulf %119, %29 : vector<8x128xf32>
    %130 = arith.addf %128, %129 : vector<8x128xf32>
    %c0_56 = arith.constant 0 : index
    %c0_57 = arith.constant 0 : index
    %131 = vector.load %arg11[%c0_56, %c0_57] : memref<64x128xf32, #tpu.memory_space<vmem>>, vector<8x128xf32>
    tpu.vector_store %arg11[%c0_56, %c0_57], %130 {strides = array<i32>} : memref<64x128xf32, #tpu.memory_space<vmem>>, vector<8x128xf32>,
    %c16 = arith.constant 16 : index
    %c0_58 = arith.constant 0 : index
    %132 = vector.load %arg12[%c16, %c0_58] : memref<64x384xf32, #tpu.memory_space<vmem>>, vector<8x384xf32>
    %cst_59 = arith.constant dense<0.000000e+00> : vector<8x384xf32>
    %133 = tpu.matmul %95, %25, %cst_59 {dimension_numbers = #tpu.dot_dimension_numbers<[1], [0], [0], [1], [0, 0, 1, 1], [], []>} : vector<8x128xf32>, vector<128x384xf32>, vector<8x384xf32> -> vector<8x384xf32>
    %134 = vector.extract_strided_slice %132 {offsets = [0, 0], sizes = [8, 128], strides = [1, 1]} : vector<8x384xf32> to vector<8x128xf32>
    %135 = vector.extract_strided_slice %133 {offsets = [0, 0], sizes = [8, 128], strides = [1, 1]} : vector<8x384xf32> to vector<8x128xf32>
    %136 = arith.addf %134, %135 : vector<8x128xf32>
    %cst_60 = arith.constant 5.000000e-01 : f32
    %137 = vector.broadcast %cst_60 : f32 to vector<8x128xf32>
    %138 = arith.mulf %137, %136 : vector<8x128xf32>
    %139 = math.tanh %138 : vector<8x128xf32>
    %cst_61 = arith.constant 1.000000e+00 : f32
    %140 = vector.broadcast %cst_61 : f32 to vector<8x128xf32>
    %141 = arith.addf %140, %139 : vector<8x128xf32>
    %cst_62 = arith.constant 5.000000e-01 : f32
    %142 = vector.broadcast %cst_62 : f32 to vector<8x128xf32>
    %143 = arith.mulf %142, %141 : vector<8x128xf32>
    %144 = vector.extract_strided_slice %132 {offsets = [0, 128], sizes = [8, 128], strides = [1, 1]} : vector<8x384xf32> to vector<8x128xf32>
    %145 = vector.extract_strided_slice %133 {offsets = [0, 128], sizes = [8, 128], strides = [1, 1]} : vector<8x384xf32> to vector<8x128xf32>
    %146 = arith.addf %144, %145 : vector<8x128xf32>
    %cst_63 = arith.constant 5.000000e-01 : f32
    %147 = vector.broadcast %cst_63 : f32 to vector<8x128xf32>
    %148 = arith.mulf %147, %146 : vector<8x128xf32>
    %149 = math.tanh %148 : vector<8x128xf32>
    %cst_64 = arith.constant 1.000000e+00 : f32
    %150 = vector.broadcast %cst_64 : f32 to vector<8x128xf32>
    %151 = arith.addf %150, %149 : vector<8x128xf32>
    %cst_65 = arith.constant 5.000000e-01 : f32
    %152 = vector.broadcast %cst_65 : f32 to vector<8x128xf32>
    %153 = arith.mulf %152, %151 : vector<8x128xf32>
    %154 = vector.extract_strided_slice %132 {offsets = [0, 256], sizes = [8, 128], strides = [1, 1]} : vector<8x384xf32> to vector<8x128xf32>
    %155 = vector.extract_strided_slice %133 {offsets = [0, 256], sizes = [8, 128], strides = [1, 1]} : vector<8x384xf32> to vector<8x128xf32>
    %156 = arith.addf %155, %21 : vector<8x128xf32>
    %157 = arith.mulf %143, %156 : vector<8x128xf32>
    %158 = arith.addf %154, %157 : vector<8x128xf32>
    %159 = math.tanh %158 : vector<8x128xf32>
    %cst_66 = arith.constant 1.000000e+00 : f32
    %160 = vector.broadcast %cst_66 : f32 to vector<8x128xf32>
    %161 = arith.subf %160, %153 : vector<8x128xf32>
    %162 = arith.mulf %161, %159 : vector<8x128xf32>
    %163 = arith.mulf %153, %95 : vector<8x128xf32>
    %164 = arith.addf %162, %163 : vector<8x128xf32>
    %cst_67 = arith.constant dense<0.000000e+00> : vector<8x384xf32>
    %165 = tpu.matmul %95, %26, %cst_67 {dimension_numbers = #tpu.dot_dimension_numbers<[1], [0], [0], [1], [0, 0, 1, 1], [], []>} : vector<8x128xf32>, vector<128x384xf32>, vector<8x384xf32> -> vector<8x384xf32>
    %166 = vector.broadcast %18 : vector<1x384xf32> to vector<8x384xf32>
    %167 = arith.addf %165, %166 : vector<8x384xf32>
    %cst_68 = arith.constant dense<0.000000e+00> : vector<8x384xf32>
    %168 = tpu.matmul %130, %27, %cst_68 {dimension_numbers = #tpu.dot_dimension_numbers<[1], [0], [0], [1], [0, 0, 1, 1], [], []>} : vector<8x128xf32>, vector<128x384xf32>, vector<8x384xf32> -> vector<8x384xf32>
    %169 = vector.extract_strided_slice %167 {offsets = [0, 0], sizes = [8, 128], strides = [1, 1]} : vector<8x384xf32> to vector<8x128xf32>
    %170 = vector.extract_strided_slice %168 {offsets = [0, 0], sizes = [8, 128], strides = [1, 1]} : vector<8x384xf32> to vector<8x128xf32>
    %171 = arith.addf %169, %170 : vector<8x128xf32>
    %cst_69 = arith.constant 5.000000e-01 : f32
    %172 = vector.broadcast %cst_69 : f32 to vector<8x128xf32>
    %173 = arith.mulf %172, %171 : vector<8x128xf32>
    %174 = math.tanh %173 : vector<8x128xf32>
    %cst_70 = arith.constant 1.000000e+00 : f32
    %175 = vector.broadcast %cst_70 : f32 to vector<8x128xf32>
    %176 = arith.addf %175, %174 : vector<8x128xf32>
    %cst_71 = arith.constant 5.000000e-01 : f32
    %177 = vector.broadcast %cst_71 : f32 to vector<8x128xf32>
    %178 = arith.mulf %177, %176 : vector<8x128xf32>
    %179 = vector.extract_strided_slice %167 {offsets = [0, 128], sizes = [8, 128], strides = [1, 1]} : vector<8x384xf32> to vector<8x128xf32>
    %180 = vector.extract_strided_slice %168 {offsets = [0, 128], sizes = [8, 128], strides = [1, 1]} : vector<8x384xf32> to vector<8x128xf32>
    %181 = arith.addf %179, %180 : vector<8x128xf32>
    %cst_72 = arith.constant 5.000000e-01 : f32
    %182 = vector.broadcast %cst_72 : f32 to vector<8x128xf32>
    %183 = arith.mulf %182, %181 : vector<8x128xf32>
    %184 = math.tanh %183 : vector<8x128xf32>
    %cst_73 = arith.constant 1.000000e+00 : f32
    %185 = vector.broadcast %cst_73 : f32 to vector<8x128xf32>
    %186 = arith.addf %185, %184 : vector<8x128xf32>
    %cst_74 = arith.constant 5.000000e-01 : f32
    %187 = vector.broadcast %cst_74 : f32 to vector<8x128xf32>
    %188 = arith.mulf %187, %186 : vector<8x128xf32>
    %189 = vector.extract_strided_slice %167 {offsets = [0, 256], sizes = [8, 128], strides = [1, 1]} : vector<8x384xf32> to vector<8x128xf32>
    %190 = vector.extract_strided_slice %168 {offsets = [0, 256], sizes = [8, 128], strides = [1, 1]} : vector<8x384xf32> to vector<8x128xf32>
    %191 = arith.addf %190, %24 : vector<8x128xf32>
    %192 = arith.mulf %178, %191 : vector<8x128xf32>
    %193 = arith.addf %189, %192 : vector<8x128xf32>
    %194 = math.tanh %193 : vector<8x128xf32>
    %cst_75 = arith.constant 1.000000e+00 : f32
    %195 = vector.broadcast %cst_75 : f32 to vector<8x128xf32>
    %196 = arith.subf %195, %188 : vector<8x128xf32>
    %197 = arith.mulf %196, %194 : vector<8x128xf32>
    %198 = arith.mulf %188, %130 : vector<8x128xf32>
    %199 = arith.addf %197, %198 : vector<8x128xf32>
    %c8_76 = arith.constant 8 : index
    %c0_77 = arith.constant 0 : index
    %200 = vector.load %arg11[%c8_76, %c0_77] : memref<64x128xf32, #tpu.memory_space<vmem>>, vector<8x128xf32>
    tpu.vector_store %arg11[%c8_76, %c0_77], %199 {strides = array<i32>} : memref<64x128xf32, #tpu.memory_space<vmem>>, vector<8x128xf32>,
    %c24 = arith.constant 24 : index
    %c0_78 = arith.constant 0 : index
    %201 = vector.load %arg12[%c24, %c0_78] : memref<64x384xf32, #tpu.memory_space<vmem>>, vector<8x384xf32>
    %cst_79 = arith.constant dense<0.000000e+00> : vector<8x384xf32>
    %202 = tpu.matmul %164, %25, %cst_79 {dimension_numbers = #tpu.dot_dimension_numbers<[1], [0], [0], [1], [0, 0, 1, 1], [], []>} : vector<8x128xf32>, vector<128x384xf32>, vector<8x384xf32> -> vector<8x384xf32>
    %203 = vector.extract_strided_slice %201 {offsets = [0, 0], sizes = [8, 128], strides = [1, 1]} : vector<8x384xf32> to vector<8x128xf32>
    %204 = vector.extract_strided_slice %202 {offsets = [0, 0], sizes = [8, 128], strides = [1, 1]} : vector<8x384xf32> to vector<8x128xf32>
    %205 = arith.addf %203, %204 : vector<8x128xf32>
    %cst_80 = arith.constant 5.000000e-01 : f32
    %206 = vector.broadcast %cst_80 : f32 to vector<8x128xf32>
    %207 = arith.mulf %206, %205 : vector<8x128xf32>
    %208 = math.tanh %207 : vector<8x128xf32>
    %cst_81 = arith.constant 1.000000e+00 : f32
    %209 = vector.broadcast %cst_81 : f32 to vector<8x128xf32>
    %210 = arith.addf %209, %208 : vector<8x128xf32>
    %cst_82 = arith.constant 5.000000e-01 : f32
    %211 = vector.broadcast %cst_82 : f32 to vector<8x128xf32>
    %212 = arith.mulf %211, %210 : vector<8x128xf32>
    %213 = vector.extract_strided_slice %201 {offsets = [0, 128], sizes = [8, 128], strides = [1, 1]} : vector<8x384xf32> to vector<8x128xf32>
    %214 = vector.extract_strided_slice %202 {offsets = [0, 128], sizes = [8, 128], strides = [1, 1]} : vector<8x384xf32> to vector<8x128xf32>
    %215 = arith.addf %213, %214 : vector<8x128xf32>
    %cst_83 = arith.constant 5.000000e-01 : f32
    %216 = vector.broadcast %cst_83 : f32 to vector<8x128xf32>
    %217 = arith.mulf %216, %215 : vector<8x128xf32>
    %218 = math.tanh %217 : vector<8x128xf32>
    %cst_84 = arith.constant 1.000000e+00 : f32
    %219 = vector.broadcast %cst_84 : f32 to vector<8x128xf32>
    %220 = arith.addf %219, %218 : vector<8x128xf32>
    %cst_85 = arith.constant 5.000000e-01 : f32
    %221 = vector.broadcast %cst_85 : f32 to vector<8x128xf32>
    %222 = arith.mulf %221, %220 : vector<8x128xf32>
    %223 = vector.extract_strided_slice %201 {offsets = [0, 256], sizes = [8, 128], strides = [1, 1]} : vector<8x384xf32> to vector<8x128xf32>
    %224 = vector.extract_strided_slice %202 {offsets = [0, 256], sizes = [8, 128], strides = [1, 1]} : vector<8x384xf32> to vector<8x128xf32>
    %225 = arith.addf %224, %21 : vector<8x128xf32>
    %226 = arith.mulf %212, %225 : vector<8x128xf32>
    %227 = arith.addf %223, %226 : vector<8x128xf32>
    %228 = math.tanh %227 : vector<8x128xf32>
    %cst_86 = arith.constant 1.000000e+00 : f32
    %229 = vector.broadcast %cst_86 : f32 to vector<8x128xf32>
    %230 = arith.subf %229, %222 : vector<8x128xf32>
    %231 = arith.mulf %230, %228 : vector<8x128xf32>
    %232 = arith.mulf %222, %164 : vector<8x128xf32>
    %233 = arith.addf %231, %232 : vector<8x128xf32>
    %cst_87 = arith.constant dense<0.000000e+00> : vector<8x384xf32>
    %234 = tpu.matmul %164, %26, %cst_87 {dimension_numbers = #tpu.dot_dimension_numbers<[1], [0], [0], [1], [0, 0, 1, 1], [], []>} : vector<8x128xf32>, vector<128x384xf32>, vector<8x384xf32> -> vector<8x384xf32>
    %235 = vector.broadcast %18 : vector<1x384xf32> to vector<8x384xf32>
    %236 = arith.addf %234, %235 : vector<8x384xf32>
    %cst_88 = arith.constant dense<0.000000e+00> : vector<8x384xf32>
    %237 = tpu.matmul %199, %27, %cst_88 {dimension_numbers = #tpu.dot_dimension_numbers<[1], [0], [0], [1], [0, 0, 1, 1], [], []>} : vector<8x128xf32>, vector<128x384xf32>, vector<8x384xf32> -> vector<8x384xf32>
    %238 = vector.extract_strided_slice %236 {offsets = [0, 0], sizes = [8, 128], strides = [1, 1]} : vector<8x384xf32> to vector<8x128xf32>
    %239 = vector.extract_strided_slice %237 {offsets = [0, 0], sizes = [8, 128], strides = [1, 1]} : vector<8x384xf32> to vector<8x128xf32>
    %240 = arith.addf %238, %239 : vector<8x128xf32>
    %cst_89 = arith.constant 5.000000e-01 : f32
    %241 = vector.broadcast %cst_89 : f32 to vector<8x128xf32>
    %242 = arith.mulf %241, %240 : vector<8x128xf32>
    %243 = math.tanh %242 : vector<8x128xf32>
    %cst_90 = arith.constant 1.000000e+00 : f32
    %244 = vector.broadcast %cst_90 : f32 to vector<8x128xf32>
    %245 = arith.addf %244, %243 : vector<8x128xf32>
    %cst_91 = arith.constant 5.000000e-01 : f32
    %246 = vector.broadcast %cst_91 : f32 to vector<8x128xf32>
    %247 = arith.mulf %246, %245 : vector<8x128xf32>
    %248 = vector.extract_strided_slice %236 {offsets = [0, 128], sizes = [8, 128], strides = [1, 1]} : vector<8x384xf32> to vector<8x128xf32>
    %249 = vector.extract_strided_slice %237 {offsets = [0, 128], sizes = [8, 128], strides = [1, 1]} : vector<8x384xf32> to vector<8x128xf32>
    %250 = arith.addf %248, %249 : vector<8x128xf32>
    %cst_92 = arith.constant 5.000000e-01 : f32
    %251 = vector.broadcast %cst_92 : f32 to vector<8x128xf32>
    %252 = arith.mulf %251, %250 : vector<8x128xf32>
    %253 = math.tanh %252 : vector<8x128xf32>
    %cst_93 = arith.constant 1.000000e+00 : f32
    %254 = vector.broadcast %cst_93 : f32 to vector<8x128xf32>
    %255 = arith.addf %254, %253 : vector<8x128xf32>
    %cst_94 = arith.constant 5.000000e-01 : f32
    %256 = vector.broadcast %cst_94 : f32 to vector<8x128xf32>
    %257 = arith.mulf %256, %255 : vector<8x128xf32>
    %258 = vector.extract_strided_slice %236 {offsets = [0, 256], sizes = [8, 128], strides = [1, 1]} : vector<8x384xf32> to vector<8x128xf32>
    %259 = vector.extract_strided_slice %237 {offsets = [0, 256], sizes = [8, 128], strides = [1, 1]} : vector<8x384xf32> to vector<8x128xf32>
    %260 = arith.addf %259, %24 : vector<8x128xf32>
    %261 = arith.mulf %247, %260 : vector<8x128xf32>
    %262 = arith.addf %258, %261 : vector<8x128xf32>
    %263 = math.tanh %262 : vector<8x128xf32>
    %cst_95 = arith.constant 1.000000e+00 : f32
    %264 = vector.broadcast %cst_95 : f32 to vector<8x128xf32>
    %265 = arith.subf %264, %257 : vector<8x128xf32>
    %266 = arith.mulf %265, %263 : vector<8x128xf32>
    %267 = arith.mulf %257, %199 : vector<8x128xf32>
    %268 = arith.addf %266, %267 : vector<8x128xf32>
    %c16_96 = arith.constant 16 : index
    %c0_97 = arith.constant 0 : index
    %269 = vector.load %arg11[%c16_96, %c0_97] : memref<64x128xf32, #tpu.memory_space<vmem>>, vector<8x128xf32>
    tpu.vector_store %arg11[%c16_96, %c0_97], %268 {strides = array<i32>} : memref<64x128xf32, #tpu.memory_space<vmem>>, vector<8x128xf32>,
    %c32 = arith.constant 32 : index
    %c0_98 = arith.constant 0 : index
    %270 = vector.load %arg12[%c32, %c0_98] : memref<64x384xf32, #tpu.memory_space<vmem>>, vector<8x384xf32>
    %cst_99 = arith.constant dense<0.000000e+00> : vector<8x384xf32>
    %271 = tpu.matmul %233, %25, %cst_99 {dimension_numbers = #tpu.dot_dimension_numbers<[1], [0], [0], [1], [0, 0, 1, 1], [], []>} : vector<8x128xf32>, vector<128x384xf32>, vector<8x384xf32> -> vector<8x384xf32>
    %272 = vector.extract_strided_slice %270 {offsets = [0, 0], sizes = [8, 128], strides = [1, 1]} : vector<8x384xf32> to vector<8x128xf32>
    %273 = vector.extract_strided_slice %271 {offsets = [0, 0], sizes = [8, 128], strides = [1, 1]} : vector<8x384xf32> to vector<8x128xf32>
    %274 = arith.addf %272, %273 : vector<8x128xf32>
    %cst_100 = arith.constant 5.000000e-01 : f32
    %275 = vector.broadcast %cst_100 : f32 to vector<8x128xf32>
    %276 = arith.mulf %275, %274 : vector<8x128xf32>
    %277 = math.tanh %276 : vector<8x128xf32>
    %cst_101 = arith.constant 1.000000e+00 : f32
    %278 = vector.broadcast %cst_101 : f32 to vector<8x128xf32>
    %279 = arith.addf %278, %277 : vector<8x128xf32>
    %cst_102 = arith.constant 5.000000e-01 : f32
    %280 = vector.broadcast %cst_102 : f32 to vector<8x128xf32>
    %281 = arith.mulf %280, %279 : vector<8x128xf32>
    %282 = vector.extract_strided_slice %270 {offsets = [0, 128], sizes = [8, 128], strides = [1, 1]} : vector<8x384xf32> to vector<8x128xf32>
    %283 = vector.extract_strided_slice %271 {offsets = [0, 128], sizes = [8, 128], strides = [1, 1]} : vector<8x384xf32> to vector<8x128xf32>
    %284 = arith.addf %282, %283 : vector<8x128xf32>
    %cst_103 = arith.constant 5.000000e-01 : f32
    %285 = vector.broadcast %cst_103 : f32 to vector<8x128xf32>
    %286 = arith.mulf %285, %284 : vector<8x128xf32>
    %287 = math.tanh %286 : vector<8x128xf32>
    %cst_104 = arith.constant 1.000000e+00 : f32
    %288 = vector.broadcast %cst_104 : f32 to vector<8x128xf32>
    %289 = arith.addf %288, %287 : vector<8x128xf32>
    %cst_105 = arith.constant 5.000000e-01 : f32
    %290 = vector.broadcast %cst_105 : f32 to vector<8x128xf32>
    %291 = arith.mulf %290, %289 : vector<8x128xf32>
    %292 = vector.extract_strided_slice %270 {offsets = [0, 256], sizes = [8, 128], strides = [1, 1]} : vector<8x384xf32> to vector<8x128xf32>
    %293 = vector.extract_strided_slice %271 {offsets = [0, 256], sizes = [8, 128], strides = [1, 1]} : vector<8x384xf32> to vector<8x128xf32>
    %294 = arith.addf %293, %21 : vector<8x128xf32>
    %295 = arith.mulf %281, %294 : vector<8x128xf32>
    %296 = arith.addf %292, %295 : vector<8x128xf32>
    %297 = math.tanh %296 : vector<8x128xf32>
    %cst_106 = arith.constant 1.000000e+00 : f32
    %298 = vector.broadcast %cst_106 : f32 to vector<8x128xf32>
    %299 = arith.subf %298, %291 : vector<8x128xf32>
    %300 = arith.mulf %299, %297 : vector<8x128xf32>
    %301 = arith.mulf %291, %233 : vector<8x128xf32>
    %302 = arith.addf %300, %301 : vector<8x128xf32>
    %cst_107 = arith.constant dense<0.000000e+00> : vector<8x384xf32>
    %303 = tpu.matmul %233, %26, %cst_107 {dimension_numbers = #tpu.dot_dimension_numbers<[1], [0], [0], [1], [0, 0, 1, 1], [], []>} : vector<8x128xf32>, vector<128x384xf32>, vector<8x384xf32> -> vector<8x384xf32>
    %304 = vector.broadcast %18 : vector<1x384xf32> to vector<8x384xf32>
    %305 = arith.addf %303, %304 : vector<8x384xf32>
    %cst_108 = arith.constant dense<0.000000e+00> : vector<8x384xf32>
    %306 = tpu.matmul %268, %27, %cst_108 {dimension_numbers = #tpu.dot_dimension_numbers<[1], [0], [0], [1], [0, 0, 1, 1], [], []>} : vector<8x128xf32>, vector<128x384xf32>, vector<8x384xf32> -> vector<8x384xf32>
    %307 = vector.extract_strided_slice %305 {offsets = [0, 0], sizes = [8, 128], strides = [1, 1]} : vector<8x384xf32> to vector<8x128xf32>
    %308 = vector.extract_strided_slice %306 {offsets = [0, 0], sizes = [8, 128], strides = [1, 1]} : vector<8x384xf32> to vector<8x128xf32>
    %309 = arith.addf %307, %308 : vector<8x128xf32>
    %cst_109 = arith.constant 5.000000e-01 : f32
    %310 = vector.broadcast %cst_109 : f32 to vector<8x128xf32>
    %311 = arith.mulf %310, %309 : vector<8x128xf32>
    %312 = math.tanh %311 : vector<8x128xf32>
    %cst_110 = arith.constant 1.000000e+00 : f32
    %313 = vector.broadcast %cst_110 : f32 to vector<8x128xf32>
    %314 = arith.addf %313, %312 : vector<8x128xf32>
    %cst_111 = arith.constant 5.000000e-01 : f32
    %315 = vector.broadcast %cst_111 : f32 to vector<8x128xf32>
    %316 = arith.mulf %315, %314 : vector<8x128xf32>
    %317 = vector.extract_strided_slice %305 {offsets = [0, 128], sizes = [8, 128], strides = [1, 1]} : vector<8x384xf32> to vector<8x128xf32>
    %318 = vector.extract_strided_slice %306 {offsets = [0, 128], sizes = [8, 128], strides = [1, 1]} : vector<8x384xf32> to vector<8x128xf32>
    %319 = arith.addf %317, %318 : vector<8x128xf32>
    %cst_112 = arith.constant 5.000000e-01 : f32
    %320 = vector.broadcast %cst_112 : f32 to vector<8x128xf32>
    %321 = arith.mulf %320, %319 : vector<8x128xf32>
    %322 = math.tanh %321 : vector<8x128xf32>
    %cst_113 = arith.constant 1.000000e+00 : f32
    %323 = vector.broadcast %cst_113 : f32 to vector<8x128xf32>
    %324 = arith.addf %323, %322 : vector<8x128xf32>
    %cst_114 = arith.constant 5.000000e-01 : f32
    %325 = vector.broadcast %cst_114 : f32 to vector<8x128xf32>
    %326 = arith.mulf %325, %324 : vector<8x128xf32>
    %327 = vector.extract_strided_slice %305 {offsets = [0, 256], sizes = [8, 128], strides = [1, 1]} : vector<8x384xf32> to vector<8x128xf32>
    %328 = vector.extract_strided_slice %306 {offsets = [0, 256], sizes = [8, 128], strides = [1, 1]} : vector<8x384xf32> to vector<8x128xf32>
    %329 = arith.addf %328, %24 : vector<8x128xf32>
    %330 = arith.mulf %316, %329 : vector<8x128xf32>
    %331 = arith.addf %327, %330 : vector<8x128xf32>
    %332 = math.tanh %331 : vector<8x128xf32>
    %cst_115 = arith.constant 1.000000e+00 : f32
    %333 = vector.broadcast %cst_115 : f32 to vector<8x128xf32>
    %334 = arith.subf %333, %326 : vector<8x128xf32>
    %335 = arith.mulf %334, %332 : vector<8x128xf32>
    %336 = arith.mulf %326, %268 : vector<8x128xf32>
    %337 = arith.addf %335, %336 : vector<8x128xf32>
    %c24_116 = arith.constant 24 : index
    %c0_117 = arith.constant 0 : index
    %338 = vector.load %arg11[%c24_116, %c0_117] : memref<64x128xf32, #tpu.memory_space<vmem>>, vector<8x128xf32>
    tpu.vector_store %arg11[%c24_116, %c0_117], %337 {strides = array<i32>} : memref<64x128xf32, #tpu.memory_space<vmem>>, vector<8x128xf32>,
    %c40 = arith.constant 40 : index
    %c0_118 = arith.constant 0 : index
    %339 = vector.load %arg12[%c40, %c0_118] : memref<64x384xf32, #tpu.memory_space<vmem>>, vector<8x384xf32>
    %cst_119 = arith.constant dense<0.000000e+00> : vector<8x384xf32>
    %340 = tpu.matmul %302, %25, %cst_119 {dimension_numbers = #tpu.dot_dimension_numbers<[1], [0], [0], [1], [0, 0, 1, 1], [], []>} : vector<8x128xf32>, vector<128x384xf32>, vector<8x384xf32> -> vector<8x384xf32>
    %341 = vector.extract_strided_slice %339 {offsets = [0, 0], sizes = [8, 128], strides = [1, 1]} : vector<8x384xf32> to vector<8x128xf32>
    %342 = vector.extract_strided_slice %340 {offsets = [0, 0], sizes = [8, 128], strides = [1, 1]} : vector<8x384xf32> to vector<8x128xf32>
    %343 = arith.addf %341, %342 : vector<8x128xf32>
    %cst_120 = arith.constant 5.000000e-01 : f32
    %344 = vector.broadcast %cst_120 : f32 to vector<8x128xf32>
    %345 = arith.mulf %344, %343 : vector<8x128xf32>
    %346 = math.tanh %345 : vector<8x128xf32>
    %cst_121 = arith.constant 1.000000e+00 : f32
    %347 = vector.broadcast %cst_121 : f32 to vector<8x128xf32>
    %348 = arith.addf %347, %346 : vector<8x128xf32>
    %cst_122 = arith.constant 5.000000e-01 : f32
    %349 = vector.broadcast %cst_122 : f32 to vector<8x128xf32>
    %350 = arith.mulf %349, %348 : vector<8x128xf32>
    %351 = vector.extract_strided_slice %339 {offsets = [0, 128], sizes = [8, 128], strides = [1, 1]} : vector<8x384xf32> to vector<8x128xf32>
    %352 = vector.extract_strided_slice %340 {offsets = [0, 128], sizes = [8, 128], strides = [1, 1]} : vector<8x384xf32> to vector<8x128xf32>
    %353 = arith.addf %351, %352 : vector<8x128xf32>
    %cst_123 = arith.constant 5.000000e-01 : f32
    %354 = vector.broadcast %cst_123 : f32 to vector<8x128xf32>
    %355 = arith.mulf %354, %353 : vector<8x128xf32>
    %356 = math.tanh %355 : vector<8x128xf32>
    %cst_124 = arith.constant 1.000000e+00 : f32
    %357 = vector.broadcast %cst_124 : f32 to vector<8x128xf32>
    %358 = arith.addf %357, %356 : vector<8x128xf32>
    %cst_125 = arith.constant 5.000000e-01 : f32
    %359 = vector.broadcast %cst_125 : f32 to vector<8x128xf32>
    %360 = arith.mulf %359, %358 : vector<8x128xf32>
    %361 = vector.extract_strided_slice %339 {offsets = [0, 256], sizes = [8, 128], strides = [1, 1]} : vector<8x384xf32> to vector<8x128xf32>
    %362 = vector.extract_strided_slice %340 {offsets = [0, 256], sizes = [8, 128], strides = [1, 1]} : vector<8x384xf32> to vector<8x128xf32>
    %363 = arith.addf %362, %21 : vector<8x128xf32>
    %364 = arith.mulf %350, %363 : vector<8x128xf32>
    %365 = arith.addf %361, %364 : vector<8x128xf32>
    %366 = math.tanh %365 : vector<8x128xf32>
    %cst_126 = arith.constant 1.000000e+00 : f32
    %367 = vector.broadcast %cst_126 : f32 to vector<8x128xf32>
    %368 = arith.subf %367, %360 : vector<8x128xf32>
    %369 = arith.mulf %368, %366 : vector<8x128xf32>
    %370 = arith.mulf %360, %302 : vector<8x128xf32>
    %371 = arith.addf %369, %370 : vector<8x128xf32>
    %cst_127 = arith.constant dense<0.000000e+00> : vector<8x384xf32>
    %372 = tpu.matmul %302, %26, %cst_127 {dimension_numbers = #tpu.dot_dimension_numbers<[1], [0], [0], [1], [0, 0, 1, 1], [], []>} : vector<8x128xf32>, vector<128x384xf32>, vector<8x384xf32> -> vector<8x384xf32>
    %373 = vector.broadcast %18 : vector<1x384xf32> to vector<8x384xf32>
    %374 = arith.addf %372, %373 : vector<8x384xf32>
    %cst_128 = arith.constant dense<0.000000e+00> : vector<8x384xf32>
    %375 = tpu.matmul %337, %27, %cst_128 {dimension_numbers = #tpu.dot_dimension_numbers<[1], [0], [0], [1], [0, 0, 1, 1], [], []>} : vector<8x128xf32>, vector<128x384xf32>, vector<8x384xf32> -> vector<8x384xf32>
    %376 = vector.extract_strided_slice %374 {offsets = [0, 0], sizes = [8, 128], strides = [1, 1]} : vector<8x384xf32> to vector<8x128xf32>
    %377 = vector.extract_strided_slice %375 {offsets = [0, 0], sizes = [8, 128], strides = [1, 1]} : vector<8x384xf32> to vector<8x128xf32>
    %378 = arith.addf %376, %377 : vector<8x128xf32>
    %cst_129 = arith.constant 5.000000e-01 : f32
    %379 = vector.broadcast %cst_129 : f32 to vector<8x128xf32>
    %380 = arith.mulf %379, %378 : vector<8x128xf32>
    %381 = math.tanh %380 : vector<8x128xf32>
    %cst_130 = arith.constant 1.000000e+00 : f32
    %382 = vector.broadcast %cst_130 : f32 to vector<8x128xf32>
    %383 = arith.addf %382, %381 : vector<8x128xf32>
    %cst_131 = arith.constant 5.000000e-01 : f32
    %384 = vector.broadcast %cst_131 : f32 to vector<8x128xf32>
    %385 = arith.mulf %384, %383 : vector<8x128xf32>
    %386 = vector.extract_strided_slice %374 {offsets = [0, 128], sizes = [8, 128], strides = [1, 1]} : vector<8x384xf32> to vector<8x128xf32>
    %387 = vector.extract_strided_slice %375 {offsets = [0, 128], sizes = [8, 128], strides = [1, 1]} : vector<8x384xf32> to vector<8x128xf32>
    %388 = arith.addf %386, %387 : vector<8x128xf32>
    %cst_132 = arith.constant 5.000000e-01 : f32
    %389 = vector.broadcast %cst_132 : f32 to vector<8x128xf32>
    %390 = arith.mulf %389, %388 : vector<8x128xf32>
    %391 = math.tanh %390 : vector<8x128xf32>
    %cst_133 = arith.constant 1.000000e+00 : f32
    %392 = vector.broadcast %cst_133 : f32 to vector<8x128xf32>
    %393 = arith.addf %392, %391 : vector<8x128xf32>
    %cst_134 = arith.constant 5.000000e-01 : f32
    %394 = vector.broadcast %cst_134 : f32 to vector<8x128xf32>
    %395 = arith.mulf %394, %393 : vector<8x128xf32>
    %396 = vector.extract_strided_slice %374 {offsets = [0, 256], sizes = [8, 128], strides = [1, 1]} : vector<8x384xf32> to vector<8x128xf32>
    %397 = vector.extract_strided_slice %375 {offsets = [0, 256], sizes = [8, 128], strides = [1, 1]} : vector<8x384xf32> to vector<8x128xf32>
    %398 = arith.addf %397, %24 : vector<8x128xf32>
    %399 = arith.mulf %385, %398 : vector<8x128xf32>
    %400 = arith.addf %396, %399 : vector<8x128xf32>
    %401 = math.tanh %400 : vector<8x128xf32>
    %cst_135 = arith.constant 1.000000e+00 : f32
    %402 = vector.broadcast %cst_135 : f32 to vector<8x128xf32>
    %403 = arith.subf %402, %395 : vector<8x128xf32>
    %404 = arith.mulf %403, %401 : vector<8x128xf32>
    %405 = arith.mulf %395, %337 : vector<8x128xf32>
    %406 = arith.addf %404, %405 : vector<8x128xf32>
    %c32_136 = arith.constant 32 : index
    %c0_137 = arith.constant 0 : index
    %407 = vector.load %arg11[%c32_136, %c0_137] : memref<64x128xf32, #tpu.memory_space<vmem>>, vector<8x128xf32>
    tpu.vector_store %arg11[%c32_136, %c0_137], %406 {strides = array<i32>} : memref<64x128xf32, #tpu.memory_space<vmem>>, vector<8x128xf32>,
    %c48 = arith.constant 48 : index
    %c0_138 = arith.constant 0 : index
    %408 = vector.load %arg12[%c48, %c0_138] : memref<64x384xf32, #tpu.memory_space<vmem>>, vector<8x384xf32>
    %cst_139 = arith.constant dense<0.000000e+00> : vector<8x384xf32>
    %409 = tpu.matmul %371, %25, %cst_139 {dimension_numbers = #tpu.dot_dimension_numbers<[1], [0], [0], [1], [0, 0, 1, 1], [], []>} : vector<8x128xf32>, vector<128x384xf32>, vector<8x384xf32> -> vector<8x384xf32>
    %410 = vector.extract_strided_slice %408 {offsets = [0, 0], sizes = [8, 128], strides = [1, 1]} : vector<8x384xf32> to vector<8x128xf32>
    %411 = vector.extract_strided_slice %409 {offsets = [0, 0], sizes = [8, 128], strides = [1, 1]} : vector<8x384xf32> to vector<8x128xf32>
    %412 = arith.addf %410, %411 : vector<8x128xf32>
    %cst_140 = arith.constant 5.000000e-01 : f32
    %413 = vector.broadcast %cst_140 : f32 to vector<8x128xf32>
    %414 = arith.mulf %413, %412 : vector<8x128xf32>
    %415 = math.tanh %414 : vector<8x128xf32>
    %cst_141 = arith.constant 1.000000e+00 : f32
    %416 = vector.broadcast %cst_141 : f32 to vector<8x128xf32>
    %417 = arith.addf %416, %415 : vector<8x128xf32>
    %cst_142 = arith.constant 5.000000e-01 : f32
    %418 = vector.broadcast %cst_142 : f32 to vector<8x128xf32>
    %419 = arith.mulf %418, %417 : vector<8x128xf32>
    %420 = vector.extract_strided_slice %408 {offsets = [0, 128], sizes = [8, 128], strides = [1, 1]} : vector<8x384xf32> to vector<8x128xf32>
    %421 = vector.extract_strided_slice %409 {offsets = [0, 128], sizes = [8, 128], strides = [1, 1]} : vector<8x384xf32> to vector<8x128xf32>
    %422 = arith.addf %420, %421 : vector<8x128xf32>
    %cst_143 = arith.constant 5.000000e-01 : f32
    %423 = vector.broadcast %cst_143 : f32 to vector<8x128xf32>
    %424 = arith.mulf %423, %422 : vector<8x128xf32>
    %425 = math.tanh %424 : vector<8x128xf32>
    %cst_144 = arith.constant 1.000000e+00 : f32
    %426 = vector.broadcast %cst_144 : f32 to vector<8x128xf32>
    %427 = arith.addf %426, %425 : vector<8x128xf32>
    %cst_145 = arith.constant 5.000000e-01 : f32
    %428 = vector.broadcast %cst_145 : f32 to vector<8x128xf32>
    %429 = arith.mulf %428, %427 : vector<8x128xf32>
    %430 = vector.extract_strided_slice %408 {offsets = [0, 256], sizes = [8, 128], strides = [1, 1]} : vector<8x384xf32> to vector<8x128xf32>
    %431 = vector.extract_strided_slice %409 {offsets = [0, 256], sizes = [8, 128], strides = [1, 1]} : vector<8x384xf32> to vector<8x128xf32>
    %432 = arith.addf %431, %21 : vector<8x128xf32>
    %433 = arith.mulf %419, %432 : vector<8x128xf32>
    %434 = arith.addf %430, %433 : vector<8x128xf32>
    %435 = math.tanh %434 : vector<8x128xf32>
    %cst_146 = arith.constant 1.000000e+00 : f32
    %436 = vector.broadcast %cst_146 : f32 to vector<8x128xf32>
    %437 = arith.subf %436, %429 : vector<8x128xf32>
    %438 = arith.mulf %437, %435 : vector<8x128xf32>
    %439 = arith.mulf %429, %371 : vector<8x128xf32>
    %440 = arith.addf %438, %439 : vector<8x128xf32>
    %cst_147 = arith.constant dense<0.000000e+00> : vector<8x384xf32>
    %441 = tpu.matmul %371, %26, %cst_147 {dimension_numbers = #tpu.dot_dimension_numbers<[1], [0], [0], [1], [0, 0, 1, 1], [], []>} : vector<8x128xf32>, vector<128x384xf32>, vector<8x384xf32> -> vector<8x384xf32>
    %442 = vector.broadcast %18 : vector<1x384xf32> to vector<8x384xf32>
    %443 = arith.addf %441, %442 : vector<8x384xf32>
    %cst_148 = arith.constant dense<0.000000e+00> : vector<8x384xf32>
    %444 = tpu.matmul %406, %27, %cst_148 {dimension_numbers = #tpu.dot_dimension_numbers<[1], [0], [0], [1], [0, 0, 1, 1], [], []>} : vector<8x128xf32>, vector<128x384xf32>, vector<8x384xf32> -> vector<8x384xf32>
    %445 = vector.extract_strided_slice %443 {offsets = [0, 0], sizes = [8, 128], strides = [1, 1]} : vector<8x384xf32> to vector<8x128xf32>
    %446 = vector.extract_strided_slice %444 {offsets = [0, 0], sizes = [8, 128], strides = [1, 1]} : vector<8x384xf32> to vector<8x128xf32>
    %447 = arith.addf %445, %446 : vector<8x128xf32>
    %cst_149 = arith.constant 5.000000e-01 : f32
    %448 = vector.broadcast %cst_149 : f32 to vector<8x128xf32>
    %449 = arith.mulf %448, %447 : vector<8x128xf32>
    %450 = math.tanh %449 : vector<8x128xf32>
    %cst_150 = arith.constant 1.000000e+00 : f32
    %451 = vector.broadcast %cst_150 : f32 to vector<8x128xf32>
    %452 = arith.addf %451, %450 : vector<8x128xf32>
    %cst_151 = arith.constant 5.000000e-01 : f32
    %453 = vector.broadcast %cst_151 : f32 to vector<8x128xf32>
    %454 = arith.mulf %453, %452 : vector<8x128xf32>
    %455 = vector.extract_strided_slice %443 {offsets = [0, 128], sizes = [8, 128], strides = [1, 1]} : vector<8x384xf32> to vector<8x128xf32>
    %456 = vector.extract_strided_slice %444 {offsets = [0, 128], sizes = [8, 128], strides = [1, 1]} : vector<8x384xf32> to vector<8x128xf32>
    %457 = arith.addf %455, %456 : vector<8x128xf32>
    %cst_152 = arith.constant 5.000000e-01 : f32
    %458 = vector.broadcast %cst_152 : f32 to vector<8x128xf32>
    %459 = arith.mulf %458, %457 : vector<8x128xf32>
    %460 = math.tanh %459 : vector<8x128xf32>
    %cst_153 = arith.constant 1.000000e+00 : f32
    %461 = vector.broadcast %cst_153 : f32 to vector<8x128xf32>
    %462 = arith.addf %461, %460 : vector<8x128xf32>
    %cst_154 = arith.constant 5.000000e-01 : f32
    %463 = vector.broadcast %cst_154 : f32 to vector<8x128xf32>
    %464 = arith.mulf %463, %462 : vector<8x128xf32>
    %465 = vector.extract_strided_slice %443 {offsets = [0, 256], sizes = [8, 128], strides = [1, 1]} : vector<8x384xf32> to vector<8x128xf32>
    %466 = vector.extract_strided_slice %444 {offsets = [0, 256], sizes = [8, 128], strides = [1, 1]} : vector<8x384xf32> to vector<8x128xf32>
    %467 = arith.addf %466, %24 : vector<8x128xf32>
    %468 = arith.mulf %454, %467 : vector<8x128xf32>
    %469 = arith.addf %465, %468 : vector<8x128xf32>
    %470 = math.tanh %469 : vector<8x128xf32>
    %cst_155 = arith.constant 1.000000e+00 : f32
    %471 = vector.broadcast %cst_155 : f32 to vector<8x128xf32>
    %472 = arith.subf %471, %464 : vector<8x128xf32>
    %473 = arith.mulf %472, %470 : vector<8x128xf32>
    %474 = arith.mulf %464, %406 : vector<8x128xf32>
    %475 = arith.addf %473, %474 : vector<8x128xf32>
    %c40_156 = arith.constant 40 : index
    %c0_157 = arith.constant 0 : index
    %476 = vector.load %arg11[%c40_156, %c0_157] : memref<64x128xf32, #tpu.memory_space<vmem>>, vector<8x128xf32>
    tpu.vector_store %arg11[%c40_156, %c0_157], %475 {strides = array<i32>} : memref<64x128xf32, #tpu.memory_space<vmem>>, vector<8x128xf32>,
    %c56 = arith.constant 56 : index
    %c0_158 = arith.constant 0 : index
    %477 = vector.load %arg12[%c56, %c0_158] : memref<64x384xf32, #tpu.memory_space<vmem>>, vector<8x384xf32>
    %cst_159 = arith.constant dense<0.000000e+00> : vector<8x384xf32>
    %478 = tpu.matmul %440, %25, %cst_159 {dimension_numbers = #tpu.dot_dimension_numbers<[1], [0], [0], [1], [0, 0, 1, 1], [], []>} : vector<8x128xf32>, vector<128x384xf32>, vector<8x384xf32> -> vector<8x384xf32>
    %479 = vector.extract_strided_slice %477 {offsets = [0, 0], sizes = [8, 128], strides = [1, 1]} : vector<8x384xf32> to vector<8x128xf32>
    %480 = vector.extract_strided_slice %478 {offsets = [0, 0], sizes = [8, 128], strides = [1, 1]} : vector<8x384xf32> to vector<8x128xf32>
    %481 = arith.addf %479, %480 : vector<8x128xf32>
    %cst_160 = arith.constant 5.000000e-01 : f32
    %482 = vector.broadcast %cst_160 : f32 to vector<8x128xf32>
    %483 = arith.mulf %482, %481 : vector<8x128xf32>
    %484 = math.tanh %483 : vector<8x128xf32>
    %cst_161 = arith.constant 1.000000e+00 : f32
    %485 = vector.broadcast %cst_161 : f32 to vector<8x128xf32>
    %486 = arith.addf %485, %484 : vector<8x128xf32>
    %cst_162 = arith.constant 5.000000e-01 : f32
    %487 = vector.broadcast %cst_162 : f32 to vector<8x128xf32>
    %488 = arith.mulf %487, %486 : vector<8x128xf32>
    %489 = vector.extract_strided_slice %477 {offsets = [0, 128], sizes = [8, 128], strides = [1, 1]} : vector<8x384xf32> to vector<8x128xf32>
    %490 = vector.extract_strided_slice %478 {offsets = [0, 128], sizes = [8, 128], strides = [1, 1]} : vector<8x384xf32> to vector<8x128xf32>
    %491 = arith.addf %489, %490 : vector<8x128xf32>
    %cst_163 = arith.constant 5.000000e-01 : f32
    %492 = vector.broadcast %cst_163 : f32 to vector<8x128xf32>
    %493 = arith.mulf %492, %491 : vector<8x128xf32>
    %494 = math.tanh %493 : vector<8x128xf32>
    %cst_164 = arith.constant 1.000000e+00 : f32
    %495 = vector.broadcast %cst_164 : f32 to vector<8x128xf32>
    %496 = arith.addf %495, %494 : vector<8x128xf32>
    %cst_165 = arith.constant 5.000000e-01 : f32
    %497 = vector.broadcast %cst_165 : f32 to vector<8x128xf32>
    %498 = arith.mulf %497, %496 : vector<8x128xf32>
    %499 = vector.extract_strided_slice %477 {offsets = [0, 256], sizes = [8, 128], strides = [1, 1]} : vector<8x384xf32> to vector<8x128xf32>
    %500 = vector.extract_strided_slice %478 {offsets = [0, 256], sizes = [8, 128], strides = [1, 1]} : vector<8x384xf32> to vector<8x128xf32>
    %501 = arith.addf %500, %21 : vector<8x128xf32>
    %502 = arith.mulf %488, %501 : vector<8x128xf32>
    %503 = arith.addf %499, %502 : vector<8x128xf32>
    %504 = math.tanh %503 : vector<8x128xf32>
    %cst_166 = arith.constant 1.000000e+00 : f32
    %505 = vector.broadcast %cst_166 : f32 to vector<8x128xf32>
    %506 = arith.subf %505, %498 : vector<8x128xf32>
    %507 = arith.mulf %506, %504 : vector<8x128xf32>
    %508 = arith.mulf %498, %440 : vector<8x128xf32>
    %509 = arith.addf %507, %508 : vector<8x128xf32>
    %cst_167 = arith.constant dense<0.000000e+00> : vector<8x384xf32>
    %510 = tpu.matmul %440, %26, %cst_167 {dimension_numbers = #tpu.dot_dimension_numbers<[1], [0], [0], [1], [0, 0, 1, 1], [], []>} : vector<8x128xf32>, vector<128x384xf32>, vector<8x384xf32> -> vector<8x384xf32>
    %511 = vector.broadcast %18 : vector<1x384xf32> to vector<8x384xf32>
    %512 = arith.addf %510, %511 : vector<8x384xf32>
    %cst_168 = arith.constant dense<0.000000e+00> : vector<8x384xf32>
    %513 = tpu.matmul %475, %27, %cst_168 {dimension_numbers = #tpu.dot_dimension_numbers<[1], [0], [0], [1], [0, 0, 1, 1], [], []>} : vector<8x128xf32>, vector<128x384xf32>, vector<8x384xf32> -> vector<8x384xf32>
    %514 = vector.extract_strided_slice %512 {offsets = [0, 0], sizes = [8, 128], strides = [1, 1]} : vector<8x384xf32> to vector<8x128xf32>
    %515 = vector.extract_strided_slice %513 {offsets = [0, 0], sizes = [8, 128], strides = [1, 1]} : vector<8x384xf32> to vector<8x128xf32>
    %516 = arith.addf %514, %515 : vector<8x128xf32>
    %cst_169 = arith.constant 5.000000e-01 : f32
    %517 = vector.broadcast %cst_169 : f32 to vector<8x128xf32>
    %518 = arith.mulf %517, %516 : vector<8x128xf32>
    %519 = math.tanh %518 : vector<8x128xf32>
    %cst_170 = arith.constant 1.000000e+00 : f32
    %520 = vector.broadcast %cst_170 : f32 to vector<8x128xf32>
    %521 = arith.addf %520, %519 : vector<8x128xf32>
    %cst_171 = arith.constant 5.000000e-01 : f32
    %522 = vector.broadcast %cst_171 : f32 to vector<8x128xf32>
    %523 = arith.mulf %522, %521 : vector<8x128xf32>
    %524 = vector.extract_strided_slice %512 {offsets = [0, 128], sizes = [8, 128], strides = [1, 1]} : vector<8x384xf32> to vector<8x128xf32>
    %525 = vector.extract_strided_slice %513 {offsets = [0, 128], sizes = [8, 128], strides = [1, 1]} : vector<8x384xf32> to vector<8x128xf32>
    %526 = arith.addf %524, %525 : vector<8x128xf32>
    %cst_172 = arith.constant 5.000000e-01 : f32
    %527 = vector.broadcast %cst_172 : f32 to vector<8x128xf32>
    %528 = arith.mulf %527, %526 : vector<8x128xf32>
    %529 = math.tanh %528 : vector<8x128xf32>
    %cst_173 = arith.constant 1.000000e+00 : f32
    %530 = vector.broadcast %cst_173 : f32 to vector<8x128xf32>
    %531 = arith.addf %530, %529 : vector<8x128xf32>
    %cst_174 = arith.constant 5.000000e-01 : f32
    %532 = vector.broadcast %cst_174 : f32 to vector<8x128xf32>
    %533 = arith.mulf %532, %531 : vector<8x128xf32>
    %534 = vector.extract_strided_slice %512 {offsets = [0, 256], sizes = [8, 128], strides = [1, 1]} : vector<8x384xf32> to vector<8x128xf32>
    %535 = vector.extract_strided_slice %513 {offsets = [0, 256], sizes = [8, 128], strides = [1, 1]} : vector<8x384xf32> to vector<8x128xf32>
    %536 = arith.addf %535, %24 : vector<8x128xf32>
    %537 = arith.mulf %523, %536 : vector<8x128xf32>
    %538 = arith.addf %534, %537 : vector<8x128xf32>
    %539 = math.tanh %538 : vector<8x128xf32>
    %cst_175 = arith.constant 1.000000e+00 : f32
    %540 = vector.broadcast %cst_175 : f32 to vector<8x128xf32>
    %541 = arith.subf %540, %533 : vector<8x128xf32>
    %542 = arith.mulf %541, %539 : vector<8x128xf32>
    %543 = arith.mulf %533, %475 : vector<8x128xf32>
    %544 = arith.addf %542, %543 : vector<8x128xf32>
    %c48_176 = arith.constant 48 : index
    %c0_177 = arith.constant 0 : index
    %545 = vector.load %arg11[%c48_176, %c0_177] : memref<64x128xf32, #tpu.memory_space<vmem>>, vector<8x128xf32>
    tpu.vector_store %arg11[%c48_176, %c0_177], %544 {strides = array<i32>} : memref<64x128xf32, #tpu.memory_space<vmem>>, vector<8x128xf32>,
    %cst_178 = arith.constant dense<0.000000e+00> : vector<8x384xf32>
    %546 = tpu.matmul %509, %26, %cst_178 {dimension_numbers = #tpu.dot_dimension_numbers<[1], [0], [0], [1], [0, 0, 1, 1], [], []>} : vector<8x128xf32>, vector<128x384xf32>, vector<8x384xf32> -> vector<8x384xf32>
    %547 = vector.broadcast %18 : vector<1x384xf32> to vector<8x384xf32>
    %548 = arith.addf %546, %547 : vector<8x384xf32>
    %cst_179 = arith.constant dense<0.000000e+00> : vector<8x384xf32>
    %549 = tpu.matmul %544, %27, %cst_179 {dimension_numbers = #tpu.dot_dimension_numbers<[1], [0], [0], [1], [0, 0, 1, 1], [], []>} : vector<8x128xf32>, vector<128x384xf32>, vector<8x384xf32> -> vector<8x384xf32>
    %550 = vector.extract_strided_slice %548 {offsets = [0, 0], sizes = [8, 128], strides = [1, 1]} : vector<8x384xf32> to vector<8x128xf32>
    %551 = vector.extract_strided_slice %549 {offsets = [0, 0], sizes = [8, 128], strides = [1, 1]} : vector<8x384xf32> to vector<8x128xf32>
    %552 = arith.addf %550, %551 : vector<8x128xf32>
    %cst_180 = arith.constant 5.000000e-01 : f32
    %553 = vector.broadcast %cst_180 : f32 to vector<8x128xf32>
    %554 = arith.mulf %553, %552 : vector<8x128xf32>
    %555 = math.tanh %554 : vector<8x128xf32>
    %cst_181 = arith.constant 1.000000e+00 : f32
    %556 = vector.broadcast %cst_181 : f32 to vector<8x128xf32>
    %557 = arith.addf %556, %555 : vector<8x128xf32>
    %cst_182 = arith.constant 5.000000e-01 : f32
    %558 = vector.broadcast %cst_182 : f32 to vector<8x128xf32>
    %559 = arith.mulf %558, %557 : vector<8x128xf32>
    %560 = vector.extract_strided_slice %548 {offsets = [0, 128], sizes = [8, 128], strides = [1, 1]} : vector<8x384xf32> to vector<8x128xf32>
    %561 = vector.extract_strided_slice %549 {offsets = [0, 128], sizes = [8, 128], strides = [1, 1]} : vector<8x384xf32> to vector<8x128xf32>
    %562 = arith.addf %560, %561 : vector<8x128xf32>
    %cst_183 = arith.constant 5.000000e-01 : f32
    %563 = vector.broadcast %cst_183 : f32 to vector<8x128xf32>
    %564 = arith.mulf %563, %562 : vector<8x128xf32>
    %565 = math.tanh %564 : vector<8x128xf32>
    %cst_184 = arith.constant 1.000000e+00 : f32
    %566 = vector.broadcast %cst_184 : f32 to vector<8x128xf32>
    %567 = arith.addf %566, %565 : vector<8x128xf32>
    %cst_185 = arith.constant 5.000000e-01 : f32
    %568 = vector.broadcast %cst_185 : f32 to vector<8x128xf32>
    %569 = arith.mulf %568, %567 : vector<8x128xf32>
    %570 = vector.extract_strided_slice %548 {offsets = [0, 256], sizes = [8, 128], strides = [1, 1]} : vector<8x384xf32> to vector<8x128xf32>
    %571 = vector.extract_strided_slice %549 {offsets = [0, 256], sizes = [8, 128], strides = [1, 1]} : vector<8x384xf32> to vector<8x128xf32>
    %572 = arith.addf %571, %24 : vector<8x128xf32>
    %573 = arith.mulf %559, %572 : vector<8x128xf32>
    %574 = arith.addf %570, %573 : vector<8x128xf32>
    %575 = math.tanh %574 : vector<8x128xf32>
    %cst_186 = arith.constant 1.000000e+00 : f32
    %576 = vector.broadcast %cst_186 : f32 to vector<8x128xf32>
    %577 = arith.subf %576, %569 : vector<8x128xf32>
    %578 = arith.mulf %577, %575 : vector<8x128xf32>
    %579 = arith.mulf %569, %544 : vector<8x128xf32>
    %580 = arith.addf %578, %579 : vector<8x128xf32>
    %c56_187 = arith.constant 56 : index
    %c0_188 = arith.constant 0 : index
    %581 = vector.load %arg11[%c56_187, %c0_188] : memref<64x128xf32, #tpu.memory_space<vmem>>, vector<8x128xf32>
    tpu.vector_store %arg11[%c56_187, %c0_188], %580 {strides = array<i32>} : memref<64x128xf32, #tpu.memory_space<vmem>>, vector<8x128xf32>,
    return
  }
}

</mosaic_0001>

<llo_original>
// kernel: gru_forward.1
$region0: #{gru_forward.1}
  #allocation0 [shape = 'u32[]', space=smem, size = 0x4, offset = 0x4, fixed_abs, tag = 'smem constant byte address 0x4 - core index']
  #allocation1 [shape = 'u32[144,128]{1,0:T(1,128)}', space=vmem, size = 0x12000, scoped, tag = 'internal scratch']
  #allocation2 [shape = 'f32[64,384]{1,0:T(8,128)}', space=vmem, size = 0x18000, scoped, tag = 'scratch operand']
  %s0 = inlined_call_operand.vmem [shape: f32[64,1024], index: 0, kind: input, shape index: {}]
  %s1 = inlined_call_operand.vmem [shape: f32[8,128], index: 1, kind: input, shape index: {}]
  %s2 = inlined_call_operand.vmem [shape: f32[8,128], index: 2, kind: input, shape index: {}]
  %s3 = inlined_call_operand.hbm [shape: f32[1024,384], index: 3, kind: input, shape index: {}]
  %s4 = inlined_call_operand.hbm [shape: f32[128,384], index: 4, kind: input, shape index: {}]
  %s5 = inlined_call_operand.hbm [shape: f32[1,384], index: 5, kind: input, shape index: {}]
  %s6 = inlined_call_operand.hbm [shape: f32[1,384], index: 6, kind: input, shape index: {}]
  %s7 = inlined_call_operand.hbm [shape: f32[128,384], index: 7, kind: input, shape index: {}]
  %s8 = inlined_call_operand.hbm [shape: f32[128,384], index: 8, kind: input, shape index: {}]
  %s9 = inlined_call_operand.hbm [shape: f32[1,384], index: 9, kind: input, shape index: {}]
  %s10 = inlined_call_operand.hbm [shape: f32[1,384], index: 10, kind: input, shape index: {}]
  %s11 = inlined_call_operand.vmem [shape: f32[64,128], index: 11, kind: output, shape index: {}]
  %s12 = sld [smem:[#allocation0]]
  $region86: #{gru_forward.1} parent=0
    _
  %s14 = ssub.s32 1, %s12
  %s15 = scalar_select 0, %s14, %s12
  $region1: #{gru_forward.1} parent=0
    #allocation3 [shape = 'u8[1572864]{0}', space=vmem, size = 0x180000, scoped, tag = 'input window, operand 3, single buffered']
    #allocation4 [shape = 's32[1]{0}', space=sflag, size = 0x4, scoped, tag = 'scoped memory for gru_forward.1']
    #allocation5 [shape = 'u8[196608]{0}', space=vmem, size = 0x30000, scoped, tag = 'input window, operand 4, single buffered']
    #allocation6 [shape = 's32[1]{0}', space=sflag, size = 0x4, scoped, tag = 'scoped memory for gru_forward.1']
    #allocation7 [shape = 'u8[1536]{0}', space=vmem, size = 0x800, scoped, tag = 'input window, operand 5, single buffered']
    #allocation8 [shape = 'u8[1536]{0}', space=vmem, size = 0x800, scoped, tag = 'input window, operand 6, single buffered']
    #allocation9 [shape = 's32[1]{0}', space=sflag, size = 0x4, scoped, tag = 'scoped memory for gru_forward.1']
    #allocation10 [shape = 'u8[196608]{0}', space=vmem, size = 0x30000, scoped, tag = 'input window, operand 7, single buffered']
    #allocation11 [shape = 'u8[196608]{0}', space=vmem, size = 0x30000, scoped, tag = 'input window, operand 8, single buffered']
    #allocation12 [shape = 's32[1]{0}', space=sflag, size = 0x4, scoped, tag = 'scoped memory for gru_forward.1']
    #allocation13 [shape = 'u8[1536]{0}', space=vmem, size = 0x800, scoped, tag = 'input window, operand 9, single buffered']
    #allocation14 [shape = 'u8[1536]{0}', space=vmem, size = 0x800, scoped, tag = 'input window, operand 10, single buffered']
    #allocation15 [shape = 's32[1]{0}', space=sflag, size = 0x4, scoped, tag = 'scoped memory for gru_forward.1']
    %16 = vsyncpa [#allocation4], 0
    %17 = vsyncpa [#allocation6], 0
    %18 = vsyncpa [#allocation9], 0
    %19 = vsyncpa [#allocation12], 0
    %20 = vsyncpa [#allocation15], 0
    // Predicated region
    $region2: #{gru_forward.1} parent=1 // pred_check
      _
    $region3: #{gru_forward.1} parent=1 // pred_check_branch
      %22 = sbr.rel (0) target = $region5
    $region4: #{gru_forward.1} parent=1 // pred_region
      _
    $region5: #{gru_forward.1} parent=1 // pred_fallthru
      _
    // Predicated region
    $region6: #{gru_forward.1} parent=1 // pred_check
      _
    $region7: #{gru_forward.1} parent=1 // pred_check_branch
      %24 = sbr.rel (0) target = $region9
    $region8: #{gru_forward.1} parent=1 // pred_region
      _
    $region9: #{gru_forward.1} parent=1 // pred_fallthru
      _
    // Predicated region
    $region10: #{gru_forward.1} parent=1 // pred_check
      _
    $region11: #{gru_forward.1} parent=1 // pred_check_branch
      %26 = sbr.rel (0) target = $region13
    $region12: #{gru_forward.1} parent=1 // pred_region
      _
    $region13: #{gru_forward.1} parent=1 // pred_fallthru
      _
    // Predicated region
    $region14: #{gru_forward.1} parent=1 // pred_check
      _
    $region15: #{gru_forward.1} parent=1 // pred_check_branch
      %28 = sbr.rel (0) target = $region17
    $region16: #{gru_forward.1} parent=1 // pred_region
      %s30 = ssub.s32 49152, 49152
      %31 = vsyncadd [#allocation4], %s30
      %s32 = sshll.u32 [#allocation3], 4
      %s33 = int_to_ptr.vmem [resolvable:$true] %s32
      %38 = dma.hbm_to_vmem [thread:$0]  %s3, 49152, %s33, [#allocation4], 384, 384, 24
    $region17: #{gru_forward.1} parent=1 // pred_fallthru
      _
    // Predicated region
    $region18: #{gru_forward.1} parent=1 // pred_check
      _
    $region19: #{gru_forward.1} parent=1 // pred_check_branch
      %40 = sbr.rel (0) target = $region21
    $region20: #{gru_forward.1} parent=1 // pred_region
      %s42 = ssub.s32 6144, 6144
      %43 = vsyncadd [#allocation6], %s42
      %s44 = sshll.u32 [#allocation5], 4
      %s45 = int_to_ptr.vmem [resolvable:$true] %s44
      %50 = dma.hbm_to_vmem [thread:$0]  %s4, 6144, %s45, [#allocation6], 384, 384, 24
    $region21: #{gru_forward.1} parent=1 // pred_fallthru
      _
    // Predicated region
    $region22: #{gru_forward.1} parent=1 // pred_check
      _
    $region23: #{gru_forward.1} parent=1 // pred_check_branch
      %52 = sbr.rel (0) target = $region25
    $region24: #{gru_forward.1} parent=1 // pred_region
      %s54 = ssub.s32 48, 48
      %55 = vsyncadd [#allocation6], %s54
      %s57 = sshll.u32 [#allocation7], 4
      %s58 = int_to_ptr.vmem [resolvable:$true] %s57
      %60 = dma.hbm_to_vmem [thread:$0]  %s5, 48, %s58, [#allocation6]
    $region25: #{gru_forward.1} parent=1 // pred_fallthru
      _
    // Predicated region
    $region26: #{gru_forward.1} parent=1 // pred_check
      _
    $region27: #{gru_forward.1} parent=1 // pred_check_branch
      %62 = sbr.rel (0) target = $region29
    $region28: #{gru_forward.1} parent=1 // pred_region
      %s64 = ssub.s32 48, 48
      %65 = vsyncadd [#allocation9], %s64
      %s67 = sshll.u32 [#allocation8], 4
      %s68 = int_to_ptr.vmem [resolvable:$true] %s67
      %70 = dma.hbm_to_vmem [thread:$0]  %s6, 48, %s68, [#allocation9]
    $region29: #{gru_forward.1} parent=1 // pred_fallthru
      _
    // Predicated region
    $region30: #{gru_forward.1} parent=1 // pred_check
      _
    $region31: #{gru_forward.1} parent=1 // pred_check_branch
      %72 = sbr.rel (0) target = $region33
    $region32: #{gru_forward.1} parent=1 // pred_region
      %s74 = ssub.s32 6144, 6144
      %75 = vsyncadd [#allocation9], %s74
      %s76 = sshll.u32 [#allocation10], 4
      %s77 = int_to_ptr.vmem [resolvable:$true] %s76
      %82 = dma.hbm_to_vmem [thread:$0]  %s7, 6144, %s77, [#allocation9], 384, 384, 24
    $region33: #{gru_forward.1} parent=1 // pred_fallthru
      _
    // Predicated region
    $region34: #{gru_forward.1} parent=1 // pred_check
      _
    $region35: #{gru_forward.1} parent=1 // pred_check_branch
      %84 = sbr.rel (0) target = $region37
    $region36: #{gru_forward.1} parent=1 // pred_region
      %s86 = ssub.s32 6144, 6144
      %87 = vsyncadd [#allocation12], %s86
      %s88 = sshll.u32 [#allocation11], 4
      %s89 = int_to_ptr.vmem [resolvable:$true] %s88
      %94 = dma.hbm_to_vmem [thread:$0]  %s8, 6144, %s89, [#allocation12], 384, 384, 24
    $region37: #{gru_forward.1} parent=1 // pred_fallthru
      _
    // Predicated region
    $region38: #{gru_forward.1} parent=1 // pred_check
      _
    $region39: #{gru_forward.1} parent=1 // pred_check_branch
      %96 = sbr.rel (0) target = $region41
    $region40: #{gru_forward.1} parent=1 // pred_region
      %s98 = ssub.s32 48, 48
      %99 = vsyncadd [#allocation12], %s98
      %s101 = sshll.u32 [#allocation13], 4
      %s102 = int_to_ptr.vmem [resolvable:$true] %s101
      %104 = dma.hbm_to_vmem [thread:$0]  %s9, 48, %s102, [#allocation12]
    $region41: #{gru_forward.1} parent=1 // pred_fallthru
      _
    // Predicated region
    $region42: #{gru_forward.1} parent=1 // pred_check
      _
    $region43: #{gru_forward.1} parent=1 // pred_check_branch
      %106 = sbr.rel (0) target = $region45
    $region44: #{gru_forward.1} parent=1 // pred_region
      %s108 = ssub.s32 48, 48
      %109 = vsyncadd [#allocation15], %s108
      %s111 = sshll.u32 [#allocation14], 4
      %s112 = int_to_ptr.vmem [resolvable:$true] %s111
      %114 = dma.hbm_to_vmem [thread:$0]  %s10, 48, %s112, [#allocation15]
    $region45: #{gru_forward.1} parent=1 // pred_fallthru
      _
    // Predicated region
    $region46: #{gru_forward.1} parent=1 // pred_check
      _
    $region47: #{gru_forward.1} parent=1 // pred_check_branch
      %116 = sbr.rel (0) target = $region49
    $region48: #{gru_forward.1} parent=1 // pred_region
      %117 = dma.done [#allocation4], 49152
    $region49: #{gru_forward.1} parent=1 // pred_fallthru
      _
    // Predicated region
    $region50: #{gru_forward.1} parent=1 // pred_check
      _
    $region51: #{gru_forward.1} parent=1 // pred_check_branch
      %119 = sbr.rel (0) target = $region53
    $region52: #{gru_forward.1} parent=1 // pred_region
      %120 = dma.done [#allocation6], 6144
    $region53: #{gru_forward.1} parent=1 // pred_fallthru
      _
    // Predicated region
    $region54: #{gru_forward.1} parent=1 // pred_check
      _
    $region55: #{gru_forward.1} parent=1 // pred_check_branch
      %122 = sbr.rel (0) target = $region57
    $region56: #{gru_forward.1} parent=1 // pred_region
      %123 = dma.done [#allocation6], 48
    $region57: #{gru_forward.1} parent=1 // pred_fallthru
      _
    // Predicated region
    $region58: #{gru_forward.1} parent=1 // pred_check
      _
    $region59: #{gru_forward.1} parent=1 // pred_check_branch
      %125 = sbr.rel (0) target = $region61
    $region60: #{gru_forward.1} parent=1 // pred_region
      %126 = dma.done [#allocation9], 48
    $region61: #{gru_forward.1} parent=1 // pred_fallthru
      _
    // Predicated region
    $region62: #{gru_forward.1} parent=1 // pred_check
      _
    $region63: #{gru_forward.1} parent=1 // pred_check_branch
      %128 = sbr.rel (0) target = $region65
    $region64: #{gru_forward.1} parent=1 // pred_region
      %129 = dma.done [#allocation9], 6144
    $region65: #{gru_forward.1} parent=1 // pred_fallthru
      _
    // Predicated region
    $region66: #{gru_forward.1} parent=1 // pred_check
      _
    $region67: #{gru_forward.1} parent=1 // pred_check_branch
      %131 = sbr.rel (0) target = $region69
    $region68: #{gru_forward.1} parent=1 // pred_region
      %132 = dma.done [#allocation12], 6144
    $region69: #{gru_forward.1} parent=1 // pred_fallthru
      _
    // Predicated region
    $region70: #{gru_forward.1} parent=1 // pred_check
      _
    $region71: #{gru_forward.1} parent=1 // pred_check_branch
      %134 = sbr.rel (0) target = $region73
    $region72: #{gru_forward.1} parent=1 // pred_region
      %135 = dma.done [#allocation12], 48
    $region73: #{gru_forward.1} parent=1 // pred_fallthru
      _
    // Predicated region
    $region74: #{gru_forward.1} parent=1 // pred_check
      _
    $region75: #{gru_forward.1} parent=1 // pred_check_branch
      %137 = sbr.rel (0) target = $region77
    $region76: #{gru_forward.1} parent=1 // pred_region
      %138 = dma.done [#allocation15], 48
    $region77: #{gru_forward.1} parent=1 // pred_fallthru
      _
    %v139 = vlaneseq
    %v140 = vand.u32 %v139, 127
    %v141 = vadd.s32 %v140, 128
    %v142 = vadd.s32 %v140, 256
    %vm143 = vcmp.lt.s32.totalorder %v140, 256
    %vm144 = vcmp.lt.s32.totalorder %v141, 256
    %vm145 = vcmp.lt.s32.totalorder %v142, 256
    %v146 = vld [vmem:[#allocation7] sm:$0x7]
    %v147 = vld [vmem:[#allocation8] sm:$0x7]
    %v149 = vlaneseq
    %v150 = vshrl.u32 %v149, 7
    %v151 = vsub.s32 0, %v150
    %v152 = vrot.slane %v147, %v151
    %v153 = vlaneseq
    %v154 = vshrl.u32 %v153, 7
    %v155 = vsub.s32 1, %v154
    %v156 = vrot.slane %v147, %v155
    %v157 = vlaneseq
    %v158 = vshrl.u32 %v157, 7
    %v159 = vsub.s32 2, %v158
    %v160 = vrot.slane %v147, %v159
    %v164 = vsel %vm143, %v152, 0.0
    %v165 = vsel %vm144, %v156, 0.0
    %v166 = vsel %vm145, %v160, 0.0
    %v170 = vcombine.low %v164, %v165
    %v172 = vunpack.c.l.s4 1966171168
    %v173 = vunpack.c.0.s8 %v172
    %v174 = vlaneseq
    %v175 = vshrl.u32 %v174, 7
    %v176 = vsub.s32 %v173, %v175
    %v177 = vrot.slane %v170, %v176
    %v179 = vunpack.c.l.s4 1966171168
    %v180 = vunpack.c.0.s8 %v179
    %v181 = vlaneseq
    %v182 = vshrl.u32 %v181, 7
    %v183 = vsub.s32 %v180, %v182
    %v184 = vrot.slane %v166, %v183
    %v185 = vcombine.low %v177, %v184
    %v187 = vunpack.c.l.s4 1966171168
    %v188 = vunpack.c.0.s8 %v187
    %v189 = vlaneseq
    %v190 = vshrl.u32 %v189, 7
    %v191 = vsub.s32 %v188, %v190
    %v192 = vrot.slane %v185, %v191
    %v194 = vadd.f32 %v146, %v192
    %v195 = vld [vmem:[%s0] sm:$0xff]
    %v196 = vld [vmem:[%s0 + $0x8] sm:$0xff]
    %v197 = vld [vmem:[%s0 + $0x10] sm:$0xff]
    %v198 = vld [vmem:[%s0 + $0x18] sm:$0xff]
    %v199 = vld [vmem:[%s0 + $0x20] sm:$0xff]
    %v200 = vld [vmem:[%s0 + $0x28] sm:$0xff]
    %v201 = vld [vmem:[%s0 + $0x30] sm:$0xff]
    %v202 = vld [vmem:[%s0 + $0x38] sm:$0xff]
    %v203 = vld [vmem:[%s0 + $0x40] sm:$0xff]
    %v204 = vld [vmem:[%s0 + $0x48] sm:$0xff]
    %v205 = vld [vmem:[%s0 + $0x50] sm:$0xff]
    %v206 = vld [vmem:[%s0 + $0x58] sm:$0xff]
    %v207 = vld [vmem:[%s0 + $0x60] sm:$0xff]
    %v208 = vld [vmem:[%s0 + $0x68] sm:$0xff]
    %v209 = vld [vmem:[%s0 + $0x70] sm:$0xff]
    %v210 = vld [vmem:[%s0 + $0x78] sm:$0xff]
    %v211 = vld [vmem:[%s0 + $0x80] sm:$0xff]
    %v212 = vld [vmem:[%s0 + $0x88] sm:$0xff]
    %v213 = vld [vmem:[%s0 + $0x90] sm:$0xff]
    %v214 = vld [vmem:[%s0 + $0x98] sm:$0xff]
    %v215 = vld [vmem:[%s0 + $0xa0] sm:$0xff]
    %v216 = vld [vmem:[%s0 + $0xa8] sm:$0xff]
    %v217 = vld [vmem:[%s0 + $0xb0] sm:$0xff]
    %v218 = vld [vmem:[%s0 + $0xb8] sm:$0xff]
    %v219 = vld [vmem:[%s0 + $0xc0] sm:$0xff]
    %v220 = vld [vmem:[%s0 + $0xc8] sm:$0xff]
    %v221 = vld [vmem:[%s0 + $0xd0] sm:$0xff]
    %v222 = vld [vmem:[%s0 + $0xd8] sm:$0xff]
    %v223 = vld [vmem:[%s0 + $0xe0] sm:$0xff]
    %v224 = vld [vmem:[%s0 + $0xe8] sm:$0xff]
    %v225 = vld [vmem:[%s0 + $0xf0] sm:$0xff]
    %v226 = vld [vmem:[%s0 + $0xf8] sm:$0xff]
    %v227 = vld [vmem:[%s0 + $0x100] sm:$0xff]
    %v228 = vld [vmem:[%s0 + $0x108] sm:$0xff]
    %v229 = vld [vmem:[%s0 + $0x110] sm:$0xff]
    %v230 = vld [vmem:[%s0 + $0x118] sm:$0xff]
    %v231 = vld [vmem:[%s0 + $0x120] sm:$0xff]
    %v232 = vld [vmem:[%s0 + $0x128] sm:$0xff]
    %v233 = vld [vmem:[%s0 + $0x130] sm:$0xff]
    %v234 = vld [vmem:[%s0 + $0x138] sm:$0xff]
    %v235 = vld [vmem:[%s0 + $0x140] sm:$0xff]
    %v236 = vld [vmem:[%s0 + $0x148] sm:$0xff]
    %v237 = vld [vmem:[%s0 + $0x150] sm:$0xff]
    %v238 = vld [vmem:[%s0 + $0x158] sm:$0xff]
    %v239 = vld [vmem:[%s0 + $0x160] sm:$0xff]
    %v240 = vld [vmem:[%s0 + $0x168] sm:$0xff]
    %v241 = vld [vmem:[%s0 + $0x170] sm:$0xff]
    %v242 = vld [vmem:[%s0 + $0x178] sm:$0xff]
    %v243 = vld [vmem:[%s0 + $0x180] sm:$0xff]
    %v244 = vld [vmem:[%s0 + $0x188] sm:$0xff]
    %v245 = vld [vmem:[%s0 + $0x190] sm:$0xff]
    %v246 = vld [vmem:[%s0 + $0x198] sm:$0xff]
    %v247 = vld [vmem:[%s0 + $0x1a0] sm:$0xff]
    %v248 = vld [vmem:[%s0 + $0x1a8] sm:$0xff]
    %v249 = vld [vmem:[%s0 + $0x1b0] sm:$0xff]
    %v250 = vld [vmem:[%s0 + $0x1b8] sm:$0xff]
    %v251 = vld [vmem:[%s0 + $0x1c0] sm:$0xff]
    %v252 = vld [vmem:[%s0 + $0x1c8] sm:$0xff]
    %v253 = vld [vmem:[%s0 + $0x1d0] sm:$0xff]
    %v254 = vld [vmem:[%s0 + $0x1d8] sm:$0xff]
    %v255 = vld [vmem:[%s0 + $0x1e0] sm:$0xff]
    %v256 = vld [vmem:[%s0 + $0x1e8] sm:$0xff]
    %v257 = vld [vmem:[%s0 + $0x1f0] sm:$0xff]
    %v258 = vld [vmem:[%s0 + $0x1f8] sm:$0xff]
    %v259 = vld [vmem:[#allocation3] sm:$0xff]
    %v260 = vld [vmem:[#allocation3 + $0x8] sm:$0xff]
    %v261 = vld [vmem:[#allocation3 + $0x10] sm:$0xff]
    %v262 = vld [vmem:[#allocation3 + $0x18] sm:$0xff]
    %v263 = vld [vmem:[#allocation3 + $0x20] sm:$0xff]
    %v264 = vld [vmem:[#allocation3 + $0x28] sm:$0xff]
    %v265 = vld [vmem:[#allocation3 + $0x30] sm:$0xff]
    %v266 = vld [vmem:[#allocation3 + $0x38] sm:$0xff]
    %v267 = vld [vmem:[#allocation3 + $0x40] sm:$0xff]
    %v268 = vld [vmem:[#allocation3 + $0x48] sm:$0xff]
    %v269 = vld [vmem:[#allocation3 + $0x50] sm:$0xff]
    %v270 = vld [vmem:[#allocation3 + $0x58] sm:$0xff]
    %v271 = vld [vmem:[#allocation3 + $0x60] sm:$0xff]
    %v272 = vld [vmem:[#allocation3 + $0x68] sm:$0xff]
    %v273 = vld [vmem:[#allocation3 + $0x70] sm:$0xff]
    %v274 = vld [vmem:[#allocation3 + $0x78] sm:$0xff]
    %v275 = vld [vmem:[#allocation3 + $0x80] sm:$0xff]
    %v276 = vld [vmem:[#allocation3 + $0x88] sm:$0xff]
    %v277 = vld [vmem:[#allocation3 + $0x90] sm:$0xff]
    %v278 = vld [vmem:[#allocation3 + $0x98] sm:$0xff]
    %v279 = vld [vmem:[#allocation3 + $0xa0] sm:$0xff]
    %v280 = vld [vmem:[#allocation3 + $0xa8] sm:$0xff]
    %v281 = vld [vmem:[#allocation3 + $0xb0] sm:$0xff]
    %v282 = vld [vmem:[#allocation3 + $0xb8] sm:$0xff]
    %v283 = vld [vmem:[#allocation3 + $0xc0] sm:$0xff]
    %v284 = vld [vmem:[#allocation3 + $0xc8] sm:$0xff]
    %v285 = vld [vmem:[#allocation3 + $0xd0] sm:$0xff]
    %v286 = vld [vmem:[#allocation3 + $0xd8] sm:$0xff]
    %v287 = vld [vmem:[#allocation3 + $0xe0] sm:$0xff]
    %v288 = vld [vmem:[#allocation3 + $0xe8] sm:$0xff]
    %v289 = vld [vmem:[#allocation3 + $0xf0] sm:$0xff]
    %v290 = vld [vmem:[#allocation3 + $0xf8] sm:$0xff]
    %v291 = vld [vmem:[#allocation3 + $0x100] sm:$0xff]
    %v292 = vld [vmem:[#allocation3 + $0x108] sm:$0xff]
    %v293 = vld [vmem:[#allocation3 + $0x110] sm:$0xff]
    %v294 = vld [vmem:[#allocation3 + $0x118] sm:$0xff]
    %v295 = vld [vmem:[#allocation3 + $0x120] sm:$0xff]
    %v296 = vld [vmem:[#allocation3 + $0x128] sm:$0xff]
    %v297 = vld [vmem:[#allocation3 + $0x130] sm:$0xff]
    %v298 = vld [vmem:[#allocation3 + $0x138] sm:$0xff]
    %v299 = vld [vmem:[#allocation3 + $0x140] sm:$0xff]
    %v300 = vld [vmem:[#allocation3 + $0x148] sm:$0xff]
    %v301 = vld [vmem:[#allocation3 + $0x150] sm:$0xff]
    %v302 = vld [vmem:[#allocation3 + $0x158] sm:$0xff]
    %v303 = vld [vmem:[#allocation3 + $0x160] sm:$0xff]
    %v304 = vld [vmem:[#allocation3 + $0x168] sm:$0xff]
    %v305 = vld [vmem:[#allocation3 + $0x170] sm:$0xff]
    %v306 = vld [vmem:[#allocation3 + $0x178] sm:$0xff]
    %v307 = vld [vmem:[#allocation3 + $0x180] sm:$0xff]
    %v308 = vld [vmem:[#allocation3 + $0x188] sm:$0xff]
    %v309 = vld [vmem:[#allocation3 + $0x190] sm:$0xff]
    %v310 = vld [vmem:[#allocation3 + $0x198] sm:$0xff]
    %v311 = vld [vmem:[#allocation3 + $0x1a0] sm:$0xff]
    %v312 = vld [vmem:[#allocation3 + $0x1a8] sm:$0xff]
    %v313 = vld [vmem:[#allocation3 + $0x1b0] sm:$0xff]
    %v314 = vld [vmem:[#allocation3 + $0x1b8] sm:$0xff]
    %v315 = vld [vmem:[#allocation3 + $0x1c0] sm:$0xff]
    %v316 = vld [vmem:[#allocation3 + $0x1c8] sm:$0xff]
    %v317 = vld [vmem:[#allocation3 + $0x1d0] sm:$0xff]
    %v318 = vld [vmem:[#allocation3 + $0x1d8] sm:$0xff]
    %v319 = vld [vmem:[#allocation3 + $0x1e0] sm:$0xff]
    %v320 = vld [vmem:[#allocation3 + $0x1e8] sm:$0xff]
    %v321 = vld [vmem:[#allocation3 + $0x1f0] sm:$0xff]
    %v322 = vld [vmem:[#allocation3 + $0x1f8] sm:$0xff]
    %v323 = vld [vmem:[#allocation3 + $0x200] sm:$0xff]
    %v324 = vld [vmem:[#allocation3 + $0x208] sm:$0xff]
    %v325 = vld [vmem:[#allocation3 + $0x210] sm:$0xff]
    %v326 = vld [vmem:[#allocation3 + $0x218] sm:$0xff]
    %v327 = vld [vmem:[#allocation3 + $0x220] sm:$0xff]
    %v328 = vld [vmem:[#allocation3 + $0x228] sm:$0xff]
    %v329 = vld [vmem:[#allocation3 + $0x230] sm:$0xff]
    %v330 = vld [vmem:[#allocation3 + $0x238] sm:$0xff]
    %v331 = vld [vmem:[#allocation3 + $0x240] sm:$0xff]
    %v332 = vld [vmem:[#allocation3 + $0x248] sm:$0xff]
    %v333 = vld [vmem:[#allocation3 + $0x250] sm:$0xff]
    %v334 = vld [vmem:[#allocation3 + $0x258] sm:$0xff]
    %v335 = vld [vmem:[#allocation3 + $0x260] sm:$0xff]
    %v336 = vld [vmem:[#allocation3 + $0x268] sm:$0xff]
    %v337 = vld [vmem:[#allocation3 + $0x270] sm:$0xff]
    %v338 = vld [vmem:[#allocation3 + $0x278] sm:$0xff]
    %v339 = vld [vmem:[#allocation3 + $0x280] sm:$0xff]
    %v340 = vld [vmem:[#allocation3 + $0x288] sm:$0xff]
    %v341 = vld [vmem:[#allocation3 + $0x290] sm:$0xff]
    %v342 = vld [vmem:[#allocation3 + $0x298] sm:$0xff]
    %v343 = vld [vmem:[#allocation3 + $0x2a0] sm:$0xff]
    %v344 = vld [vmem:[#allocation3 + $0x2a8] sm:$0xff]
    %v345 = vld [vmem:[#allocation3 + $0x2b0] sm:$0xff]
    %v346 = vld [vmem:[#allocation3 + $0x2b8] sm:$0xff]
    %v347 = vld [vmem:[#allocation3 + $0x2c0] sm:$0xff]
    %v348 = vld [vmem:[#allocation3 + $0x2c8] sm:$0xff]
    %v349 = vld [vmem:[#allocation3 + $0x2d0] sm:$0xff]
    %v350 = vld [vmem:[#allocation3 + $0x2d8] sm:$0xff]
    %v351 = vld [vmem:[#allocation3 + $0x2e0] sm:$0xff]
    %v352 = vld [vmem:[#allocation3 + $0x2e8] sm:$0xff]
    %v353 = vld [vmem:[#allocation3 + $0x2f0] sm:$0xff]
    %v354 = vld [vmem:[#allocation3 + $0x2f8] sm:$0xff]
    %v355 = vld [vmem:[#allocation3 + $0x300] sm:$0xff]
    %v356 = vld [vmem:[#allocation3 + $0x308] sm:$0xff]
    %v357 = vld [vmem:[#allocation3 + $0x310] sm:$0xff]
    %v358 = vld [vmem:[#allocation3 + $0x318] sm:$0xff]
    %v359 = vld [vmem:[#allocation3 + $0x320] sm:$0xff]
    %v360 = vld [vmem:[#allocation3 + $0x328] sm:$0xff]
    %v361 = vld [vmem:[#allocation3 + $0x330] sm:$0xff]
    %v362 = vld [vmem:[#allocation3 + $0x338] sm:$0xff]
    %v363 = vld [vmem:[#allocation3 + $0x340] sm:$0xff]
    %v364 = vld [vmem:[#allocation3 + $0x348] sm:$0xff]
    %v365 = vld [vmem:[#allocation3 + $0x350] sm:$0xff]
    %v366 = vld [vmem:[#allocation3 + $0x358] sm:$0xff]
    %v367 = vld [vmem:[#allocation3 + $0x360] sm:$0xff]
    %v368 = vld [vmem:[#allocation3 + $0x368] sm:$0xff]
    %v369 = vld [vmem:[#allocation3 + $0x370] sm:$0xff]
    %v370 = vld [vmem:[#allocation3 + $0x378] sm:$0xff]
    %v371 = vld [vmem:[#allocation3 + $0x380] sm:$0xff]
    %v372 = vld [vmem:[#allocation3 + $0x388] sm:$0xff]
    %v373 = vld [vmem:[#allocation3 + $0x390] sm:$0xff]
    %v374 = vld [vmem:[#allocation3 + $0x398] sm:$0xff]
    %v375 = vld [vmem:[#allocation3 + $0x3a0] sm:$0xff]
    %v376 = vld [vmem:[#allocation3 + $0x3a8] sm:$0xff]
    %v377 = vld [vmem:[#allocation3 + $0x3b0] sm:$0xff]
    %v378 = vld [vmem:[#allocation3 + $0x3b8] sm:$0xff]
    %v379 = vld [vmem:[#allocation3 + $0x3c0] sm:$0xff]
    %v380 = vld [vmem:[#allocation3 + $0x3c8] sm:$0xff]
    %v381 = vld [vmem:[#allocation3 + $0x3d0] sm:$0xff]
    %v382 = vld [vmem:[#allocation3 + $0x3d8] sm:$0xff]
    %v383 = vld [vmem:[#allocation3 + $0x3e0] sm:$0xff]
    %v384 = vld [vmem:[#allocation3 + $0x3e8] sm:$0xff]
    %v385 = vld [vmem:[#allocation3 + $0x3f0] sm:$0xff]
    %v386 = vld [vmem:[#allocation3 + $0x3f8] sm:$0xff]
    %v387 = vld [vmem:[#allocation3 + $0x400] sm:$0xff]
    %v388 = vld [vmem:[#allocation3 + $0x408] sm:$0xff]
    %v389 = vld [vmem:[#allocation3 + $0x410] sm:$0xff]
    %v390 = vld [vmem:[#allocation3 + $0x418] sm:$0xff]
    %v391 = vld [vmem:[#allocation3 + $0x420] sm:$0xff]
    %v392 = vld [vmem:[#allocation3 + $0x428] sm:$0xff]
    %v393 = vld [vmem:[#allocation3 + $0x430] sm:$0xff]
    %v394 = vld [vmem:[#allocation3 + $0x438] sm:$0xff]
    %v395 = vld [vmem:[#allocation3 + $0x440] sm:$0xff]
    %v396 = vld [vmem:[#allocation3 + $0x448] sm:$0xff]
    %v397 = vld [vmem:[#allocation3 + $0x450] sm:$0xff]
    %v398 = vld [vmem:[#allocation3 + $0x458] sm:$0xff]
    %v399 = vld [vmem:[#allocation3 + $0x460] sm:$0xff]
    %v400 = vld [vmem:[#allocation3 + $0x468] sm:$0xff]
    %v401 = vld [vmem:[#allocation3 + $0x470] sm:$0xff]
    %v402 = vld [vmem:[#allocation3 + $0x478] sm:$0xff]
    %v403 = vld [vmem:[#allocation3 + $0x480] sm:$0xff]
    %v404 = vld [vmem:[#allocation3 + $0x488] sm:$0xff]
    %v405 = vld [vmem:[#allocation3 + $0x490] sm:$0xff]
    %v406 = vld [vmem:[#allocation3 + $0x498] sm:$0xff]
    %v407 = vld [vmem:[#allocation3 + $0x4a0] sm:$0xff]
    %v408 = vld [vmem:[#allocation3 + $0x4a8] sm:$0xff]
    %v409 = vld [vmem:[#allocation3 + $0x4b0] sm:$0xff]
    %v410 = vld [vmem:[#allocation3 + $0x4b8] sm:$0xff]
    %v411 = vld [vmem:[#allocation3 + $0x4c0] sm:$0xff]
    %v412 = vld [vmem:[#allocation3 + $0x4c8] sm:$0xff]
    %v413 = vld [vmem:[#allocation3 + $0x4d0] sm:$0xff]
    %v414 = vld [vmem:[#allocation3 + $0x4d8] sm:$0xff]
    %v415 = vld [vmem:[#allocation3 + $0x4e0] sm:$0xff]
    %v416 = vld [vmem:[#allocation3 + $0x4e8] sm:$0xff]
    %v417 = vld [vmem:[#allocation3 + $0x4f0] sm:$0xff]
    %v418 = vld [vmem:[#allocation3 + $0x4f8] sm:$0xff]
    %v419 = vld [vmem:[#allocation3 + $0x500] sm:$0xff]
    %v420 = vld [vmem:[#allocation3 + $0x508] sm:$0xff]
    %v421 = vld [vmem:[#allocation3 + $0x510] sm:$0xff]
    %v422 = vld [vmem:[#allocation3 + $0x518] sm:$0xff]
    %v423 = vld [vmem:[#allocation3 + $0x520] sm:$0xff]
    %v424 = vld [vmem:[#allocation3 + $0x528] sm:$0xff]
    %v425 = vld [vmem:[#allocation3 + $0x530] sm:$0xff]
    %v426 = vld [vmem:[#allocation3 + $0x538] sm:$0xff]
    %v427 = vld [vmem:[#allocation3 + $0x540] sm:$0xff]
    %v428 = vld [vmem:[#allocation3 + $0x548] sm:$0xff]
    %v429 = vld [vmem:[#allocation3 + $0x550] sm:$0xff]
    %v430 = vld [vmem:[#allocation3 + $0x558] sm:$0xff]
    %v431 = vld [vmem:[#allocation3 + $0x560] sm:$0xff]
    %v432 = vld [vmem:[#allocation3 + $0x568] sm:$0xff]
    %v433 = vld [vmem:[#allocation3 + $0x570] sm:$0xff]
    %v434 = vld [vmem:[#allocation3 + $0x578] sm:$0xff]
    %v435 = vld [vmem:[#allocation3 + $0x580] sm:$0xff]
    %v436 = vld [vmem:[#allocation3 + $0x588] sm:$0xff]
    %v437 = vld [vmem:[#allocation3 + $0x590] sm:$0xff]
    %v438 = vld [vmem:[#allocation3 + $0x598] sm:$0xff]
    %v439 = vld [vmem:[#allocation3 + $0x5a0] sm:$0xff]
    %v440 = vld [vmem:[#allocation3 + $0x5a8] sm:$0xff]
    %v441 = vld [vmem:[#allocation3 + $0x5b0] sm:$0xff]
    %v442 = vld [vmem:[#allocation3 + $0x5b8] sm:$0xff]
    %v443 = vld [vmem:[#allocation3 + $0x5c0] sm:$0xff]
    %v444 = vld [vmem:[#allocation3 + $0x5c8] sm:$0xff]
    %v445 = vld [vmem:[#allocation3 + $0x5d0] sm:$0xff]
    %v446 = vld [vmem:[#allocation3 + $0x5d8] sm:$0xff]
    %v447 = vld [vmem:[#allocation3 + $0x5e0] sm:$0xff]
    %v448 = vld [vmem:[#allocation3 + $0x5e8] sm:$0xff]
    %v449 = vld [vmem:[#allocation3 + $0x5f0] sm:$0xff]
    %v450 = vld [vmem:[#allocation3 + $0x5f8] sm:$0xff]
    %v451 = vld [vmem:[#allocation3 + $0x600] sm:$0xff]
    %v452 = vld [vmem:[#allocation3 + $0x608] sm:$0xff]
    %v453 = vld [vmem:[#allocation3 + $0x610] sm:$0xff]
    %v454 = vld [vmem:[#allocation3 + $0x618] sm:$0xff]
    %v455 = vld [vmem:[#allocation3 + $0x620] sm:$0xff]
    %v456 = vld [vmem:[#allocation3 + $0x628] sm:$0xff]
    %v457 = vld [vmem:[#allocation3 + $0x630] sm:$0xff]
    %v458 = vld [vmem:[#allocation3 + $0x638] sm:$0xff]
    %v459 = vld [vmem:[#allocation3 + $0x640] sm:$0xff]
    %v460 = vld [vmem:[#allocation3 + $0x648] sm:$0xff]
    %v461 = vld [vmem:[#allocation3 + $0x650] sm:$0xff]
    %v462 = vld [vmem:[#allocation3 + $0x658] sm:$0xff]
    %v463 = vld [vmem:[#allocation3 + $0x660] sm:$0xff]
    %v464 = vld [vmem:[#allocation3 + $0x668] sm:$0xff]
    %v465 = vld [vmem:[#allocation3 + $0x670] sm:$0xff]
    %v466 = vld [vmem:[#allocation3 + $0x678] sm:$0xff]
    %v467 = vld [vmem:[#allocation3 + $0x680] sm:$0xff]
    %v468 = vld [vmem:[#allocation3 + $0x688] sm:$0xff]
    %v469 = vld [vmem:[#allocation3 + $0x690] sm:$0xff]
    %v470 = vld [vmem:[#allocation3 + $0x698] sm:$0xff]
    %v471 = vld [vmem:[#allocation3 + $0x6a0] sm:$0xff]
    %v472 = vld [vmem:[#allocation3 + $0x6a8] sm:$0xff]
    %v473 = vld [vmem:[#allocation3 + $0x6b0] sm:$0xff]
    %v474 = vld [vmem:[#allocation3 + $0x6b8] sm:$0xff]
    %v475 = vld [vmem:[#allocation3 + $0x6c0] sm:$0xff]
    %v476 = vld [vmem:[#allocation3 + $0x6c8] sm:$0xff]
    %v477 = vld [vmem:[#allocation3 + $0x6d0] sm:$0xff]
    %v478 = vld [vmem:[#allocation3 + $0x6d8] sm:$0xff]
    %v479 = vld [vmem:[#allocation3 + $0x6e0] sm:$0xff]
    %v480 = vld [vmem:[#allocation3 + $0x6e8] sm:$0xff]
    %v481 = vld [vmem:[#allocation3 + $0x6f0] sm:$0xff]
    %v482 = vld [vmem:[#allocation3 + $0x6f8] sm:$0xff]
    %v483 = vld [vmem:[#allocation3 + $0x700] sm:$0xff]
    %v484 = vld [vmem:[#allocation3 + $0x708] sm:$0xff]
    %v485 = vld [vmem:[#allocation3 + $0x710] sm:$0xff]
    %v486 = vld [vmem:[#allocation3 + $0x718] sm:$0xff]
    %v487 = vld [vmem:[#allocation3 + $0x720] sm:$0xff]
    %v488 = vld [vmem:[#allocation3 + $0x728] sm:$0xff]
    %v489 = vld [vmem:[#allocation3 + $0x730] sm:$0xff]
    %v490 = vld [vmem:[#allocation3 + $0x738] sm:$0xff]
    %v491 = vld [vmem:[#allocation3 + $0x740] sm:$0xff]
    %v492 = vld [vmem:[#allocation3 + $0x748] sm:$0xff]
    %v493 = vld [vmem:[#allocation3 + $0x750] sm:$0xff]
    %v494 = vld [vmem:[#allocation3 + $0x758] sm:$0xff]
    %v495 = vld [vmem:[#allocation3 + $0x760] sm:$0xff]
    %v496 = vld [vmem:[#allocation3 + $0x768] sm:$0xff]
    %v497 = vld [vmem:[#allocation3 + $0x770] sm:$0xff]
    %v498 = vld [vmem:[#allocation3 + $0x778] sm:$0xff]
    %v499 = vld [vmem:[#allocation3 + $0x780] sm:$0xff]
    %v500 = vld [vmem:[#allocation3 + $0x788] sm:$0xff]
    %v501 = vld [vmem:[#allocation3 + $0x790] sm:$0xff]
    %v502 = vld [vmem:[#allocation3 + $0x798] sm:$0xff]
    %v503 = vld [vmem:[#allocation3 + $0x7a0] sm:$0xff]
    %v504 = vld [vmem:[#allocation3 + $0x7a8] sm:$0xff]
    %v505 = vld [vmem:[#allocation3 + $0x7b0] sm:$0xff]
    %v506 = vld [vmem:[#allocation3 + $0x7b8] sm:$0xff]
    %v507 = vld [vmem:[#allocation3 + $0x7c0] sm:$0xff]
    %v508 = vld [vmem:[#allocation3 + $0x7c8] sm:$0xff]
    %v509 = vld [vmem:[#allocation3 + $0x7d0] sm:$0xff]
    %v510 = vld [vmem:[#allocation3 + $0x7d8] sm:$0xff]
    %v511 = vld [vmem:[#allocation3 + $0x7e0] sm:$0xff]
    %v512 = vld [vmem:[#allocation3 + $0x7e8] sm:$0xff]
    %v513 = vld [vmem:[#allocation3 + $0x7f0] sm:$0xff]
    %v514 = vld [vmem:[#allocation3 + $0x7f8] sm:$0xff]
    %v515 = vld [vmem:[#allocation3 + $0x800] sm:$0xff]
    %v516 = vld [vmem:[#allocation3 + $0x808] sm:$0xff]
    %v517 = vld [vmem:[#allocation3 + $0x810] sm:$0xff]
    %v518 = vld [vmem:[#allocation3 + $0x818] sm:$0xff]
    %v519 = vld [vmem:[#allocation3 + $0x820] sm:$0xff]
    %v520 = vld [vmem:[#allocation3 + $0x828] sm:$0xff]
    %v521 = vld [vmem:[#allocation3 + $0x830] sm:$0xff]
    %v522 = vld [vmem:[#allocation3 + $0x838] sm:$0xff]
    %v523 = vld [vmem:[#allocation3 + $0x840] sm:$0xff]
    %v524 = vld [vmem:[#allocation3 + $0x848] sm:$0xff]
    %v525 = vld [vmem:[#allocation3 + $0x850] sm:$0xff]
    %v526 = vld [vmem:[#allocation3 + $0x858] sm:$0xff]
    %v527 = vld [vmem:[#allocation3 + $0x860] sm:$0xff]
    %v528 = vld [vmem:[#allocation3 + $0x868] sm:$0xff]
    %v529 = vld [vmem:[#allocation3 + $0x870] sm:$0xff]
    %v530 = vld [vmem:[#allocation3 + $0x878] sm:$0xff]
    %v531 = vld [vmem:[#allocation3 + $0x880] sm:$0xff]
    %v532 = vld [vmem:[#allocation3 + $0x888] sm:$0xff]
    %v533 = vld [vmem:[#allocation3 + $0x890] sm:$0xff]
    %v534 = vld [vmem:[#allocation3 + $0x898] sm:$0xff]
    %v535 = vld [vmem:[#allocation3 + $0x8a0] sm:$0xff]
    %v536 = vld [vmem:[#allocation3 + $0x8a8] sm:$0xff]
    %v537 = vld [vmem:[#allocation3 + $0x8b0] sm:$0xff]
    %v538 = vld [vmem:[#allocation3 + $0x8b8] sm:$0xff]
    %v539 = vld [vmem:[#allocation3 + $0x8c0] sm:$0xff]
    %v540 = vld [vmem:[#allocation3 + $0x8c8] sm:$0xff]
    %v541 = vld [vmem:[#allocation3 + $0x8d0] sm:$0xff]
    %v542 = vld [vmem:[#allocation3 + $0x8d8] sm:$0xff]
    %v543 = vld [vmem:[#allocation3 + $0x8e0] sm:$0xff]
    %v544 = vld [vmem:[#allocation3 + $0x8e8] sm:$0xff]
    %v545 = vld [vmem:[#allocation3 + $0x8f0] sm:$0xff]
    %v546 = vld [vmem:[#allocation3 + $0x8f8] sm:$0xff]
    %v547 = vld [vmem:[#allocation3 + $0x900] sm:$0xff]
    %v548 = vld [vmem:[#allocation3 + $0x908] sm:$0xff]
    %v549 = vld [vmem:[#allocation3 + $0x910] sm:$0xff]
    %v550 = vld [vmem:[#allocation3 + $0x918] sm:$0xff]
    %v551 = vld [vmem:[#allocation3 + $0x920] sm:$0xff]
    %v552 = vld [vmem:[#allocation3 + $0x928] sm:$0xff]
    %v553 = vld [vmem:[#allocation3 + $0x930] sm:$0xff]
    %v554 = vld [vmem:[#allocation3 + $0x938] sm:$0xff]
    %v555 = vld [vmem:[#allocation3 + $0x940] sm:$0xff]
    %v556 = vld [vmem:[#allocation3 + $0x948] sm:$0xff]
    %v557 = vld [vmem:[#allocation3 + $0x950] sm:$0xff]
    %v558 = vld [vmem:[#allocation3 + $0x958] sm:$0xff]
    %v559 = vld [vmem:[#allocation3 + $0x960] sm:$0xff]
    %v560 = vld [vmem:[#allocation3 + $0x968] sm:$0xff]
    %v561 = vld [vmem:[#allocation3 + $0x970] sm:$0xff]
    %v562 = vld [vmem:[#allocation3 + $0x978] sm:$0xff]
    %v563 = vld [vmem:[#allocation3 + $0x980] sm:$0xff]
    %v564 = vld [vmem:[#allocation3 + $0x988] sm:$0xff]
    %v565 = vld [vmem:[#allocation3 + $0x990] sm:$0xff]
    %v566 = vld [vmem:[#allocation3 + $0x998] sm:$0xff]
    %v567 = vld [vmem:[#allocation3 + $0x9a0] sm:$0xff]
    %v568 = vld [vmem:[#allocation3 + $0x9a8] sm:$0xff]
    %v569 = vld [vmem:[#allocation3 + $0x9b0] sm:$0xff]
    %v570 = vld [vmem:[#allocation3 + $0x9b8] sm:$0xff]
    %v571 = vld [vmem:[#allocation3 + $0x9c0] sm:$0xff]
    %v572 = vld [vmem:[#allocation3 + $0x9c8] sm:$0xff]
    %v573 = vld [vmem:[#allocation3 + $0x9d0] sm:$0xff]
    %v574 = vld [vmem:[#allocation3 + $0x9d8] sm:$0xff]
    %v575 = vld [vmem:[#allocation3 + $0x9e0] sm:$0xff]
    %v576 = vld [vmem:[#allocation3 + $0x9e8] sm:$0xff]
    %v577 = vld [vmem:[#allocation3 + $0x9f0] sm:$0xff]
    %v578 = vld [vmem:[#allocation3 + $0x9f8] sm:$0xff]
    %v579 = vld [vmem:[#allocation3 + $0xa00] sm:$0xff]
    %v580 = vld [vmem:[#allocation3 + $0xa08] sm:$0xff]
    %v581 = vld [vmem:[#allocation3 + $0xa10] sm:$0xff]
    %v582 = vld [vmem:[#allocation3 + $0xa18] sm:$0xff]
    %v583 = vld [vmem:[#allocation3 + $0xa20] sm:$0xff]
    %v584 = vld [vmem:[#allocation3 + $0xa28] sm:$0xff]
    %v585 = vld [vmem:[#allocation3 + $0xa30] sm:$0xff]
    %v586 = vld [vmem:[#allocation3 + $0xa38] sm:$0xff]
    %v587 = vld [vmem:[#allocation3 + $0xa40] sm:$0xff]
    %v588 = vld [vmem:[#allocation3 + $0xa48] sm:$0xff]
    %v589 = vld [vmem:[#allocation3 + $0xa50] sm:$0xff]
    %v590 = vld [vmem:[#allocation3 + $0xa58] sm:$0xff]
    %v591 = vld [vmem:[#allocation3 + $0xa60] sm:$0xff]
    %v592 = vld [vmem:[#allocation3 + $0xa68] sm:$0xff]
    %v593 = vld [vmem:[#allocation3 + $0xa70] sm:$0xff]
    %v594 = vld [vmem:[#allocation3 + $0xa78] sm:$0xff]
    %v595 = vld [vmem:[#allocation3 + $0xa80] sm:$0xff]
    %v596 = vld [vmem:[#allocation3 + $0xa88] sm:$0xff]
    %v597 = vld [vmem:[#allocation3 + $0xa90] sm:$0xff]
    %v598 = vld [vmem:[#allocation3 + $0xa98] sm:$0xff]
    %v599 = vld [vmem:[#allocation3 + $0xaa0] sm:$0xff]
    %v600 = vld [vmem:[#allocation3 + $0xaa8] sm:$0xff]
    %v601 = vld [vmem:[#allocation3 + $0xab0] sm:$0xff]
    %v602 = vld [vmem:[#allocation3 + $0xab8] sm:$0xff]
    %v603 = vld [vmem:[#allocation3 + $0xac0] sm:$0xff]
    %v604 = vld [vmem:[#allocation3 + $0xac8] sm:$0xff]
    %v605 = vld [vmem:[#allocation3 + $0xad0] sm:$0xff]
    %v606 = vld [vmem:[#allocation3 + $0xad8] sm:$0xff]
    %v607 = vld [vmem:[#allocation3 + $0xae0] sm:$0xff]
    %v608 = vld [vmem:[#allocation3 + $0xae8] sm:$0xff]
    %v609 = vld [vmem:[#allocation3 + $0xaf0] sm:$0xff]
    %v610 = vld [vmem:[#allocation3 + $0xaf8] sm:$0xff]
    %v611 = vld [vmem:[#allocation3 + $0xb00] sm:$0xff]
    %v612 = vld [vmem:[#allocation3 + $0xb08] sm:$0xff]
    %v613 = vld [vmem:[#allocation3 + $0xb10] sm:$0xff]
    %v614 = vld [vmem:[#allocation3 + $0xb18] sm:$0xff]
    %v615 = vld [vmem:[#allocation3 + $0xb20] sm:$0xff]
    %v616 = vld [vmem:[#allocation3 + $0xb28] sm:$0xff]
    %v617 = vld [vmem:[#allocation3 + $0xb30] sm:$0xff]
    %v618 = vld [vmem:[#allocation3 + $0xb38] sm:$0xff]
    %v619 = vld [vmem:[#allocation3 + $0xb40] sm:$0xff]
    %v620 = vld [vmem:[#allocation3 + $0xb48] sm:$0xff]
    %v621 = vld [vmem:[#allocation3 + $0xb50] sm:$0xff]
    %v622 = vld [vmem:[#allocation3 + $0xb58] sm:$0xff]
    %v623 = vld [vmem:[#allocation3 + $0xb60] sm:$0xff]
    %v624 = vld [vmem:[#allocation3 + $0xb68] sm:$0xff]
    %v625 = vld [vmem:[#allocation3 + $0xb70] sm:$0xff]
    %v626 = vld [vmem:[#allocation3 + $0xb78] sm:$0xff]
    %v627 = vld [vmem:[#allocation3 + $0xb80] sm:$0xff]
    %v628 = vld [vmem:[#allocation3 + $0xb88] sm:$0xff]
    %v629 = vld [vmem:[#allocation3 + $0xb90] sm:$0xff]
    %v630 = vld [vmem:[#allocation3 + $0xb98] sm:$0xff]
    %v631 = vld [vmem:[#allocation3 + $0xba0] sm:$0xff]
    %v632 = vld [vmem:[#allocation3 + $0xba8] sm:$0xff]
    %v633 = vld [vmem:[#allocation3 + $0xbb0] sm:$0xff]
    %v634 = vld [vmem:[#allocation3 + $0xbb8] sm:$0xff]
    %v635 = vld [vmem:[#allocation3 + $0xbc0] sm:$0xff]
    %v636 = vld [vmem:[#allocation3 + $0xbc8] sm:$0xff]
    %v637 = vld [vmem:[#allocation3 + $0xbd0] sm:$0xff]
    %v638 = vld [vmem:[#allocation3 + $0xbd8] sm:$0xff]
    %v639 = vld [vmem:[#allocation3 + $0xbe0] sm:$0xff]
    %v640 = vld [vmem:[#allocation3 + $0xbe8] sm:$0xff]
    %v641 = vld [vmem:[#allocation3 + $0xbf0] sm:$0xff]
    %v642 = vld [vmem:[#allocation3 + $0xbf8] sm:$0xff]
    %v644 = vlaneseq
    %v645 = vshrl.u32 %v644, 7
    %v646 = vsub.s32 0, %v645
    %v647 = vrot.slane %v194, %v646
    %v648 = vlaneseq
    %v649 = vshrl.u32 %v648, 7
    %v650 = vsub.s32 1, %v649
    %v651 = vrot.slane %v194, %v650
    %v652 = vlaneseq
    %v653 = vshrl.u32 %v652, 7
    %v654 = vsub.s32 2, %v653
    %v655 = vrot.slane %v194, %v654
    %659 = vmatprep.subr.mxu0 %v260
    %660 = vmatpush1.msra.mxu0 %v259
    %661 = vmatprep.subr.mxu0 %v263
    %662 = vmatpush1.msra.mxu0 %v262
    %663 = vmatprep.subr.mxu0 %v266
    %664 = vmatpush1.msra.mxu0 %v265
    %665 = vmatprep.subr.mxu0 %v269
    %666 = vmatpush1.msra.mxu0 %v268
    %667 = vmatprep.subr.mxu0 %v272
    %668 = vmatpush1.msra.mxu0 %v271
    %669 = vmatprep.subr.mxu0 %v275
    %670 = vmatpush1.msra.mxu0 %v274
    %671 = vmatprep.subr.mxu0 %v278
    %672 = vmatpush1.msra.mxu0 %v277
    %673 = vmatprep.subr.mxu0 %v281
    %674 = vmatpush1.msra.mxu0 %v280
    %675 = vmatprep.subr.mxu0 %v284
    %676 = vmatpush1.msra.mxu0 %v283
    %677 = vmatprep.subr.mxu0 %v287
    %678 = vmatpush1.msra.mxu0 %v286
    %679 = vmatprep.subr.mxu0 %v290
    %680 = vmatpush1.msra.mxu0 %v289
    %681 = vmatprep.subr.mxu0 %v293
    %682 = vmatpush1.msra.mxu0 %v292
    %683 = vmatprep.subr.mxu0 %v296
    %684 = vmatpush1.msra.mxu0 %v295
    %685 = vmatprep.subr.mxu0 %v299
    %686 = vmatpush1.msra.mxu0 %v298
    %687 = vmatprep.subr.mxu0 %v302
    %688 = vmatpush1.msra.mxu0 %v301
    %689 = vmatprep.subr.mxu0 %v305
    %690 = vmatpush1.msra.mxu0 %v304
    %691 = vmatprep.subr.mxu0 %v308
    %692 = vmatpush1.msra.mxu0 %v307
    %693 = vmatprep.subr.mxu0 %v311
    %694 = vmatpush1.msra.mxu0 %v310
    %695 = vmatprep.subr.mxu0 %v314
    %696 = vmatpush1.msra.mxu0 %v313
    %697 = vmatprep.subr.mxu0 %v317
    %698 = vmatpush1.msra.mxu0 %v316
    %699 = vmatprep.subr.mxu0 %v320
    %700 = vmatpush1.msra.mxu0 %v319
    %701 = vmatprep.subr.mxu0 %v323
    %702 = vmatpush1.msra.mxu0 %v322
    %703 = vmatprep.subr.mxu0 %v326
    %704 = vmatpush1.msra.mxu0 %v325
    %705 = vmatprep.subr.mxu0 %v329
    %706 = vmatpush1.msra.mxu0 %v328
    %707 = vmatprep.subr.mxu0 %v332
    %708 = vmatpush1.msra.mxu0 %v331
    %709 = vmatprep.subr.mxu0 %v335
    %710 = vmatpush1.msra.mxu0 %v334
    %711 = vmatprep.subr.mxu0 %v338
    %712 = vmatpush1.msra.mxu0 %v337
    %713 = vmatprep.subr.mxu0 %v341
    %714 = vmatpush1.msra.mxu0 %v340
    %715 = vmatprep.subr.mxu0 %v344
    %716 = vmatpush1.msra.mxu0 %v343
    %717 = vmatprep.subr.mxu0 %v347
    %718 = vmatpush1.msra.mxu0 %v346
    %719 = vmatprep.subr.mxu0 %v350
    %720 = vmatpush1.msra.mxu0 %v349
    %721 = vmatprep.subr.mxu0 %v353
    %722 = vmatpush1.msra.mxu0 %v352
    %723 = vmatprep.mubr.f32.mxu0 %v196
    %724 = vmatmul.mubr.f32.gmra.mrb[0].mxu0 %v195
    %v725 = vpop.f32.mrb[0].mxu0
    %v726 = vadd.f32 %v647, %v725
    %v727 = vpop.f32.mrb[0].mxu0
    %v728 = vadd.f32 %v651, %v727
    %729 = vmatprep.mubr.f32.mxu0 %v204
    %730 = vmatmul.mubr.f32.gmra.mrb[0].mxu0 %v203
    %v731 = vpop.f32.mrb[0].mxu0
    %v732 = vadd.f32 %v647, %v731
    %v733 = vpop.f32.mrb[0].mxu0
    %v734 = vadd.f32 %v651, %v733
    %735 = vmatprep.mubr.f32.mxu0 %v212
    %736 = vmatmul.mubr.f32.gmra.mrb[0].mxu0 %v211
    %v737 = vpop.f32.mrb[0].mxu0
    %v738 = vadd.f32 %v647, %v737
    %v739 = vpop.f32.mrb[0].mxu0
    %v740 = vadd.f32 %v651, %v739
    %741 = vmatprep.mubr.f32.mxu0 %v220
    %742 = vmatmul.mubr.f32.gmra.mrb[0].mxu0 %v219
    %v743 = vpop.f32.mrb[0].mxu0
    %v744 = vadd.f32 %v647, %v743
    %v745 = vpop.f32.mrb[0].mxu0
    %v746 = vadd.f32 %v651, %v745
    %747 = vmatprep.mubr.f32.mxu0 %v228
    %748 = vmatmul.mubr.f32.gmra.mrb[0].mxu0 %v227
    %v749 = vpop.f32.mrb[0].mxu0
    %v750 = vadd.f32 %v647, %v749
    %v751 = vpop.f32.mrb[0].mxu0
    %v752 = vadd.f32 %v651, %v751
    %753 = vmatprep.mubr.f32.mxu0 %v236
    %754 = vmatmul.mubr.f32.gmra.mrb[0].mxu0 %v235
    %v755 = vpop.f32.mrb[0].mxu0
    %v756 = vadd.f32 %v647, %v755
    %v757 = vpop.f32.mrb[0].mxu0
    %v758 = vadd.f32 %v651, %v757
    %759 = vmatprep.mubr.f32.mxu0 %v244
    %760 = vmatmul.mubr.f32.gmra.mrb[0].mxu0 %v243
    %v761 = vpop.f32.mrb[0].mxu0
    %v762 = vadd.f32 %v647, %v761
    %v763 = vpop.f32.mrb[0].mxu0
    %v764 = vadd.f32 %v651, %v763
    %765 = vmatprep.mubr.f32.mxu0 %v252
    %766 = vmatmul.mubr.f32.gmra.mrb[0].mxu0 %v251
    %v767 = vpop.f32.mrb[0].mxu0
    %v768 = vadd.f32 %v647, %v767
    %v769 = vpop.f32.mrb[0].mxu0
    %v770 = vadd.f32 %v651, %v769
    %771 = vdwg.mxu0
    %772 = vmatprep.subr.mxu0 %v356
    %773 = vmatpush1.msra.mxu0 %v355
    %774 = vmatprep.subr.mxu0 %v359
    %775 = vmatpush1.msra.mxu0 %v358
    %776 = vmatprep.subr.mxu0 %v362
    %777 = vmatpush1.msra.mxu0 %v361
    %778 = vmatprep.subr.mxu0 %v365
    %779 = vmatpush1.msra.mxu0 %v364
    %780 = vmatprep.subr.mxu0 %v368
    %781 = vmatpush1.msra.mxu0 %v367
    %782 = vmatprep.subr.mxu0 %v371
    %783 = vmatpush1.msra.mxu0 %v370
    %784 = vmatprep.subr.mxu0 %v374
    %785 = vmatpush1.msra.mxu0 %v373
    %786 = vmatprep.subr.mxu0 %v377
    %787 = vmatpush1.msra.mxu0 %v376
    %788 = vmatprep.subr.mxu0 %v380
    %789 = vmatpush1.msra.mxu0 %v379
    %790 = vmatprep.subr.mxu0 %v383
    %791 = vmatpush1.msra.mxu0 %v382
    %792 = vmatprep.subr.mxu0 %v386
    %793 = vmatpush1.msra.mxu0 %v385
    %794 = vmatprep.subr.mxu0 %v389
    %795 = vmatpush1.msra.mxu0 %v388
    %796 = vmatprep.subr.mxu0 %v392
    %797 = vmatpush1.msra.mxu0 %v391
    %798 = vmatprep.subr.mxu0 %v395
    %799 = vmatpush1.msra.mxu0 %v394
    %800 = vmatprep.subr.mxu0 %v398
    %801 = vmatpush1.msra.mxu0 %v397
    %802 = vmatprep.subr.mxu0 %v401
    %803 = vmatpush1.msra.mxu0 %v400
    %804 = vmatprep.subr.mxu0 %v404
    %805 = vmatpush1.msra.mxu0 %v403
    %806 = vmatprep.subr.mxu0 %v407
    %807 = vmatpush1.msra.mxu0 %v406
    %808 = vmatprep.subr.mxu0 %v410
    %809 = vmatpush1.msra.mxu0 %v409
    %810 = vmatprep.subr.mxu0 %v413
    %811 = vmatpush1.msra.mxu0 %v412
    %812 = vmatprep.subr.mxu0 %v416
    %813 = vmatpush1.msra.mxu0 %v415
    %814 = vmatprep.subr.mxu0 %v419
    %815 = vmatpush1.msra.mxu0 %v418
    %816 = vmatprep.subr.mxu0 %v422
    %817 = vmatpush1.msra.mxu0 %v421
    %818 = vmatprep.subr.mxu0 %v425
    %819 = vmatpush1.msra.mxu0 %v424
    %820 = vmatprep.subr.mxu0 %v428
    %821 = vmatpush1.msra.mxu0 %v427
    %822 = vmatprep.subr.mxu0 %v431
    %823 = vmatpush1.msra.mxu0 %v430
    %824 = vmatprep.subr.mxu0 %v434
    %825 = vmatpush1.msra.mxu0 %v433
    %826 = vmatprep.subr.mxu0 %v437
    %827 = vmatpush1.msra.mxu0 %v436
    %828 = vmatprep.subr.mxu0 %v440
    %829 = vmatpush1.msra.mxu0 %v439
    %830 = vmatprep.subr.mxu0 %v443
    %831 = vmatpush1.msra.mxu0 %v442
    %832 = vmatprep.subr.mxu0 %v446
    %833 = vmatpush1.msra.mxu0 %v445
    %834 = vmatprep.subr.mxu0 %v449
    %835 = vmatpush1.msra.mxu0 %v448
    %836 = vmatprep.mubr.f32.mxu0 %v198
    %837 = vmatmul.mubr.f32.gmra.mrb[0].mxu0 %v197
    %v838 = vpop.f32.mrb[0].mxu0
    %v839 = vadd.f32 %v726, %v838
    %v840 = vpop.f32.mrb[0].mxu0
    %v841 = vadd.f32 %v728, %v840
    %842 = vmatprep.mubr.f32.mxu0 %v206
    %843 = vmatmul.mubr.f32.gmra.mrb[0].mxu0 %v205
    %v844 = vpop.f32.mrb[0].mxu0
    %v845 = vadd.f32 %v732, %v844
    %v846 = vpop.f32.mrb[0].mxu0
    %v847 = vadd.f32 %v734, %v846
    %848 = vmatprep.mubr.f32.mxu0 %v214
    %849 = vmatmul.mubr.f32.gmra.mrb[0].mxu0 %v213
    %v850 = vpop.f32.mrb[0].mxu0
    %v851 = vadd.f32 %v738, %v850
    %v852 = vpop.f32.mrb[0].mxu0
    %v853 = vadd.f32 %v740, %v852
    %854 = vmatprep.mubr.f32.mxu0 %v222
    %855 = vmatmul.mubr.f32.gmra.mrb[0].mxu0 %v221
    %v856 = vpop.f32.mrb[0].mxu0
    %v857 = vadd.f32 %v744, %v856
    %v858 = vpop.f32.mrb[0].mxu0
    %v859 = vadd.f32 %v746, %v858
    %860 = vmatprep.mubr.f32.mxu0 %v230
    %861 = vmatmul.mubr.f32.gmra.mrb[0].mxu0 %v229
    %v862 = vpop.f32.mrb[0].mxu0
    %v863 = vadd.f32 %v750, %v862
    %v864 = vpop.f32.mrb[0].mxu0
    %v865 = vadd.f32 %v752, %v864
    %866 = vmatprep.mubr.f32.mxu0 %v238
    %867 = vmatmul.mubr.f32.gmra.mrb[0].mxu0 %v237
    %v868 = vpop.f32.mrb[0].mxu0
    %v869 = vadd.f32 %v756, %v868
    %v870 = vpop.f32.mrb[0].mxu0
    %v871 = vadd.f32 %v758, %v870
    %872 = vmatprep.mubr.f32.mxu0 %v246
    %873 = vmatmul.mubr.f32.gmra.mrb[0].mxu0 %v245
    %v874 = vpop.f32.mrb[0].mxu0
    %v875 = vadd.f32 %v762, %v874
    %v876 = vpop.f32.mrb[0].mxu0
    %v877 = vadd.f32 %v764, %v876
    %878 = vmatprep.mubr.f32.mxu0 %v254
    %879 = vmatmul.mubr.f32.gmra.mrb[0].mxu0 %v253
    %v880 = vpop.f32.mrb[0].mxu0
    %v881 = vadd.f32 %v768, %v880
    %v882 = vpop.f32.mrb[0].mxu0
    %v883 = vadd.f32 %v770, %v882
    %884 = vdwg.mxu0
    %885 = vmatprep.subr.mxu0 %v452
    %886 = vmatpush1.msra.mxu0 %v451
    %887 = vmatprep.subr.mxu0 %v455
    %888 = vmatpush1.msra.mxu0 %v454
    %889 = vmatprep.subr.mxu0 %v458
    %890 = vmatpush1.msra.mxu0 %v457
    %891 = vmatprep.subr.mxu0 %v461
    %892 = vmatpush1.msra.mxu0 %v460
    %893 = vmatprep.subr.mxu0 %v464
    %894 = vmatpush1.msra.mxu0 %v463
    %895 = vmatprep.subr.mxu0 %v467
    %896 = vmatpush1.msra.mxu0 %v466
    %897 = vmatprep.subr.mxu0 %v470
    %898 = vmatpush1.msra.mxu0 %v469
    %899 = vmatprep.subr.mxu0 %v473
    %900 = vmatpush1.msra.mxu0 %v472
    %901 = vmatprep.subr.mxu0 %v476
    %902 = vmatpush1.msra.mxu0 %v475
    %903 = vmatprep.subr.mxu0 %v479
    %904 = vmatpush1.msra.mxu0 %v478
    %905 = vmatprep.subr.mxu0 %v482
    %906 = vmatpush1.msra.mxu0 %v481
    %907 = vmatprep.subr.mxu0 %v485
    %908 = vmatpush1.msra.mxu0 %v484
    %909 = vmatprep.subr.mxu0 %v488
    %910 = vmatpush1.msra.mxu0 %v487
    %911 = vmatprep.subr.mxu0 %v491
    %912 = vmatpush1.msra.mxu0 %v490
    %913 = vmatprep.subr.mxu0 %v494
    %914 = vmatpush1.msra.mxu0 %v493
    %915 = vmatprep.subr.mxu0 %v497
    %916 = vmatpush1.msra.mxu0 %v496
    %917 = vmatprep.subr.mxu0 %v500
    %918 = vmatpush1.msra.mxu0 %v499
    %919 = vmatprep.subr.mxu0 %v503
    %920 = vmatpush1.msra.mxu0 %v502
    %921 = vmatprep.subr.mxu0 %v506
    %922 = vmatpush1.msra.mxu0 %v505
    %923 = vmatprep.subr.mxu0 %v509
    %924 = vmatpush1.msra.mxu0 %v508
    %925 = vmatprep.subr.mxu0 %v512
    %926 = vmatpush1.msra.mxu0 %v511
    %927 = vmatprep.subr.mxu0 %v515
    %928 = vmatpush1.msra.mxu0 %v514
    %929 = vmatprep.subr.mxu0 %v518
    %930 = vmatpush1.msra.mxu0 %v517
    %931 = vmatprep.subr.mxu0 %v521
    %932 = vmatpush1.msra.mxu0 %v520
    %933 = vmatprep.subr.mxu0 %v524
    %934 = vmatpush1.msra.mxu0 %v523
    %935 = vmatprep.subr.mxu0 %v527
    %936 = vmatpush1.msra.mxu0 %v526
    %937 = vmatprep.subr.mxu0 %v530
    %938 = vmatpush1.msra.mxu0 %v529
    %939 = vmatprep.subr.mxu0 %v533
    %940 = vmatpush1.msra.mxu0 %v532
    %941 = vmatprep.subr.mxu0 %v536
    %942 = vmatpush1.msra.mxu0 %v535
    %943 = vmatprep.subr.mxu0 %v539
    %944 = vmatpush1.msra.mxu0 %v538
    %945 = vmatprep.subr.mxu0 %v542
    %946 = vmatpush1.msra.mxu0 %v541
    %947 = vmatprep.subr.mxu0 %v545
    %948 = vmatpush1.msra.mxu0 %v544
    %949 = vmatprep.mubr.f32.mxu0 %v200
    %950 = vmatmul.mubr.f32.gmra.mrb[0].mxu0 %v199
    %v951 = vpop.f32.mrb[0].mxu0
    %v952 = vadd.f32 %v839, %v951
    %v953 = vpop.f32.mrb[0].mxu0
    %v954 = vadd.f32 %v841, %v953
    %955 = vmatprep.mubr.f32.mxu0 %v208
    %956 = vmatmul.mubr.f32.gmra.mrb[0].mxu0 %v207
    %v957 = vpop.f32.mrb[0].mxu0
    %v958 = vadd.f32 %v845, %v957
    %v959 = vpop.f32.mrb[0].mxu0
    %v960 = vadd.f32 %v847, %v959
    %961 = vmatprep.mubr.f32.mxu0 %v216
    %962 = vmatmul.mubr.f32.gmra.mrb[0].mxu0 %v215
    %v963 = vpop.f32.mrb[0].mxu0
    %v964 = vadd.f32 %v851, %v963
    %v965 = vpop.f32.mrb[0].mxu0
    %v966 = vadd.f32 %v853, %v965
    %967 = vmatprep.mubr.f32.mxu0 %v224
    %968 = vmatmul.mubr.f32.gmra.mrb[0].mxu0 %v223
    %v969 = vpop.f32.mrb[0].mxu0
    %v970 = vadd.f32 %v857, %v969
    %v971 = vpop.f32.mrb[0].mxu0
    %v972 = vadd.f32 %v859, %v971
    %973 = vmatprep.mubr.f32.mxu0 %v232
    %974 = vmatmul.mubr.f32.gmra.mrb[0].mxu0 %v231
    %v975 = vpop.f32.mrb[0].mxu0
    %v976 = vadd.f32 %v863, %v975
    %v977 = vpop.f32.mrb[0].mxu0
    %v978 = vadd.f32 %v865, %v977
    %979 = vmatprep.mubr.f32.mxu0 %v240
    %980 = vmatmul.mubr.f32.gmra.mrb[0].mxu0 %v239
    %v981 = vpop.f32.mrb[0].mxu0
    %v982 = vadd.f32 %v869, %v981
    %v983 = vpop.f32.mrb[0].mxu0
    %v984 = vadd.f32 %v871, %v983
    %985 = vmatprep.mubr.f32.mxu0 %v248
    %986 = vmatmul.mubr.f32.gmra.mrb[0].mxu0 %v247
    %v987 = vpop.f32.mrb[0].mxu0
    %v988 = vadd.f32 %v875, %v987
    %v989 = vpop.f32.mrb[0].mxu0
    %v990 = vadd.f32 %v877, %v989
    %991 = vmatprep.mubr.f32.mxu0 %v256
    %992 = vmatmul.mubr.f32.gmra.mrb[0].mxu0 %v255
    %v993 = vpop.f32.mrb[0].mxu0
    %v994 = vadd.f32 %v881, %v993
    %v995 = vpop.f32.mrb[0].mxu0
    %v996 = vadd.f32 %v883, %v995
    %997 = vdwg.mxu0
    %998 = vmatprep.subr.mxu0 %v548
    %999 = vmatpush1.msra.mxu0 %v547
    %1000 = vmatprep.subr.mxu0 %v551
    %1001 = vmatpush1.msra.mxu0 %v550
    %1002 = vmatprep.subr.mxu0 %v554
    %1003 = vmatpush1.msra.mxu0 %v553
    %1004 = vmatprep.subr.mxu0 %v557
    %1005 = vmatpush1.msra.mxu0 %v556
    %1006 = vmatprep.subr.mxu0 %v560
    %1007 = vmatpush1.msra.mxu0 %v559
    %1008 = vmatprep.subr.mxu0 %v563
    %1009 = vmatpush1.msra.mxu0 %v562
    %1010 = vmatprep.subr.mxu0 %v566
    %1011 = vmatpush1.msra.mxu0 %v565
    %1012 = vmatprep.subr.mxu0 %v569
    %1013 = vmatpush1.msra.mxu0 %v568
    %1014 = vmatprep.subr.mxu0 %v572
    %1015 = vmatpush1.msra.mxu0 %v571
    %1016 = vmatprep.subr.mxu0 %v575
    %1017 = vmatpush1.msra.mxu0 %v574
    %1018 = vmatprep.subr.mxu0 %v578
    %1019 = vmatpush1.msra.mxu0 %v577
    %1020 = vmatprep.subr.mxu0 %v581
    %1021 = vmatpush1.msra.mxu0 %v580
    %1022 = vmatprep.subr.mxu0 %v584
    %1023 = vmatpush1.msra.mxu0 %v583
    %1024 = vmatprep.subr.mxu0 %v587
    %1025 = vmatpush1.msra.mxu0 %v586
    %1026 = vmatprep.subr.mxu0 %v590
    %1027 = vmatpush1.msra.mxu0 %v589
    %1028 = vmatprep.subr.mxu0 %v593
    %1029 = vmatpush1.msra.mxu0 %v592
    %1030 = vmatprep.subr.mxu0 %v596
    %1031 = vmatpush1.msra.mxu0 %v595
    %1032 = vmatprep.subr.mxu0 %v599
    %1033 = vmatpush1.msra.mxu0 %v598
    %1034 = vmatprep.subr.mxu0 %v602
    %1035 = vmatpush1.msra.mxu0 %v601
    %1036 = vmatprep.subr.mxu0 %v605
    %1037 = vmatpush1.msra.mxu0 %v604
    %1038 = vmatprep.subr.mxu0 %v608
    %1039 = vmatpush1.msra.mxu0 %v607
    %1040 = vmatprep.subr.mxu0 %v611
    %1041 = vmatpush1.msra.mxu0 %v610
    %1042 = vmatprep.subr.mxu0 %v614
    %1043 = vmatpush1.msra.mxu0 %v613
    %1044 = vmatprep.subr.mxu0 %v617
    %1045 = vmatpush1.msra.mxu0 %v616
    %1046 = vmatprep.subr.mxu0 %v620
    %1047 = vmatpush1.msra.mxu0 %v619
    %1048 = vmatprep.subr.mxu0 %v623
    %1049 = vmatpush1.msra.mxu0 %v622
    %1050 = vmatprep.subr.mxu0 %v626
    %1051 = vmatpush1.msra.mxu0 %v625
    %1052 = vmatprep.subr.mxu0 %v629
    %1053 = vmatpush1.msra.mxu0 %v628
    %1054 = vmatprep.subr.mxu0 %v632
    %1055 = vmatpush1.msra.mxu0 %v631
    %1056 = vmatprep.subr.mxu0 %v635
    %1057 = vmatpush1.msra.mxu0 %v634
    %1058 = vmatprep.subr.mxu0 %v638
    %1059 = vmatpush1.msra.mxu0 %v637
    %1060 = vmatprep.subr.mxu0 %v641
    %1061 = vmatpush1.msra.mxu0 %v640
    %1062 = vmatprep.mubr.f32.mxu0 %v202
    %1063 = vmatmul.mubr.f32.gmra.mrb[0].mxu0 %v201
    %v1064 = vpop.f32.mrb[0].mxu0
    %v1065 = vadd.f32 %v952, %v1064
    %v1066 = vpop.f32.mrb[0].mxu0
    %v1067 = vadd.f32 %v954, %v1066
    %1068 = vmatprep.mubr.f32.mxu0 %v210
    %1069 = vmatmul.mubr.f32.gmra.mrb[0].mxu0 %v209
    %v1070 = vpop.f32.mrb[0].mxu0
    %v1071 = vadd.f32 %v958, %v1070
    %v1072 = vpop.f32.mrb[0].mxu0
    %v1073 = vadd.f32 %v960, %v1072
    %1074 = vmatprep.mubr.f32.mxu0 %v218
    %1075 = vmatmul.mubr.f32.gmra.mrb[0].mxu0 %v217
    %v1076 = vpop.f32.mrb[0].mxu0
    %v1077 = vadd.f32 %v964, %v1076
    %v1078 = vpop.f32.mrb[0].mxu0
    %v1079 = vadd.f32 %v966, %v1078
    %1080 = vmatprep.mubr.f32.mxu0 %v226
    %1081 = vmatmul.mubr.f32.gmra.mrb[0].mxu0 %v225
    %v1082 = vpop.f32.mrb[0].mxu0
    %v1083 = vadd.f32 %v970, %v1082
    %v1084 = vpop.f32.mrb[0].mxu0
    %v1085 = vadd.f32 %v972, %v1084
    %1086 = vmatprep.mubr.f32.mxu0 %v234
    %1087 = vmatmul.mubr.f32.gmra.mrb[0].mxu0 %v233
    %v1088 = vpop.f32.mrb[0].mxu0
    %v1089 = vadd.f32 %v976, %v1088
    %v1090 = vpop.f32.mrb[0].mxu0
    %v1091 = vadd.f32 %v978, %v1090
    %1092 = vmatprep.mubr.f32.mxu0 %v242
    %1093 = vmatmul.mubr.f32.gmra.mrb[0].mxu0 %v241
    %v1094 = vpop.f32.mrb[0].mxu0
    %v1095 = vadd.f32 %v982, %v1094
    %v1096 = vpop.f32.mrb[0].mxu0
    %v1097 = vadd.f32 %v984, %v1096
    %1098 = vmatprep.mubr.f32.mxu0 %v250
    %1099 = vmatmul.mubr.f32.gmra.mrb[0].mxu0 %v249
    %v1100 = vpop.f32.mrb[0].mxu0
    %v1101 = vadd.f32 %v988, %v1100
    %v1102 = vpop.f32.mrb[0].mxu0
    %v1103 = vadd.f32 %v990, %v1102
    %1104 = vmatprep.mubr.f32.mxu0 %v258
    %1105 = vmatmul.mubr.f32.gmra.mrb[0].mxu0 %v257
    %v1106 = vpop.f32.mrb[0].mxu0
    %v1107 = vadd.f32 %v994, %v1106
    %v1108 = vpop.f32.mrb[0].mxu0
    %v1109 = vadd.f32 %v996, %v1108
    %1110 = vdwg.mxu0
    %1111 = vmatprep.subr.mxu0 0.0
    %1112 = vmatpush1.msra.mxu0 %v261
    %1113 = vmatprep.subr.mxu0 0.0
    %1114 = vmatpush1.msra.mxu0 %v264
    %1115 = vmatprep.subr.mxu0 0.0
    %1116 = vmatpush1.msra.mxu0 %v267
    %1117 = vmatprep.subr.mxu0 0.0
    %1118 = vmatpush1.msra.mxu0 %v270
    %1119 = vmatprep.subr.mxu0 0.0
    %1120 = vmatpush1.msra.mxu0 %v273
    %1121 = vmatprep.subr.mxu0 0.0
    %1122 = vmatpush1.msra.mxu0 %v276
    %1123 = vmatprep.subr.mxu0 0.0
    %1124 = vmatpush1.msra.mxu0 %v279
    %1125 = vmatprep.subr.mxu0 0.0
    %1126 = vmatpush1.msra.mxu0 %v282
    %1127 = vmatprep.subr.mxu0 0.0
    %1128 = vmatpush1.msra.mxu0 %v285
    %1129 = vmatprep.subr.mxu0 0.0
    %1130 = vmatpush1.msra.mxu0 %v288
    %1131 = vmatprep.subr.mxu0 0.0
    %1132 = vmatpush1.msra.mxu0 %v291
    %1133 = vmatprep.subr.mxu0 0.0
    %1134 = vmatpush1.msra.mxu0 %v294
    %1135 = vmatprep.subr.mxu0 0.0
    %1136 = vmatpush1.msra.mxu0 %v297
    %1137 = vmatprep.subr.mxu0 0.0
    %1138 = vmatpush1.msra.mxu0 %v300
    %1139 = vmatprep.subr.mxu0 0.0
    %1140 = vmatpush1.msra.mxu0 %v303
    %1141 = vmatprep.subr.mxu0 0.0
    %1142 = vmatpush1.msra.mxu0 %v306
    %1143 = vmatprep.subr.mxu0 0.0
    %1144 = vmatpush1.msra.mxu0 %v309
    %1145 = vmatprep.subr.mxu0 0.0
    %1146 = vmatpush1.msra.mxu0 %v312
    %1147 = vmatprep.subr.mxu0 0.0
    %1148 = vmatpush1.msra.mxu0 %v315
    %1149 = vmatprep.subr.mxu0 0.0
    %1150 = vmatpush1.msra.mxu0 %v318
    %1151 = vmatprep.subr.mxu0 0.0
    %1152 = vmatpush1.msra.mxu0 %v321
    %1153 = vmatprep.subr.mxu0 0.0
    %1154 = vmatpush1.msra.mxu0 %v324
    %1155 = vmatprep.subr.mxu0 0.0
    %1156 = vmatpush1.msra.mxu0 %v327
    %1157 = vmatprep.subr.mxu0 0.0
    %1158 = vmatpush1.msra.mxu0 %v330
    %1159 = vmatprep.subr.mxu0 0.0
    %1160 = vmatpush1.msra.mxu0 %v333
    %1161 = vmatprep.subr.mxu0 0.0
    %1162 = vmatpush1.msra.mxu0 %v336
    %1163 = vmatprep.subr.mxu0 0.0
    %1164 = vmatpush1.msra.mxu0 %v339
    %1165 = vmatprep.subr.mxu0 0.0
    %1166 = vmatpush1.msra.mxu0 %v342
    %1167 = vmatprep.subr.mxu0 0.0
    %1168 = vmatpush1.msra.mxu0 %v345
    %1169 = vmatprep.subr.mxu0 0.0
    %1170 = vmatpush1.msra.mxu0 %v348
    %1171 = vmatprep.subr.mxu0 0.0
    %1172 = vmatpush1.msra.mxu0 %v351
    %1173 = vmatprep.subr.mxu0 0.0
    %1174 = vmatpush1.msra.mxu0 %v354
    %1175 = vmatprep.mubr.f32.mxu0 %v196
    %1176 = vmatmul.mubr.f32.gmra.mrb[0].mxu0 %v195
    %v1177 = vpop.f32.mrb[0].mxu0
    %v1178 = vadd.f32 %v655, %v1177
    %v1179 = vpop.f32.mrb[0].mxu0
    %1180 = vmatprep.mubr.f32.mxu0 %v204
    %1181 = vmatmul.mubr.f32.gmra.mrb[0].mxu0 %v203
    %v1182 = vpop.f32.mrb[0].mxu0
    %v1183 = vadd.f32 %v655, %v1182
    %v1184 = vpop.f32.mrb[0].mxu0
    %1185 = vmatprep.mubr.f32.mxu0 %v212
    %1186 = vmatmul.mubr.f32.gmra.mrb[0].mxu0 %v211
    %v1187 = vpop.f32.mrb[0].mxu0
    %v1188 = vadd.f32 %v655, %v1187
    %v1189 = vpop.f32.mrb[0].mxu0
    %1190 = vmatprep.mubr.f32.mxu0 %v220
    %1191 = vmatmul.mubr.f32.gmra.mrb[0].mxu0 %v219
    %v1192 = vpop.f32.mrb[0].mxu0
    %v1193 = vadd.f32 %v655, %v1192
    %v1194 = vpop.f32.mrb[0].mxu0
    %1195 = vmatprep.mubr.f32.mxu0 %v228
    %1196 = vmatmul.mubr.f32.gmra.mrb[0].mxu0 %v227
    %v1197 = vpop.f32.mrb[0].mxu0
    %v1198 = vadd.f32 %v655, %v1197
    %v1199 = vpop.f32.mrb[0].mxu0
    %1200 = vmatprep.mubr.f32.mxu0 %v236
    %1201 = vmatmul.mubr.f32.gmra.mrb[0].mxu0 %v235
    %v1202 = vpop.f32.mrb[0].mxu0
    %v1203 = vadd.f32 %v655, %v1202
    %v1204 = vpop.f32.mrb[0].mxu0
    %1205 = vmatprep.mubr.f32.mxu0 %v244
    %1206 = vmatmul.mubr.f32.gmra.mrb[0].mxu0 %v243
    %v1207 = vpop.f32.mrb[0].mxu0
    %v1208 = vadd.f32 %v655, %v1207
    %v1209 = vpop.f32.mrb[0].mxu0
    %1210 = vmatprep.mubr.f32.mxu0 %v252
    %1211 = vmatmul.mubr.f32.gmra.mrb[0].mxu0 %v251
    %v1212 = vpop.f32.mrb[0].mxu0
    %v1213 = vadd.f32 %v655, %v1212
    %v1214 = vpop.f32.mrb[0].mxu0
    %1215 = vdwg.mxu0
    %1216 = vmatprep.subr.mxu0 0.0
    %1217 = vmatpush1.msra.mxu0 %v357
    %1218 = vmatprep.subr.mxu0 0.0
    %1219 = vmatpush1.msra.mxu0 %v360
    %1220 = vmatprep.subr.mxu0 0.0
    %1221 = vmatpush1.msra.mxu0 %v363
    %1222 = vmatprep.subr.mxu0 0.0
    %1223 = vmatpush1.msra.mxu0 %v366
    %1224 = vmatprep.subr.mxu0 0.0
    %1225 = vmatpush1.msra.mxu0 %v369
    %1226 = vmatprep.subr.mxu0 0.0
    %1227 = vmatpush1.msra.mxu0 %v372
    %1228 = vmatprep.subr.mxu0 0.0
    %1229 = vmatpush1.msra.mxu0 %v375
    %1230 = vmatprep.subr.mxu0 0.0
    %1231 = vmatpush1.msra.mxu0 %v378
    %1232 = vmatprep.subr.mxu0 0.0
    %1233 = vmatpush1.msra.mxu0 %v381
    %1234 = vmatprep.subr.mxu0 0.0
    %1235 = vmatpush1.msra.mxu0 %v384
    %1236 = vmatprep.subr.mxu0 0.0
    %1237 = vmatpush1.msra.mxu0 %v387
    %1238 = vmatprep.subr.mxu0 0.0
    %1239 = vmatpush1.msra.mxu0 %v390
    %1240 = vmatprep.subr.mxu0 0.0
    %1241 = vmatpush1.msra.mxu0 %v393
    %1242 = vmatprep.subr.mxu0 0.0
    %1243 = vmatpush1.msra.mxu0 %v396
    %1244 = vmatprep.subr.mxu0 0.0
    %1245 = vmatpush1.msra.mxu0 %v399
    %1246 = vmatprep.subr.mxu0 0.0
    %1247 = vmatpush1.msra.mxu0 %v402
    %1248 = vmatprep.subr.mxu0 0.0
    %1249 = vmatpush1.msra.mxu0 %v405
    %1250 = vmatprep.subr.mxu0 0.0
    %1251 = vmatpush1.msra.mxu0 %v408
    %1252 = vmatprep.subr.mxu0 0.0
    %1253 = vmatpush1.msra.mxu0 %v411
    %1254 = vmatprep.subr.mxu0 0.0
    %1255 = vmatpush1.msra.mxu0 %v414
    %1256 = vmatprep.subr.mxu0 0.0
    %1257 = vmatpush1.msra.mxu0 %v417
    %1258 = vmatprep.subr.mxu0 0.0
    %1259 = vmatpush1.msra.mxu0 %v420
    %1260 = vmatprep.subr.mxu0 0.0
    %1261 = vmatpush1.msra.mxu0 %v423
    %1262 = vmatprep.subr.mxu0 0.0
    %1263 = vmatpush1.msra.mxu0 %v426
    %1264 = vmatprep.subr.mxu0 0.0
    %1265 = vmatpush1.msra.mxu0 %v429
    %1266 = vmatprep.subr.mxu0 0.0
    %1267 = vmatpush1.msra.mxu0 %v432
    %1268 = vmatprep.subr.mxu0 0.0
    %1269 = vmatpush1.msra.mxu0 %v435
    %1270 = vmatprep.subr.mxu0 0.0
    %1271 = vmatpush1.msra.mxu0 %v438
    %1272 = vmatprep.subr.mxu0 0.0
    %1273 = vmatpush1.msra.mxu0 %v441
    %1274 = vmatprep.subr.mxu0 0.0
    %1275 = vmatpush1.msra.mxu0 %v444
    %1276 = vmatprep.subr.mxu0 0.0
    %1277 = vmatpush1.msra.mxu0 %v447
    %1278 = vmatprep.subr.mxu0 0.0
    %1279 = vmatpush1.msra.mxu0 %v450
    %1280 = vmatprep.mubr.f32.mxu0 %v198
    %1281 = vmatmul.mubr.f32.gmra.mrb[0].mxu0 %v197
    %v1282 = vpop.f32.mrb[0].mxu0
    %v1283 = vadd.f32 %v1178, %v1282
    %v1284 = vpop.f32.mrb[0].mxu0
    %1285 = vmatprep.mubr.f32.mxu0 %v206
    %1286 = vmatmul.mubr.f32.gmra.mrb[0].mxu0 %v205
    %v1287 = vpop.f32.mrb[0].mxu0
    %v1288 = vadd.f32 %v1183, %v1287
    %v1289 = vpop.f32.mrb[0].mxu0
    %1290 = vmatprep.mubr.f32.mxu0 %v214
    %1291 = vmatmul.mubr.f32.gmra.mrb[0].mxu0 %v213
    %v1292 = vpop.f32.mrb[0].mxu0
    %v1293 = vadd.f32 %v1188, %v1292
    %v1294 = vpop.f32.mrb[0].mxu0
    %1295 = vmatprep.mubr.f32.mxu0 %v222
    %1296 = vmatmul.mubr.f32.gmra.mrb[0].mxu0 %v221
    %v1297 = vpop.f32.mrb[0].mxu0
    %v1298 = vadd.f32 %v1193, %v1297
    %v1299 = vpop.f32.mrb[0].mxu0
    %1300 = vmatprep.mubr.f32.mxu0 %v230
    %1301 = vmatmul.mubr.f32.gmra.mrb[0].mxu0 %v229
    %v1302 = vpop.f32.mrb[0].mxu0
    %v1303 = vadd.f32 %v1198, %v1302
    %v1304 = vpop.f32.mrb[0].mxu0
    %1305 = vmatprep.mubr.f32.mxu0 %v238
    %1306 = vmatmul.mubr.f32.gmra.mrb[0].mxu0 %v237
    %v1307 = vpop.f32.mrb[0].mxu0
    %v1308 = vadd.f32 %v1203, %v1307
    %v1309 = vpop.f32.mrb[0].mxu0
    %1310 = vmatprep.mubr.f32.mxu0 %v246
    %1311 = vmatmul.mubr.f32.gmra.mrb[0].mxu0 %v245
    %v1312 = vpop.f32.mrb[0].mxu0
    %v1313 = vadd.f32 %v1208, %v1312
    %v1314 = vpop.f32.mrb[0].mxu0
    %1315 = vmatprep.mubr.f32.mxu0 %v254
    %1316 = vmatmul.mubr.f32.gmra.mrb[0].mxu0 %v253
    %v1317 = vpop.f32.mrb[0].mxu0
    %v1318 = vadd.f32 %v1213, %v1317
    %v1319 = vpop.f32.mrb[0].mxu0
    %1320 = vdwg.mxu0
    %1321 = vmatprep.subr.mxu0 0.0
    %1322 = vmatpush1.msra.mxu0 %v453
    %1323 = vmatprep.subr.mxu0 0.0
    %1324 = vmatpush1.msra.mxu0 %v456
    %1325 = vmatprep.subr.mxu0 0.0
    %1326 = vmatpush1.msra.mxu0 %v459
    %1327 = vmatprep.subr.mxu0 0.0
    %1328 = vmatpush1.msra.mxu0 %v462
    %1329 = vmatprep.subr.mxu0 0.0
    %1330 = vmatpush1.msra.mxu0 %v465
    %1331 = vmatprep.subr.mxu0 0.0
    %1332 = vmatpush1.msra.mxu0 %v468
    %1333 = vmatprep.subr.mxu0 0.0
    %1334 = vmatpush1.msra.mxu0 %v471
    %1335 = vmatprep.subr.mxu0 0.0
    %1336 = vmatpush1.msra.mxu0 %v474
    %1337 = vmatprep.subr.mxu0 0.0
    %1338 = vmatpush1.msra.mxu0 %v477
    %1339 = vmatprep.subr.mxu0 0.0
    %1340 = vmatpush1.msra.mxu0 %v480
    %1341 = vmatprep.subr.mxu0 0.0
    %1342 = vmatpush1.msra.mxu0 %v483
    %1343 = vmatprep.subr.mxu0 0.0
    %1344 = vmatpush1.msra.mxu0 %v486
    %1345 = vmatprep.subr.mxu0 0.0
    %1346 = vmatpush1.msra.mxu0 %v489
    %1347 = vmatprep.subr.mxu0 0.0
    %1348 = vmatpush1.msra.mxu0 %v492
    %1349 = vmatprep.subr.mxu0 0.0
    %1350 = vmatpush1.msra.mxu0 %v495
    %1351 = vmatprep.subr.mxu0 0.0
    %1352 = vmatpush1.msra.mxu0 %v498
    %1353 = vmatprep.subr.mxu0 0.0
    %1354 = vmatpush1.msra.mxu0 %v501
    %1355 = vmatprep.subr.mxu0 0.0
    %1356 = vmatpush1.msra.mxu0 %v504
    %1357 = vmatprep.subr.mxu0 0.0
    %1358 = vmatpush1.msra.mxu0 %v507
    %1359 = vmatprep.subr.mxu0 0.0
    %1360 = vmatpush1.msra.mxu0 %v510
    %1361 = vmatprep.subr.mxu0 0.0
    %1362 = vmatpush1.msra.mxu0 %v513
    %1363 = vmatprep.subr.mxu0 0.0
    %1364 = vmatpush1.msra.mxu0 %v516
    %1365 = vmatprep.subr.mxu0 0.0
    %1366 = vmatpush1.msra.mxu0 %v519
    %1367 = vmatprep.subr.mxu0 0.0
    %1368 = vmatpush1.msra.mxu0 %v522
    %1369 = vmatprep.subr.mxu0 0.0
    %1370 = vmatpush1.msra.mxu0 %v525
    %1371 = vmatprep.subr.mxu0 0.0
    %1372 = vmatpush1.msra.mxu0 %v528
    %1373 = vmatprep.subr.mxu0 0.0
    %1374 = vmatpush1.msra.mxu0 %v531
    %1375 = vmatprep.subr.mxu0 0.0
    %1376 = vmatpush1.msra.mxu0 %v534
    %1377 = vmatprep.subr.mxu0 0.0
    %1378 = vmatpush1.msra.mxu0 %v537
    %1379 = vmatprep.subr.mxu0 0.0
    %1380 = vmatpush1.msra.mxu0 %v540
    %1381 = vmatprep.subr.mxu0 0.0
    %1382 = vmatpush1.msra.mxu0 %v543
    %1383 = vmatprep.subr.mxu0 0.0
    %1384 = vmatpush1.msra.mxu0 %v546
    %1385 = vmatprep.mubr.f32.mxu0 %v200
    %1386 = vmatmul.mubr.f32.gmra.mrb[0].mxu0 %v199
    %v1387 = vpop.f32.mrb[0].mxu0
    %v1388 = vadd.f32 %v1283, %v1387
    %v1389 = vpop.f32.mrb[0].mxu0
    %1390 = vmatprep.mubr.f32.mxu0 %v208
    %1391 = vmatmul.mubr.f32.gmra.mrb[0].mxu0 %v207
    %v1392 = vpop.f32.mrb[0].mxu0
    %v1393 = vadd.f32 %v1288, %v1392
    %v1394 = vpop.f32.mrb[0].mxu0
    %1395 = vmatprep.mubr.f32.mxu0 %v216
    %1396 = vmatmul.mubr.f32.gmra.mrb[0].mxu0 %v215
    %v1397 = vpop.f32.mrb[0].mxu0
    %v1398 = vadd.f32 %v1293, %v1397
    %v1399 = vpop.f32.mrb[0].mxu0
    %1400 = vmatprep.mubr.f32.mxu0 %v224
    %1401 = vmatmul.mubr.f32.gmra.mrb[0].mxu0 %v223
    %v1402 = vpop.f32.mrb[0].mxu0
    %v1403 = vadd.f32 %v1298, %v1402
    %v1404 = vpop.f32.mrb[0].mxu0
    %1405 = vmatprep.mubr.f32.mxu0 %v232
    %1406 = vmatmul.mubr.f32.gmra.mrb[0].mxu0 %v231
    %v1407 = vpop.f32.mrb[0].mxu0
    %v1408 = vadd.f32 %v1303, %v1407
    %v1409 = vpop.f32.mrb[0].mxu0
    %1410 = vmatprep.mubr.f32.mxu0 %v240
    %1411 = vmatmul.mubr.f32.gmra.mrb[0].mxu0 %v239
    %v1412 = vpop.f32.mrb[0].mxu0
    %v1413 = vadd.f32 %v1308, %v1412
    %v1414 = vpop.f32.mrb[0].mxu0
    %1415 = vmatprep.mubr.f32.mxu0 %v248
    %1416 = vmatmul.mubr.f32.gmra.mrb[0].mxu0 %v247
    %v1417 = vpop.f32.mrb[0].mxu0
    %v1418 = vadd.f32 %v1313, %v1417
    %v1419 = vpop.f32.mrb[0].mxu0
    %1420 = vmatprep.mubr.f32.mxu0 %v256
    %1421 = vmatmul.mubr.f32.gmra.mrb[0].mxu0 %v255
    %v1422 = vpop.f32.mrb[0].mxu0
    %v1423 = vadd.f32 %v1318, %v1422
    %v1424 = vpop.f32.mrb[0].mxu0
    %1425 = vdwg.mxu0
    %1426 = vmatprep.subr.mxu0 0.0
    %1427 = vmatpush1.msra.mxu0 %v549
    %1428 = vmatprep.subr.mxu0 0.0
    %1429 = vmatpush1.msra.mxu0 %v552
    %1430 = vmatprep.subr.mxu0 0.0
    %1431 = vmatpush1.msra.mxu0 %v555
    %1432 = vmatprep.subr.mxu0 0.0
    %1433 = vmatpush1.msra.mxu0 %v558
    %1434 = vmatprep.subr.mxu0 0.0
    %1435 = vmatpush1.msra.mxu0 %v561
    %1436 = vmatprep.subr.mxu0 0.0
    %1437 = vmatpush1.msra.mxu0 %v564
    %1438 = vmatprep.subr.mxu0 0.0
    %1439 = vmatpush1.msra.mxu0 %v567
    %1440 = vmatprep.subr.mxu0 0.0
    %1441 = vmatpush1.msra.mxu0 %v570
    %1442 = vmatprep.subr.mxu0 0.0
    %1443 = vmatpush1.msra.mxu0 %v573
    %1444 = vmatprep.subr.mxu0 0.0
    %1445 = vmatpush1.msra.mxu0 %v576
    %1446 = vmatprep.subr.mxu0 0.0
    %1447 = vmatpush1.msra.mxu0 %v579
    %1448 = vmatprep.subr.mxu0 0.0
    %1449 = vmatpush1.msra.mxu0 %v582
    %1450 = vmatprep.subr.mxu0 0.0
    %1451 = vmatpush1.msra.mxu0 %v585
    %1452 = vmatprep.subr.mxu0 0.0
    %1453 = vmatpush1.msra.mxu0 %v588
    %1454 = vmatprep.subr.mxu0 0.0
    %1455 = vmatpush1.msra.mxu0 %v591
    %1456 = vmatprep.subr.mxu0 0.0
    %1457 = vmatpush1.msra.mxu0 %v594
    %1458 = vmatprep.subr.mxu0 0.0
    %1459 = vmatpush1.msra.mxu0 %v597
    %1460 = vmatprep.subr.mxu0 0.0
    %1461 = vmatpush1.msra.mxu0 %v600
    %1462 = vmatprep.subr.mxu0 0.0
    %1463 = vmatpush1.msra.mxu0 %v603
    %1464 = vmatprep.subr.mxu0 0.0
    %1465 = vmatpush1.msra.mxu0 %v606
    %1466 = vmatprep.subr.mxu0 0.0
    %1467 = vmatpush1.msra.mxu0 %v609
    %1468 = vmatprep.subr.mxu0 0.0
    %1469 = vmatpush1.msra.mxu0 %v612
    %1470 = vmatprep.subr.mxu0 0.0
    %1471 = vmatpush1.msra.mxu0 %v615
    %1472 = vmatprep.subr.mxu0 0.0
    %1473 = vmatpush1.msra.mxu0 %v618
    %1474 = vmatprep.subr.mxu0 0.0
    %1475 = vmatpush1.msra.mxu0 %v621
    %1476 = vmatprep.subr.mxu0 0.0
    %1477 = vmatpush1.msra.mxu0 %v624
    %1478 = vmatprep.subr.mxu0 0.0
    %1479 = vmatpush1.msra.mxu0 %v627
    %1480 = vmatprep.subr.mxu0 0.0
    %1481 = vmatpush1.msra.mxu0 %v630
    %1482 = vmatprep.subr.mxu0 0.0
    %1483 = vmatpush1.msra.mxu0 %v633
    %1484 = vmatprep.subr.mxu0 0.0
    %1485 = vmatpush1.msra.mxu0 %v636
    %1486 = vmatprep.subr.mxu0 0.0
    %1487 = vmatpush1.msra.mxu0 %v639
    %1488 = vmatprep.subr.mxu0 0.0
    %1489 = vmatpush1.msra.mxu0 %v642
    %1490 = vmatprep.mubr.f32.mxu0 %v202
    %1491 = vmatmul.mubr.f32.gmra.mrb[0].mxu0 %v201
    %v1492 = vpop.f32.mrb[0].mxu0
    %v1493 = vadd.f32 %v1388, %v1492
    %v1494 = vpop.f32.mrb[0].mxu0
    %1495 = vmatprep.mubr.f32.mxu0 %v210
    %1496 = vmatmul.mubr.f32.gmra.mrb[0].mxu0 %v209
    %v1497 = vpop.f32.mrb[0].mxu0
    %v1498 = vadd.f32 %v1393, %v1497
    %v1499 = vpop.f32.mrb[0].mxu0
    %1500 = vmatprep.mubr.f32.mxu0 %v218
    %1501 = vmatmul.mubr.f32.gmra.mrb[0].mxu0 %v217
    %v1502 = vpop.f32.mrb[0].mxu0
    %v1503 = vadd.f32 %v1398, %v1502
    %v1504 = vpop.f32.mrb[0].mxu0
    %1505 = vmatprep.mubr.f32.mxu0 %v226
    %1506 = vmatmul.mubr.f32.gmra.mrb[0].mxu0 %v225
    %v1507 = vpop.f32.mrb[0].mxu0
    %v1508 = vadd.f32 %v1403, %v1507
    %v1509 = vpop.f32.mrb[0].mxu0
    %1510 = vmatprep.mubr.f32.mxu0 %v234
    %1511 = vmatmul.mubr.f32.gmra.mrb[0].mxu0 %v233
    %v1512 = vpop.f32.mrb[0].mxu0
    %v1513 = vadd.f32 %v1408, %v1512
    %v1514 = vpop.f32.mrb[0].mxu0
    %1515 = vmatprep.mubr.f32.mxu0 %v242
    %1516 = vmatmul.mubr.f32.gmra.mrb[0].mxu0 %v241
    %v1517 = vpop.f32.mrb[0].mxu0
    %v1518 = vadd.f32 %v1413, %v1517
    %v1519 = vpop.f32.mrb[0].mxu0
    %1520 = vmatprep.mubr.f32.mxu0 %v250
    %1521 = vmatmul.mubr.f32.gmra.mrb[0].mxu0 %v249
    %v1522 = vpop.f32.mrb[0].mxu0
    %v1523 = vadd.f32 %v1418, %v1522
    %v1524 = vpop.f32.mrb[0].mxu0
    %1525 = vmatprep.mubr.f32.mxu0 %v258
    %1526 = vmatmul.mubr.f32.gmra.mrb[0].mxu0 %v257
    %v1527 = vpop.f32.mrb[0].mxu0
    %v1528 = vadd.f32 %v1423, %v1527
    %v1529 = vpop.f32.mrb[0].mxu0
    %1530 = vdwg.mxu0
    %1531 = vst [vmem:[#allocation2] sm:$0xff] %v1065
    %1532 = vst [vmem:[#allocation2 + $0x8] sm:$0xff] %v1067
    %1533 = vst [vmem:[#allocation2 + $0x10] sm:$0xff] %v1493
    %1534 = vst [vmem:[#allocation2 + $0x18] sm:$0xff] %v1071
    %1535 = vst [vmem:[#allocation2 + $0x20] sm:$0xff] %v1073
    %1536 = vst [vmem:[#allocation2 + $0x28] sm:$0xff] %v1498
    %1537 = vst [vmem:[#allocation2 + $0x30] sm:$0xff] %v1077
    %1538 = vst [vmem:[#allocation2 + $0x38] sm:$0xff] %v1079
    %1539 = vst [vmem:[#allocation2 + $0x40] sm:$0xff] %v1503
    %1540 = vst [vmem:[#allocation2 + $0x48] sm:$0xff] %v1083
    %1541 = vst [vmem:[#allocation2 + $0x50] sm:$0xff] %v1085
    %1542 = vst [vmem:[#allocation2 + $0x58] sm:$0xff] %v1508
    %1543 = vst [vmem:[#allocation2 + $0x60] sm:$0xff] %v1089
    %1544 = vst [vmem:[#allocation2 + $0x68] sm:$0xff] %v1091
    %1545 = vst [vmem:[#allocation2 + $0x70] sm:$0xff] %v1513
    %1546 = vst [vmem:[#allocation2 + $0x78] sm:$0xff] %v1095
    %1547 = vst [vmem:[#allocation2 + $0x80] sm:$0xff] %v1097
    %1548 = vst [vmem:[#allocation2 + $0x88] sm:$0xff] %v1518
    %1549 = vst [vmem:[#allocation2 + $0x90] sm:$0xff] %v1101
    %1550 = vst [vmem:[#allocation2 + $0x98] sm:$0xff] %v1103
    %1551 = vst [vmem:[#allocation2 + $0xa0] sm:$0xff] %v1523
    %1552 = vst [vmem:[#allocation2 + $0xa8] sm:$0xff] %v1107
    %1553 = vst [vmem:[#allocation2 + $0xb0] sm:$0xff] %v1109
    %1554 = vst [vmem:[#allocation2 + $0xb8] sm:$0xff] %v1528
    %v1555 = vld [vmem:[#allocation13] sm:$0x7]
    %v1556 = vld [vmem:[#allocation14] sm:$0x7]
    %v1558 = vlaneseq
    %v1559 = vshrl.u32 %v1558, 7
    %v1560 = vsub.s32 0, %v1559
    %v1561 = vrot.slane %v1556, %v1560
    %v1562 = vlaneseq
    %v1563 = vshrl.u32 %v1562, 7
    %v1564 = vsub.s32 1, %v1563
    %v1565 = vrot.slane %v1556, %v1564
    %v1566 = vlaneseq
    %v1567 = vshrl.u32 %v1566, 7
    %v1568 = vsub.s32 2, %v1567
    %v1569 = vrot.slane %v1556, %v1568
    %v1573 = vsel %vm143, %v1561, 0.0
    %v1574 = vsel %vm144, %v1565, 0.0
    %v1575 = vsel %vm145, %v1569, 0.0
    %v1579 = vcombine.low %v1573, %v1574
    %v1581 = vunpack.c.l.s4 1966171168
    %v1582 = vunpack.c.0.s8 %v1581
    %v1583 = vlaneseq
    %v1584 = vshrl.u32 %v1583, 7
    %v1585 = vsub.s32 %v1582, %v1584
    %v1586 = vrot.slane %v1579, %v1585
    %v1588 = vunpack.c.l.s4 1966171168
    %v1589 = vunpack.c.0.s8 %v1588
    %v1590 = vlaneseq
    %v1591 = vshrl.u32 %v1590, 7
    %v1592 = vsub.s32 %v1589, %v1591
    %v1593 = vrot.slane %v1575, %v1592
    %v1594 = vcombine.low %v1586, %v1593
    %v1596 = vunpack.c.l.s4 1966171168
    %v1597 = vunpack.c.0.s8 %v1596
    %v1598 = vlaneseq
    %v1599 = vshrl.u32 %v1598, 7
    %v1600 = vsub.s32 %v1597, %v1599
    %v1601 = vrot.slane %v1594, %v1600
    %v1603 = vadd.f32 %v1555, %v1601
    %v1604 = vld [vmem:[#allocation8 + $0x2] sm:$0x1]
    %v1606 = vlaneseq
    %v1607 = vshrl.u32 %v1606, 7
    %v1608 = vsub.s32 0, %v1607
    %v1609 = vrot.slane %v1604, %v1608
    %v1611 = vld [vmem:[#allocation14 + $0x2] sm:$0x1]
    %v1613 = vlaneseq
    %v1614 = vshrl.u32 %v1613, 7
    %v1615 = vsub.s32 0, %v1614
    %v1616 = vrot.slane %v1611, %v1615
    %v1618 = vld [vmem:[#allocation5] sm:$0xff]
    %v1619 = vld [vmem:[#allocation5 + $0x8] sm:$0xff]
    %v1620 = vld [vmem:[#allocation5 + $0x10] sm:$0xff]
    %v1621 = vld [vmem:[#allocation5 + $0x18] sm:$0xff]
    %v1622 = vld [vmem:[#allocation5 + $0x20] sm:$0xff]
    %v1623 = vld [vmem:[#allocation5 + $0x28] sm:$0xff]
    %v1624 = vld [vmem:[#allocation5 + $0x30] sm:$0xff]
    %v1625 = vld [vmem:[#allocation5 + $0x38] sm:$0xff]
    %v1626 = vld [vmem:[#allocation5 + $0x40] sm:$0xff]
    %v1627 = vld [vmem:[#allocation5 + $0x48] sm:$0xff]
    %v1628 = vld [vmem:[#allocation5 + $0x50] sm:$0xff]
    %v1629 = vld [vmem:[#allocation5 + $0x58] sm:$0xff]
    %v1630 = vld [vmem:[#allocation5 + $0x60] sm:$0xff]
    %v1631 = vld [vmem:[#allocation5 + $0x68] sm:$0xff]
    %v1632 = vld [vmem:[#allocation5 + $0x70] sm:$0xff]
    %v1633 = vld [vmem:[#allocation5 + $0x78] sm:$0xff]
    %v1634 = vld [vmem:[#allocation5 + $0x80] sm:$0xff]
    %v1635 = vld [vmem:[#allocation5 + $0x88] sm:$0xff]
    %v1636 = vld [vmem:[#allocation5 + $0x90] sm:$0xff]
    %v1637 = vld [vmem:[#allocation5 + $0x98] sm:$0xff]
    %v1638 = vld [vmem:[#allocation5 + $0xa0] sm:$0xff]
    %v1639 = vld [vmem:[#allocation5 + $0xa8] sm:$0xff]
    %v1640 = vld [vmem:[#allocation5 + $0xb0] sm:$0xff]
    %v1641 = vld [vmem:[#allocation5 + $0xb8] sm:$0xff]
    %v1642 = vld [vmem:[#allocation5 + $0xc0] sm:$0xff]
    %v1643 = vld [vmem:[#allocation5 + $0xc8] sm:$0xff]
    %v1644 = vld [vmem:[#allocation5 + $0xd0] sm:$0xff]
    %v1645 = vld [vmem:[#allocation5 + $0xd8] sm:$0xff]
    %v1646 = vld [vmem:[#allocation5 + $0xe0] sm:$0xff]
    %v1647 = vld [vmem:[#allocation5 + $0xe8] sm:$0xff]
    %v1648 = vld [vmem:[#allocation5 + $0xf0] sm:$0xff]
    %v1649 = vld [vmem:[#allocation5 + $0xf8] sm:$0xff]
    %v1650 = vld [vmem:[#allocation5 + $0x100] sm:$0xff]
    %v1651 = vld [vmem:[#allocation5 + $0x108] sm:$0xff]
    %v1652 = vld [vmem:[#allocation5 + $0x110] sm:$0xff]
    %v1653 = vld [vmem:[#allocation5 + $0x118] sm:$0xff]
    %v1654 = vld [vmem:[#allocation5 + $0x120] sm:$0xff]
    %v1655 = vld [vmem:[#allocation5 + $0x128] sm:$0xff]
    %v1656 = vld [vmem:[#allocation5 + $0x130] sm:$0xff]
    %v1657 = vld [vmem:[#allocation5 + $0x138] sm:$0xff]
    %v1658 = vld [vmem:[#allocation5 + $0x140] sm:$0xff]
    %v1659 = vld [vmem:[#allocation5 + $0x148] sm:$0xff]
    %v1660 = vld [vmem:[#allocation5 + $0x150] sm:$0xff]
    %v1661 = vld [vmem:[#allocation5 + $0x158] sm:$0xff]
    %v1662 = vld [vmem:[#allocation5 + $0x160] sm:$0xff]
    %v1663 = vld [vmem:[#allocation5 + $0x168] sm:$0xff]
    %v1664 = vld [vmem:[#allocation5 + $0x170] sm:$0xff]
    %v1665 = vld [vmem:[#allocation5 + $0x178] sm:$0xff]
    %v1666 = vld [vmem:[#allocation10] sm:$0xff]
    %v1667 = vld [vmem:[#allocation10 + $0x8] sm:$0xff]
    %v1668 = vld [vmem:[#allocation10 + $0x10] sm:$0xff]
    %v1669 = vld [vmem:[#allocation10 + $0x18] sm:$0xff]
    %v1670 = vld [vmem:[#allocation10 + $0x20] sm:$0xff]
    %v1671 = vld [vmem:[#allocation10 + $0x28] sm:$0xff]
    %v1672 = vld [vmem:[#allocation10 + $0x30] sm:$0xff]
    %v1673 = vld [vmem:[#allocation10 + $0x38] sm:$0xff]
    %v1674 = vld [vmem:[#allocation10 + $0x40] sm:$0xff]
    %v1675 = vld [vmem:[#allocation10 + $0x48] sm:$0xff]
    %v1676 = vld [vmem:[#allocation10 + $0x50] sm:$0xff]
    %v1677 = vld [vmem:[#allocation10 + $0x58] sm:$0xff]
    %v1678 = vld [vmem:[#allocation10 + $0x60] sm:$0xff]
    %v1679 = vld [vmem:[#allocation10 + $0x68] sm:$0xff]
    %v1680 = vld [vmem:[#allocation10 + $0x70] sm:$0xff]
    %v1681 = vld [vmem:[#allocation10 + $0x78] sm:$0xff]
    %v1682 = vld [vmem:[#allocation10 + $0x80] sm:$0xff]
    %v1683 = vld [vmem:[#allocation10 + $0x88] sm:$0xff]
    %v1684 = vld [vmem:[#allocation10 + $0x90] sm:$0xff]
    %v1685 = vld [vmem:[#allocation10 + $0x98] sm:$0xff]
    %v1686 = vld [vmem:[#allocation10 + $0xa0] sm:$0xff]
    %v1687 = vld [vmem:[#allocation10 + $0xa8] sm:$0xff]
    %v1688 = vld [vmem:[#allocation10 + $0xb0] sm:$0xff]
    %v1689 = vld [vmem:[#allocation10 + $0xb8] sm:$0xff]
    %v1690 = vld [vmem:[#allocation10 + $0xc0] sm:$0xff]
    %v1691 = vld [vmem:[#allocation10 + $0xc8] sm:$0xff]
    %v1692 = vld [vmem:[#allocation10 + $0xd0] sm:$0xff]
    %v1693 = vld [vmem:[#allocation10 + $0xd8] sm:$0xff]
    %v1694 = vld [vmem:[#allocation10 + $0xe0] sm:$0xff]
    %v1695 = vld [vmem:[#allocation10 + $0xe8] sm:$0xff]
    %v1696 = vld [vmem:[#allocation10 + $0xf0] sm:$0xff]
    %v1697 = vld [vmem:[#allocation10 + $0xf8] sm:$0xff]
    %v1698 = vld [vmem:[#allocation10 + $0x100] sm:$0xff]
    %v1699 = vld [vmem:[#allocation10 + $0x108] sm:$0xff]
    %v1700 = vld [vmem:[#allocation10 + $0x110] sm:$0xff]
    %v1701 = vld [vmem:[#allocation10 + $0x118] sm:$0xff]
    %v1702 = vld [vmem:[#allocation10 + $0x120] sm:$0xff]
    %v1703 = vld [vmem:[#allocation10 + $0x128] sm:$0xff]
    %v1704 = vld [vmem:[#allocation10 + $0x130] sm:$0xff]
    %v1705 = vld [vmem:[#allocation10 + $0x138] sm:$0xff]
    %v1706 = vld [vmem:[#allocation10 + $0x140] sm:$0xff]
    %v1707 = vld [vmem:[#allocation10 + $0x148] sm:$0xff]
    %v1708 = vld [vmem:[#allocation10 + $0x150] sm:$0xff]
    %v1709 = vld [vmem:[#allocation10 + $0x158] sm:$0xff]
    %v1710 = vld [vmem:[#allocation10 + $0x160] sm:$0xff]
    %v1711 = vld [vmem:[#allocation10 + $0x168] sm:$0xff]
    %v1712 = vld [vmem:[#allocation10 + $0x170] sm:$0xff]
    %v1713 = vld [vmem:[#allocation10 + $0x178] sm:$0xff]
    %v1714 = vld [vmem:[#allocation11] sm:$0xff]
    %v1715 = vld [vmem:[#allocation11 + $0x8] sm:$0xff]
    %v1716 = vld [vmem:[#allocation11 + $0x10] sm:$0xff]
    %v1717 = vld [vmem:[#allocation11 + $0x18] sm:$0xff]
    %v1718 = vld [vmem:[#allocation11 + $0x20] sm:$0xff]
    %v1719 = vld [vmem:[#allocation11 + $0x28] sm:$0xff]
    %v1720 = vld [vmem:[#allocation11 + $0x30] sm:$0xff]
    %v1721 = vld [vmem:[#allocation11 + $0x38] sm:$0xff]
    %v1722 = vld [vmem:[#allocation11 + $0x40] sm:$0xff]
    %v1723 = vld [vmem:[#allocation11 + $0x48] sm:$0xff]
    %v1724 = vld [vmem:[#allocation11 + $0x50] sm:$0xff]
    %v1725 = vld [vmem:[#allocation11 + $0x58] sm:$0xff]
    %v1726 = vld [vmem:[#allocation11 + $0x60] sm:$0xff]
    %v1727 = vld [vmem:[#allocation11 + $0x68] sm:$0xff]
    %v1728 = vld [vmem:[#allocation11 + $0x70] sm:$0xff]
    %v1729 = vld [vmem:[#allocation11 + $0x78] sm:$0xff]
    %v1730 = vld [vmem:[#allocation11 + $0x80] sm:$0xff]
    %v1731 = vld [vmem:[#allocation11 + $0x88] sm:$0xff]
    %v1732 = vld [vmem:[#allocation11 + $0x90] sm:$0xff]
    %v1733 = vld [vmem:[#allocation11 + $0x98] sm:$0xff]
    %v1734 = vld [vmem:[#allocation11 + $0xa0] sm:$0xff]
    %v1735 = vld [vmem:[#allocation11 + $0xa8] sm:$0xff]
    %v1736 = vld [vmem:[#allocation11 + $0xb0] sm:$0xff]
    %v1737 = vld [vmem:[#allocation11 + $0xb8] sm:$0xff]
    %v1738 = vld [vmem:[#allocation11 + $0xc0] sm:$0xff]
    %v1739 = vld [vmem:[#allocation11 + $0xc8] sm:$0xff]
    %v1740 = vld [vmem:[#allocation11 + $0xd0] sm:$0xff]
    %v1741 = vld [vmem:[#allocation11 + $0xd8] sm:$0xff]
    %v1742 = vld [vmem:[#allocation11 + $0xe0] sm:$0xff]
    %v1743 = vld [vmem:[#allocation11 + $0xe8] sm:$0xff]
    %v1744 = vld [vmem:[#allocation11 + $0xf0] sm:$0xff]
    %v1745 = vld [vmem:[#allocation11 + $0xf8] sm:$0xff]
    %v1746 = vld [vmem:[#allocation11 + $0x100] sm:$0xff]
    %v1747 = vld [vmem:[#allocation11 + $0x108] sm:$0xff]
    %v1748 = vld [vmem:[#allocation11 + $0x110] sm:$0xff]
    %v1749 = vld [vmem:[#allocation11 + $0x118] sm:$0xff]
    %v1750 = vld [vmem:[#allocation11 + $0x120] sm:$0xff]
    %v1751 = vld [vmem:[#allocation11 + $0x128] sm:$0xff]
    %v1752 = vld [vmem:[#allocation11 + $0x130] sm:$0xff]
    %v1753 = vld [vmem:[#allocation11 + $0x138] sm:$0xff]
    %v1754 = vld [vmem:[#allocation11 + $0x140] sm:$0xff]
    %v1755 = vld [vmem:[#allocation11 + $0x148] sm:$0xff]
    %v1756 = vld [vmem:[#allocation11 + $0x150] sm:$0xff]
    %v1757 = vld [vmem:[#allocation11 + $0x158] sm:$0xff]
    %v1758 = vld [vmem:[#allocation11 + $0x160] sm:$0xff]
    %v1759 = vld [vmem:[#allocation11 + $0x168] sm:$0xff]
    %v1760 = vld [vmem:[#allocation11 + $0x170] sm:$0xff]
    %v1761 = vld [vmem:[#allocation11 + $0x178] sm:$0xff]
    %v1762 = vld [vmem:[%s1] sm:$0xff]
    %v1763 = vld [vmem:[%s2] sm:$0xff]
    %v1764 = vld [vmem:[#allocation2] sm:$0xff]
    %v1765 = vld [vmem:[#allocation2 + $0x8] sm:$0xff]
    %v1766 = vld [vmem:[#allocation2 + $0x10] sm:$0xff]
    %1767 = vmatprep.subr.mxu0 %v1619
    %1768 = vmatpush1.msra.mxu0 %v1618
    %1769 = vmatprep.subr.mxu0 %v1622
    %1770 = vmatpush1.msra.mxu0 %v1621
    %1771 = vmatprep.subr.mxu0 %v1625
    %1772 = vmatpush1.msra.mxu0 %v1624
    %1773 = vmatprep.subr.mxu0 %v1628
    %1774 = vmatpush1.msra.mxu0 %v1627
    %1775 = vmatprep.subr.mxu0 %v1631
    %1776 = vmatpush1.msra.mxu0 %v1630
    %1777 = vmatprep.subr.mxu0 %v1634
    %1778 = vmatpush1.msra.mxu0 %v1633
    %1779 = vmatprep.subr.mxu0 %v1637
    %1780 = vmatpush1.msra.mxu0 %v1636
    %1781 = vmatprep.subr.mxu0 %v1640
    %1782 = vmatpush1.msra.mxu0 %v1639
    %1783 = vmatprep.subr.mxu0 %v1643
    %1784 = vmatpush1.msra.mxu0 %v1642
    %1785 = vmatprep.subr.mxu0 %v1646
    %1786 = vmatpush1.msra.mxu0 %v1645
    %1787 = vmatprep.subr.mxu0 %v1649
    %1788 = vmatpush1.msra.mxu0 %v1648
    %1789 = vmatprep.subr.mxu0 %v1652
    %1790 = vmatpush1.msra.mxu0 %v1651
    %1791 = vmatprep.subr.mxu0 %v1655
    %1792 = vmatpush1.msra.mxu0 %v1654
    %1793 = vmatprep.subr.mxu0 %v1658
    %1794 = vmatpush1.msra.mxu0 %v1657
    %1795 = vmatprep.subr.mxu0 %v1661
    %1796 = vmatpush1.msra.mxu0 %v1660
    %1797 = vmatprep.subr.mxu0 %v1664
    %1798 = vmatpush1.msra.mxu0 %v1663
    %1799 = vmatprep.subr.mxu0 0.0
    %1800 = vmatpush1.msra.mxu0 0.0
    %1801 = vmatprep.subr.mxu0 0.0
    %1802 = vmatpush1.msra.mxu0 0.0
    %1803 = vmatprep.subr.mxu0 0.0
    %1804 = vmatpush1.msra.mxu0 0.0
    %1805 = vmatprep.subr.mxu0 0.0
    %1806 = vmatpush1.msra.mxu0 0.0
    %1807 = vmatprep.subr.mxu0 0.0
    %1808 = vmatpush1.msra.mxu0 0.0
    %1809 = vmatprep.subr.mxu0 0.0
    %1810 = vmatpush1.msra.mxu0 0.0
    %1811 = vmatprep.subr.mxu0 0.0
    %1812 = vmatpush1.msra.mxu0 0.0
    %1813 = vmatprep.subr.mxu0 0.0
    %1814 = vmatpush1.msra.mxu0 0.0
    %1815 = vmatprep.subr.mxu0 0.0
    %1816 = vmatpush1.msra.mxu0 0.0
    %1817 = vmatprep.subr.mxu0 0.0
    %1818 = vmatpush1.msra.mxu0 0.0
    %1819 = vmatprep.subr.mxu0 0.0
    %1820 = vmatpush1.msra.mxu0 0.0
    %1821 = vmatprep.subr.mxu0 0.0
    %1822 = vmatpush1.msra.mxu0 0.0
    %1823 = vmatprep.subr.mxu0 0.0
    %1824 = vmatpush1.msra.mxu0 0.0
    %1825 = vmatprep.subr.mxu0 0.0
    %1826 = vmatpush1.msra.mxu0 0.0
    %1827 = vmatprep.subr.mxu0 0.0
    %1828 = vmatpush1.msra.mxu0 0.0
    %1829 = vmatprep.subr.mxu0 0.0
    %1830 = vmatpush1.msra.mxu0 0.0
    %1831 = vmatprep.mubr.f32.mxu0 0.0
    %1832 = vmatmul.mubr.f32.gmra.mrb[0].mxu0 %v1762
    %v1833 = vpop.f32.mrb[0].mxu0
    %v1834 = vadd.f32 0.0, %v1833
    %v1835 = vpop.f32.mrb[0].mxu0
    %v1836 = vadd.f32 0.0, %v1835
    %1837 = vdwg.mxu0
    %1838 = vmatprep.subr.mxu0 0.0
    %1839 = vmatpush1.msra.mxu0 %v1620
    %1840 = vmatprep.subr.mxu0 0.0
    %1841 = vmatpush1.msra.mxu0 %v1623
    %1842 = vmatprep.subr.mxu0 0.0
    %1843 = vmatpush1.msra.mxu0 %v1626
    %1844 = vmatprep.subr.mxu0 0.0
    %1845 = vmatpush1.msra.mxu0 %v1629
    %1846 = vmatprep.subr.mxu0 0.0
    %1847 = vmatpush1.msra.mxu0 %v1632
    %1848 = vmatprep.subr.mxu0 0.0
    %1849 = vmatpush1.msra.mxu0 %v1635
    %1850 = vmatprep.subr.mxu0 0.0
    %1851 = vmatpush1.msra.mxu0 %v1638
    %1852 = vmatprep.subr.mxu0 0.0
    %1853 = vmatpush1.msra.mxu0 %v1641
    %1854 = vmatprep.subr.mxu0 0.0
    %1855 = vmatpush1.msra.mxu0 %v1644
    %1856 = vmatprep.subr.mxu0 0.0
    %1857 = vmatpush1.msra.mxu0 %v1647
    %1858 = vmatprep.subr.mxu0 0.0
    %1859 = vmatpush1.msra.mxu0 %v1650
    %1860 = vmatprep.subr.mxu0 0.0
    %1861 = vmatpush1.msra.mxu0 %v1653
    %1862 = vmatprep.subr.mxu0 0.0
    %1863 = vmatpush1.msra.mxu0 %v1656
    %1864 = vmatprep.subr.mxu0 0.0
    %1865 = vmatpush1.msra.mxu0 %v1659
    %1866 = vmatprep.subr.mxu0 0.0
    %1867 = vmatpush1.msra.mxu0 %v1662
    %1868 = vmatprep.subr.mxu0 0.0
    %1869 = vmatpush1.msra.mxu0 %v1665
    %1870 = vmatprep.subr.mxu0 0.0
    %1871 = vmatpush1.msra.mxu0 0.0
    %1872 = vmatprep.subr.mxu0 0.0
    %1873 = vmatpush1.msra.mxu0 0.0
    %1874 = vmatprep.subr.mxu0 0.0
    %1875 = vmatpush1.msra.mxu0 0.0
    %1876 = vmatprep.subr.mxu0 0.0
    %1877 = vmatpush1.msra.mxu0 0.0
    %1878 = vmatprep.subr.mxu0 0.0
    %1879 = vmatpush1.msra.mxu0 0.0
    %1880 = vmatprep.subr.mxu0 0.0
    %1881 = vmatpush1.msra.mxu0 0.0
    %1882 = vmatprep.subr.mxu0 0.0
    %1883 = vmatpush1.msra.mxu0 0.0
    %1884 = vmatprep.subr.mxu0 0.0
    %1885 = vmatpush1.msra.mxu0 0.0
    %1886 = vmatprep.subr.mxu0 0.0
    %1887 = vmatpush1.msra.mxu0 0.0
    %1888 = vmatprep.subr.mxu0 0.0
    %1889 = vmatpush1.msra.mxu0 0.0
    %1890 = vmatprep.subr.mxu0 0.0
    %1891 = vmatpush1.msra.mxu0 0.0
    %1892 = vmatprep.subr.mxu0 0.0
    %1893 = vmatpush1.msra.mxu0 0.0
    %1894 = vmatprep.subr.mxu0 0.0
    %1895 = vmatpush1.msra.mxu0 0.0
    %1896 = vmatprep.subr.mxu0 0.0
    %1897 = vmatpush1.msra.mxu0 0.0
    %1898 = vmatprep.subr.mxu0 0.0
    %1899 = vmatpush1.msra.mxu0 0.0
    %1900 = vmatprep.subr.mxu0 0.0
    %1901 = vmatpush1.msra.mxu0 0.0
    %1902 = vmatprep.mubr.f32.mxu0 0.0
    %1903 = vmatmul.mubr.f32.gmra.mrb[0].mxu0 %v1762
    %v1904 = vpop.f32.mrb[0].mxu0
    %v1905 = vadd.f32 0.0, %v1904
    %v1906 = vpop.f32.mrb[0].mxu0
    %1907 = vdwg.mxu0
    %v1908 = vadd.f32 %v1764, %v1834
    %v1909 = vmul.f32 %v1908, 0.5
    %v1910 = vtanh.pop %v1909
    %v1911 = vadd.f32 %v1910, 1.0
    %v1912 = vmul.f32 %v1911, 0.5
    %v1913 = vadd.f32 %v1765, %v1836
    %v1914 = vmul.f32 %v1913, 0.5
    %v1915 = vtanh.pop %v1914
    %v1916 = vadd.f32 %v1915, 1.0
    %v1917 = vmul.f32 %v1916, 0.5
    %v1918 = vadd.f32 %v1905, %v1609
    %v1919 = vmul.f32 %v1912, %v1918
    %v1920 = vadd.f32 %v1766, %v1919
    %v1921 = vtanh.pop %v1920
    %v1922 = vsub.f32 1.0, %v1917
    %v1923 = vmul.f32 %v1922, %v1921
    %v1924 = vmul.f32 %v1917, %v1762
    %v1925 = vadd.f32 %v1923, %v1924
    %v1926 = vld [vmem:[#allocation2 + $0x18] sm:$0xff]
    %v1927 = vld [vmem:[#allocation2 + $0x20] sm:$0xff]
    %v1928 = vld [vmem:[#allocation2 + $0x28] sm:$0xff]
    %1929 = vmatprep.subr.mxu0 %v1619
    %1930 = vmatpush1.msra.mxu0 %v1618
    %1931 = vmatprep.subr.mxu0 %v1622
    %1932 = vmatpush1.msra.mxu0 %v1621
    %1933 = vmatprep.subr.mxu0 %v1625
    %1934 = vmatpush1.msra.mxu0 %v1624
    %1935 = vmatprep.subr.mxu0 %v1628
    %1936 = vmatpush1.msra.mxu0 %v1627
    %1937 = vmatprep.subr.mxu0 %v1631
    %1938 = vmatpush1.msra.mxu0 %v1630
    %1939 = vmatprep.subr.mxu0 %v1634
    %1940 = vmatpush1.msra.mxu0 %v1633
    %1941 = vmatprep.subr.mxu0 %v1637
    %1942 = vmatpush1.msra.mxu0 %v1636
    %1943 = vmatprep.subr.mxu0 %v1640
    %1944 = vmatpush1.msra.mxu0 %v1639
    %1945 = vmatprep.subr.mxu0 %v1643
    %1946 = vmatpush1.msra.mxu0 %v1642
    %1947 = vmatprep.subr.mxu0 %v1646
    %1948 = vmatpush1.msra.mxu0 %v1645
    %1949 = vmatprep.subr.mxu0 %v1649
    %1950 = vmatpush1.msra.mxu0 %v1648
    %1951 = vmatprep.subr.mxu0 %v1652
    %1952 = vmatpush1.msra.mxu0 %v1651
    %1953 = vmatprep.subr.mxu0 %v1655
    %1954 = vmatpush1.msra.mxu0 %v1654
    %1955 = vmatprep.subr.mxu0 %v1658
    %1956 = vmatpush1.msra.mxu0 %v1657
    %1957 = vmatprep.subr.mxu0 %v1661
    %1958 = vmatpush1.msra.mxu0 %v1660
    %1959 = vmatprep.subr.mxu0 %v1664
    %1960 = vmatpush1.msra.mxu0 %v1663
    %1961 = vmatprep.subr.mxu0 0.0
    %1962 = vmatpush1.msra.mxu0 0.0
    %1963 = vmatprep.subr.mxu0 0.0
    %1964 = vmatpush1.msra.mxu0 0.0
    %1965 = vmatprep.subr.mxu0 0.0
    %1966 = vmatpush1.msra.mxu0 0.0
    %1967 = vmatprep.subr.mxu0 0.0
    %1968 = vmatpush1.msra.mxu0 0.0
    %1969 = vmatprep.subr.mxu0 0.0
    %1970 = vmatpush1.msra.mxu0 0.0
    %1971 = vmatprep.subr.mxu0 0.0
    %1972 = vmatpush1.msra.mxu0 0.0
    %1973 = vmatprep.subr.mxu0 0.0
    %1974 = vmatpush1.msra.mxu0 0.0
    %1975 = vmatprep.subr.mxu0 0.0
    %1976 = vmatpush1.msra.mxu0 0.0
    %1977 = vmatprep.subr.mxu0 0.0
    %1978 = vmatpush1.msra.mxu0 0.0
    %1979 = vmatprep.subr.mxu0 0.0
    %1980 = vmatpush1.msra.mxu0 0.0
    %1981 = vmatprep.subr.mxu0 0.0
    %1982 = vmatpush1.msra.mxu0 0.0
    %1983 = vmatprep.subr.mxu0 0.0
    %1984 = vmatpush1.msra.mxu0 0.0
    %1985 = vmatprep.subr.mxu0 0.0
    %1986 = vmatpush1.msra.mxu0 0.0
    %1987 = vmatprep.subr.mxu0 0.0
    %1988 = vmatpush1.msra.mxu0 0.0
    %1989 = vmatprep.subr.mxu0 0.0
    %1990 = vmatpush1.msra.mxu0 0.0
    %1991 = vmatprep.subr.mxu0 0.0
    %1992 = vmatpush1.msra.mxu0 0.0
    %1993 = vmatprep.mubr.f32.mxu0 0.0
    %1994 = vmatmul.mubr.f32.gmra.mrb[0].mxu0 %v1925
    %v1995 = vpop.f32.mrb[0].mxu0
    %v1996 = vadd.f32 0.0, %v1995
    %v1997 = vpop.f32.mrb[0].mxu0
    %v1998 = vadd.f32 0.0, %v1997
    %1999 = vdwg.mxu0
    %2000 = vmatprep.subr.mxu0 0.0
    %2001 = vmatpush1.msra.mxu0 %v1620
    %2002 = vmatprep.subr.mxu0 0.0
    %2003 = vmatpush1.msra.mxu0 %v1623
    %2004 = vmatprep.subr.mxu0 0.0
    %2005 = vmatpush1.msra.mxu0 %v1626
    %2006 = vmatprep.subr.mxu0 0.0
    %2007 = vmatpush1.msra.mxu0 %v1629
    %2008 = vmatprep.subr.mxu0 0.0
    %2009 = vmatpush1.msra.mxu0 %v1632
    %2010 = vmatprep.subr.mxu0 0.0
    %2011 = vmatpush1.msra.mxu0 %v1635
    %2012 = vmatprep.subr.mxu0 0.0
    %2013 = vmatpush1.msra.mxu0 %v1638
    %2014 = vmatprep.subr.mxu0 0.0
    %2015 = vmatpush1.msra.mxu0 %v1641
    %2016 = vmatprep.subr.mxu0 0.0
    %2017 = vmatpush1.msra.mxu0 %v1644
    %2018 = vmatprep.subr.mxu0 0.0
    %2019 = vmatpush1.msra.mxu0 %v1647
    %2020 = vmatprep.subr.mxu0 0.0
    %2021 = vmatpush1.msra.mxu0 %v1650
    %2022 = vmatprep.subr.mxu0 0.0
    %2023 = vmatpush1.msra.mxu0 %v1653
    %2024 = vmatprep.subr.mxu0 0.0
    %2025 = vmatpush1.msra.mxu0 %v1656
    %2026 = vmatprep.subr.mxu0 0.0
    %2027 = vmatpush1.msra.mxu0 %v1659
    %2028 = vmatprep.subr.mxu0 0.0
    %2029 = vmatpush1.msra.mxu0 %v1662
    %2030 = vmatprep.subr.mxu0 0.0
    %2031 = vmatpush1.msra.mxu0 %v1665
    %2032 = vmatprep.subr.mxu0 0.0
    %2033 = vmatpush1.msra.mxu0 0.0
    %2034 = vmatprep.subr.mxu0 0.0
    %2035 = vmatpush1.msra.mxu0 0.0
    %2036 = vmatprep.subr.mxu0 0.0
    %2037 = vmatpush1.msra.mxu0 0.0
    %2038 = vmatprep.subr.mxu0 0.0
    %2039 = vmatpush1.msra.mxu0 0.0
    %2040 = vmatprep.subr.mxu0 0.0
    %2041 = vmatpush1.msra.mxu0 0.0
    %2042 = vmatprep.subr.mxu0 0.0
    %2043 = vmatpush1.msra.mxu0 0.0
    %2044 = vmatprep.subr.mxu0 0.0
    %2045 = vmatpush1.msra.mxu0 0.0
    %2046 = vmatprep.subr.mxu0 0.0
    %2047 = vmatpush1.msra.mxu0 0.0
    %2048 = vmatprep.subr.mxu0 0.0
    %2049 = vmatpush1.msra.mxu0 0.0
    %2050 = vmatprep.subr.mxu0 0.0
    %2051 = vmatpush1.msra.mxu0 0.0
    %2052 = vmatprep.subr.mxu0 0.0
    %2053 = vmatpush1.msra.mxu0 0.0
    %2054 = vmatprep.subr.mxu0 0.0
    %2055 = vmatpush1.msra.mxu0 0.0
    %2056 = vmatprep.subr.mxu0 0.0
    %2057 = vmatpush1.msra.mxu0 0.0
    %2058 = vmatprep.subr.mxu0 0.0
    %2059 = vmatpush1.msra.mxu0 0.0
    %2060 = vmatprep.subr.mxu0 0.0
    %2061 = vmatpush1.msra.mxu0 0.0
    %2062 = vmatprep.subr.mxu0 0.0
    %2063 = vmatpush1.msra.mxu0 0.0
    %2064 = vmatprep.mubr.f32.mxu0 0.0
    %2065 = vmatmul.mubr.f32.gmra.mrb[0].mxu0 %v1925
    %v2066 = vpop.f32.mrb[0].mxu0
    %v2067 = vadd.f32 0.0, %v2066
    %v2068 = vpop.f32.mrb[0].mxu0
    %2069 = vdwg.mxu0
    %v2070 = vadd.f32 %v1926, %v1996
    %v2071 = vmul.f32 %v2070, 0.5
    %v2072 = vtanh.pop %v2071
    %v2073 = vadd.f32 %v2072, 1.0
    %v2074 = vmul.f32 %v2073, 0.5
    %v2075 = vadd.f32 %v1927, %v1998
    %v2076 = vmul.f32 %v2075, 0.5
    %v2077 = vtanh.pop %v2076
    %v2078 = vadd.f32 %v2077, 1.0
    %v2079 = vmul.f32 %v2078, 0.5
    %v2080 = vadd.f32 %v2067, %v1609
    %v2081 = vmul.f32 %v2074, %v2080
    %v2082 = vadd.f32 %v1928, %v2081
    %v2083 = vtanh.pop %v2082
    %v2084 = vsub.f32 1.0, %v2079
    %v2085 = vmul.f32 %v2084, %v2083
    %v2086 = vmul.f32 %v2079, %v1925
    %v2087 = vadd.f32 %v2085, %v2086
    %v2089 = vlaneseq
    %v2090 = vshrl.u32 %v2089, 7
    %v2091 = vsub.s32 0, %v2090
    %v2092 = vrot.slane %v1603, %v2091
    %v2093 = vlaneseq
    %v2094 = vshrl.u32 %v2093, 7
    %v2095 = vsub.s32 1, %v2094
    %v2096 = vrot.slane %v1603, %v2095
    %v2097 = vlaneseq
    %v2098 = vshrl.u32 %v2097, 7
    %v2099 = vsub.s32 2, %v2098
    %v2100 = vrot.slane %v1603, %v2099
    %2104 = vmatprep.subr.mxu0 %v1667
    %2105 = vmatpush1.msra.mxu0 %v1666
    %2106 = vmatprep.subr.mxu0 %v1670
    %2107 = vmatpush1.msra.mxu0 %v1669
    %2108 = vmatprep.subr.mxu0 %v1673
    %2109 = vmatpush1.msra.mxu0 %v1672
    %2110 = vmatprep.subr.mxu0 %v1676
    %2111 = vmatpush1.msra.mxu0 %v1675
    %2112 = vmatprep.subr.mxu0 %v1679
    %2113 = vmatpush1.msra.mxu0 %v1678
    %2114 = vmatprep.subr.mxu0 %v1682
    %2115 = vmatpush1.msra.mxu0 %v1681
    %2116 = vmatprep.subr.mxu0 %v1685
    %2117 = vmatpush1.msra.mxu0 %v1684
    %2118 = vmatprep.subr.mxu0 %v1688
    %2119 = vmatpush1.msra.mxu0 %v1687
    %2120 = vmatprep.subr.mxu0 %v1691
    %2121 = vmatpush1.msra.mxu0 %v1690
    %2122 = vmatprep.subr.mxu0 %v1694
    %2123 = vmatpush1.msra.mxu0 %v1693
    %2124 = vmatprep.subr.mxu0 %v1697
    %2125 = vmatpush1.msra.mxu0 %v1696
    %2126 = vmatprep.subr.mxu0 %v1700
    %2127 = vmatpush1.msra.mxu0 %v1699
    %2128 = vmatprep.subr.mxu0 %v1703
    %2129 = vmatpush1.msra.mxu0 %v1702
    %2130 = vmatprep.subr.mxu0 %v1706
    %2131 = vmatpush1.msra.mxu0 %v1705
    %2132 = vmatprep.subr.mxu0 %v1709
    %2133 = vmatpush1.msra.mxu0 %v1708
    %2134 = vmatprep.subr.mxu0 %v1712
    %2135 = vmatpush1.msra.mxu0 %v1711
    %2136 = vmatprep.subr.mxu0 0.0
    %2137 = vmatpush1.msra.mxu0 0.0
    %2138 = vmatprep.subr.mxu0 0.0
    %2139 = vmatpush1.msra.mxu0 0.0
    %2140 = vmatprep.subr.mxu0 0.0
    %2141 = vmatpush1.msra.mxu0 0.0
    %2142 = vmatprep.subr.mxu0 0.0
    %2143 = vmatpush1.msra.mxu0 0.0
    %2144 = vmatprep.subr.mxu0 0.0
    %2145 = vmatpush1.msra.mxu0 0.0
    %2146 = vmatprep.subr.mxu0 0.0
    %2147 = vmatpush1.msra.mxu0 0.0
    %2148 = vmatprep.subr.mxu0 0.0
    %2149 = vmatpush1.msra.mxu0 0.0
    %2150 = vmatprep.subr.mxu0 0.0
    %2151 = vmatpush1.msra.mxu0 0.0
    %2152 = vmatprep.subr.mxu0 0.0
    %2153 = vmatpush1.msra.mxu0 0.0
    %2154 = vmatprep.subr.mxu0 0.0
    %2155 = vmatpush1.msra.mxu0 0.0
    %2156 = vmatprep.subr.mxu0 0.0
    %2157 = vmatpush1.msra.mxu0 0.0
    %2158 = vmatprep.subr.mxu0 0.0
    %2159 = vmatpush1.msra.mxu0 0.0
    %2160 = vmatprep.subr.mxu0 0.0
    %2161 = vmatpush1.msra.mxu0 0.0
    %2162 = vmatprep.subr.mxu0 0.0
    %2163 = vmatpush1.msra.mxu0 0.0
    %2164 = vmatprep.subr.mxu0 0.0
    %2165 = vmatpush1.msra.mxu0 0.0
    %2166 = vmatprep.subr.mxu0 0.0
    %2167 = vmatpush1.msra.mxu0 0.0
    %2168 = vmatprep.mubr.f32.mxu0 0.0
    %2169 = vmatmul.mubr.f32.gmra.mrb[0].mxu0 %v1925
    %v2170 = vpop.f32.mrb[0].mxu0
    %v2171 = vadd.f32 %v2092, %v2170
    %v2172 = vpop.f32.mrb[0].mxu0
    %v2173 = vadd.f32 %v2096, %v2172
    %2174 = vdwg.mxu0
    %2175 = vmatprep.subr.mxu0 0.0
    %2176 = vmatpush1.msra.mxu0 %v1668
    %2177 = vmatprep.subr.mxu0 0.0
    %2178 = vmatpush1.msra.mxu0 %v1671
    %2179 = vmatprep.subr.mxu0 0.0
    %2180 = vmatpush1.msra.mxu0 %v1674
    %2181 = vmatprep.subr.mxu0 0.0
    %2182 = vmatpush1.msra.mxu0 %v1677
    %2183 = vmatprep.subr.mxu0 0.0
    %2184 = vmatpush1.msra.mxu0 %v1680
    %2185 = vmatprep.subr.mxu0 0.0
    %2186 = vmatpush1.msra.mxu0 %v1683
    %2187 = vmatprep.subr.mxu0 0.0
    %2188 = vmatpush1.msra.mxu0 %v1686
    %2189 = vmatprep.subr.mxu0 0.0
    %2190 = vmatpush1.msra.mxu0 %v1689
    %2191 = vmatprep.subr.mxu0 0.0
    %2192 = vmatpush1.msra.mxu0 %v1692
    %2193 = vmatprep.subr.mxu0 0.0
    %2194 = vmatpush1.msra.mxu0 %v1695
    %2195 = vmatprep.subr.mxu0 0.0
    %2196 = vmatpush1.msra.mxu0 %v1698
    %2197 = vmatprep.subr.mxu0 0.0
    %2198 = vmatpush1.msra.mxu0 %v1701
    %2199 = vmatprep.subr.mxu0 0.0
    %2200 = vmatpush1.msra.mxu0 %v1704
    %2201 = vmatprep.subr.mxu0 0.0
    %2202 = vmatpush1.msra.mxu0 %v1707
    %2203 = vmatprep.subr.mxu0 0.0
    %2204 = vmatpush1.msra.mxu0 %v1710
    %2205 = vmatprep.subr.mxu0 0.0
    %2206 = vmatpush1.msra.mxu0 %v1713
    %2207 = vmatprep.subr.mxu0 0.0
    %2208 = vmatpush1.msra.mxu0 0.0
    %2209 = vmatprep.subr.mxu0 0.0
    %2210 = vmatpush1.msra.mxu0 0.0
    %2211 = vmatprep.subr.mxu0 0.0
    %2212 = vmatpush1.msra.mxu0 0.0
    %2213 = vmatprep.subr.mxu0 0.0
    %2214 = vmatpush1.msra.mxu0 0.0
    %2215 = vmatprep.subr.mxu0 0.0
    %2216 = vmatpush1.msra.mxu0 0.0
    %2217 = vmatprep.subr.mxu0 0.0
    %2218 = vmatpush1.msra.mxu0 0.0
    %2219 = vmatprep.subr.mxu0 0.0
    %2220 = vmatpush1.msra.mxu0 0.0
    %2221 = vmatprep.subr.mxu0 0.0
    %2222 = vmatpush1.msra.mxu0 0.0
    %2223 = vmatprep.subr.mxu0 0.0
    %2224 = vmatpush1.msra.mxu0 0.0
    %2225 = vmatprep.subr.mxu0 0.0
    %2226 = vmatpush1.msra.mxu0 0.0
    %2227 = vmatprep.subr.mxu0 0.0
    %2228 = vmatpush1.msra.mxu0 0.0
    %2229 = vmatprep.subr.mxu0 0.0
    %2230 = vmatpush1.msra.mxu0 0.0
    %2231 = vmatprep.subr.mxu0 0.0
    %2232 = vmatpush1.msra.mxu0 0.0
    %2233 = vmatprep.subr.mxu0 0.0
    %2234 = vmatpush1.msra.mxu0 0.0
    %2235 = vmatprep.subr.mxu0 0.0
    %2236 = vmatpush1.msra.mxu0 0.0
    %2237 = vmatprep.subr.mxu0 0.0
    %2238 = vmatpush1.msra.mxu0 0.0
    %2239 = vmatprep.mubr.f32.mxu0 0.0
    %2240 = vmatmul.mubr.f32.gmra.mrb[0].mxu0 %v1925
    %v2241 = vpop.f32.mrb[0].mxu0
    %v2242 = vadd.f32 %v2100, %v2241
    %v2243 = vpop.f32.mrb[0].mxu0
    %2244 = vdwg.mxu0
    %2245 = vmatprep.subr.mxu0 %v1715
    %2246 = vmatpush1.msra.mxu0 %v1714
    %2247 = vmatprep.subr.mxu0 %v1718
    %2248 = vmatpush1.msra.mxu0 %v1717
    %2249 = vmatprep.subr.mxu0 %v1721
    %2250 = vmatpush1.msra.mxu0 %v1720
    %2251 = vmatprep.subr.mxu0 %v1724
    %2252 = vmatpush1.msra.mxu0 %v1723
    %2253 = vmatprep.subr.mxu0 %v1727
    %2254 = vmatpush1.msra.mxu0 %v1726
    %2255 = vmatprep.subr.mxu0 %v1730
    %2256 = vmatpush1.msra.mxu0 %v1729
    %2257 = vmatprep.subr.mxu0 %v1733
    %2258 = vmatpush1.msra.mxu0 %v1732
    %2259 = vmatprep.subr.mxu0 %v1736
    %2260 = vmatpush1.msra.mxu0 %v1735
    %2261 = vmatprep.subr.mxu0 %v1739
    %2262 = vmatpush1.msra.mxu0 %v1738
    %2263 = vmatprep.subr.mxu0 %v1742
    %2264 = vmatpush1.msra.mxu0 %v1741
    %2265 = vmatprep.subr.mxu0 %v1745
    %2266 = vmatpush1.msra.mxu0 %v1744
    %2267 = vmatprep.subr.mxu0 %v1748
    %2268 = vmatpush1.msra.mxu0 %v1747
    %2269 = vmatprep.subr.mxu0 %v1751
    %2270 = vmatpush1.msra.mxu0 %v1750
    %2271 = vmatprep.subr.mxu0 %v1754
    %2272 = vmatpush1.msra.mxu0 %v1753
    %2273 = vmatprep.subr.mxu0 %v1757
    %2274 = vmatpush1.msra.mxu0 %v1756
    %2275 = vmatprep.subr.mxu0 %v1760
    %2276 = vmatpush1.msra.mxu0 %v1759
    %2277 = vmatprep.subr.mxu0 0.0
    %2278 = vmatpush1.msra.mxu0 0.0
    %2279 = vmatprep.subr.mxu0 0.0
    %2280 = vmatpush1.msra.mxu0 0.0
    %2281 = vmatprep.subr.mxu0 0.0
    %2282 = vmatpush1.msra.mxu0 0.0
    %2283 = vmatprep.subr.mxu0 0.0
    %2284 = vmatpush1.msra.mxu0 0.0
    %2285 = vmatprep.subr.mxu0 0.0
    %2286 = vmatpush1.msra.mxu0 0.0
    %2287 = vmatprep.subr.mxu0 0.0
    %2288 = vmatpush1.msra.mxu0 0.0
    %2289 = vmatprep.subr.mxu0 0.0
    %2290 = vmatpush1.msra.mxu0 0.0
    %2291 = vmatprep.subr.mxu0 0.0
    %2292 = vmatpush1.msra.mxu0 0.0
    %2293 = vmatprep.subr.mxu0 0.0
    %2294 = vmatpush1.msra.mxu0 0.0
    %2295 = vmatprep.subr.mxu0 0.0
    %2296 = vmatpush1.msra.mxu0 0.0
    %2297 = vmatprep.subr.mxu0 0.0
    %2298 = vmatpush1.msra.mxu0 0.0
    %2299 = vmatprep.subr.mxu0 0.0
    %2300 = vmatpush1.msra.mxu0 0.0
    %2301 = vmatprep.subr.mxu0 0.0
    %2302 = vmatpush1.msra.mxu0 0.0
    %2303 = vmatprep.subr.mxu0 0.0
    %2304 = vmatpush1.msra.mxu0 0.0
    %2305 = vmatprep.subr.mxu0 0.0
    %2306 = vmatpush1.msra.mxu0 0.0
    %2307 = vmatprep.subr.mxu0 0.0
    %2308 = vmatpush1.msra.mxu0 0.0
    %2309 = vmatprep.mubr.f32.mxu0 0.0
    %2310 = vmatmul.mubr.f32.gmra.mrb[0].mxu0 %v1763
    %v2311 = vpop.f32.mrb[0].mxu0
    %v2312 = vadd.f32 0.0, %v2311
    %v2313 = vpop.f32.mrb[0].mxu0
    %v2314 = vadd.f32 0.0, %v2313
    %2315 = vdwg.mxu0
    %2316 = vmatprep.subr.mxu0 0.0
    %2317 = vmatpush1.msra.mxu0 %v1716
    %2318 = vmatprep.subr.mxu0 0.0
    %2319 = vmatpush1.msra.mxu0 %v1719
    %2320 = vmatprep.subr.mxu0 0.0
    %2321 = vmatpush1.msra.mxu0 %v1722
    %2322 = vmatprep.subr.mxu0 0.0
    %2323 = vmatpush1.msra.mxu0 %v1725
    %2324 = vmatprep.subr.mxu0 0.0
    %2325 = vmatpush1.msra.mxu0 %v1728
    %2326 = vmatprep.subr.mxu0 0.0
    %2327 = vmatpush1.msra.mxu0 %v1731
    %2328 = vmatprep.subr.mxu0 0.0
    %2329 = vmatpush1.msra.mxu0 %v1734
    %2330 = vmatprep.subr.mxu0 0.0
    %2331 = vmatpush1.msra.mxu0 %v1737
    %2332 = vmatprep.subr.mxu0 0.0
    %2333 = vmatpush1.msra.mxu0 %v1740
    %2334 = vmatprep.subr.mxu0 0.0
    %2335 = vmatpush1.msra.mxu0 %v1743
    %2336 = vmatprep.subr.mxu0 0.0
    %2337 = vmatpush1.msra.mxu0 %v1746
    %2338 = vmatprep.subr.mxu0 0.0
    %2339 = vmatpush1.msra.mxu0 %v1749
    %2340 = vmatprep.subr.mxu0 0.0
    %2341 = vmatpush1.msra.mxu0 %v1752
    %2342 = vmatprep.subr.mxu0 0.0
    %2343 = vmatpush1.msra.mxu0 %v1755
    %2344 = vmatprep.subr.mxu0 0.0
    %2345 = vmatpush1.msra.mxu0 %v1758
    %2346 = vmatprep.subr.mxu0 0.0
    %2347 = vmatpush1.msra.mxu0 %v1761
    %2348 = vmatprep.subr.mxu0 0.0
    %2349 = vmatpush1.msra.mxu0 0.0
    %2350 = vmatprep.subr.mxu0 0.0
    %2351 = vmatpush1.msra.mxu0 0.0
    %2352 = vmatprep.subr.mxu0 0.0
    %2353 = vmatpush1.msra.mxu0 0.0
    %2354 = vmatprep.subr.mxu0 0.0
    %2355 = vmatpush1.msra.mxu0 0.0
    %2356 = vmatprep.subr.mxu0 0.0
    %2357 = vmatpush1.msra.mxu0 0.0
    %2358 = vmatprep.subr.mxu0 0.0
    %2359 = vmatpush1.msra.mxu0 0.0
    %2360 = vmatprep.subr.mxu0 0.0
    %2361 = vmatpush1.msra.mxu0 0.0
    %2362 = vmatprep.subr.mxu0 0.0
    %2363 = vmatpush1.msra.mxu0 0.0
    %2364 = vmatprep.subr.mxu0 0.0
    %2365 = vmatpush1.msra.mxu0 0.0
    %2366 = vmatprep.subr.mxu0 0.0
    %2367 = vmatpush1.msra.mxu0 0.0
    %2368 = vmatprep.subr.mxu0 0.0
    %2369 = vmatpush1.msra.mxu0 0.0
    %2370 = vmatprep.subr.mxu0 0.0
    %2371 = vmatpush1.msra.mxu0 0.0
    %2372 = vmatprep.subr.mxu0 0.0
    %2373 = vmatpush1.msra.mxu0 0.0
    %2374 = vmatprep.subr.mxu0 0.0
    %2375 = vmatpush1.msra.mxu0 0.0
    %2376 = vmatprep.subr.mxu0 0.0
    %2377 = vmatpush1.msra.mxu0 0.0
    %2378 = vmatprep.subr.mxu0 0.0
    %2379 = vmatpush1.msra.mxu0 0.0
    %2380 = vmatprep.mubr.f32.mxu0 0.0
    %2381 = vmatmul.mubr.f32.gmra.mrb[0].mxu0 %v1763
    %v2382 = vpop.f32.mrb[0].mxu0
    %v2383 = vadd.f32 0.0, %v2382
    %v2384 = vpop.f32.mrb[0].mxu0
    %2385 = vdwg.mxu0
    %v2386 = vadd.f32 %v2171, %v2312
    %v2387 = vmul.f32 %v2386, 0.5
    %v2388 = vtanh.pop %v2387
    %v2389 = vadd.f32 %v2388, 1.0
    %v2390 = vmul.f32 %v2389, 0.5
    %v2391 = vadd.f32 %v2173, %v2314
    %v2392 = vmul.f32 %v2391, 0.5
    %v2393 = vtanh.pop %v2392
    %v2394 = vadd.f32 %v2393, 1.0
    %v2395 = vmul.f32 %v2394, 0.5
    %v2396 = vadd.f32 %v2383, %v1616
    %v2397 = vmul.f32 %v2390, %v2396
    %v2398 = vadd.f32 %v2242, %v2397
    %v2399 = vtanh.pop %v2398
    %v2400 = vsub.f32 1.0, %v2395
    %v2401 = vmul.f32 %v2400, %v2399
    %v2402 = vmul.f32 %v2395, %v1763
    %v2403 = vadd.f32 %v2401, %v2402
    %2404 = vst [vmem:[%s11] sm:$0xff] %v2403
    %v2405 = vld [vmem:[#allocation2 + $0x30] sm:$0xff]
    %v2406 = vld [vmem:[#allocation2 + $0x38] sm:$0xff]
    %v2407 = vld [vmem:[#allocation2 + $0x40] sm:$0xff]
    %2408 = vmatprep.subr.mxu0 %v1619
    %2409 = vmatpush1.msra.mxu0 %v1618
    %2410 = vmatprep.subr.mxu0 %v1622
    %2411 = vmatpush1.msra.mxu0 %v1621
    %2412 = vmatprep.subr.mxu0 %v1625
    %2413 = vmatpush1.msra.mxu0 %v1624
    %2414 = vmatprep.subr.mxu0 %v1628
    %2415 = vmatpush1.msra.mxu0 %v1627
    %2416 = vmatprep.subr.mxu0 %v1631
    %2417 = vmatpush1.msra.mxu0 %v1630
    %2418 = vmatprep.subr.mxu0 %v1634
    %2419 = vmatpush1.msra.mxu0 %v1633
    %2420 = vmatprep.subr.mxu0 %v1637
    %2421 = vmatpush1.msra.mxu0 %v1636
    %2422 = vmatprep.subr.mxu0 %v1640
    %2423 = vmatpush1.msra.mxu0 %v1639
    %2424 = vmatprep.subr.mxu0 %v1643
    %2425 = vmatpush1.msra.mxu0 %v1642
    %2426 = vmatprep.subr.mxu0 %v1646
    %2427 = vmatpush1.msra.mxu0 %v1645
    %2428 = vmatprep.subr.mxu0 %v1649
    %2429 = vmatpush1.msra.mxu0 %v1648
    %2430 = vmatprep.subr.mxu0 %v1652
    %2431 = vmatpush1.msra.mxu0 %v1651
    %2432 = vmatprep.subr.mxu0 %v1655
    %2433 = vmatpush1.msra.mxu0 %v1654
    %2434 = vmatprep.subr.mxu0 %v1658
    %2435 = vmatpush1.msra.mxu0 %v1657
    %2436 = vmatprep.subr.mxu0 %v1661
    %2437 = vmatpush1.msra.mxu0 %v1660
    %2438 = vmatprep.subr.mxu0 %v1664
    %2439 = vmatpush1.msra.mxu0 %v1663
    %2440 = vmatprep.subr.mxu0 0.0
    %2441 = vmatpush1.msra.mxu0 0.0
    %2442 = vmatprep.subr.mxu0 0.0
    %2443 = vmatpush1.msra.mxu0 0.0
    %2444 = vmatprep.subr.mxu0 0.0
    %2445 = vmatpush1.msra.mxu0 0.0
    %2446 = vmatprep.subr.mxu0 0.0
    %2447 = vmatpush1.msra.mxu0 0.0
    %2448 = vmatprep.subr.mxu0 0.0
    %2449 = vmatpush1.msra.mxu0 0.0
    %2450 = vmatprep.subr.mxu0 0.0
    %2451 = vmatpush1.msra.mxu0 0.0
    %2452 = vmatprep.subr.mxu0 0.0
    %2453 = vmatpush1.msra.mxu0 0.0
    %2454 = vmatprep.subr.mxu0 0.0
    %2455 = vmatpush1.msra.mxu0 0.0
    %2456 = vmatprep.subr.mxu0 0.0
    %2457 = vmatpush1.msra.mxu0 0.0
    %2458 = vmatprep.subr.mxu0 0.0
    %2459 = vmatpush1.msra.mxu0 0.0
    %2460 = vmatprep.subr.mxu0 0.0
    %2461 = vmatpush1.msra.mxu0 0.0
    %2462 = vmatprep.subr.mxu0 0.0
    %2463 = vmatpush1.msra.mxu0 0.0
    %2464 = vmatprep.subr.mxu0 0.0
    %2465 = vmatpush1.msra.mxu0 0.0
    %2466 = vmatprep.subr.mxu0 0.0
    %2467 = vmatpush1.msra.mxu0 0.0
    %2468 = vmatprep.subr.mxu0 0.0
    %2469 = vmatpush1.msra.mxu0 0.0
    %2470 = vmatprep.subr.mxu0 0.0
    %2471 = vmatpush1.msra.mxu0 0.0
    %2472 = vmatprep.mubr.f32.mxu0 0.0
    %2473 = vmatmul.mubr.f32.gmra.mrb[0].mxu0 %v2087
    %v2474 = vpop.f32.mrb[0].mxu0
    %v2475 = vadd.f32 0.0, %v2474
    %v2476 = vpop.f32.mrb[0].mxu0
    %v2477 = vadd.f32 0.0, %v2476
    %2478 = vdwg.mxu0
    %2479 = vmatprep.subr.mxu0 0.0
    %2480 = vmatpush1.msra.mxu0 %v1620
    %2481 = vmatprep.subr.mxu0 0.0
    %2482 = vmatpush1.msra.mxu0 %v1623
    %2483 = vmatprep.subr.mxu0 0.0
    %2484 = vmatpush1.msra.mxu0 %v1626
    %2485 = vmatprep.subr.mxu0 0.0
    %2486 = vmatpush1.msra.mxu0 %v1629
    %2487 = vmatprep.subr.mxu0 0.0
    %2488 = vmatpush1.msra.mxu0 %v1632
    %2489 = vmatprep.subr.mxu0 0.0
    %2490 = vmatpush1.msra.mxu0 %v1635
    %2491 = vmatprep.subr.mxu0 0.0
    %2492 = vmatpush1.msra.mxu0 %v1638
    %2493 = vmatprep.subr.mxu0 0.0
    %2494 = vmatpush1.msra.mxu0 %v1641
    %2495 = vmatprep.subr.mxu0 0.0
    %2496 = vmatpush1.msra.mxu0 %v1644
    %2497 = vmatprep.subr.mxu0 0.0
    %2498 = vmatpush1.msra.mxu0 %v1647
    %2499 = vmatprep.subr.mxu0 0.0
    %2500 = vmatpush1.msra.mxu0 %v1650
    %2501 = vmatprep.subr.mxu0 0.0
    %2502 = vmatpush1.msra.mxu0 %v1653
    %2503 = vmatprep.subr.mxu0 0.0
    %2504 = vmatpush1.msra.mxu0 %v1656
    %2505 = vmatprep.subr.mxu0 0.0
    %2506 = vmatpush1.msra.mxu0 %v1659
    %2507 = vmatprep.subr.mxu0 0.0
    %2508 = vmatpush1.msra.mxu0 %v1662
    %2509 = vmatprep.subr.mxu0 0.0
    %2510 = vmatpush1.msra.mxu0 %v1665
    %2511 = vmatprep.subr.mxu0 0.0
    %2512 = vmatpush1.msra.mxu0 0.0
    %2513 = vmatprep.subr.mxu0 0.0
    %2514 = vmatpush1.msra.mxu0 0.0
    %2515 = vmatprep.subr.mxu0 0.0
    %2516 = vmatpush1.msra.mxu0 0.0
    %2517 = vmatprep.subr.mxu0 0.0
    %2518 = vmatpush1.msra.mxu0 0.0
    %2519 = vmatprep.subr.mxu0 0.0
    %2520 = vmatpush1.msra.mxu0 0.0
    %2521 = vmatprep.subr.mxu0 0.0
    %2522 = vmatpush1.msra.mxu0 0.0
    %2523 = vmatprep.subr.mxu0 0.0
    %2524 = vmatpush1.msra.mxu0 0.0
    %2525 = vmatprep.subr.mxu0 0.0
    %2526 = vmatpush1.msra.mxu0 0.0
    %2527 = vmatprep.subr.mxu0 0.0
    %2528 = vmatpush1.msra.mxu0 0.0
    %2529 = vmatprep.subr.mxu0 0.0
    %2530 = vmatpush1.msra.mxu0 0.0
    %2531 = vmatprep.subr.mxu0 0.0
    %2532 = vmatpush1.msra.mxu0 0.0
    %2533 = vmatprep.subr.mxu0 0.0
    %2534 = vmatpush1.msra.mxu0 0.0
    %2535 = vmatprep.subr.mxu0 0.0
    %2536 = vmatpush1.msra.mxu0 0.0
    %2537 = vmatprep.subr.mxu0 0.0
    %2538 = vmatpush1.msra.mxu0 0.0
    %2539 = vmatprep.subr.mxu0 0.0
    %2540 = vmatpush1.msra.mxu0 0.0
    %2541 = vmatprep.subr.mxu0 0.0
    %2542 = vmatpush1.msra.mxu0 0.0
    %2543 = vmatprep.mubr.f32.mxu0 0.0
    %2544 = vmatmul.mubr.f32.gmra.mrb[0].mxu0 %v2087
    %v2545 = vpop.f32.mrb[0].mxu0
    %v2546 = vadd.f32 0.0, %v2545
    %v2547 = vpop.f32.mrb[0].mxu0
    %2548 = vdwg.mxu0
    %v2549 = vadd.f32 %v2405, %v2475
    %v2550 = vmul.f32 %v2549, 0.5
    %v2551 = vtanh.pop %v2550
    %v2552 = vadd.f32 %v2551, 1.0
    %v2553 = vmul.f32 %v2552, 0.5
    %v2554 = vadd.f32 %v2406, %v2477
    %v2555 = vmul.f32 %v2554, 0.5
    %v2556 = vtanh.pop %v2555
    %v2557 = vadd.f32 %v2556, 1.0
    %v2558 = vmul.f32 %v2557, 0.5
    %v2559 = vadd.f32 %v2546, %v1609
    %v2560 = vmul.f32 %v2553, %v2559
    %v2561 = vadd.f32 %v2407, %v2560
    %v2562 = vtanh.pop %v2561
    %v2563 = vsub.f32 1.0, %v2558
    %v2564 = vmul.f32 %v2563, %v2562
    %v2565 = vmul.f32 %v2558, %v2087
    %v2566 = vadd.f32 %v2564, %v2565
    %2567 = vmatprep.subr.mxu0 %v1667
    %2568 = vmatpush1.msra.mxu0 %v1666
    %2569 = vmatprep.subr.mxu0 %v1670
    %2570 = vmatpush1.msra.mxu0 %v1669
    %2571 = vmatprep.subr.mxu0 %v1673
    %2572 = vmatpush1.msra.mxu0 %v1672
    %2573 = vmatprep.subr.mxu0 %v1676
    %2574 = vmatpush1.msra.mxu0 %v1675
    %2575 = vmatprep.subr.mxu0 %v1679
    %2576 = vmatpush1.msra.mxu0 %v1678
    %2577 = vmatprep.subr.mxu0 %v1682
    %2578 = vmatpush1.msra.mxu0 %v1681
    %2579 = vmatprep.subr.mxu0 %v1685
    %2580 = vmatpush1.msra.mxu0 %v1684
    %2581 = vmatprep.subr.mxu0 %v1688
    %2582 = vmatpush1.msra.mxu0 %v1687
    %2583 = vmatprep.subr.mxu0 %v1691
    %2584 = vmatpush1.msra.mxu0 %v1690
    %2585 = vmatprep.subr.mxu0 %v1694
    %2586 = vmatpush1.msra.mxu0 %v1693
    %2587 = vmatprep.subr.mxu0 %v1697
    %2588 = vmatpush1.msra.mxu0 %v1696
    %2589 = vmatprep.subr.mxu0 %v1700
    %2590 = vmatpush1.msra.mxu0 %v1699
    %2591 = vmatprep.subr.mxu0 %v1703
    %2592 = vmatpush1.msra.mxu0 %v1702
    %2593 = vmatprep.subr.mxu0 %v1706
    %2594 = vmatpush1.msra.mxu0 %v1705
    %2595 = vmatprep.subr.mxu0 %v1709
    %2596 = vmatpush1.msra.mxu0 %v1708
    %2597 = vmatprep.subr.mxu0 %v1712
    %2598 = vmatpush1.msra.mxu0 %v1711
    %2599 = vmatprep.subr.mxu0 0.0
    %2600 = vmatpush1.msra.mxu0 0.0
    %2601 = vmatprep.subr.mxu0 0.0
    %2602 = vmatpush1.msra.mxu0 0.0
    %2603 = vmatprep.subr.mxu0 0.0
    %2604 = vmatpush1.msra.mxu0 0.0
    %2605 = vmatprep.subr.mxu0 0.0
    %2606 = vmatpush1.msra.mxu0 0.0
    %2607 = vmatprep.subr.mxu0 0.0
    %2608 = vmatpush1.msra.mxu0 0.0
    %2609 = vmatprep.subr.mxu0 0.0
    %2610 = vmatpush1.msra.mxu0 0.0
    %2611 = vmatprep.subr.mxu0 0.0
    %2612 = vmatpush1.msra.mxu0 0.0
    %2613 = vmatprep.subr.mxu0 0.0
    %2614 = vmatpush1.msra.mxu0 0.0
    %2615 = vmatprep.subr.mxu0 0.0
    %2616 = vmatpush1.msra.mxu0 0.0
    %2617 = vmatprep.subr.mxu0 0.0
    %2618 = vmatpush1.msra.mxu0 0.0
    %2619 = vmatprep.subr.mxu0 0.0
    %2620 = vmatpush1.msra.mxu0 0.0
    %2621 = vmatprep.subr.mxu0 0.0
    %2622 = vmatpush1.msra.mxu0 0.0
    %2623 = vmatprep.subr.mxu0 0.0
    %2624 = vmatpush1.msra.mxu0 0.0
    %2625 = vmatprep.subr.mxu0 0.0
    %2626 = vmatpush1.msra.mxu0 0.0
    %2627 = vmatprep.subr.mxu0 0.0
    %2628 = vmatpush1.msra.mxu0 0.0
    %2629 = vmatprep.subr.mxu0 0.0
    %2630 = vmatpush1.msra.mxu0 0.0
    %2631 = vmatprep.mubr.f32.mxu0 0.0
    %2632 = vmatmul.mubr.f32.gmra.mrb[0].mxu0 %v2087
    %v2633 = vpop.f32.mrb[0].mxu0
    %v2634 = vadd.f32 %v2092, %v2633
    %v2635 = vpop.f32.mrb[0].mxu0
    %v2636 = vadd.f32 %v2096, %v2635
    %2637 = vdwg.mxu0
    %2638 = vmatprep.subr.mxu0 0.0
    %2639 = vmatpush1.msra.mxu0 %v1668
    %2640 = vmatprep.subr.mxu0 0.0
    %2641 = vmatpush1.msra.mxu0 %v1671
    %2642 = vmatprep.subr.mxu0 0.0
    %2643 = vmatpush1.msra.mxu0 %v1674
    %2644 = vmatprep.subr.mxu0 0.0
    %2645 = vmatpush1.msra.mxu0 %v1677
    %2646 = vmatprep.subr.mxu0 0.0
    %2647 = vmatpush1.msra.mxu0 %v1680
    %2648 = vmatprep.subr.mxu0 0.0
    %2649 = vmatpush1.msra.mxu0 %v1683
    %2650 = vmatprep.subr.mxu0 0.0
    %2651 = vmatpush1.msra.mxu0 %v1686
    %2652 = vmatprep.subr.mxu0 0.0
    %2653 = vmatpush1.msra.mxu0 %v1689
    %2654 = vmatprep.subr.mxu0 0.0
    %2655 = vmatpush1.msra.mxu0 %v1692
    %2656 = vmatprep.subr.mxu0 0.0
    %2657 = vmatpush1.msra.mxu0 %v1695
    %2658 = vmatprep.subr.mxu0 0.0
    %2659 = vmatpush1.msra.mxu0 %v1698
    %2660 = vmatprep.subr.mxu0 0.0
    %2661 = vmatpush1.msra.mxu0 %v1701
    %2662 = vmatprep.subr.mxu0 0.0
    %2663 = vmatpush1.msra.mxu0 %v1704
    %2664 = vmatprep.subr.mxu0 0.0
    %2665 = vmatpush1.msra.mxu0 %v1707
    %2666 = vmatprep.subr.mxu0 0.0
    %2667 = vmatpush1.msra.mxu0 %v1710
    %2668 = vmatprep.subr.mxu0 0.0
    %2669 = vmatpush1.msra.mxu0 %v1713
    %2670 = vmatprep.subr.mxu0 0.0
    %2671 = vmatpush1.msra.mxu0 0.0
    %2672 = vmatprep.subr.mxu0 0.0
    %2673 = vmatpush1.msra.mxu0 0.0
    %2674 = vmatprep.subr.mxu0 0.0
    %2675 = vmatpush1.msra.mxu0 0.0
    %2676 = vmatprep.subr.mxu0 0.0
    %2677 = vmatpush1.msra.mxu0 0.0
    %2678 = vmatprep.subr.mxu0 0.0
    %2679 = vmatpush1.msra.mxu0 0.0
    %2680 = vmatprep.subr.mxu0 0.0
    %2681 = vmatpush1.msra.mxu0 0.0
    %2682 = vmatprep.subr.mxu0 0.0
    %2683 = vmatpush1.msra.mxu0 0.0
    %2684 = vmatprep.subr.mxu0 0.0
    %2685 = vmatpush1.msra.mxu0 0.0
    %2686 = vmatprep.subr.mxu0 0.0
    %2687 = vmatpush1.msra.mxu0 0.0
    %2688 = vmatprep.subr.mxu0 0.0
    %2689 = vmatpush1.msra.mxu0 0.0
    %2690 = vmatprep.subr.mxu0 0.0
    %2691 = vmatpush1.msra.mxu0 0.0
    %2692 = vmatprep.subr.mxu0 0.0
    %2693 = vmatpush1.msra.mxu0 0.0
    %2694 = vmatprep.subr.mxu0 0.0
    %2695 = vmatpush1.msra.mxu0 0.0
    %2696 = vmatprep.subr.mxu0 0.0
    %2697 = vmatpush1.msra.mxu0 0.0
    %2698 = vmatprep.subr.mxu0 0.0
    %2699 = vmatpush1.msra.mxu0 0.0
    %2700 = vmatprep.subr.mxu0 0.0
    %2701 = vmatpush1.msra.mxu0 0.0
    %2702 = vmatprep.mubr.f32.mxu0 0.0
    %2703 = vmatmul.mubr.f32.gmra.mrb[0].mxu0 %v2087
    %v2704 = vpop.f32.mrb[0].mxu0
    %v2705 = vadd.f32 %v2100, %v2704
    %v2706 = vpop.f32.mrb[0].mxu0
    %2707 = vdwg.mxu0
    %2708 = vmatprep.subr.mxu0 %v1715
    %2709 = vmatpush1.msra.mxu0 %v1714
    %2710 = vmatprep.subr.mxu0 %v1718
    %2711 = vmatpush1.msra.mxu0 %v1717
    %2712 = vmatprep.subr.mxu0 %v1721
    %2713 = vmatpush1.msra.mxu0 %v1720
    %2714 = vmatprep.subr.mxu0 %v1724
    %2715 = vmatpush1.msra.mxu0 %v1723
    %2716 = vmatprep.subr.mxu0 %v1727
    %2717 = vmatpush1.msra.mxu0 %v1726
    %2718 = vmatprep.subr.mxu0 %v1730
    %2719 = vmatpush1.msra.mxu0 %v1729
    %2720 = vmatprep.subr.mxu0 %v1733
    %2721 = vmatpush1.msra.mxu0 %v1732
    %2722 = vmatprep.subr.mxu0 %v1736
    %2723 = vmatpush1.msra.mxu0 %v1735
    %2724 = vmatprep.subr.mxu0 %v1739
    %2725 = vmatpush1.msra.mxu0 %v1738
    %2726 = vmatprep.subr.mxu0 %v1742
    %2727 = vmatpush1.msra.mxu0 %v1741
    %2728 = vmatprep.subr.mxu0 %v1745
    %2729 = vmatpush1.msra.mxu0 %v1744
    %2730 = vmatprep.subr.mxu0 %v1748
    %2731 = vmatpush1.msra.mxu0 %v1747
    %2732 = vmatprep.subr.mxu0 %v1751
    %2733 = vmatpush1.msra.mxu0 %v1750
    %2734 = vmatprep.subr.mxu0 %v1754
    %2735 = vmatpush1.msra.mxu0 %v1753
    %2736 = vmatprep.subr.mxu0 %v1757
    %2737 = vmatpush1.msra.mxu0 %v1756
    %2738 = vmatprep.subr.mxu0 %v1760
    %2739 = vmatpush1.msra.mxu0 %v1759
    %2740 = vmatprep.subr.mxu0 0.0
    %2741 = vmatpush1.msra.mxu0 0.0
    %2742 = vmatprep.subr.mxu0 0.0
    %2743 = vmatpush1.msra.mxu0 0.0
    %2744 = vmatprep.subr.mxu0 0.0
    %2745 = vmatpush1.msra.mxu0 0.0
    %2746 = vmatprep.subr.mxu0 0.0
    %2747 = vmatpush1.msra.mxu0 0.0
    %2748 = vmatprep.subr.mxu0 0.0
    %2749 = vmatpush1.msra.mxu0 0.0
    %2750 = vmatprep.subr.mxu0 0.0
    %2751 = vmatpush1.msra.mxu0 0.0
    %2752 = vmatprep.subr.mxu0 0.0
    %2753 = vmatpush1.msra.mxu0 0.0
    %2754 = vmatprep.subr.mxu0 0.0
    %2755 = vmatpush1.msra.mxu0 0.0
    %2756 = vmatprep.subr.mxu0 0.0
    %2757 = vmatpush1.msra.mxu0 0.0
    %2758 = vmatprep.subr.mxu0 0.0
    %2759 = vmatpush1.msra.mxu0 0.0
    %2760 = vmatprep.subr.mxu0 0.0
    %2761 = vmatpush1.msra.mxu0 0.0
    %2762 = vmatprep.subr.mxu0 0.0
    %2763 = vmatpush1.msra.mxu0 0.0
    %2764 = vmatprep.subr.mxu0 0.0
    %2765 = vmatpush1.msra.mxu0 0.0
    %2766 = vmatprep.subr.mxu0 0.0
    %2767 = vmatpush1.msra.mxu0 0.0
    %2768 = vmatprep.subr.mxu0 0.0
    %2769 = vmatpush1.msra.mxu0 0.0
    %2770 = vmatprep.subr.mxu0 0.0
    %2771 = vmatpush1.msra.mxu0 0.0
    %2772 = vmatprep.mubr.f32.mxu0 0.0
    %2773 = vmatmul.mubr.f32.gmra.mrb[0].mxu0 %v2403
    %v2774 = vpop.f32.mrb[0].mxu0
    %v2775 = vadd.f32 0.0, %v2774
    %v2776 = vpop.f32.mrb[0].mxu0
    %v2777 = vadd.f32 0.0, %v2776
    %2778 = vdwg.mxu0
    %2779 = vmatprep.subr.mxu0 0.0
    %2780 = vmatpush1.msra.mxu0 %v1716
    %2781 = vmatprep.subr.mxu0 0.0
    %2782 = vmatpush1.msra.mxu0 %v1719
    %2783 = vmatprep.subr.mxu0 0.0
    %2784 = vmatpush1.msra.mxu0 %v1722
    %2785 = vmatprep.subr.mxu0 0.0
    %2786 = vmatpush1.msra.mxu0 %v1725
    %2787 = vmatprep.subr.mxu0 0.0
    %2788 = vmatpush1.msra.mxu0 %v1728
    %2789 = vmatprep.subr.mxu0 0.0
    %2790 = vmatpush1.msra.mxu0 %v1731
    %2791 = vmatprep.subr.mxu0 0.0
    %2792 = vmatpush1.msra.mxu0 %v1734
    %2793 = vmatprep.subr.mxu0 0.0
    %2794 = vmatpush1.msra.mxu0 %v1737
    %2795 = vmatprep.subr.mxu0 0.0
    %2796 = vmatpush1.msra.mxu0 %v1740
    %2797 = vmatprep.subr.mxu0 0.0
    %2798 = vmatpush1.msra.mxu0 %v1743
    %2799 = vmatprep.subr.mxu0 0.0
    %2800 = vmatpush1.msra.mxu0 %v1746
    %2801 = vmatprep.subr.mxu0 0.0
    %2802 = vmatpush1.msra.mxu0 %v1749
    %2803 = vmatprep.subr.mxu0 0.0
    %2804 = vmatpush1.msra.mxu0 %v1752
    %2805 = vmatprep.subr.mxu0 0.0
    %2806 = vmatpush1.msra.mxu0 %v1755
    %2807 = vmatprep.subr.mxu0 0.0
    %2808 = vmatpush1.msra.mxu0 %v1758
    %2809 = vmatprep.subr.mxu0 0.0
    %2810 = vmatpush1.msra.mxu0 %v1761
    %2811 = vmatprep.subr.mxu0 0.0
    %2812 = vmatpush1.msra.mxu0 0.0
    %2813 = vmatprep.subr.mxu0 0.0
    %2814 = vmatpush1.msra.mxu0 0.0
    %2815 = vmatprep.subr.mxu0 0.0
    %2816 = vmatpush1.msra.mxu0 0.0
    %2817 = vmatprep.subr.mxu0 0.0
    %2818 = vmatpush1.msra.mxu0 0.0
    %2819 = vmatprep.subr.mxu0 0.0
    %2820 = vmatpush1.msra.mxu0 0.0
    %2821 = vmatprep.subr.mxu0 0.0
    %2822 = vmatpush1.msra.mxu0 0.0
    %2823 = vmatprep.subr.mxu0 0.0
    %2824 = vmatpush1.msra.mxu0 0.0
    %2825 = vmatprep.subr.mxu0 0.0
    %2826 = vmatpush1.msra.mxu0 0.0
    %2827 = vmatprep.subr.mxu0 0.0
    %2828 = vmatpush1.msra.mxu0 0.0
    %2829 = vmatprep.subr.mxu0 0.0
    %2830 = vmatpush1.msra.mxu0 0.0
    %2831 = vmatprep.subr.mxu0 0.0
    %2832 = vmatpush1.msra.mxu0 0.0
    %2833 = vmatprep.subr.mxu0 0.0
    %2834 = vmatpush1.msra.mxu0 0.0
    %2835 = vmatprep.subr.mxu0 0.0
    %2836 = vmatpush1.msra.mxu0 0.0
    %2837 = vmatprep.subr.mxu0 0.0
    %2838 = vmatpush1.msra.mxu0 0.0
    %2839 = vmatprep.subr.mxu0 0.0
    %2840 = vmatpush1.msra.mxu0 0.0
    %2841 = vmatprep.subr.mxu0 0.0
    %2842 = vmatpush1.msra.mxu0 0.0
    %2843 = vmatprep.mubr.f32.mxu0 0.0
    %2844 = vmatmul.mubr.f32.gmra.mrb[0].mxu0 %v2403
    %v2845 = vpop.f32.mrb[0].mxu0
    %v2846 = vadd.f32 0.0, %v2845
    %v2847 = vpop.f32.mrb[0].mxu0
    %2848 = vdwg.mxu0
    %v2849 = vadd.f32 %v2634, %v2775
    %v2850 = vmul.f32 %v2849, 0.5
    %v2851 = vtanh.pop %v2850
    %v2852 = vadd.f32 %v2851, 1.0
    %v2853 = vmul.f32 %v2852, 0.5
    %v2854 = vadd.f32 %v2636, %v2777
    %v2855 = vmul.f32 %v2854, 0.5
    %v2856 = vtanh.pop %v2855
    %v2857 = vadd.f32 %v2856, 1.0
    %v2858 = vmul.f32 %v2857, 0.5
    %v2859 = vadd.f32 %v2846, %v1616
    %v2860 = vmul.f32 %v2853, %v2859
    %v2861 = vadd.f32 %v2705, %v2860
    %v2862 = vtanh.pop %v2861
    %v2863 = vsub.f32 1.0, %v2858
    %v2864 = vmul.f32 %v2863, %v2862
    %v2865 = vmul.f32 %v2858, %v2403
    %v2866 = vadd.f32 %v2864, %v2865
    %2867 = vst [vmem:[%s11 + $0x8] sm:$0xff] %v2866
    %v2868 = vld [vmem:[#allocation2 + $0x48] sm:$0xff]
    %v2869 = vld [vmem:[#allocation2 + $0x50] sm:$0xff]
    %v2870 = vld [vmem:[#allocation2 + $0x58] sm:$0xff]
    %2871 = vmatprep.subr.mxu0 %v1619
    %2872 = vmatpush1.msra.mxu0 %v1618
    %2873 = vmatprep.subr.mxu0 %v1622
    %2874 = vmatpush1.msra.mxu0 %v1621
    %2875 = vmatprep.subr.mxu0 %v1625
    %2876 = vmatpush1.msra.mxu0 %v1624
    %2877 = vmatprep.subr.mxu0 %v1628
    %2878 = vmatpush1.msra.mxu0 %v1627
    %2879 = vmatprep.subr.mxu0 %v1631
    %2880 = vmatpush1.msra.mxu0 %v1630
    %2881 = vmatprep.subr.mxu0 %v1634
    %2882 = vmatpush1.msra.mxu0 %v1633
    %2883 = vmatprep.subr.mxu0 %v1637
    %2884 = vmatpush1.msra.mxu0 %v1636
    %2885 = vmatprep.subr.mxu0 %v1640
    %2886 = vmatpush1.msra.mxu0 %v1639
    %2887 = vmatprep.subr.mxu0 %v1643
    %2888 = vmatpush1.msra.mxu0 %v1642
    %2889 = vmatprep.subr.mxu0 %v1646
    %2890 = vmatpush1.msra.mxu0 %v1645
    %2891 = vmatprep.subr.mxu0 %v1649
    %2892 = vmatpush1.msra.mxu0 %v1648
    %2893 = vmatprep.subr.mxu0 %v1652
    %2894 = vmatpush1.msra.mxu0 %v1651
    %2895 = vmatprep.subr.mxu0 %v1655
    %2896 = vmatpush1.msra.mxu0 %v1654
    %2897 = vmatprep.subr.mxu0 %v1658
    %2898 = vmatpush1.msra.mxu0 %v1657
    %2899 = vmatprep.subr.mxu0 %v1661
    %2900 = vmatpush1.msra.mxu0 %v1660
    %2901 = vmatprep.subr.mxu0 %v1664
    %2902 = vmatpush1.msra.mxu0 %v1663
    %2903 = vmatprep.subr.mxu0 0.0
    %2904 = vmatpush1.msra.mxu0 0.0
    %2905 = vmatprep.subr.mxu0 0.0
    %2906 = vmatpush1.msra.mxu0 0.0
    %2907 = vmatprep.subr.mxu0 0.0
    %2908 = vmatpush1.msra.mxu0 0.0
    %2909 = vmatprep.subr.mxu0 0.0
    %2910 = vmatpush1.msra.mxu0 0.0
    %2911 = vmatprep.subr.mxu0 0.0
    %2912 = vmatpush1.msra.mxu0 0.0
    %2913 = vmatprep.subr.mxu0 0.0
    %2914 = vmatpush1.msra.mxu0 0.0
    %2915 = vmatprep.subr.mxu0 0.0
    %2916 = vmatpush1.msra.mxu0 0.0
    %2917 = vmatprep.subr.mxu0 0.0
    %2918 = vmatpush1.msra.mxu0 0.0
    %2919 = vmatprep.subr.mxu0 0.0
    %2920 = vmatpush1.msra.mxu0 0.0
    %2921 = vmatprep.subr.mxu0 0.0
    %2922 = vmatpush1.msra.mxu0 0.0
    %2923 = vmatprep.subr.mxu0 0.0
    %2924 = vmatpush1.msra.mxu0 0.0
    %2925 = vmatprep.subr.mxu0 0.0
    %2926 = vmatpush1.msra.mxu0 0.0
    %2927 = vmatprep.subr.mxu0 0.0
    %2928 = vmatpush1.msra.mxu0 0.0
    %2929 = vmatprep.subr.mxu0 0.0
    %2930 = vmatpush1.msra.mxu0 0.0
    %2931 = vmatprep.subr.mxu0 0.0
    %2932 = vmatpush1.msra.mxu0 0.0
    %2933 = vmatprep.subr.mxu0 0.0
    %2934 = vmatpush1.msra.mxu0 0.0
    %2935 = vmatprep.mubr.f32.mxu0 0.0
    %2936 = vmatmul.mubr.f32.gmra.mrb[0].mxu0 %v2566
    %v2937 = vpop.f32.mrb[0].mxu0
    %v2938 = vadd.f32 0.0, %v2937
    %v2939 = vpop.f32.mrb[0].mxu0
    %v2940 = vadd.f32 0.0, %v2939
    %2941 = vdwg.mxu0
    %2942 = vmatprep.subr.mxu0 0.0
    %2943 = vmatpush1.msra.mxu0 %v1620
    %2944 = vmatprep.subr.mxu0 0.0
    %2945 = vmatpush1.msra.mxu0 %v1623
    %2946 = vmatprep.subr.mxu0 0.0
    %2947 = vmatpush1.msra.mxu0 %v1626
    %2948 = vmatprep.subr.mxu0 0.0
    %2949 = vmatpush1.msra.mxu0 %v1629
    %2950 = vmatprep.subr.mxu0 0.0
    %2951 = vmatpush1.msra.mxu0 %v1632
    %2952 = vmatprep.subr.mxu0 0.0
    %2953 = vmatpush1.msra.mxu0 %v1635
    %2954 = vmatprep.subr.mxu0 0.0
    %2955 = vmatpush1.msra.mxu0 %v1638
    %2956 = vmatprep.subr.mxu0 0.0
    %2957 = vmatpush1.msra.mxu0 %v1641
    %2958 = vmatprep.subr.mxu0 0.0
    %2959 = vmatpush1.msra.mxu0 %v1644
    %2960 = vmatprep.subr.mxu0 0.0
    %2961 = vmatpush1.msra.mxu0 %v1647
    %2962 = vmatprep.subr.mxu0 0.0
    %2963 = vmatpush1.msra.mxu0 %v1650
    %2964 = vmatprep.subr.mxu0 0.0
    %2965 = vmatpush1.msra.mxu0 %v1653
    %2966 = vmatprep.subr.mxu0 0.0
    %2967 = vmatpush1.msra.mxu0 %v1656
    %2968 = vmatprep.subr.mxu0 0.0
    %2969 = vmatpush1.msra.mxu0 %v1659
    %2970 = vmatprep.subr.mxu0 0.0
    %2971 = vmatpush1.msra.mxu0 %v1662
    %2972 = vmatprep.subr.mxu0 0.0
    %2973 = vmatpush1.msra.mxu0 %v1665
    %2974 = vmatprep.subr.mxu0 0.0
    %2975 = vmatpush1.msra.mxu0 0.0
    %2976 = vmatprep.subr.mxu0 0.0
    %2977 = vmatpush1.msra.mxu0 0.0
    %2978 = vmatprep.subr.mxu0 0.0
    %2979 = vmatpush1.msra.mxu0 0.0
    %2980 = vmatprep.subr.mxu0 0.0
    %2981 = vmatpush1.msra.mxu0 0.0
    %2982 = vmatprep.subr.mxu0 0.0
    %2983 = vmatpush1.msra.mxu0 0.0
    %2984 = vmatprep.subr.mxu0 0.0
    %2985 = vmatpush1.msra.mxu0 0.0
    %2986 = vmatprep.subr.mxu0 0.0
    %2987 = vmatpush1.msra.mxu0 0.0
    %2988 = vmatprep.subr.mxu0 0.0
    %2989 = vmatpush1.msra.mxu0 0.0
    %2990 = vmatprep.subr.mxu0 0.0
    %2991 = vmatpush1.msra.mxu0 0.0
    %2992 = vmatprep.subr.mxu0 0.0
    %2993 = vmatpush1.msra.mxu0 0.0
    %2994 = vmatprep.subr.mxu0 0.0
    %2995 = vmatpush1.msra.mxu0 0.0
    %2996 = vmatprep.subr.mxu0 0.0
    %2997 = vmatpush1.msra.mxu0 0.0
    %2998 = vmatprep.subr.mxu0 0.0
    %2999 = vmatpush1.msra.mxu0 0.0
    %3000 = vmatprep.subr.mxu0 0.0
    %3001 = vmatpush1.msra.mxu0 0.0
    %3002 = vmatprep.subr.mxu0 0.0
    %3003 = vmatpush1.msra.mxu0 0.0
    %3004 = vmatprep.subr.mxu0 0.0
    %3005 = vmatpush1.msra.mxu0 0.0
    %3006 = vmatprep.mubr.f32.mxu0 0.0
    %3007 = vmatmul.mubr.f32.gmra.mrb[0].mxu0 %v2566
    %v3008 = vpop.f32.mrb[0].mxu0
    %v3009 = vadd.f32 0.0, %v3008
    %v3010 = vpop.f32.mrb[0].mxu0
    %3011 = vdwg.mxu0
    %v3012 = vadd.f32 %v2868, %v2938
    %v3013 = vmul.f32 %v3012, 0.5
    %v3014 = vtanh.pop %v3013
    %v3015 = vadd.f32 %v3014, 1.0
    %v3016 = vmul.f32 %v3015, 0.5
    %v3017 = vadd.f32 %v2869, %v2940
    %v3018 = vmul.f32 %v3017, 0.5
    %v3019 = vtanh.pop %v3018
    %v3020 = vadd.f32 %v3019, 1.0
    %v3021 = vmul.f32 %v3020, 0.5
    %v3022 = vadd.f32 %v3009, %v1609
    %v3023 = vmul.f32 %v3016, %v3022
    %v3024 = vadd.f32 %v2870, %v3023
    %v3025 = vtanh.pop %v3024
    %v3026 = vsub.f32 1.0, %v3021
    %v3027 = vmul.f32 %v3026, %v3025
    %v3028 = vmul.f32 %v3021, %v2566
    %v3029 = vadd.f32 %v3027, %v3028
    %3030 = vmatprep.subr.mxu0 %v1667
    %3031 = vmatpush1.msra.mxu0 %v1666
    %3032 = vmatprep.subr.mxu0 %v1670
    %3033 = vmatpush1.msra.mxu0 %v1669
    %3034 = vmatprep.subr.mxu0 %v1673
    %3035 = vmatpush1.msra.mxu0 %v1672
    %3036 = vmatprep.subr.mxu0 %v1676
    %3037 = vmatpush1.msra.mxu0 %v1675
    %3038 = vmatprep.subr.mxu0 %v1679
    %3039 = vmatpush1.msra.mxu0 %v1678
    %3040 = vmatprep.subr.mxu0 %v1682
    %3041 = vmatpush1.msra.mxu0 %v1681
    %3042 = vmatprep.subr.mxu0 %v1685
    %3043 = vmatpush1.msra.mxu0 %v1684
    %3044 = vmatprep.subr.mxu0 %v1688
    %3045 = vmatpush1.msra.mxu0 %v1687
    %3046 = vmatprep.subr.mxu0 %v1691
    %3047 = vmatpush1.msra.mxu0 %v1690
    %3048 = vmatprep.subr.mxu0 %v1694
    %3049 = vmatpush1.msra.mxu0 %v1693
    %3050 = vmatprep.subr.mxu0 %v1697
    %3051 = vmatpush1.msra.mxu0 %v1696
    %3052 = vmatprep.subr.mxu0 %v1700
    %3053 = vmatpush1.msra.mxu0 %v1699
    %3054 = vmatprep.subr.mxu0 %v1703
    %3055 = vmatpush1.msra.mxu0 %v1702
    %3056 = vmatprep.subr.mxu0 %v1706
    %3057 = vmatpush1.msra.mxu0 %v1705
    %3058 = vmatprep.subr.mxu0 %v1709
    %3059 = vmatpush1.msra.mxu0 %v1708
    %3060 = vmatprep.subr.mxu0 %v1712
    %3061 = vmatpush1.msra.mxu0 %v1711
    %3062 = vmatprep.subr.mxu0 0.0
    %3063 = vmatpush1.msra.mxu0 0.0
    %3064 = vmatprep.subr.mxu0 0.0
    %3065 = vmatpush1.msra.mxu0 0.0
    %3066 = vmatprep.subr.mxu0 0.0
    %3067 = vmatpush1.msra.mxu0 0.0
    %3068 = vmatprep.subr.mxu0 0.0
    %3069 = vmatpush1.msra.mxu0 0.0
    %3070 = vmatprep.subr.mxu0 0.0
    %3071 = vmatpush1.msra.mxu0 0.0
    %3072 = vmatprep.subr.mxu0 0.0
    %3073 = vmatpush1.msra.mxu0 0.0
    %3074 = vmatprep.subr.mxu0 0.0
    %3075 = vmatpush1.msra.mxu0 0.0
    %3076 = vmatprep.subr.mxu0 0.0
    %3077 = vmatpush1.msra.mxu0 0.0
    %3078 = vmatprep.subr.mxu0 0.0
    %3079 = vmatpush1.msra.mxu0 0.0
    %3080 = vmatprep.subr.mxu0 0.0
    %3081 = vmatpush1.msra.mxu0 0.0
    %3082 = vmatprep.subr.mxu0 0.0
    %3083 = vmatpush1.msra.mxu0 0.0
    %3084 = vmatprep.subr.mxu0 0.0
    %3085 = vmatpush1.msra.mxu0 0.0
    %3086 = vmatprep.subr.mxu0 0.0
    %3087 = vmatpush1.msra.mxu0 0.0
    %3088 = vmatprep.subr.mxu0 0.0
    %3089 = vmatpush1.msra.mxu0 0.0
    %3090 = vmatprep.subr.mxu0 0.0
    %3091 = vmatpush1.msra.mxu0 0.0
    %3092 = vmatprep.subr.mxu0 0.0
    %3093 = vmatpush1.msra.mxu0 0.0
    %3094 = vmatprep.mubr.f32.mxu0 0.0
    %3095 = vmatmul.mubr.f32.gmra.mrb[0].mxu0 %v2566
    %v3096 = vpop.f32.mrb[0].mxu0
    %v3097 = vadd.f32 %v2092, %v3096
    %v3098 = vpop.f32.mrb[0].mxu0
    %v3099 = vadd.f32 %v2096, %v3098
    %3100 = vdwg.mxu0
    %3101 = vmatprep.subr.mxu0 0.0
    %3102 = vmatpush1.msra.mxu0 %v1668
    %3103 = vmatprep.subr.mxu0 0.0
    %3104 = vmatpush1.msra.mxu0 %v1671
    %3105 = vmatprep.subr.mxu0 0.0
    %3106 = vmatpush1.msra.mxu0 %v1674
    %3107 = vmatprep.subr.mxu0 0.0
    %3108 = vmatpush1.msra.mxu0 %v1677
    %3109 = vmatprep.subr.mxu0 0.0
    %3110 = vmatpush1.msra.mxu0 %v1680
    %3111 = vmatprep.subr.mxu0 0.0
    %3112 = vmatpush1.msra.mxu0 %v1683
    %3113 = vmatprep.subr.mxu0 0.0
    %3114 = vmatpush1.msra.mxu0 %v1686
    %3115 = vmatprep.subr.mxu0 0.0
    %3116 = vmatpush1.msra.mxu0 %v1689
    %3117 = vmatprep.subr.mxu0 0.0
    %3118 = vmatpush1.msra.mxu0 %v1692
    %3119 = vmatprep.subr.mxu0 0.0
    %3120 = vmatpush1.msra.mxu0 %v1695
    %3121 = vmatprep.subr.mxu0 0.0
    %3122 = vmatpush1.msra.mxu0 %v1698
    %3123 = vmatprep.subr.mxu0 0.0
    %3124 = vmatpush1.msra.mxu0 %v1701
    %3125 = vmatprep.subr.mxu0 0.0
    %3126 = vmatpush1.msra.mxu0 %v1704
    %3127 = vmatprep.subr.mxu0 0.0
    %3128 = vmatpush1.msra.mxu0 %v1707
    %3129 = vmatprep.subr.mxu0 0.0
    %3130 = vmatpush1.msra.mxu0 %v1710
    %3131 = vmatprep.subr.mxu0 0.0
    %3132 = vmatpush1.msra.mxu0 %v1713
    %3133 = vmatprep.subr.mxu0 0.0
    %3134 = vmatpush1.msra.mxu0 0.0
    %3135 = vmatprep.subr.mxu0 0.0
    %3136 = vmatpush1.msra.mxu0 0.0
    %3137 = vmatprep.subr.mxu0 0.0
    %3138 = vmatpush1.msra.mxu0 0.0
    %3139 = vmatprep.subr.mxu0 0.0
    %3140 = vmatpush1.msra.mxu0 0.0
    %3141 = vmatprep.subr.mxu0 0.0
    %3142 = vmatpush1.msra.mxu0 0.0
    %3143 = vmatprep.subr.mxu0 0.0
    %3144 = vmatpush1.msra.mxu0 0.0
    %3145 = vmatprep.subr.mxu0 0.0
    %3146 = vmatpush1.msra.mxu0 0.0
    %3147 = vmatprep.subr.mxu0 0.0
    %3148 = vmatpush1.msra.mxu0 0.0
    %3149 = vmatprep.subr.mxu0 0.0
    %3150 = vmatpush1.msra.mxu0 0.0
    %3151 = vmatprep.subr.mxu0 0.0
    %3152 = vmatpush1.msra.mxu0 0.0
    %3153 = vmatprep.subr.mxu0 0.0
    %3154 = vmatpush1.msra.mxu0 0.0
    %3155 = vmatprep.subr.mxu0 0.0
    %3156 = vmatpush1.msra.mxu0 0.0
    %3157 = vmatprep.subr.mxu0 0.0
    %3158 = vmatpush1.msra.mxu0 0.0
    %3159 = vmatprep.subr.mxu0 0.0
    %3160 = vmatpush1.msra.mxu0 0.0
    %3161 = vmatprep.subr.mxu0 0.0
    %3162 = vmatpush1.msra.mxu0 0.0
    %3163 = vmatprep.subr.mxu0 0.0
    %3164 = vmatpush1.msra.mxu0 0.0
    %3165 = vmatprep.mubr.f32.mxu0 0.0
    %3166 = vmatmul.mubr.f32.gmra.mrb[0].mxu0 %v2566
    %v3167 = vpop.f32.mrb[0].mxu0
    %v3168 = vadd.f32 %v2100, %v3167
    %v3169 = vpop.f32.mrb[0].mxu0
    %3170 = vdwg.mxu0
    %3171 = vmatprep.subr.mxu0 %v1715
    %3172 = vmatpush1.msra.mxu0 %v1714
    %3173 = vmatprep.subr.mxu0 %v1718
    %3174 = vmatpush1.msra.mxu0 %v1717
    %3175 = vmatprep.subr.mxu0 %v1721
    %3176 = vmatpush1.msra.mxu0 %v1720
    %3177 = vmatprep.subr.mxu0 %v1724
    %3178 = vmatpush1.msra.mxu0 %v1723
    %3179 = vmatprep.subr.mxu0 %v1727
    %3180 = vmatpush1.msra.mxu0 %v1726
    %3181 = vmatprep.subr.mxu0 %v1730
    %3182 = vmatpush1.msra.mxu0 %v1729
    %3183 = vmatprep.subr.mxu0 %v1733
    %3184 = vmatpush1.msra.mxu0 %v1732
    %3185 = vmatprep.subr.mxu0 %v1736
    %3186 = vmatpush1.msra.mxu0 %v1735
    %3187 = vmatprep.subr.mxu0 %v1739
    %3188 = vmatpush1.msra.mxu0 %v1738
    %3189 = vmatprep.subr.mxu0 %v1742
    %3190 = vmatpush1.msra.mxu0 %v1741
    %3191 = vmatprep.subr.mxu0 %v1745
    %3192 = vmatpush1.msra.mxu0 %v1744
    %3193 = vmatprep.subr.mxu0 %v1748
    %3194 = vmatpush1.msra.mxu0 %v1747
    %3195 = vmatprep.subr.mxu0 %v1751
    %3196 = vmatpush1.msra.mxu0 %v1750
    %3197 = vmatprep.subr.mxu0 %v1754
    %3198 = vmatpush1.msra.mxu0 %v1753
    %3199 = vmatprep.subr.mxu0 %v1757
    %3200 = vmatpush1.msra.mxu0 %v1756
    %3201 = vmatprep.subr.mxu0 %v1760
    %3202 = vmatpush1.msra.mxu0 %v1759
    %3203 = vmatprep.subr.mxu0 0.0
    %3204 = vmatpush1.msra.mxu0 0.0
    %3205 = vmatprep.subr.mxu0 0.0
    %3206 = vmatpush1.msra.mxu0 0.0
    %3207 = vmatprep.subr.mxu0 0.0
    %3208 = vmatpush1.msra.mxu0 0.0
    %3209 = vmatprep.subr.mxu0 0.0
    %3210 = vmatpush1.msra.mxu0 0.0
    %3211 = vmatprep.subr.mxu0 0.0
    %3212 = vmatpush1.msra.mxu0 0.0
    %3213 = vmatprep.subr.mxu0 0.0
    %3214 = vmatpush1.msra.mxu0 0.0
    %3215 = vmatprep.subr.mxu0 0.0
    %3216 = vmatpush1.msra.mxu0 0.0
    %3217 = vmatprep.subr.mxu0 0.0
    %3218 = vmatpush1.msra.mxu0 0.0
    %3219 = vmatprep.subr.mxu0 0.0
    %3220 = vmatpush1.msra.mxu0 0.0
    %3221 = vmatprep.subr.mxu0 0.0
    %3222 = vmatpush1.msra.mxu0 0.0
    %3223 = vmatprep.subr.mxu0 0.0
    %3224 = vmatpush1.msra.mxu0 0.0
    %3225 = vmatprep.subr.mxu0 0.0
    %3226 = vmatpush1.msra.mxu0 0.0
    %3227 = vmatprep.subr.mxu0 0.0
    %3228 = vmatpush1.msra.mxu0 0.0
    %3229 = vmatprep.subr.mxu0 0.0
    %3230 = vmatpush1.msra.mxu0 0.0
    %3231 = vmatprep.subr.mxu0 0.0
    %3232 = vmatpush1.msra.mxu0 0.0
    %3233 = vmatprep.subr.mxu0 0.0
    %3234 = vmatpush1.msra.mxu0 0.0
    %3235 = vmatprep.mubr.f32.mxu0 0.0
    %3236 = vmatmul.mubr.f32.gmra.mrb[0].mxu0 %v2866
    %v3237 = vpop.f32.mrb[0].mxu0
    %v3238 = vadd.f32 0.0, %v3237
    %v3239 = vpop.f32.mrb[0].mxu0
    %v3240 = vadd.f32 0.0, %v3239
    %3241 = vdwg.mxu0
    %3242 = vmatprep.subr.mxu0 0.0
    %3243 = vmatpush1.msra.mxu0 %v1716
    %3244 = vmatprep.subr.mxu0 0.0
    %3245 = vmatpush1.msra.mxu0 %v1719
    %3246 = vmatprep.subr.mxu0 0.0
    %3247 = vmatpush1.msra.mxu0 %v1722
    %3248 = vmatprep.subr.mxu0 0.0
    %3249 = vmatpush1.msra.mxu0 %v1725
    %3250 = vmatprep.subr.mxu0 0.0
    %3251 = vmatpush1.msra.mxu0 %v1728
    %3252 = vmatprep.subr.mxu0 0.0
    %3253 = vmatpush1.msra.mxu0 %v1731
    %3254 = vmatprep.subr.mxu0 0.0
    %3255 = vmatpush1.msra.mxu0 %v1734
    %3256 = vmatprep.subr.mxu0 0.0
    %3257 = vmatpush1.msra.mxu0 %v1737
    %3258 = vmatprep.subr.mxu0 0.0
    %3259 = vmatpush1.msra.mxu0 %v1740
    %3260 = vmatprep.subr.mxu0 0.0
    %3261 = vmatpush1.msra.mxu0 %v1743
    %3262 = vmatprep.subr.mxu0 0.0
    %3263 = vmatpush1.msra.mxu0 %v1746
    %3264 = vmatprep.subr.mxu0 0.0
    %3265 = vmatpush1.msra.mxu0 %v1749
    %3266 = vmatprep.subr.mxu0 0.0
    %3267 = vmatpush1.msra.mxu0 %v1752
    %3268 = vmatprep.subr.mxu0 0.0
    %3269 = vmatpush1.msra.mxu0 %v1755
    %3270 = vmatprep.subr.mxu0 0.0
    %3271 = vmatpush1.msra.mxu0 %v1758
    %3272 = vmatprep.subr.mxu0 0.0
    %3273 = vmatpush1.msra.mxu0 %v1761
    %3274 = vmatprep.subr.mxu0 0.0
    %3275 = vmatpush1.msra.mxu0 0.0
    %3276 = vmatprep.subr.mxu0 0.0
    %3277 = vmatpush1.msra.mxu0 0.0
    %3278 = vmatprep.subr.mxu0 0.0
    %3279 = vmatpush1.msra.mxu0 0.0
    %3280 = vmatprep.subr.mxu0 0.0
    %3281 = vmatpush1.msra.mxu0 0.0
    %3282 = vmatprep.subr.mxu0 0.0
    %3283 = vmatpush1.msra.mxu0 0.0
    %3284 = vmatprep.subr.mxu0 0.0
    %3285 = vmatpush1.msra.mxu0 0.0
    %3286 = vmatprep.subr.mxu0 0.0
    %3287 = vmatpush1.msra.mxu0 0.0
    %3288 = vmatprep.subr.mxu0 0.0
    %3289 = vmatpush1.msra.mxu0 0.0
    %3290 = vmatprep.subr.mxu0 0.0
    %3291 = vmatpush1.msra.mxu0 0.0
    %3292 = vmatprep.subr.mxu0 0.0
    %3293 = vmatpush1.msra.mxu0 0.0
    %3294 = vmatprep.subr.mxu0 0.0
    %3295 = vmatpush1.msra.mxu0 0.0
    %3296 = vmatprep.subr.mxu0 0.0
    %3297 = vmatpush1.msra.mxu0 0.0
    %3298 = vmatprep.subr.mxu0 0.0
    %3299 = vmatpush1.msra.mxu0 0.0
    %3300 = vmatprep.subr.mxu0 0.0
    %3301 = vmatpush1.msra.mxu0 0.0
    %3302 = vmatprep.subr.mxu0 0.0
    %3303 = vmatpush1.msra.mxu0 0.0
    %3304 = vmatprep.subr.mxu0 0.0
    %3305 = vmatpush1.msra.mxu0 0.0
    %3306 = vmatprep.mubr.f32.mxu0 0.0
    %3307 = vmatmul.mubr.f32.gmra.mrb[0].mxu0 %v2866
    %v3308 = vpop.f32.mrb[0].mxu0
    %v3309 = vadd.f32 0.0, %v3308
    %v3310 = vpop.f32.mrb[0].mxu0
    %3311 = vdwg.mxu0
    %v3312 = vadd.f32 %v3097, %v3238
    %v3313 = vmul.f32 %v3312, 0.5
    %v3314 = vtanh.pop %v3313
    %v3315 = vadd.f32 %v3314, 1.0
    %v3316 = vmul.f32 %v3315, 0.5
    %v3317 = vadd.f32 %v3099, %v3240
    %v3318 = vmul.f32 %v3317, 0.5
    %v3319 = vtanh.pop %v3318
    %v3320 = vadd.f32 %v3319, 1.0
    %v3321 = vmul.f32 %v3320, 0.5
    %v3322 = vadd.f32 %v3309, %v1616
    %v3323 = vmul.f32 %v3316, %v3322
    %v3324 = vadd.f32 %v3168, %v3323
    %v3325 = vtanh.pop %v3324
    %v3326 = vsub.f32 1.0, %v3321
    %v3327 = vmul.f32 %v3326, %v3325
    %v3328 = vmul.f32 %v3321, %v2866
    %v3329 = vadd.f32 %v3327, %v3328
    %3330 = vst [vmem:[%s11 + $0x10] sm:$0xff] %v3329
    %v3331 = vld [vmem:[#allocation2 + $0x60] sm:$0xff]
    %v3332 = vld [vmem:[#allocation2 + $0x68] sm:$0xff]
    %v3333 = vld [vmem:[#allocation2 + $0x70] sm:$0xff]
    %3334 = vmatprep.subr.mxu0 %v1619
    %3335 = vmatpush1.msra.mxu0 %v1618
    %3336 = vmatprep.subr.mxu0 %v1622
    %3337 = vmatpush1.msra.mxu0 %v1621
    %3338 = vmatprep.subr.mxu0 %v1625
    %3339 = vmatpush1.msra.mxu0 %v1624
    %3340 = vmatprep.subr.mxu0 %v1628
    %3341 = vmatpush1.msra.mxu0 %v1627
    %3342 = vmatprep.subr.mxu0 %v1631
    %3343 = vmatpush1.msra.mxu0 %v1630
    %3344 = vmatprep.subr.mxu0 %v1634
    %3345 = vmatpush1.msra.mxu0 %v1633
    %3346 = vmatprep.subr.mxu0 %v1637
    %3347 = vmatpush1.msra.mxu0 %v1636
    %3348 = vmatprep.subr.mxu0 %v1640
    %3349 = vmatpush1.msra.mxu0 %v1639
    %3350 = vmatprep.subr.mxu0 %v1643
    %3351 = vmatpush1.msra.mxu0 %v1642
    %3352 = vmatprep.subr.mxu0 %v1646
    %3353 = vmatpush1.msra.mxu0 %v1645
    %3354 = vmatprep.subr.mxu0 %v1649
    %3355 = vmatpush1.msra.mxu0 %v1648
    %3356 = vmatprep.subr.mxu0 %v1652
    %3357 = vmatpush1.msra.mxu0 %v1651
    %3358 = vmatprep.subr.mxu0 %v1655
    %3359 = vmatpush1.msra.mxu0 %v1654
    %3360 = vmatprep.subr.mxu0 %v1658
    %3361 = vmatpush1.msra.mxu0 %v1657
    %3362 = vmatprep.subr.mxu0 %v1661
    %3363 = vmatpush1.msra.mxu0 %v1660
    %3364 = vmatprep.subr.mxu0 %v1664
    %3365 = vmatpush1.msra.mxu0 %v1663
    %3366 = vmatprep.subr.mxu0 0.0
    %3367 = vmatpush1.msra.mxu0 0.0
    %3368 = vmatprep.subr.mxu0 0.0
    %3369 = vmatpush1.msra.mxu0 0.0
    %3370 = vmatprep.subr.mxu0 0.0
    %3371 = vmatpush1.msra.mxu0 0.0
    %3372 = vmatprep.subr.mxu0 0.0
    %3373 = vmatpush1.msra.mxu0 0.0
    %3374 = vmatprep.subr.mxu0 0.0
    %3375 = vmatpush1.msra.mxu0 0.0
    %3376 = vmatprep.subr.mxu0 0.0
    %3377 = vmatpush1.msra.mxu0 0.0
    %3378 = vmatprep.subr.mxu0 0.0
    %3379 = vmatpush1.msra.mxu0 0.0
    %3380 = vmatprep.subr.mxu0 0.0
    %3381 = vmatpush1.msra.mxu0 0.0
    %3382 = vmatprep.subr.mxu0 0.0
    %3383 = vmatpush1.msra.mxu0 0.0
    %3384 = vmatprep.subr.mxu0 0.0
    %3385 = vmatpush1.msra.mxu0 0.0
    %3386 = vmatprep.subr.mxu0 0.0
    %3387 = vmatpush1.msra.mxu0 0.0
    %3388 = vmatprep.subr.mxu0 0.0
    %3389 = vmatpush1.msra.mxu0 0.0
    %3390 = vmatprep.subr.mxu0 0.0
    %3391 = vmatpush1.msra.mxu0 0.0
    %3392 = vmatprep.subr.mxu0 0.0
    %3393 = vmatpush1.msra.mxu0 0.0
    %3394 = vmatprep.subr.mxu0 0.0
    %3395 = vmatpush1.msra.mxu0 0.0
    %3396 = vmatprep.subr.mxu0 0.0
    %3397 = vmatpush1.msra.mxu0 0.0
    %3398 = vmatprep.mubr.f32.mxu0 0.0
    %3399 = vmatmul.mubr.f32.gmra.mrb[0].mxu0 %v3029
    %v3400 = vpop.f32.mrb[0].mxu0
    %v3401 = vadd.f32 0.0, %v3400
    %v3402 = vpop.f32.mrb[0].mxu0
    %v3403 = vadd.f32 0.0, %v3402
    %3404 = vdwg.mxu0
    %3405 = vmatprep.subr.mxu0 0.0
    %3406 = vmatpush1.msra.mxu0 %v1620
    %3407 = vmatprep.subr.mxu0 0.0
    %3408 = vmatpush1.msra.mxu0 %v1623
    %3409 = vmatprep.subr.mxu0 0.0
    %3410 = vmatpush1.msra.mxu0 %v1626
    %3411 = vmatprep.subr.mxu0 0.0
    %3412 = vmatpush1.msra.mxu0 %v1629
    %3413 = vmatprep.subr.mxu0 0.0
    %3414 = vmatpush1.msra.mxu0 %v1632
    %3415 = vmatprep.subr.mxu0 0.0
    %3416 = vmatpush1.msra.mxu0 %v1635
    %3417 = vmatprep.subr.mxu0 0.0
    %3418 = vmatpush1.msra.mxu0 %v1638
    %3419 = vmatprep.subr.mxu0 0.0
    %3420 = vmatpush1.msra.mxu0 %v1641
    %3421 = vmatprep.subr.mxu0 0.0
    %3422 = vmatpush1.msra.mxu0 %v1644
    %3423 = vmatprep.subr.mxu0 0.0
    %3424 = vmatpush1.msra.mxu0 %v1647
    %3425 = vmatprep.subr.mxu0 0.0
    %3426 = vmatpush1.msra.mxu0 %v1650
    %3427 = vmatprep.subr.mxu0 0.0
    %3428 = vmatpush1.msra.mxu0 %v1653
    %3429 = vmatprep.subr.mxu0 0.0
    %3430 = vmatpush1.msra.mxu0 %v1656
    %3431 = vmatprep.subr.mxu0 0.0
    %3432 = vmatpush1.msra.mxu0 %v1659
    %3433 = vmatprep.subr.mxu0 0.0
    %3434 = vmatpush1.msra.mxu0 %v1662
    %3435 = vmatprep.subr.mxu0 0.0
    %3436 = vmatpush1.msra.mxu0 %v1665
    %3437 = vmatprep.subr.mxu0 0.0
    %3438 = vmatpush1.msra.mxu0 0.0
    %3439 = vmatprep.subr.mxu0 0.0
    %3440 = vmatpush1.msra.mxu0 0.0
    %3441 = vmatprep.subr.mxu0 0.0
    %3442 = vmatpush1.msra.mxu0 0.0
    %3443 = vmatprep.subr.mxu0 0.0
    %3444 = vmatpush1.msra.mxu0 0.0
    %3445 = vmatprep.subr.mxu0 0.0
    %3446 = vmatpush1.msra.mxu0 0.0
    %3447 = vmatprep.subr.mxu0 0.0
    %3448 = vmatpush1.msra.mxu0 0.0
    %3449 = vmatprep.subr.mxu0 0.0
    %3450 = vmatpush1.msra.mxu0 0.0
    %3451 = vmatprep.subr.mxu0 0.0
    %3452 = vmatpush1.msra.mxu0 0.0
    %3453 = vmatprep.subr.mxu0 0.0
    %3454 = vmatpush1.msra.mxu0 0.0
    %3455 = vmatprep.subr.mxu0 0.0
    %3456 = vmatpush1.msra.mxu0 0.0
    %3457 = vmatprep.subr.mxu0 0.0
    %3458 = vmatpush1.msra.mxu0 0.0
    %3459 = vmatprep.subr.mxu0 0.0
    %3460 = vmatpush1.msra.mxu0 0.0
    %3461 = vmatprep.subr.mxu0 0.0
    %3462 = vmatpush1.msra.mxu0 0.0
    %3463 = vmatprep.subr.mxu0 0.0
    %3464 = vmatpush1.msra.mxu0 0.0
    %3465 = vmatprep.subr.mxu0 0.0
    %3466 = vmatpush1.msra.mxu0 0.0
    %3467 = vmatprep.subr.mxu0 0.0
    %3468 = vmatpush1.msra.mxu0 0.0
    %3469 = vmatprep.mubr.f32.mxu0 0.0
    %3470 = vmatmul.mubr.f32.gmra.mrb[0].mxu0 %v3029
    %v3471 = vpop.f32.mrb[0].mxu0
    %v3472 = vadd.f32 0.0, %v3471
    %v3473 = vpop.f32.mrb[0].mxu0
    %3474 = vdwg.mxu0
    %v3475 = vadd.f32 %v3331, %v3401
    %v3476 = vmul.f32 %v3475, 0.5
    %v3477 = vtanh.pop %v3476
    %v3478 = vadd.f32 %v3477, 1.0
    %v3479 = vmul.f32 %v3478, 0.5
    %v3480 = vadd.f32 %v3332, %v3403
    %v3481 = vmul.f32 %v3480, 0.5
    %v3482 = vtanh.pop %v3481
    %v3483 = vadd.f32 %v3482, 1.0
    %v3484 = vmul.f32 %v3483, 0.5
    %v3485 = vadd.f32 %v3472, %v1609
    %v3486 = vmul.f32 %v3479, %v3485
    %v3487 = vadd.f32 %v3333, %v3486
    %v3488 = vtanh.pop %v3487
    %v3489 = vsub.f32 1.0, %v3484
    %v3490 = vmul.f32 %v3489, %v3488
    %v3491 = vmul.f32 %v3484, %v3029
    %v3492 = vadd.f32 %v3490, %v3491
    %3493 = vmatprep.subr.mxu0 %v1667
    %3494 = vmatpush1.msra.mxu0 %v1666
    %3495 = vmatprep.subr.mxu0 %v1670
    %3496 = vmatpush1.msra.mxu0 %v1669
    %3497 = vmatprep.subr.mxu0 %v1673
    %3498 = vmatpush1.msra.mxu0 %v1672
    %3499 = vmatprep.subr.mxu0 %v1676
    %3500 = vmatpush1.msra.mxu0 %v1675
    %3501 = vmatprep.subr.mxu0 %v1679
    %3502 = vmatpush1.msra.mxu0 %v1678
    %3503 = vmatprep.subr.mxu0 %v1682
    %3504 = vmatpush1.msra.mxu0 %v1681
    %3505 = vmatprep.subr.mxu0 %v1685
    %3506 = vmatpush1.msra.mxu0 %v1684
    %3507 = vmatprep.subr.mxu0 %v1688
    %3508 = vmatpush1.msra.mxu0 %v1687
    %3509 = vmatprep.subr.mxu0 %v1691
    %3510 = vmatpush1.msra.mxu0 %v1690
    %3511 = vmatprep.subr.mxu0 %v1694
    %3512 = vmatpush1.msra.mxu0 %v1693
    %3513 = vmatprep.subr.mxu0 %v1697
    %3514 = vmatpush1.msra.mxu0 %v1696
    %3515 = vmatprep.subr.mxu0 %v1700
    %3516 = vmatpush1.msra.mxu0 %v1699
    %3517 = vmatprep.subr.mxu0 %v1703
    %3518 = vmatpush1.msra.mxu0 %v1702
    %3519 = vmatprep.subr.mxu0 %v1706
    %3520 = vmatpush1.msra.mxu0 %v1705
    %3521 = vmatprep.subr.mxu0 %v1709
    %3522 = vmatpush1.msra.mxu0 %v1708
    %3523 = vmatprep.subr.mxu0 %v1712
    %3524 = vmatpush1.msra.mxu0 %v1711
    %3525 = vmatprep.subr.mxu0 0.0
    %3526 = vmatpush1.msra.mxu0 0.0
    %3527 = vmatprep.subr.mxu0 0.0
    %3528 = vmatpush1.msra.mxu0 0.0
    %3529 = vmatprep.subr.mxu0 0.0
    %3530 = vmatpush1.msra.mxu0 0.0
    %3531 = vmatprep.subr.mxu0 0.0
    %3532 = vmatpush1.msra.mxu0 0.0
    %3533 = vmatprep.subr.mxu0 0.0
    %3534 = vmatpush1.msra.mxu0 0.0
    %3535 = vmatprep.subr.mxu0 0.0
    %3536 = vmatpush1.msra.mxu0 0.0
    %3537 = vmatprep.subr.mxu0 0.0
    %3538 = vmatpush1.msra.mxu0 0.0
    %3539 = vmatprep.subr.mxu0 0.0
    %3540 = vmatpush1.msra.mxu0 0.0
    %3541 = vmatprep.subr.mxu0 0.0
    %3542 = vmatpush1.msra.mxu0 0.0
    %3543 = vmatprep.subr.mxu0 0.0
    %3544 = vmatpush1.msra.mxu0 0.0
    %3545 = vmatprep.subr.mxu0 0.0
    %3546 = vmatpush1.msra.mxu0 0.0
    %3547 = vmatprep.subr.mxu0 0.0
    %3548 = vmatpush1.msra.mxu0 0.0
    %3549 = vmatprep.subr.mxu0 0.0
    %3550 = vmatpush1.msra.mxu0 0.0
    %3551 = vmatprep.subr.mxu0 0.0
    %3552 = vmatpush1.msra.mxu0 0.0
    %3553 = vmatprep.subr.mxu0 0.0
    %3554 = vmatpush1.msra.mxu0 0.0
    %3555 = vmatprep.subr.mxu0 0.0
    %3556 = vmatpush1.msra.mxu0 0.0
    %3557 = vmatprep.mubr.f32.mxu0 0.0
    %3558 = vmatmul.mubr.f32.gmra.mrb[0].mxu0 %v3029
    %v3559 = vpop.f32.mrb[0].mxu0
    %v3560 = vadd.f32 %v2092, %v3559
    %v3561 = vpop.f32.mrb[0].mxu0
    %v3562 = vadd.f32 %v2096, %v3561
    %3563 = vdwg.mxu0
    %3564 = vmatprep.subr.mxu0 0.0
    %3565 = vmatpush1.msra.mxu0 %v1668
    %3566 = vmatprep.subr.mxu0 0.0
    %3567 = vmatpush1.msra.mxu0 %v1671
    %3568 = vmatprep.subr.mxu0 0.0
    %3569 = vmatpush1.msra.mxu0 %v1674
    %3570 = vmatprep.subr.mxu0 0.0
    %3571 = vmatpush1.msra.mxu0 %v1677
    %3572 = vmatprep.subr.mxu0 0.0
    %3573 = vmatpush1.msra.mxu0 %v1680
    %3574 = vmatprep.subr.mxu0 0.0
    %3575 = vmatpush1.msra.mxu0 %v1683
    %3576 = vmatprep.subr.mxu0 0.0
    %3577 = vmatpush1.msra.mxu0 %v1686
    %3578 = vmatprep.subr.mxu0 0.0
    %3579 = vmatpush1.msra.mxu0 %v1689
    %3580 = vmatprep.subr.mxu0 0.0
    %3581 = vmatpush1.msra.mxu0 %v1692
    %3582 = vmatprep.subr.mxu0 0.0
    %3583 = vmatpush1.msra.mxu0 %v1695
    %3584 = vmatprep.subr.mxu0 0.0
    %3585 = vmatpush1.msra.mxu0 %v1698
    %3586 = vmatprep.subr.mxu0 0.0
    %3587 = vmatpush1.msra.mxu0 %v1701
    %3588 = vmatprep.subr.mxu0 0.0
    %3589 = vmatpush1.msra.mxu0 %v1704
    %3590 = vmatprep.subr.mxu0 0.0
    %3591 = vmatpush1.msra.mxu0 %v1707
    %3592 = vmatprep.subr.mxu0 0.0
    %3593 = vmatpush1.msra.mxu0 %v1710
    %3594 = vmatprep.subr.mxu0 0.0
    %3595 = vmatpush1.msra.mxu0 %v1713
    %3596 = vmatprep.subr.mxu0 0.0
    %3597 = vmatpush1.msra.mxu0 0.0
    %3598 = vmatprep.subr.mxu0 0.0
    %3599 = vmatpush1.msra.mxu0 0.0
    %3600 = vmatprep.subr.mxu0 0.0
    %3601 = vmatpush1.msra.mxu0 0.0
    %3602 = vmatprep.subr.mxu0 0.0
    %3603 = vmatpush1.msra.mxu0 0.0
    %3604 = vmatprep.subr.mxu0 0.0
    %3605 = vmatpush1.msra.mxu0 0.0
    %3606 = vmatprep.subr.mxu0 0.0
    %3607 = vmatpush1.msra.mxu0 0.0
    %3608 = vmatprep.subr.mxu0 0.0
    %3609 = vmatpush1.msra.mxu0 0.0
    %3610 = vmatprep.subr.mxu0 0.0
    %3611 = vmatpush1.msra.mxu0 0.0
    %3612 = vmatprep.subr.mxu0 0.0
    %3613 = vmatpush1.msra.mxu0 0.0
    %3614 = vmatprep.subr.mxu0 0.0
    %3615 = vmatpush1.msra.mxu0 0.0
    %3616 = vmatprep.subr.mxu0 0.0
    %3617 = vmatpush1.msra.mxu0 0.0
    %3618 = vmatprep.subr.mxu0 0.0
    %3619 = vmatpush1.msra.mxu0 0.0
    %3620 = vmatprep.subr.mxu0 0.0
    %3621 = vmatpush1.msra.mxu0 0.0
    %3622 = vmatprep.subr.mxu0 0.0
    %3623 = vmatpush1.msra.mxu0 0.0
    %3624 = vmatprep.subr.mxu0 0.0
    %3625 = vmatpush1.msra.mxu0 0.0
    %3626 = vmatprep.subr.mxu0 0.0
    %3627 = vmatpush1.msra.mxu0 0.0
    %3628 = vmatprep.mubr.f32.mxu0 0.0
    %3629 = vmatmul.mubr.f32.gmra.mrb[0].mxu0 %v3029
    %v3630 = vpop.f32.mrb[0].mxu0
    %v3631 = vadd.f32 %v2100, %v3630
    %v3632 = vpop.f32.mrb[0].mxu0
    %3633 = vdwg.mxu0
    %3634 = vmatprep.subr.mxu0 %v1715
    %3635 = vmatpush1.msra.mxu0 %v1714
    %3636 = vmatprep.subr.mxu0 %v1718
    %3637 = vmatpush1.msra.mxu0 %v1717
    %3638 = vmatprep.subr.mxu0 %v1721
    %3639 = vmatpush1.msra.mxu0 %v1720
    %3640 = vmatprep.subr.mxu0 %v1724
    %3641 = vmatpush1.msra.mxu0 %v1723
    %3642 = vmatprep.subr.mxu0 %v1727
    %3643 = vmatpush1.msra.mxu0 %v1726
    %3644 = vmatprep.subr.mxu0 %v1730
    %3645 = vmatpush1.msra.mxu0 %v1729
    %3646 = vmatprep.subr.mxu0 %v1733
    %3647 = vmatpush1.msra.mxu0 %v1732
    %3648 = vmatprep.subr.mxu0 %v1736
    %3649 = vmatpush1.msra.mxu0 %v1735
    %3650 = vmatprep.subr.mxu0 %v1739
    %3651 = vmatpush1.msra.mxu0 %v1738
    %3652 = vmatprep.subr.mxu0 %v1742
    %3653 = vmatpush1.msra.mxu0 %v1741
    %3654 = vmatprep.subr.mxu0 %v1745
    %3655 = vmatpush1.msra.mxu0 %v1744
    %3656 = vmatprep.subr.mxu0 %v1748
    %3657 = vmatpush1.msra.mxu0 %v1747
    %3658 = vmatprep.subr.mxu0 %v1751
    %3659 = vmatpush1.msra.mxu0 %v1750
    %3660 = vmatprep.subr.mxu0 %v1754
    %3661 = vmatpush1.msra.mxu0 %v1753
    %3662 = vmatprep.subr.mxu0 %v1757
    %3663 = vmatpush1.msra.mxu0 %v1756
    %3664 = vmatprep.subr.mxu0 %v1760
    %3665 = vmatpush1.msra.mxu0 %v1759
    %3666 = vmatprep.subr.mxu0 0.0
    %3667 = vmatpush1.msra.mxu0 0.0
    %3668 = vmatprep.subr.mxu0 0.0
    %3669 = vmatpush1.msra.mxu0 0.0
    %3670 = vmatprep.subr.mxu0 0.0
    %3671 = vmatpush1.msra.mxu0 0.0
    %3672 = vmatprep.subr.mxu0 0.0
    %3673 = vmatpush1.msra.mxu0 0.0
    %3674 = vmatprep.subr.mxu0 0.0
    %3675 = vmatpush1.msra.mxu0 0.0
    %3676 = vmatprep.subr.mxu0 0.0
    %3677 = vmatpush1.msra.mxu0 0.0
    %3678 = vmatprep.subr.mxu0 0.0
    %3679 = vmatpush1.msra.mxu0 0.0
    %3680 = vmatprep.subr.mxu0 0.0
    %3681 = vmatpush1.msra.mxu0 0.0
    %3682 = vmatprep.subr.mxu0 0.0
    %3683 = vmatpush1.msra.mxu0 0.0
    %3684 = vmatprep.subr.mxu0 0.0
    %3685 = vmatpush1.msra.mxu0 0.0
    %3686 = vmatprep.subr.mxu0 0.0
    %3687 = vmatpush1.msra.mxu0 0.0
    %3688 = vmatprep.subr.mxu0 0.0
    %3689 = vmatpush1.msra.mxu0 0.0
    %3690 = vmatprep.subr.mxu0 0.0
    %3691 = vmatpush1.msra.mxu0 0.0
    %3692 = vmatprep.subr.mxu0 0.0
    %3693 = vmatpush1.msra.mxu0 0.0
    %3694 = vmatprep.subr.mxu0 0.0
    %3695 = vmatpush1.msra.mxu0 0.0
    %3696 = vmatprep.subr.mxu0 0.0
    %3697 = vmatpush1.msra.mxu0 0.0
    %3698 = vmatprep.mubr.f32.mxu0 0.0
    %3699 = vmatmul.mubr.f32.gmra.mrb[0].mxu0 %v3329
    %v3700 = vpop.f32.mrb[0].mxu0
    %v3701 = vadd.f32 0.0, %v3700
    %v3702 = vpop.f32.mrb[0].mxu0
    %v3703 = vadd.f32 0.0, %v3702
    %3704 = vdwg.mxu0
    %3705 = vmatprep.subr.mxu0 0.0
    %3706 = vmatpush1.msra.mxu0 %v1716
    %3707 = vmatprep.subr.mxu0 0.0
    %3708 = vmatpush1.msra.mxu0 %v1719
    %3709 = vmatprep.subr.mxu0 0.0
    %3710 = vmatpush1.msra.mxu0 %v1722
    %3711 = vmatprep.subr.mxu0 0.0
    %3712 = vmatpush1.msra.mxu0 %v1725
    %3713 = vmatprep.subr.mxu0 0.0
    %3714 = vmatpush1.msra.mxu0 %v1728
    %3715 = vmatprep.subr.mxu0 0.0
    %3716 = vmatpush1.msra.mxu0 %v1731
    %3717 = vmatprep.subr.mxu0 0.0
    %3718 = vmatpush1.msra.mxu0 %v1734
    %3719 = vmatprep.subr.mxu0 0.0
    %3720 = vmatpush1.msra.mxu0 %v1737
    %3721 = vmatprep.subr.mxu0 0.0
    %3722 = vmatpush1.msra.mxu0 %v1740
    %3723 = vmatprep.subr.mxu0 0.0
    %3724 = vmatpush1.msra.mxu0 %v1743
    %3725 = vmatprep.subr.mxu0 0.0
    %3726 = vmatpush1.msra.mxu0 %v1746
    %3727 = vmatprep.subr.mxu0 0.0
    %3728 = vmatpush1.msra.mxu0 %v1749
    %3729 = vmatprep.subr.mxu0 0.0
    %3730 = vmatpush1.msra.mxu0 %v1752
    %3731 = vmatprep.subr.mxu0 0.0
    %3732 = vmatpush1.msra.mxu0 %v1755
    %3733 = vmatprep.subr.mxu0 0.0
    %3734 = vmatpush1.msra.mxu0 %v1758
    %3735 = vmatprep.subr.mxu0 0.0
    %3736 = vmatpush1.msra.mxu0 %v1761
    %3737 = vmatprep.subr.mxu0 0.0
    %3738 = vmatpush1.msra.mxu0 0.0
    %3739 = vmatprep.subr.mxu0 0.0
    %3740 = vmatpush1.msra.mxu0 0.0
    %3741 = vmatprep.subr.mxu0 0.0
    %3742 = vmatpush1.msra.mxu0 0.0
    %3743 = vmatprep.subr.mxu0 0.0
    %3744 = vmatpush1.msra.mxu0 0.0
    %3745 = vmatprep.subr.mxu0 0.0
    %3746 = vmatpush1.msra.mxu0 0.0
    %3747 = vmatprep.subr.mxu0 0.0
    %3748 = vmatpush1.msra.mxu0 0.0
    %3749 = vmatprep.subr.mxu0 0.0
    %3750 = vmatpush1.msra.mxu0 0.0
    %3751 = vmatprep.subr.mxu0 0.0
    %3752 = vmatpush1.msra.mxu0 0.0
    %3753 = vmatprep.subr.mxu0 0.0
    %3754 = vmatpush1.msra.mxu0 0.0
    %3755 = vmatprep.subr.mxu0 0.0
    %3756 = vmatpush1.msra.mxu0 0.0
    %3757 = vmatprep.subr.mxu0 0.0
    %3758 = vmatpush1.msra.mxu0 0.0
    %3759 = vmatprep.subr.mxu0 0.0
    %3760 = vmatpush1.msra.mxu0 0.0
    %3761 = vmatprep.subr.mxu0 0.0
    %3762 = vmatpush1.msra.mxu0 0.0
    %3763 = vmatprep.subr.mxu0 0.0
    %3764 = vmatpush1.msra.mxu0 0.0
    %3765 = vmatprep.subr.mxu0 0.0
    %3766 = vmatpush1.msra.mxu0 0.0
    %3767 = vmatprep.subr.mxu0 0.0
    %3768 = vmatpush1.msra.mxu0 0.0
    %3769 = vmatprep.mubr.f32.mxu0 0.0
    %3770 = vmatmul.mubr.f32.gmra.mrb[0].mxu0 %v3329
    %v3771 = vpop.f32.mrb[0].mxu0
    %v3772 = vadd.f32 0.0, %v3771
    %v3773 = vpop.f32.mrb[0].mxu0
    %3774 = vdwg.mxu0
    %v3775 = vadd.f32 %v3560, %v3701
    %v3776 = vmul.f32 %v3775, 0.5
    %v3777 = vtanh.pop %v3776
    %v3778 = vadd.f32 %v3777, 1.0
    %v3779 = vmul.f32 %v3778, 0.5
    %v3780 = vadd.f32 %v3562, %v3703
    %v3781 = vmul.f32 %v3780, 0.5
    %v3782 = vtanh.pop %v3781
    %v3783 = vadd.f32 %v3782, 1.0
    %v3784 = vmul.f32 %v3783, 0.5
    %v3785 = vadd.f32 %v3772, %v1616
    %v3786 = vmul.f32 %v3779, %v3785
    %v3787 = vadd.f32 %v3631, %v3786
    %v3788 = vtanh.pop %v3787
    %v3789 = vsub.f32 1.0, %v3784
    %v3790 = vmul.f32 %v3789, %v3788
    %v3791 = vmul.f32 %v3784, %v3329
    %v3792 = vadd.f32 %v3790, %v3791
    %3793 = vst [vmem:[%s11 + $0x18] sm:$0xff] %v3792
    %v3794 = vld [vmem:[#allocation2 + $0x78] sm:$0xff]
    %v3795 = vld [vmem:[#allocation2 + $0x80] sm:$0xff]
    %v3796 = vld [vmem:[#allocation2 + $0x88] sm:$0xff]
    %3797 = vmatprep.subr.mxu0 %v1619
    %3798 = vmatpush1.msra.mxu0 %v1618
    %3799 = vmatprep.subr.mxu0 %v1622
    %3800 = vmatpush1.msra.mxu0 %v1621
    %3801 = vmatprep.subr.mxu0 %v1625
    %3802 = vmatpush1.msra.mxu0 %v1624
    %3803 = vmatprep.subr.mxu0 %v1628
    %3804 = vmatpush1.msra.mxu0 %v1627
    %3805 = vmatprep.subr.mxu0 %v1631
    %3806 = vmatpush1.msra.mxu0 %v1630
    %3807 = vmatprep.subr.mxu0 %v1634
    %3808 = vmatpush1.msra.mxu0 %v1633
    %3809 = vmatprep.subr.mxu0 %v1637
    %3810 = vmatpush1.msra.mxu0 %v1636
    %3811 = vmatprep.subr.mxu0 %v1640
    %3812 = vmatpush1.msra.mxu0 %v1639
    %3813 = vmatprep.subr.mxu0 %v1643
    %3814 = vmatpush1.msra.mxu0 %v1642
    %3815 = vmatprep.subr.mxu0 %v1646
    %3816 = vmatpush1.msra.mxu0 %v1645
    %3817 = vmatprep.subr.mxu0 %v1649
    %3818 = vmatpush1.msra.mxu0 %v1648
    %3819 = vmatprep.subr.mxu0 %v1652
    %3820 = vmatpush1.msra.mxu0 %v1651
    %3821 = vmatprep.subr.mxu0 %v1655
    %3822 = vmatpush1.msra.mxu0 %v1654
    %3823 = vmatprep.subr.mxu0 %v1658
    %3824 = vmatpush1.msra.mxu0 %v1657
    %3825 = vmatprep.subr.mxu0 %v1661
    %3826 = vmatpush1.msra.mxu0 %v1660
    %3827 = vmatprep.subr.mxu0 %v1664
    %3828 = vmatpush1.msra.mxu0 %v1663
    %3829 = vmatprep.subr.mxu0 0.0
    %3830 = vmatpush1.msra.mxu0 0.0
    %3831 = vmatprep.subr.mxu0 0.0
    %3832 = vmatpush1.msra.mxu0 0.0
    %3833 = vmatprep.subr.mxu0 0.0
    %3834 = vmatpush1.msra.mxu0 0.0
    %3835 = vmatprep.subr.mxu0 0.0
    %3836 = vmatpush1.msra.mxu0 0.0
    %3837 = vmatprep.subr.mxu0 0.0
    %3838 = vmatpush1.msra.mxu0 0.0
    %3839 = vmatprep.subr.mxu0 0.0
    %3840 = vmatpush1.msra.mxu0 0.0
    %3841 = vmatprep.subr.mxu0 0.0
    %3842 = vmatpush1.msra.mxu0 0.0
    %3843 = vmatprep.subr.mxu0 0.0
    %3844 = vmatpush1.msra.mxu0 0.0
    %3845 = vmatprep.subr.mxu0 0.0
    %3846 = vmatpush1.msra.mxu0 0.0
    %3847 = vmatprep.subr.mxu0 0.0
    %3848 = vmatpush1.msra.mxu0 0.0
    %3849 = vmatprep.subr.mxu0 0.0
    %3850 = vmatpush1.msra.mxu0 0.0
    %3851 = vmatprep.subr.mxu0 0.0
    %3852 = vmatpush1.msra.mxu0 0.0
    %3853 = vmatprep.subr.mxu0 0.0
    %3854 = vmatpush1.msra.mxu0 0.0
    %3855 = vmatprep.subr.mxu0 0.0
    %3856 = vmatpush1.msra.mxu0 0.0
    %3857 = vmatprep.subr.mxu0 0.0
    %3858 = vmatpush1.msra.mxu0 0.0
    %3859 = vmatprep.subr.mxu0 0.0
    %3860 = vmatpush1.msra.mxu0 0.0
    %3861 = vmatprep.mubr.f32.mxu0 0.0
    %3862 = vmatmul.mubr.f32.gmra.mrb[0].mxu0 %v3492
    %v3863 = vpop.f32.mrb[0].mxu0
    %v3864 = vadd.f32 0.0, %v3863
    %v3865 = vpop.f32.mrb[0].mxu0
    %v3866 = vadd.f32 0.0, %v3865
    %3867 = vdwg.mxu0
    %3868 = vmatprep.subr.mxu0 0.0
    %3869 = vmatpush1.msra.mxu0 %v1620
    %3870 = vmatprep.subr.mxu0 0.0
    %3871 = vmatpush1.msra.mxu0 %v1623
    %3872 = vmatprep.subr.mxu0 0.0
    %3873 = vmatpush1.msra.mxu0 %v1626
    %3874 = vmatprep.subr.mxu0 0.0
    %3875 = vmatpush1.msra.mxu0 %v1629
    %3876 = vmatprep.subr.mxu0 0.0
    %3877 = vmatpush1.msra.mxu0 %v1632
    %3878 = vmatprep.subr.mxu0 0.0
    %3879 = vmatpush1.msra.mxu0 %v1635
    %3880 = vmatprep.subr.mxu0 0.0
    %3881 = vmatpush1.msra.mxu0 %v1638
    %3882 = vmatprep.subr.mxu0 0.0
    %3883 = vmatpush1.msra.mxu0 %v1641
    %3884 = vmatprep.subr.mxu0 0.0
    %3885 = vmatpush1.msra.mxu0 %v1644
    %3886 = vmatprep.subr.mxu0 0.0
    %3887 = vmatpush1.msra.mxu0 %v1647
    %3888 = vmatprep.subr.mxu0 0.0
    %3889 = vmatpush1.msra.mxu0 %v1650
    %3890 = vmatprep.subr.mxu0 0.0
    %3891 = vmatpush1.msra.mxu0 %v1653
    %3892 = vmatprep.subr.mxu0 0.0
    %3893 = vmatpush1.msra.mxu0 %v1656
    %3894 = vmatprep.subr.mxu0 0.0
    %3895 = vmatpush1.msra.mxu0 %v1659
    %3896 = vmatprep.subr.mxu0 0.0
    %3897 = vmatpush1.msra.mxu0 %v1662
    %3898 = vmatprep.subr.mxu0 0.0
    %3899 = vmatpush1.msra.mxu0 %v1665
    %3900 = vmatprep.subr.mxu0 0.0
    %3901 = vmatpush1.msra.mxu0 0.0
    %3902 = vmatprep.subr.mxu0 0.0
    %3903 = vmatpush1.msra.mxu0 0.0
    %3904 = vmatprep.subr.mxu0 0.0
    %3905 = vmatpush1.msra.mxu0 0.0
    %3906 = vmatprep.subr.mxu0 0.0
    %3907 = vmatpush1.msra.mxu0 0.0
    %3908 = vmatprep.subr.mxu0 0.0
    %3909 = vmatpush1.msra.mxu0 0.0
    %3910 = vmatprep.subr.mxu0 0.0
    %3911 = vmatpush1.msra.mxu0 0.0
    %3912 = vmatprep.subr.mxu0 0.0
    %3913 = vmatpush1.msra.mxu0 0.0
    %3914 = vmatprep.subr.mxu0 0.0
    %3915 = vmatpush1.msra.mxu0 0.0
    %3916 = vmatprep.subr.mxu0 0.0
    %3917 = vmatpush1.msra.mxu0 0.0
    %3918 = vmatprep.subr.mxu0 0.0
    %3919 = vmatpush1.msra.mxu0 0.0
    %3920 = vmatprep.subr.mxu0 0.0
    %3921 = vmatpush1.msra.mxu0 0.0
    %3922 = vmatprep.subr.mxu0 0.0
    %3923 = vmatpush1.msra.mxu0 0.0
    %3924 = vmatprep.subr.mxu0 0.0
    %3925 = vmatpush1.msra.mxu0 0.0
    %3926 = vmatprep.subr.mxu0 0.0
    %3927 = vmatpush1.msra.mxu0 0.0
    %3928 = vmatprep.subr.mxu0 0.0
    %3929 = vmatpush1.msra.mxu0 0.0
    %3930 = vmatprep.subr.mxu0 0.0
    %3931 = vmatpush1.msra.mxu0 0.0
    %3932 = vmatprep.mubr.f32.mxu0 0.0
    %3933 = vmatmul.mubr.f32.gmra.mrb[0].mxu0 %v3492
    %v3934 = vpop.f32.mrb[0].mxu0
    %v3935 = vadd.f32 0.0, %v3934
    %v3936 = vpop.f32.mrb[0].mxu0
    %3937 = vdwg.mxu0
    %v3938 = vadd.f32 %v3794, %v3864
    %v3939 = vmul.f32 %v3938, 0.5
    %v3940 = vtanh.pop %v3939
    %v3941 = vadd.f32 %v3940, 1.0
    %v3942 = vmul.f32 %v3941, 0.5
    %v3943 = vadd.f32 %v3795, %v3866
    %v3944 = vmul.f32 %v3943, 0.5
    %v3945 = vtanh.pop %v3944
    %v3946 = vadd.f32 %v3945, 1.0
    %v3947 = vmul.f32 %v3946, 0.5
    %v3948 = vadd.f32 %v3935, %v1609
    %v3949 = vmul.f32 %v3942, %v3948
    %v3950 = vadd.f32 %v3796, %v3949
    %v3951 = vtanh.pop %v3950
    %v3952 = vsub.f32 1.0, %v3947
    %v3953 = vmul.f32 %v3952, %v3951
    %v3954 = vmul.f32 %v3947, %v3492
    %v3955 = vadd.f32 %v3953, %v3954
    %3956 = vmatprep.subr.mxu0 %v1667
    %3957 = vmatpush1.msra.mxu0 %v1666
    %3958 = vmatprep.subr.mxu0 %v1670
    %3959 = vmatpush1.msra.mxu0 %v1669
    %3960 = vmatprep.subr.mxu0 %v1673
    %3961 = vmatpush1.msra.mxu0 %v1672
    %3962 = vmatprep.subr.mxu0 %v1676
    %3963 = vmatpush1.msra.mxu0 %v1675
    %3964 = vmatprep.subr.mxu0 %v1679
    %3965 = vmatpush1.msra.mxu0 %v1678
    %3966 = vmatprep.subr.mxu0 %v1682
    %3967 = vmatpush1.msra.mxu0 %v1681
    %3968 = vmatprep.subr.mxu0 %v1685
    %3969 = vmatpush1.msra.mxu0 %v1684
    %3970 = vmatprep.subr.mxu0 %v1688
    %3971 = vmatpush1.msra.mxu0 %v1687
    %3972 = vmatprep.subr.mxu0 %v1691
    %3973 = vmatpush1.msra.mxu0 %v1690
    %3974 = vmatprep.subr.mxu0 %v1694
    %3975 = vmatpush1.msra.mxu0 %v1693
    %3976 = vmatprep.subr.mxu0 %v1697
    %3977 = vmatpush1.msra.mxu0 %v1696
    %3978 = vmatprep.subr.mxu0 %v1700
    %3979 = vmatpush1.msra.mxu0 %v1699
    %3980 = vmatprep.subr.mxu0 %v1703
    %3981 = vmatpush1.msra.mxu0 %v1702
    %3982 = vmatprep.subr.mxu0 %v1706
    %3983 = vmatpush1.msra.mxu0 %v1705
    %3984 = vmatprep.subr.mxu0 %v1709
    %3985 = vmatpush1.msra.mxu0 %v1708
    %3986 = vmatprep.subr.mxu0 %v1712
    %3987 = vmatpush1.msra.mxu0 %v1711
    %3988 = vmatprep.subr.mxu0 0.0
    %3989 = vmatpush1.msra.mxu0 0.0
    %3990 = vmatprep.subr.mxu0 0.0
    %3991 = vmatpush1.msra.mxu0 0.0
    %3992 = vmatprep.subr.mxu0 0.0
    %3993 = vmatpush1.msra.mxu0 0.0
    %3994 = vmatprep.subr.mxu0 0.0
    %3995 = vmatpush1.msra.mxu0 0.0
    %3996 = vmatprep.subr.mxu0 0.0
    %3997 = vmatpush1.msra.mxu0 0.0
    %3998 = vmatprep.subr.mxu0 0.0
    %3999 = vmatpush1.msra.mxu0 0.0
    %4000 = vmatprep.subr.mxu0 0.0
    %4001 = vmatpush1.msra.mxu0 0.0
    %4002 = vmatprep.subr.mxu0 0.0
    %4003 = vmatpush1.msra.mxu0 0.0
    %4004 = vmatprep.subr.mxu0 0.0
    %4005 = vmatpush1.msra.mxu0 0.0
    %4006 = vmatprep.subr.mxu0 0.0
    %4007 = vmatpush1.msra.mxu0 0.0
    %4008 = vmatprep.subr.mxu0 0.0
    %4009 = vmatpush1.msra.mxu0 0.0
    %4010 = vmatprep.subr.mxu0 0.0
    %4011 = vmatpush1.msra.mxu0 0.0
    %4012 = vmatprep.subr.mxu0 0.0
    %4013 = vmatpush1.msra.mxu0 0.0
    %4014 = vmatprep.subr.mxu0 0.0
    %4015 = vmatpush1.msra.mxu0 0.0
    %4016 = vmatprep.subr.mxu0 0.0
    %4017 = vmatpush1.msra.mxu0 0.0
    %4018 = vmatprep.subr.mxu0 0.0
    %4019 = vmatpush1.msra.mxu0 0.0
    %4020 = vmatprep.mubr.f32.mxu0 0.0
    %4021 = vmatmul.mubr.f32.gmra.mrb[0].mxu0 %v3492
    %v4022 = vpop.f32.mrb[0].mxu0
    %v4023 = vadd.f32 %v2092, %v4022
    %v4024 = vpop.f32.mrb[0].mxu0
    %v4025 = vadd.f32 %v2096, %v4024
    %4026 = vdwg.mxu0
    %4027 = vmatprep.subr.mxu0 0.0
    %4028 = vmatpush1.msra.mxu0 %v1668
    %4029 = vmatprep.subr.mxu0 0.0
    %4030 = vmatpush1.msra.mxu0 %v1671
    %4031 = vmatprep.subr.mxu0 0.0
    %4032 = vmatpush1.msra.mxu0 %v1674
    %4033 = vmatprep.subr.mxu0 0.0
    %4034 = vmatpush1.msra.mxu0 %v1677
    %4035 = vmatprep.subr.mxu0 0.0
    %4036 = vmatpush1.msra.mxu0 %v1680
    %4037 = vmatprep.subr.mxu0 0.0
    %4038 = vmatpush1.msra.mxu0 %v1683
    %4039 = vmatprep.subr.mxu0 0.0
    %4040 = vmatpush1.msra.mxu0 %v1686
    %4041 = vmatprep.subr.mxu0 0.0
    %4042 = vmatpush1.msra.mxu0 %v1689
    %4043 = vmatprep.subr.mxu0 0.0
    %4044 = vmatpush1.msra.mxu0 %v1692
    %4045 = vmatprep.subr.mxu0 0.0
    %4046 = vmatpush1.msra.mxu0 %v1695
    %4047 = vmatprep.subr.mxu0 0.0
    %4048 = vmatpush1.msra.mxu0 %v1698
    %4049 = vmatprep.subr.mxu0 0.0
    %4050 = vmatpush1.msra.mxu0 %v1701
    %4051 = vmatprep.subr.mxu0 0.0
    %4052 = vmatpush1.msra.mxu0 %v1704
    %4053 = vmatprep.subr.mxu0 0.0
    %4054 = vmatpush1.msra.mxu0 %v1707
    %4055 = vmatprep.subr.mxu0 0.0
    %4056 = vmatpush1.msra.mxu0 %v1710
    %4057 = vmatprep.subr.mxu0 0.0
    %4058 = vmatpush1.msra.mxu0 %v1713
    %4059 = vmatprep.subr.mxu0 0.0
    %4060 = vmatpush1.msra.mxu0 0.0
    %4061 = vmatprep.subr.mxu0 0.0
    %4062 = vmatpush1.msra.mxu0 0.0
    %4063 = vmatprep.subr.mxu0 0.0
    %4064 = vmatpush1.msra.mxu0 0.0
    %4065 = vmatprep.subr.mxu0 0.0
    %4066 = vmatpush1.msra.mxu0 0.0
    %4067 = vmatprep.subr.mxu0 0.0
    %4068 = vmatpush1.msra.mxu0 0.0
    %4069 = vmatprep.subr.mxu0 0.0
    %4070 = vmatpush1.msra.mxu0 0.0
    %4071 = vmatprep.subr.mxu0 0.0
    %4072 = vmatpush1.msra.mxu0 0.0
    %4073 = vmatprep.subr.mxu0 0.0
    %4074 = vmatpush1.msra.mxu0 0.0
    %4075 = vmatprep.subr.mxu0 0.0
    %4076 = vmatpush1.msra.mxu0 0.0
    %4077 = vmatprep.subr.mxu0 0.0
    %4078 = vmatpush1.msra.mxu0 0.0
    %4079 = vmatprep.subr.mxu0 0.0
    %4080 = vmatpush1.msra.mxu0 0.0
    %4081 = vmatprep.subr.mxu0 0.0
    %4082 = vmatpush1.msra.mxu0 0.0
    %4083 = vmatprep.subr.mxu0 0.0
    %4084 = vmatpush1.msra.mxu0 0.0
    %4085 = vmatprep.subr.mxu0 0.0
    %4086 = vmatpush1.msra.mxu0 0.0
    %4087 = vmatprep.subr.mxu0 0.0
    %4088 = vmatpush1.msra.mxu0 0.0
    %4089 = vmatprep.subr.mxu0 0.0
    %4090 = vmatpush1.msra.mxu0 0.0
    %4091 = vmatprep.mubr.f32.mxu0 0.0
    %4092 = vmatmul.mubr.f32.gmra.mrb[0].mxu0 %v3492
    %v4093 = vpop.f32.mrb[0].mxu0
    %v4094 = vadd.f32 %v2100, %v4093
    %v4095 = vpop.f32.mrb[0].mxu0
    %4096 = vdwg.mxu0
    %4097 = vmatprep.subr.mxu0 %v1715
    %4098 = vmatpush1.msra.mxu0 %v1714
    %4099 = vmatprep.subr.mxu0 %v1718
    %4100 = vmatpush1.msra.mxu0 %v1717
    %4101 = vmatprep.subr.mxu0 %v1721
    %4102 = vmatpush1.msra.mxu0 %v1720
    %4103 = vmatprep.subr.mxu0 %v1724
    %4104 = vmatpush1.msra.mxu0 %v1723
    %4105 = vmatprep.subr.mxu0 %v1727
    %4106 = vmatpush1.msra.mxu0 %v1726
    %4107 = vmatprep.subr.mxu0 %v1730
    %4108 = vmatpush1.msra.mxu0 %v1729
    %4109 = vmatprep.subr.mxu0 %v1733
    %4110 = vmatpush1.msra.mxu0 %v1732
    %4111 = vmatprep.subr.mxu0 %v1736
    %4112 = vmatpush1.msra.mxu0 %v1735
    %4113 = vmatprep.subr.mxu0 %v1739
    %4114 = vmatpush1.msra.mxu0 %v1738
    %4115 = vmatprep.subr.mxu0 %v1742
    %4116 = vmatpush1.msra.mxu0 %v1741
    %4117 = vmatprep.subr.mxu0 %v1745
    %4118 = vmatpush1.msra.mxu0 %v1744
    %4119 = vmatprep.subr.mxu0 %v1748
    %4120 = vmatpush1.msra.mxu0 %v1747
    %4121 = vmatprep.subr.mxu0 %v1751
    %4122 = vmatpush1.msra.mxu0 %v1750
    %4123 = vmatprep.subr.mxu0 %v1754
    %4124 = vmatpush1.msra.mxu0 %v1753
    %4125 = vmatprep.subr.mxu0 %v1757
    %4126 = vmatpush1.msra.mxu0 %v1756
    %4127 = vmatprep.subr.mxu0 %v1760
    %4128 = vmatpush1.msra.mxu0 %v1759
    %4129 = vmatprep.subr.mxu0 0.0
    %4130 = vmatpush1.msra.mxu0 0.0
    %4131 = vmatprep.subr.mxu0 0.0
    %4132 = vmatpush1.msra.mxu0 0.0
    %4133 = vmatprep.subr.mxu0 0.0
    %4134 = vmatpush1.msra.mxu0 0.0
    %4135 = vmatprep.subr.mxu0 0.0
    %4136 = vmatpush1.msra.mxu0 0.0
    %4137 = vmatprep.subr.mxu0 0.0
    %4138 = vmatpush1.msra.mxu0 0.0
    %4139 = vmatprep.subr.mxu0 0.0
    %4140 = vmatpush1.msra.mxu0 0.0
    %4141 = vmatprep.subr.mxu0 0.0
    %4142 = vmatpush1.msra.mxu0 0.0
    %4143 = vmatprep.subr.mxu0 0.0
    %4144 = vmatpush1.msra.mxu0 0.0
    %4145 = vmatprep.subr.mxu0 0.0
    %4146 = vmatpush1.msra.mxu0 0.0
    %4147 = vmatprep.subr.mxu0 0.0
    %4148 = vmatpush1.msra.mxu0 0.0
    %4149 = vmatprep.subr.mxu0 0.0
    %4150 = vmatpush1.msra.mxu0 0.0
    %4151 = vmatprep.subr.mxu0 0.0
    %4152 = vmatpush1.msra.mxu0 0.0
    %4153 = vmatprep.subr.mxu0 0.0
    %4154 = vmatpush1.msra.mxu0 0.0
    %4155 = vmatprep.subr.mxu0 0.0
    %4156 = vmatpush1.msra.mxu0 0.0
    %4157 = vmatprep.subr.mxu0 0.0
    %4158 = vmatpush1.msra.mxu0 0.0
    %4159 = vmatprep.subr.mxu0 0.0
    %4160 = vmatpush1.msra.mxu0 0.0
    %4161 = vmatprep.mubr.f32.mxu0 0.0
    %4162 = vmatmul.mubr.f32.gmra.mrb[0].mxu0 %v3792
    %v4163 = vpop.f32.mrb[0].mxu0
    %v4164 = vadd.f32 0.0, %v4163
    %v4165 = vpop.f32.mrb[0].mxu0
    %v4166 = vadd.f32 0.0, %v4165
    %4167 = vdwg.mxu0
    %4168 = vmatprep.subr.mxu0 0.0
    %4169 = vmatpush1.msra.mxu0 %v1716
    %4170 = vmatprep.subr.mxu0 0.0
    %4171 = vmatpush1.msra.mxu0 %v1719
    %4172 = vmatprep.subr.mxu0 0.0
    %4173 = vmatpush1.msra.mxu0 %v1722
    %4174 = vmatprep.subr.mxu0 0.0
    %4175 = vmatpush1.msra.mxu0 %v1725
    %4176 = vmatprep.subr.mxu0 0.0
    %4177 = vmatpush1.msra.mxu0 %v1728
    %4178 = vmatprep.subr.mxu0 0.0
    %4179 = vmatpush1.msra.mxu0 %v1731
    %4180 = vmatprep.subr.mxu0 0.0
    %4181 = vmatpush1.msra.mxu0 %v1734
    %4182 = vmatprep.subr.mxu0 0.0
    %4183 = vmatpush1.msra.mxu0 %v1737
    %4184 = vmatprep.subr.mxu0 0.0
    %4185 = vmatpush1.msra.mxu0 %v1740
    %4186 = vmatprep.subr.mxu0 0.0
    %4187 = vmatpush1.msra.mxu0 %v1743
    %4188 = vmatprep.subr.mxu0 0.0
    %4189 = vmatpush1.msra.mxu0 %v1746
    %4190 = vmatprep.subr.mxu0 0.0
    %4191 = vmatpush1.msra.mxu0 %v1749
    %4192 = vmatprep.subr.mxu0 0.0
    %4193 = vmatpush1.msra.mxu0 %v1752
    %4194 = vmatprep.subr.mxu0 0.0
    %4195 = vmatpush1.msra.mxu0 %v1755
    %4196 = vmatprep.subr.mxu0 0.0
    %4197 = vmatpush1.msra.mxu0 %v1758
    %4198 = vmatprep.subr.mxu0 0.0
    %4199 = vmatpush1.msra.mxu0 %v1761
    %4200 = vmatprep.subr.mxu0 0.0
    %4201 = vmatpush1.msra.mxu0 0.0
    %4202 = vmatprep.subr.mxu0 0.0
    %4203 = vmatpush1.msra.mxu0 0.0
    %4204 = vmatprep.subr.mxu0 0.0
    %4205 = vmatpush1.msra.mxu0 0.0
    %4206 = vmatprep.subr.mxu0 0.0
    %4207 = vmatpush1.msra.mxu0 0.0
    %4208 = vmatprep.subr.mxu0 0.0
    %4209 = vmatpush1.msra.mxu0 0.0
    %4210 = vmatprep.subr.mxu0 0.0
    %4211 = vmatpush1.msra.mxu0 0.0
    %4212 = vmatprep.subr.mxu0 0.0
    %4213 = vmatpush1.msra.mxu0 0.0
    %4214 = vmatprep.subr.mxu0 0.0
    %4215 = vmatpush1.msra.mxu0 0.0
    %4216 = vmatprep.subr.mxu0 0.0
    %4217 = vmatpush1.msra.mxu0 0.0
    %4218 = vmatprep.subr.mxu0 0.0
    %4219 = vmatpush1.msra.mxu0 0.0
    %4220 = vmatprep.subr.mxu0 0.0
    %4221 = vmatpush1.msra.mxu0 0.0
    %4222 = vmatprep.subr.mxu0 0.0
    %4223 = vmatpush1.msra.mxu0 0.0
    %4224 = vmatprep.subr.mxu0 0.0
    %4225 = vmatpush1.msra.mxu0 0.0
    %4226 = vmatprep.subr.mxu0 0.0
    %4227 = vmatpush1.msra.mxu0 0.0
    %4228 = vmatprep.subr.mxu0 0.0
    %4229 = vmatpush1.msra.mxu0 0.0
    %4230 = vmatprep.subr.mxu0 0.0
    %4231 = vmatpush1.msra.mxu0 0.0
    %4232 = vmatprep.mubr.f32.mxu0 0.0
    %4233 = vmatmul.mubr.f32.gmra.mrb[0].mxu0 %v3792
    %v4234 = vpop.f32.mrb[0].mxu0
    %v4235 = vadd.f32 0.0, %v4234
    %v4236 = vpop.f32.mrb[0].mxu0
    %4237 = vdwg.mxu0
    %v4238 = vadd.f32 %v4023, %v4164
    %v4239 = vmul.f32 %v4238, 0.5
    %v4240 = vtanh.pop %v4239
    %v4241 = vadd.f32 %v4240, 1.0
    %v4242 = vmul.f32 %v4241, 0.5
    %v4243 = vadd.f32 %v4025, %v4166
    %v4244 = vmul.f32 %v4243, 0.5
    %v4245 = vtanh.pop %v4244
    %v4246 = vadd.f32 %v4245, 1.0
    %v4247 = vmul.f32 %v4246, 0.5
    %v4248 = vadd.f32 %v4235, %v1616
    %v4249 = vmul.f32 %v4242, %v4248
    %v4250 = vadd.f32 %v4094, %v4249
    %v4251 = vtanh.pop %v4250
    %v4252 = vsub.f32 1.0, %v4247
    %v4253 = vmul.f32 %v4252, %v4251
    %v4254 = vmul.f32 %v4247, %v3792
    %v4255 = vadd.f32 %v4253, %v4254
    %4256 = vst [vmem:[%s11 + $0x20] sm:$0xff] %v4255
    %v4257 = vld [vmem:[#allocation2 + $0x90] sm:$0xff]
    %v4258 = vld [vmem:[#allocation2 + $0x98] sm:$0xff]
    %v4259 = vld [vmem:[#allocation2 + $0xa0] sm:$0xff]
    %4260 = vmatprep.subr.mxu0 %v1619
    %4261 = vmatpush1.msra.mxu0 %v1618
    %4262 = vmatprep.subr.mxu0 %v1622
    %4263 = vmatpush1.msra.mxu0 %v1621
    %4264 = vmatprep.subr.mxu0 %v1625
    %4265 = vmatpush1.msra.mxu0 %v1624
    %4266 = vmatprep.subr.mxu0 %v1628
    %4267 = vmatpush1.msra.mxu0 %v1627
    %4268 = vmatprep.subr.mxu0 %v1631
    %4269 = vmatpush1.msra.mxu0 %v1630
    %4270 = vmatprep.subr.mxu0 %v1634
    %4271 = vmatpush1.msra.mxu0 %v1633
    %4272 = vmatprep.subr.mxu0 %v1637
    %4273 = vmatpush1.msra.mxu0 %v1636
    %4274 = vmatprep.subr.mxu0 %v1640
    %4275 = vmatpush1.msra.mxu0 %v1639
    %4276 = vmatprep.subr.mxu0 %v1643
    %4277 = vmatpush1.msra.mxu0 %v1642
    %4278 = vmatprep.subr.mxu0 %v1646
    %4279 = vmatpush1.msra.mxu0 %v1645
    %4280 = vmatprep.subr.mxu0 %v1649
    %4281 = vmatpush1.msra.mxu0 %v1648
    %4282 = vmatprep.subr.mxu0 %v1652
    %4283 = vmatpush1.msra.mxu0 %v1651
    %4284 = vmatprep.subr.mxu0 %v1655
    %4285 = vmatpush1.msra.mxu0 %v1654
    %4286 = vmatprep.subr.mxu0 %v1658
    %4287 = vmatpush1.msra.mxu0 %v1657
    %4288 = vmatprep.subr.mxu0 %v1661
    %4289 = vmatpush1.msra.mxu0 %v1660
    %4290 = vmatprep.subr.mxu0 %v1664
    %4291 = vmatpush1.msra.mxu0 %v1663
    %4292 = vmatprep.subr.mxu0 0.0
    %4293 = vmatpush1.msra.mxu0 0.0
    %4294 = vmatprep.subr.mxu0 0.0
    %4295 = vmatpush1.msra.mxu0 0.0
    %4296 = vmatprep.subr.mxu0 0.0
    %4297 = vmatpush1.msra.mxu0 0.0
    %4298 = vmatprep.subr.mxu0 0.0
    %4299 = vmatpush1.msra.mxu0 0.0
    %4300 = vmatprep.subr.mxu0 0.0
    %4301 = vmatpush1.msra.mxu0 0.0
    %4302 = vmatprep.subr.mxu0 0.0
    %4303 = vmatpush1.msra.mxu0 0.0
    %4304 = vmatprep.subr.mxu0 0.0
    %4305 = vmatpush1.msra.mxu0 0.0
    %4306 = vmatprep.subr.mxu0 0.0
    %4307 = vmatpush1.msra.mxu0 0.0
    %4308 = vmatprep.subr.mxu0 0.0
    %4309 = vmatpush1.msra.mxu0 0.0
    %4310 = vmatprep.subr.mxu0 0.0
    %4311 = vmatpush1.msra.mxu0 0.0
    %4312 = vmatprep.subr.mxu0 0.0
    %4313 = vmatpush1.msra.mxu0 0.0
    %4314 = vmatprep.subr.mxu0 0.0
    %4315 = vmatpush1.msra.mxu0 0.0
    %4316 = vmatprep.subr.mxu0 0.0
    %4317 = vmatpush1.msra.mxu0 0.0
    %4318 = vmatprep.subr.mxu0 0.0
    %4319 = vmatpush1.msra.mxu0 0.0
    %4320 = vmatprep.subr.mxu0 0.0
    %4321 = vmatpush1.msra.mxu0 0.0
    %4322 = vmatprep.subr.mxu0 0.0
    %4323 = vmatpush1.msra.mxu0 0.0
    %4324 = vmatprep.mubr.f32.mxu0 0.0
    %4325 = vmatmul.mubr.f32.gmra.mrb[0].mxu0 %v3955
    %v4326 = vpop.f32.mrb[0].mxu0
    %v4327 = vadd.f32 0.0, %v4326
    %v4328 = vpop.f32.mrb[0].mxu0
    %v4329 = vadd.f32 0.0, %v4328
    %4330 = vdwg.mxu0
    %4331 = vmatprep.subr.mxu0 0.0
    %4332 = vmatpush1.msra.mxu0 %v1620
    %4333 = vmatprep.subr.mxu0 0.0
    %4334 = vmatpush1.msra.mxu0 %v1623
    %4335 = vmatprep.subr.mxu0 0.0
    %4336 = vmatpush1.msra.mxu0 %v1626
    %4337 = vmatprep.subr.mxu0 0.0
    %4338 = vmatpush1.msra.mxu0 %v1629
    %4339 = vmatprep.subr.mxu0 0.0
    %4340 = vmatpush1.msra.mxu0 %v1632
    %4341 = vmatprep.subr.mxu0 0.0
    %4342 = vmatpush1.msra.mxu0 %v1635
    %4343 = vmatprep.subr.mxu0 0.0
    %4344 = vmatpush1.msra.mxu0 %v1638
    %4345 = vmatprep.subr.mxu0 0.0
    %4346 = vmatpush1.msra.mxu0 %v1641
    %4347 = vmatprep.subr.mxu0 0.0
    %4348 = vmatpush1.msra.mxu0 %v1644
    %4349 = vmatprep.subr.mxu0 0.0
    %4350 = vmatpush1.msra.mxu0 %v1647
    %4351 = vmatprep.subr.mxu0 0.0
    %4352 = vmatpush1.msra.mxu0 %v1650
    %4353 = vmatprep.subr.mxu0 0.0
    %4354 = vmatpush1.msra.mxu0 %v1653
    %4355 = vmatprep.subr.mxu0 0.0
    %4356 = vmatpush1.msra.mxu0 %v1656
    %4357 = vmatprep.subr.mxu0 0.0
    %4358 = vmatpush1.msra.mxu0 %v1659
    %4359 = vmatprep.subr.mxu0 0.0
    %4360 = vmatpush1.msra.mxu0 %v1662
    %4361 = vmatprep.subr.mxu0 0.0
    %4362 = vmatpush1.msra.mxu0 %v1665
    %4363 = vmatprep.subr.mxu0 0.0
    %4364 = vmatpush1.msra.mxu0 0.0
    %4365 = vmatprep.subr.mxu0 0.0
    %4366 = vmatpush1.msra.mxu0 0.0
    %4367 = vmatprep.subr.mxu0 0.0
    %4368 = vmatpush1.msra.mxu0 0.0
    %4369 = vmatprep.subr.mxu0 0.0
    %4370 = vmatpush1.msra.mxu0 0.0
    %4371 = vmatprep.subr.mxu0 0.0
    %4372 = vmatpush1.msra.mxu0 0.0
    %4373 = vmatprep.subr.mxu0 0.0
    %4374 = vmatpush1.msra.mxu0 0.0
    %4375 = vmatprep.subr.mxu0 0.0
    %4376 = vmatpush1.msra.mxu0 0.0
    %4377 = vmatprep.subr.mxu0 0.0
    %4378 = vmatpush1.msra.mxu0 0.0
    %4379 = vmatprep.subr.mxu0 0.0
    %4380 = vmatpush1.msra.mxu0 0.0
    %4381 = vmatprep.subr.mxu0 0.0
    %4382 = vmatpush1.msra.mxu0 0.0
    %4383 = vmatprep.subr.mxu0 0.0
    %4384 = vmatpush1.msra.mxu0 0.0
    %4385 = vmatprep.subr.mxu0 0.0
    %4386 = vmatpush1.msra.mxu0 0.0
    %4387 = vmatprep.subr.mxu0 0.0
    %4388 = vmatpush1.msra.mxu0 0.0
    %4389 = vmatprep.subr.mxu0 0.0
    %4390 = vmatpush1.msra.mxu0 0.0
    %4391 = vmatprep.subr.mxu0 0.0
    %4392 = vmatpush1.msra.mxu0 0.0
    %4393 = vmatprep.subr.mxu0 0.0
    %4394 = vmatpush1.msra.mxu0 0.0
    %4395 = vmatprep.mubr.f32.mxu0 0.0
    %4396 = vmatmul.mubr.f32.gmra.mrb[0].mxu0 %v3955
    %v4397 = vpop.f32.mrb[0].mxu0
    %v4398 = vadd.f32 0.0, %v4397
    %v4399 = vpop.f32.mrb[0].mxu0
    %4400 = vdwg.mxu0
    %v4401 = vadd.f32 %v4257, %v4327
    %v4402 = vmul.f32 %v4401, 0.5
    %v4403 = vtanh.pop %v4402
    %v4404 = vadd.f32 %v4403, 1.0
    %v4405 = vmul.f32 %v4404, 0.5
    %v4406 = vadd.f32 %v4258, %v4329
    %v4407 = vmul.f32 %v4406, 0.5
    %v4408 = vtanh.pop %v4407
    %v4409 = vadd.f32 %v4408, 1.0
    %v4410 = vmul.f32 %v4409, 0.5
    %v4411 = vadd.f32 %v4398, %v1609
    %v4412 = vmul.f32 %v4405, %v4411
    %v4413 = vadd.f32 %v4259, %v4412
    %v4414 = vtanh.pop %v4413
    %v4415 = vsub.f32 1.0, %v4410
    %v4416 = vmul.f32 %v4415, %v4414
    %v4417 = vmul.f32 %v4410, %v3955
    %v4418 = vadd.f32 %v4416, %v4417
    %4419 = vmatprep.subr.mxu0 %v1667
    %4420 = vmatpush1.msra.mxu0 %v1666
    %4421 = vmatprep.subr.mxu0 %v1670
    %4422 = vmatpush1.msra.mxu0 %v1669
    %4423 = vmatprep.subr.mxu0 %v1673
    %4424 = vmatpush1.msra.mxu0 %v1672
    %4425 = vmatprep.subr.mxu0 %v1676
    %4426 = vmatpush1.msra.mxu0 %v1675
    %4427 = vmatprep.subr.mxu0 %v1679
    %4428 = vmatpush1.msra.mxu0 %v1678
    %4429 = vmatprep.subr.mxu0 %v1682
    %4430 = vmatpush1.msra.mxu0 %v1681
    %4431 = vmatprep.subr.mxu0 %v1685
    %4432 = vmatpush1.msra.mxu0 %v1684
    %4433 = vmatprep.subr.mxu0 %v1688
    %4434 = vmatpush1.msra.mxu0 %v1687
    %4435 = vmatprep.subr.mxu0 %v1691
    %4436 = vmatpush1.msra.mxu0 %v1690
    %4437 = vmatprep.subr.mxu0 %v1694
    %4438 = vmatpush1.msra.mxu0 %v1693
    %4439 = vmatprep.subr.mxu0 %v1697
    %4440 = vmatpush1.msra.mxu0 %v1696
    %4441 = vmatprep.subr.mxu0 %v1700
    %4442 = vmatpush1.msra.mxu0 %v1699
    %4443 = vmatprep.subr.mxu0 %v1703
    %4444 = vmatpush1.msra.mxu0 %v1702
    %4445 = vmatprep.subr.mxu0 %v1706
    %4446 = vmatpush1.msra.mxu0 %v1705
    %4447 = vmatprep.subr.mxu0 %v1709
    %4448 = vmatpush1.msra.mxu0 %v1708
    %4449 = vmatprep.subr.mxu0 %v1712
    %4450 = vmatpush1.msra.mxu0 %v1711
    %4451 = vmatprep.subr.mxu0 0.0
    %4452 = vmatpush1.msra.mxu0 0.0
    %4453 = vmatprep.subr.mxu0 0.0
    %4454 = vmatpush1.msra.mxu0 0.0
    %4455 = vmatprep.subr.mxu0 0.0
    %4456 = vmatpush1.msra.mxu0 0.0
    %4457 = vmatprep.subr.mxu0 0.0
    %4458 = vmatpush1.msra.mxu0 0.0
    %4459 = vmatprep.subr.mxu0 0.0
    %4460 = vmatpush1.msra.mxu0 0.0
    %4461 = vmatprep.subr.mxu0 0.0
    %4462 = vmatpush1.msra.mxu0 0.0
    %4463 = vmatprep.subr.mxu0 0.0
    %4464 = vmatpush1.msra.mxu0 0.0
    %4465 = vmatprep.subr.mxu0 0.0
    %4466 = vmatpush1.msra.mxu0 0.0
    %4467 = vmatprep.subr.mxu0 0.0
    %4468 = vmatpush1.msra.mxu0 0.0
    %4469 = vmatprep.subr.mxu0 0.0
    %4470 = vmatpush1.msra.mxu0 0.0
    %4471 = vmatprep.subr.mxu0 0.0
    %4472 = vmatpush1.msra.mxu0 0.0
    %4473 = vmatprep.subr.mxu0 0.0
    %4474 = vmatpush1.msra.mxu0 0.0
    %4475 = vmatprep.subr.mxu0 0.0
    %4476 = vmatpush1.msra.mxu0 0.0
    %4477 = vmatprep.subr.mxu0 0.0
    %4478 = vmatpush1.msra.mxu0 0.0
    %4479 = vmatprep.subr.mxu0 0.0
    %4480 = vmatpush1.msra.mxu0 0.0
    %4481 = vmatprep.subr.mxu0 0.0
    %4482 = vmatpush1.msra.mxu0 0.0
    %4483 = vmatprep.mubr.f32.mxu0 0.0
    %4484 = vmatmul.mubr.f32.gmra.mrb[0].mxu0 %v3955
    %v4485 = vpop.f32.mrb[0].mxu0
    %v4486 = vadd.f32 %v2092, %v4485
    %v4487 = vpop.f32.mrb[0].mxu0
    %v4488 = vadd.f32 %v2096, %v4487
    %4489 = vdwg.mxu0
    %4490 = vmatprep.subr.mxu0 0.0
    %4491 = vmatpush1.msra.mxu0 %v1668
    %4492 = vmatprep.subr.mxu0 0.0
    %4493 = vmatpush1.msra.mxu0 %v1671
    %4494 = vmatprep.subr.mxu0 0.0
    %4495 = vmatpush1.msra.mxu0 %v1674
    %4496 = vmatprep.subr.mxu0 0.0
    %4497 = vmatpush1.msra.mxu0 %v1677
    %4498 = vmatprep.subr.mxu0 0.0
    %4499 = vmatpush1.msra.mxu0 %v1680
    %4500 = vmatprep.subr.mxu0 0.0
    %4501 = vmatpush1.msra.mxu0 %v1683
    %4502 = vmatprep.subr.mxu0 0.0
    %4503 = vmatpush1.msra.mxu0 %v1686
    %4504 = vmatprep.subr.mxu0 0.0
    %4505 = vmatpush1.msra.mxu0 %v1689
    %4506 = vmatprep.subr.mxu0 0.0
    %4507 = vmatpush1.msra.mxu0 %v1692
    %4508 = vmatprep.subr.mxu0 0.0
    %4509 = vmatpush1.msra.mxu0 %v1695
    %4510 = vmatprep.subr.mxu0 0.0
    %4511 = vmatpush1.msra.mxu0 %v1698
    %4512 = vmatprep.subr.mxu0 0.0
    %4513 = vmatpush1.msra.mxu0 %v1701
    %4514 = vmatprep.subr.mxu0 0.0
    %4515 = vmatpush1.msra.mxu0 %v1704
    %4516 = vmatprep.subr.mxu0 0.0
    %4517 = vmatpush1.msra.mxu0 %v1707
    %4518 = vmatprep.subr.mxu0 0.0
    %4519 = vmatpush1.msra.mxu0 %v1710
    %4520 = vmatprep.subr.mxu0 0.0
    %4521 = vmatpush1.msra.mxu0 %v1713
    %4522 = vmatprep.subr.mxu0 0.0
    %4523 = vmatpush1.msra.mxu0 0.0
    %4524 = vmatprep.subr.mxu0 0.0
    %4525 = vmatpush1.msra.mxu0 0.0
    %4526 = vmatprep.subr.mxu0 0.0
    %4527 = vmatpush1.msra.mxu0 0.0
    %4528 = vmatprep.subr.mxu0 0.0
    %4529 = vmatpush1.msra.mxu0 0.0
    %4530 = vmatprep.subr.mxu0 0.0
    %4531 = vmatpush1.msra.mxu0 0.0
    %4532 = vmatprep.subr.mxu0 0.0
    %4533 = vmatpush1.msra.mxu0 0.0
    %4534 = vmatprep.subr.mxu0 0.0
    %4535 = vmatpush1.msra.mxu0 0.0
    %4536 = vmatprep.subr.mxu0 0.0
    %4537 = vmatpush1.msra.mxu0 0.0
    %4538 = vmatprep.subr.mxu0 0.0
    %4539 = vmatpush1.msra.mxu0 0.0
    %4540 = vmatprep.subr.mxu0 0.0
    %4541 = vmatpush1.msra.mxu0 0.0
    %4542 = vmatprep.subr.mxu0 0.0
    %4543 = vmatpush1.msra.mxu0 0.0
    %4544 = vmatprep.subr.mxu0 0.0
    %4545 = vmatpush1.msra.mxu0 0.0
    %4546 = vmatprep.subr.mxu0 0.0
    %4547 = vmatpush1.msra.mxu0 0.0
    %4548 = vmatprep.subr.mxu0 0.0
    %4549 = vmatpush1.msra.mxu0 0.0
    %4550 = vmatprep.subr.mxu0 0.0
    %4551 = vmatpush1.msra.mxu0 0.0
    %4552 = vmatprep.subr.mxu0 0.0
    %4553 = vmatpush1.msra.mxu0 0.0
    %4554 = vmatprep.mubr.f32.mxu0 0.0
    %4555 = vmatmul.mubr.f32.gmra.mrb[0].mxu0 %v3955
    %v4556 = vpop.f32.mrb[0].mxu0
    %v4557 = vadd.f32 %v2100, %v4556
    %v4558 = vpop.f32.mrb[0].mxu0
    %4559 = vdwg.mxu0
    %4560 = vmatprep.subr.mxu0 %v1715
    %4561 = vmatpush1.msra.mxu0 %v1714
    %4562 = vmatprep.subr.mxu0 %v1718
    %4563 = vmatpush1.msra.mxu0 %v1717
    %4564 = vmatprep.subr.mxu0 %v1721
    %4565 = vmatpush1.msra.mxu0 %v1720
    %4566 = vmatprep.subr.mxu0 %v1724
    %4567 = vmatpush1.msra.mxu0 %v1723
    %4568 = vmatprep.subr.mxu0 %v1727
    %4569 = vmatpush1.msra.mxu0 %v1726
    %4570 = vmatprep.subr.mxu0 %v1730
    %4571 = vmatpush1.msra.mxu0 %v1729
    %4572 = vmatprep.subr.mxu0 %v1733
    %4573 = vmatpush1.msra.mxu0 %v1732
    %4574 = vmatprep.subr.mxu0 %v1736
    %4575 = vmatpush1.msra.mxu0 %v1735
    %4576 = vmatprep.subr.mxu0 %v1739
    %4577 = vmatpush1.msra.mxu0 %v1738
    %4578 = vmatprep.subr.mxu0 %v1742
    %4579 = vmatpush1.msra.mxu0 %v1741
    %4580 = vmatprep.subr.mxu0 %v1745
    %4581 = vmatpush1.msra.mxu0 %v1744
    %4582 = vmatprep.subr.mxu0 %v1748
    %4583 = vmatpush1.msra.mxu0 %v1747
    %4584 = vmatprep.subr.mxu0 %v1751
    %4585 = vmatpush1.msra.mxu0 %v1750
    %4586 = vmatprep.subr.mxu0 %v1754
    %4587 = vmatpush1.msra.mxu0 %v1753
    %4588 = vmatprep.subr.mxu0 %v1757
    %4589 = vmatpush1.msra.mxu0 %v1756
    %4590 = vmatprep.subr.mxu0 %v1760
    %4591 = vmatpush1.msra.mxu0 %v1759
    %4592 = vmatprep.subr.mxu0 0.0
    %4593 = vmatpush1.msra.mxu0 0.0
    %4594 = vmatprep.subr.mxu0 0.0
    %4595 = vmatpush1.msra.mxu0 0.0
    %4596 = vmatprep.subr.mxu0 0.0
    %4597 = vmatpush1.msra.mxu0 0.0
    %4598 = vmatprep.subr.mxu0 0.0
    %4599 = vmatpush1.msra.mxu0 0.0
    %4600 = vmatprep.subr.mxu0 0.0
    %4601 = vmatpush1.msra.mxu0 0.0
    %4602 = vmatprep.subr.mxu0 0.0
    %4603 = vmatpush1.msra.mxu0 0.0
    %4604 = vmatprep.subr.mxu0 0.0
    %4605 = vmatpush1.msra.mxu0 0.0
    %4606 = vmatprep.subr.mxu0 0.0
    %4607 = vmatpush1.msra.mxu0 0.0
    %4608 = vmatprep.subr.mxu0 0.0
    %4609 = vmatpush1.msra.mxu0 0.0
    %4610 = vmatprep.subr.mxu0 0.0
    %4611 = vmatpush1.msra.mxu0 0.0
    %4612 = vmatprep.subr.mxu0 0.0
    %4613 = vmatpush1.msra.mxu0 0.0
    %4614 = vmatprep.subr.mxu0 0.0
    %4615 = vmatpush1.msra.mxu0 0.0
    %4616 = vmatprep.subr.mxu0 0.0
    %4617 = vmatpush1.msra.mxu0 0.0
    %4618 = vmatprep.subr.mxu0 0.0
    %4619 = vmatpush1.msra.mxu0 0.0
    %4620 = vmatprep.subr.mxu0 0.0
    %4621 = vmatpush1.msra.mxu0 0.0
    %4622 = vmatprep.subr.mxu0 0.0
    %4623 = vmatpush1.msra.mxu0 0.0
    %4624 = vmatprep.mubr.f32.mxu0 0.0
    %4625 = vmatmul.mubr.f32.gmra.mrb[0].mxu0 %v4255
    %v4626 = vpop.f32.mrb[0].mxu0
    %v4627 = vadd.f32 0.0, %v4626
    %v4628 = vpop.f32.mrb[0].mxu0
    %v4629 = vadd.f32 0.0, %v4628
    %4630 = vdwg.mxu0
    %4631 = vmatprep.subr.mxu0 0.0
    %4632 = vmatpush1.msra.mxu0 %v1716
    %4633 = vmatprep.subr.mxu0 0.0
    %4634 = vmatpush1.msra.mxu0 %v1719
    %4635 = vmatprep.subr.mxu0 0.0
    %4636 = vmatpush1.msra.mxu0 %v1722
    %4637 = vmatprep.subr.mxu0 0.0
    %4638 = vmatpush1.msra.mxu0 %v1725
    %4639 = vmatprep.subr.mxu0 0.0
    %4640 = vmatpush1.msra.mxu0 %v1728
    %4641 = vmatprep.subr.mxu0 0.0
    %4642 = vmatpush1.msra.mxu0 %v1731
    %4643 = vmatprep.subr.mxu0 0.0
    %4644 = vmatpush1.msra.mxu0 %v1734
    %4645 = vmatprep.subr.mxu0 0.0
    %4646 = vmatpush1.msra.mxu0 %v1737
    %4647 = vmatprep.subr.mxu0 0.0
    %4648 = vmatpush1.msra.mxu0 %v1740
    %4649 = vmatprep.subr.mxu0 0.0
    %4650 = vmatpush1.msra.mxu0 %v1743
    %4651 = vmatprep.subr.mxu0 0.0
    %4652 = vmatpush1.msra.mxu0 %v1746
    %4653 = vmatprep.subr.mxu0 0.0
    %4654 = vmatpush1.msra.mxu0 %v1749
    %4655 = vmatprep.subr.mxu0 0.0
    %4656 = vmatpush1.msra.mxu0 %v1752
    %4657 = vmatprep.subr.mxu0 0.0
    %4658 = vmatpush1.msra.mxu0 %v1755
    %4659 = vmatprep.subr.mxu0 0.0
    %4660 = vmatpush1.msra.mxu0 %v1758
    %4661 = vmatprep.subr.mxu0 0.0
    %4662 = vmatpush1.msra.mxu0 %v1761
    %4663 = vmatprep.subr.mxu0 0.0
    %4664 = vmatpush1.msra.mxu0 0.0
    %4665 = vmatprep.subr.mxu0 0.0
    %4666 = vmatpush1.msra.mxu0 0.0
    %4667 = vmatprep.subr.mxu0 0.0
    %4668 = vmatpush1.msra.mxu0 0.0
    %4669 = vmatprep.subr.mxu0 0.0
    %4670 = vmatpush1.msra.mxu0 0.0
    %4671 = vmatprep.subr.mxu0 0.0
    %4672 = vmatpush1.msra.mxu0 0.0
    %4673 = vmatprep.subr.mxu0 0.0
    %4674 = vmatpush1.msra.mxu0 0.0
    %4675 = vmatprep.subr.mxu0 0.0
    %4676 = vmatpush1.msra.mxu0 0.0
    %4677 = vmatprep.subr.mxu0 0.0
    %4678 = vmatpush1.msra.mxu0 0.0
    %4679 = vmatprep.subr.mxu0 0.0
    %4680 = vmatpush1.msra.mxu0 0.0
    %4681 = vmatprep.subr.mxu0 0.0
    %4682 = vmatpush1.msra.mxu0 0.0
    %4683 = vmatprep.subr.mxu0 0.0
    %4684 = vmatpush1.msra.mxu0 0.0
    %4685 = vmatprep.subr.mxu0 0.0
    %4686 = vmatpush1.msra.mxu0 0.0
    %4687 = vmatprep.subr.mxu0 0.0
    %4688 = vmatpush1.msra.mxu0 0.0
    %4689 = vmatprep.subr.mxu0 0.0
    %4690 = vmatpush1.msra.mxu0 0.0
    %4691 = vmatprep.subr.mxu0 0.0
    %4692 = vmatpush1.msra.mxu0 0.0
    %4693 = vmatprep.subr.mxu0 0.0
    %4694 = vmatpush1.msra.mxu0 0.0
    %4695 = vmatprep.mubr.f32.mxu0 0.0
    %4696 = vmatmul.mubr.f32.gmra.mrb[0].mxu0 %v4255
    %v4697 = vpop.f32.mrb[0].mxu0
    %v4698 = vadd.f32 0.0, %v4697
    %v4699 = vpop.f32.mrb[0].mxu0
    %4700 = vdwg.mxu0
    %v4701 = vadd.f32 %v4486, %v4627
    %v4702 = vmul.f32 %v4701, 0.5
    %v4703 = vtanh.pop %v4702
    %v4704 = vadd.f32 %v4703, 1.0
    %v4705 = vmul.f32 %v4704, 0.5
    %v4706 = vadd.f32 %v4488, %v4629
    %v4707 = vmul.f32 %v4706, 0.5
    %v4708 = vtanh.pop %v4707
    %v4709 = vadd.f32 %v4708, 1.0
    %v4710 = vmul.f32 %v4709, 0.5
    %v4711 = vadd.f32 %v4698, %v1616
    %v4712 = vmul.f32 %v4705, %v4711
    %v4713 = vadd.f32 %v4557, %v4712
    %v4714 = vtanh.pop %v4713
    %v4715 = vsub.f32 1.0, %v4710
    %v4716 = vmul.f32 %v4715, %v4714
    %v4717 = vmul.f32 %v4710, %v4255
    %v4718 = vadd.f32 %v4716, %v4717
    %4719 = vst [vmem:[%s11 + $0x28] sm:$0xff] %v4718
    %v4720 = vld [vmem:[#allocation2 + $0xa8] sm:$0xff]
    %v4721 = vld [vmem:[#allocation2 + $0xb0] sm:$0xff]
    %v4722 = vld [vmem:[#allocation2 + $0xb8] sm:$0xff]
    %4723 = vmatprep.subr.mxu0 %v1619
    %4724 = vmatpush1.msra.mxu0 %v1618
    %4725 = vmatprep.subr.mxu0 %v1622
    %4726 = vmatpush1.msra.mxu0 %v1621
    %4727 = vmatprep.subr.mxu0 %v1625
    %4728 = vmatpush1.msra.mxu0 %v1624
    %4729 = vmatprep.subr.mxu0 %v1628
    %4730 = vmatpush1.msra.mxu0 %v1627
    %4731 = vmatprep.subr.mxu0 %v1631
    %4732 = vmatpush1.msra.mxu0 %v1630
    %4733 = vmatprep.subr.mxu0 %v1634
    %4734 = vmatpush1.msra.mxu0 %v1633
    %4735 = vmatprep.subr.mxu0 %v1637
    %4736 = vmatpush1.msra.mxu0 %v1636
    %4737 = vmatprep.subr.mxu0 %v1640
    %4738 = vmatpush1.msra.mxu0 %v1639
    %4739 = vmatprep.subr.mxu0 %v1643
    %4740 = vmatpush1.msra.mxu0 %v1642
    %4741 = vmatprep.subr.mxu0 %v1646
    %4742 = vmatpush1.msra.mxu0 %v1645
    %4743 = vmatprep.subr.mxu0 %v1649
    %4744 = vmatpush1.msra.mxu0 %v1648
    %4745 = vmatprep.subr.mxu0 %v1652
    %4746 = vmatpush1.msra.mxu0 %v1651
    %4747 = vmatprep.subr.mxu0 %v1655
    %4748 = vmatpush1.msra.mxu0 %v1654
    %4749 = vmatprep.subr.mxu0 %v1658
    %4750 = vmatpush1.msra.mxu0 %v1657
    %4751 = vmatprep.subr.mxu0 %v1661
    %4752 = vmatpush1.msra.mxu0 %v1660
    %4753 = vmatprep.subr.mxu0 %v1664
    %4754 = vmatpush1.msra.mxu0 %v1663
    %4755 = vmatprep.subr.mxu0 0.0
    %4756 = vmatpush1.msra.mxu0 0.0
    %4757 = vmatprep.subr.mxu0 0.0
    %4758 = vmatpush1.msra.mxu0 0.0
    %4759 = vmatprep.subr.mxu0 0.0
    %4760 = vmatpush1.msra.mxu0 0.0
    %4761 = vmatprep.subr.mxu0 0.0
    %4762 = vmatpush1.msra.mxu0 0.0
    %4763 = vmatprep.subr.mxu0 0.0
    %4764 = vmatpush1.msra.mxu0 0.0
    %4765 = vmatprep.subr.mxu0 0.0
    %4766 = vmatpush1.msra.mxu0 0.0
    %4767 = vmatprep.subr.mxu0 0.0
    %4768 = vmatpush1.msra.mxu0 0.0
    %4769 = vmatprep.subr.mxu0 0.0
    %4770 = vmatpush1.msra.mxu0 0.0
    %4771 = vmatprep.subr.mxu0 0.0
    %4772 = vmatpush1.msra.mxu0 0.0
    %4773 = vmatprep.subr.mxu0 0.0
    %4774 = vmatpush1.msra.mxu0 0.0
    %4775 = vmatprep.subr.mxu0 0.0
    %4776 = vmatpush1.msra.mxu0 0.0
    %4777 = vmatprep.subr.mxu0 0.0
    %4778 = vmatpush1.msra.mxu0 0.0
    %4779 = vmatprep.subr.mxu0 0.0
    %4780 = vmatpush1.msra.mxu0 0.0
    %4781 = vmatprep.subr.mxu0 0.0
    %4782 = vmatpush1.msra.mxu0 0.0
    %4783 = vmatprep.subr.mxu0 0.0
    %4784 = vmatpush1.msra.mxu0 0.0
    %4785 = vmatprep.subr.mxu0 0.0
    %4786 = vmatpush1.msra.mxu0 0.0
    %4787 = vmatprep.mubr.f32.mxu0 0.0
    %4788 = vmatmul.mubr.f32.gmra.mrb[0].mxu0 %v4418
    %v4789 = vpop.f32.mrb[0].mxu0
    %v4790 = vadd.f32 0.0, %v4789
    %v4791 = vpop.f32.mrb[0].mxu0
    %v4792 = vadd.f32 0.0, %v4791
    %4793 = vdwg.mxu0
    %4794 = vmatprep.subr.mxu0 0.0
    %4795 = vmatpush1.msra.mxu0 %v1620
    %4796 = vmatprep.subr.mxu0 0.0
    %4797 = vmatpush1.msra.mxu0 %v1623
    %4798 = vmatprep.subr.mxu0 0.0
    %4799 = vmatpush1.msra.mxu0 %v1626
    %4800 = vmatprep.subr.mxu0 0.0
    %4801 = vmatpush1.msra.mxu0 %v1629
    %4802 = vmatprep.subr.mxu0 0.0
    %4803 = vmatpush1.msra.mxu0 %v1632
    %4804 = vmatprep.subr.mxu0 0.0
    %4805 = vmatpush1.msra.mxu0 %v1635
    %4806 = vmatprep.subr.mxu0 0.0
    %4807 = vmatpush1.msra.mxu0 %v1638
    %4808 = vmatprep.subr.mxu0 0.0
    %4809 = vmatpush1.msra.mxu0 %v1641
    %4810 = vmatprep.subr.mxu0 0.0
    %4811 = vmatpush1.msra.mxu0 %v1644
    %4812 = vmatprep.subr.mxu0 0.0
    %4813 = vmatpush1.msra.mxu0 %v1647
    %4814 = vmatprep.subr.mxu0 0.0
    %4815 = vmatpush1.msra.mxu0 %v1650
    %4816 = vmatprep.subr.mxu0 0.0
    %4817 = vmatpush1.msra.mxu0 %v1653
    %4818 = vmatprep.subr.mxu0 0.0
    %4819 = vmatpush1.msra.mxu0 %v1656
    %4820 = vmatprep.subr.mxu0 0.0
    %4821 = vmatpush1.msra.mxu0 %v1659
    %4822 = vmatprep.subr.mxu0 0.0
    %4823 = vmatpush1.msra.mxu0 %v1662
    %4824 = vmatprep.subr.mxu0 0.0
    %4825 = vmatpush1.msra.mxu0 %v1665
    %4826 = vmatprep.subr.mxu0 0.0
    %4827 = vmatpush1.msra.mxu0 0.0
    %4828 = vmatprep.subr.mxu0 0.0
    %4829 = vmatpush1.msra.mxu0 0.0
    %4830 = vmatprep.subr.mxu0 0.0
    %4831 = vmatpush1.msra.mxu0 0.0
    %4832 = vmatprep.subr.mxu0 0.0
    %4833 = vmatpush1.msra.mxu0 0.0
    %4834 = vmatprep.subr.mxu0 0.0
    %4835 = vmatpush1.msra.mxu0 0.0
    %4836 = vmatprep.subr.mxu0 0.0
    %4837 = vmatpush1.msra.mxu0 0.0
    %4838 = vmatprep.subr.mxu0 0.0
    %4839 = vmatpush1.msra.mxu0 0.0
    %4840 = vmatprep.subr.mxu0 0.0
    %4841 = vmatpush1.msra.mxu0 0.0
    %4842 = vmatprep.subr.mxu0 0.0
    %4843 = vmatpush1.msra.mxu0 0.0
    %4844 = vmatprep.subr.mxu0 0.0
    %4845 = vmatpush1.msra.mxu0 0.0
    %4846 = vmatprep.subr.mxu0 0.0
    %4847 = vmatpush1.msra.mxu0 0.0
    %4848 = vmatprep.subr.mxu0 0.0
    %4849 = vmatpush1.msra.mxu0 0.0
    %4850 = vmatprep.subr.mxu0 0.0
    %4851 = vmatpush1.msra.mxu0 0.0
    %4852 = vmatprep.subr.mxu0 0.0
    %4853 = vmatpush1.msra.mxu0 0.0
    %4854 = vmatprep.subr.mxu0 0.0
    %4855 = vmatpush1.msra.mxu0 0.0
    %4856 = vmatprep.subr.mxu0 0.0
    %4857 = vmatpush1.msra.mxu0 0.0
    %4858 = vmatprep.mubr.f32.mxu0 0.0
    %4859 = vmatmul.mubr.f32.gmra.mrb[0].mxu0 %v4418
    %v4860 = vpop.f32.mrb[0].mxu0
    %v4861 = vadd.f32 0.0, %v4860
    %v4862 = vpop.f32.mrb[0].mxu0
    %4863 = vdwg.mxu0
    %v4864 = vadd.f32 %v4720, %v4790
    %v4865 = vmul.f32 %v4864, 0.5
    %v4866 = vtanh.pop %v4865
    %v4867 = vadd.f32 %v4866, 1.0
    %v4868 = vmul.f32 %v4867, 0.5
    %v4869 = vadd.f32 %v4721, %v4792
    %v4870 = vmul.f32 %v4869, 0.5
    %v4871 = vtanh.pop %v4870
    %v4872 = vadd.f32 %v4871, 1.0
    %v4873 = vmul.f32 %v4872, 0.5
    %v4874 = vadd.f32 %v4861, %v1609
    %v4875 = vmul.f32 %v4868, %v4874
    %v4876 = vadd.f32 %v4722, %v4875
    %v4877 = vtanh.pop %v4876
    %v4878 = vsub.f32 1.0, %v4873
    %v4879 = vmul.f32 %v4878, %v4877
    %v4880 = vmul.f32 %v4873, %v4418
    %v4881 = vadd.f32 %v4879, %v4880
    %4882 = vmatprep.subr.mxu0 %v1667
    %4883 = vmatpush1.msra.mxu0 %v1666
    %4884 = vmatprep.subr.mxu0 %v1670
    %4885 = vmatpush1.msra.mxu0 %v1669
    %4886 = vmatprep.subr.mxu0 %v1673
    %4887 = vmatpush1.msra.mxu0 %v1672
    %4888 = vmatprep.subr.mxu0 %v1676
    %4889 = vmatpush1.msra.mxu0 %v1675
    %4890 = vmatprep.subr.mxu0 %v1679
    %4891 = vmatpush1.msra.mxu0 %v1678
    %4892 = vmatprep.subr.mxu0 %v1682
    %4893 = vmatpush1.msra.mxu0 %v1681
    %4894 = vmatprep.subr.mxu0 %v1685
    %4895 = vmatpush1.msra.mxu0 %v1684
    %4896 = vmatprep.subr.mxu0 %v1688
    %4897 = vmatpush1.msra.mxu0 %v1687
    %4898 = vmatprep.subr.mxu0 %v1691
    %4899 = vmatpush1.msra.mxu0 %v1690
    %4900 = vmatprep.subr.mxu0 %v1694
    %4901 = vmatpush1.msra.mxu0 %v1693
    %4902 = vmatprep.subr.mxu0 %v1697
    %4903 = vmatpush1.msra.mxu0 %v1696
    %4904 = vmatprep.subr.mxu0 %v1700
    %4905 = vmatpush1.msra.mxu0 %v1699
    %4906 = vmatprep.subr.mxu0 %v1703
    %4907 = vmatpush1.msra.mxu0 %v1702
    %4908 = vmatprep.subr.mxu0 %v1706
    %4909 = vmatpush1.msra.mxu0 %v1705
    %4910 = vmatprep.subr.mxu0 %v1709
    %4911 = vmatpush1.msra.mxu0 %v1708
    %4912 = vmatprep.subr.mxu0 %v1712
    %4913 = vmatpush1.msra.mxu0 %v1711
    %4914 = vmatprep.subr.mxu0 0.0
    %4915 = vmatpush1.msra.mxu0 0.0
    %4916 = vmatprep.subr.mxu0 0.0
    %4917 = vmatpush1.msra.mxu0 0.0
    %4918 = vmatprep.subr.mxu0 0.0
    %4919 = vmatpush1.msra.mxu0 0.0
    %4920 = vmatprep.subr.mxu0 0.0
    %4921 = vmatpush1.msra.mxu0 0.0
    %4922 = vmatprep.subr.mxu0 0.0
    %4923 = vmatpush1.msra.mxu0 0.0
    %4924 = vmatprep.subr.mxu0 0.0
    %4925 = vmatpush1.msra.mxu0 0.0
    %4926 = vmatprep.subr.mxu0 0.0
    %4927 = vmatpush1.msra.mxu0 0.0
    %4928 = vmatprep.subr.mxu0 0.0
    %4929 = vmatpush1.msra.mxu0 0.0
    %4930 = vmatprep.subr.mxu0 0.0
    %4931 = vmatpush1.msra.mxu0 0.0
    %4932 = vmatprep.subr.mxu0 0.0
    %4933 = vmatpush1.msra.mxu0 0.0
    %4934 = vmatprep.subr.mxu0 0.0
    %4935 = vmatpush1.msra.mxu0 0.0
    %4936 = vmatprep.subr.mxu0 0.0
    %4937 = vmatpush1.msra.mxu0 0.0
    %4938 = vmatprep.subr.mxu0 0.0
    %4939 = vmatpush1.msra.mxu0 0.0
    %4940 = vmatprep.subr.mxu0 0.0
    %4941 = vmatpush1.msra.mxu0 0.0
    %4942 = vmatprep.subr.mxu0 0.0
    %4943 = vmatpush1.msra.mxu0 0.0
    %4944 = vmatprep.subr.mxu0 0.0
    %4945 = vmatpush1.msra.mxu0 0.0
    %4946 = vmatprep.mubr.f32.mxu0 0.0
    %4947 = vmatmul.mubr.f32.gmra.mrb[0].mxu0 %v4418
    %v4948 = vpop.f32.mrb[0].mxu0
    %v4949 = vadd.f32 %v2092, %v4948
    %v4950 = vpop.f32.mrb[0].mxu0
    %v4951 = vadd.f32 %v2096, %v4950
    %4952 = vdwg.mxu0
    %4953 = vmatprep.subr.mxu0 0.0
    %4954 = vmatpush1.msra.mxu0 %v1668
    %4955 = vmatprep.subr.mxu0 0.0
    %4956 = vmatpush1.msra.mxu0 %v1671
    %4957 = vmatprep.subr.mxu0 0.0
    %4958 = vmatpush1.msra.mxu0 %v1674
    %4959 = vmatprep.subr.mxu0 0.0
    %4960 = vmatpush1.msra.mxu0 %v1677
    %4961 = vmatprep.subr.mxu0 0.0
    %4962 = vmatpush1.msra.mxu0 %v1680
    %4963 = vmatprep.subr.mxu0 0.0
    %4964 = vmatpush1.msra.mxu0 %v1683
    %4965 = vmatprep.subr.mxu0 0.0
    %4966 = vmatpush1.msra.mxu0 %v1686
    %4967 = vmatprep.subr.mxu0 0.0
    %4968 = vmatpush1.msra.mxu0 %v1689
    %4969 = vmatprep.subr.mxu0 0.0
    %4970 = vmatpush1.msra.mxu0 %v1692
    %4971 = vmatprep.subr.mxu0 0.0
    %4972 = vmatpush1.msra.mxu0 %v1695
    %4973 = vmatprep.subr.mxu0 0.0
    %4974 = vmatpush1.msra.mxu0 %v1698
    %4975 = vmatprep.subr.mxu0 0.0
    %4976 = vmatpush1.msra.mxu0 %v1701
    %4977 = vmatprep.subr.mxu0 0.0
    %4978 = vmatpush1.msra.mxu0 %v1704
    %4979 = vmatprep.subr.mxu0 0.0
    %4980 = vmatpush1.msra.mxu0 %v1707
    %4981 = vmatprep.subr.mxu0 0.0
    %4982 = vmatpush1.msra.mxu0 %v1710
    %4983 = vmatprep.subr.mxu0 0.0
    %4984 = vmatpush1.msra.mxu0 %v1713
    %4985 = vmatprep.subr.mxu0 0.0
    %4986 = vmatpush1.msra.mxu0 0.0
    %4987 = vmatprep.subr.mxu0 0.0
    %4988 = vmatpush1.msra.mxu0 0.0
    %4989 = vmatprep.subr.mxu0 0.0
    %4990 = vmatpush1.msra.mxu0 0.0
    %4991 = vmatprep.subr.mxu0 0.0
    %4992 = vmatpush1.msra.mxu0 0.0
    %4993 = vmatprep.subr.mxu0 0.0
    %4994 = vmatpush1.msra.mxu0 0.0
    %4995 = vmatprep.subr.mxu0 0.0
    %4996 = vmatpush1.msra.mxu0 0.0
    %4997 = vmatprep.subr.mxu0 0.0
    %4998 = vmatpush1.msra.mxu0 0.0
    %4999 = vmatprep.subr.mxu0 0.0
    %5000 = vmatpush1.msra.mxu0 0.0
    %5001 = vmatprep.subr.mxu0 0.0
    %5002 = vmatpush1.msra.mxu0 0.0
    %5003 = vmatprep.subr.mxu0 0.0
    %5004 = vmatpush1.msra.mxu0 0.0
    %5005 = vmatprep.subr.mxu0 0.0
    %5006 = vmatpush1.msra.mxu0 0.0
    %5007 = vmatprep.subr.mxu0 0.0
    %5008 = vmatpush1.msra.mxu0 0.0
    %5009 = vmatprep.subr.mxu0 0.0
    %5010 = vmatpush1.msra.mxu0 0.0
    %5011 = vmatprep.subr.mxu0 0.0
    %5012 = vmatpush1.msra.mxu0 0.0
    %5013 = vmatprep.subr.mxu0 0.0
    %5014 = vmatpush1.msra.mxu0 0.0
    %5015 = vmatprep.subr.mxu0 0.0
    %5016 = vmatpush1.msra.mxu0 0.0
    %5017 = vmatprep.mubr.f32.mxu0 0.0
    %5018 = vmatmul.mubr.f32.gmra.mrb[0].mxu0 %v4418
    %v5019 = vpop.f32.mrb[0].mxu0
    %v5020 = vadd.f32 %v2100, %v5019
    %v5021 = vpop.f32.mrb[0].mxu0
    %5022 = vdwg.mxu0
    %5023 = vmatprep.subr.mxu0 %v1715
    %5024 = vmatpush1.msra.mxu0 %v1714
    %5025 = vmatprep.subr.mxu0 %v1718
    %5026 = vmatpush1.msra.mxu0 %v1717
    %5027 = vmatprep.subr.mxu0 %v1721
    %5028 = vmatpush1.msra.mxu0 %v1720
    %5029 = vmatprep.subr.mxu0 %v1724
    %5030 = vmatpush1.msra.mxu0 %v1723
    %5031 = vmatprep.subr.mxu0 %v1727
    %5032 = vmatpush1.msra.mxu0 %v1726
    %5033 = vmatprep.subr.mxu0 %v1730
    %5034 = vmatpush1.msra.mxu0 %v1729
    %5035 = vmatprep.subr.mxu0 %v1733
    %5036 = vmatpush1.msra.mxu0 %v1732
    %5037 = vmatprep.subr.mxu0 %v1736
    %5038 = vmatpush1.msra.mxu0 %v1735
    %5039 = vmatprep.subr.mxu0 %v1739
    %5040 = vmatpush1.msra.mxu0 %v1738
    %5041 = vmatprep.subr.mxu0 %v1742
    %5042 = vmatpush1.msra.mxu0 %v1741
    %5043 = vmatprep.subr.mxu0 %v1745
    %5044 = vmatpush1.msra.mxu0 %v1744
    %5045 = vmatprep.subr.mxu0 %v1748
    %5046 = vmatpush1.msra.mxu0 %v1747
    %5047 = vmatprep.subr.mxu0 %v1751
    %5048 = vmatpush1.msra.mxu0 %v1750
    %5049 = vmatprep.subr.mxu0 %v1754
    %5050 = vmatpush1.msra.mxu0 %v1753
    %5051 = vmatprep.subr.mxu0 %v1757
    %5052 = vmatpush1.msra.mxu0 %v1756
    %5053 = vmatprep.subr.mxu0 %v1760
    %5054 = vmatpush1.msra.mxu0 %v1759
    %5055 = vmatprep.subr.mxu0 0.0
    %5056 = vmatpush1.msra.mxu0 0.0
    %5057 = vmatprep.subr.mxu0 0.0
    %5058 = vmatpush1.msra.mxu0 0.0
    %5059 = vmatprep.subr.mxu0 0.0
    %5060 = vmatpush1.msra.mxu0 0.0
    %5061 = vmatprep.subr.mxu0 0.0
    %5062 = vmatpush1.msra.mxu0 0.0
    %5063 = vmatprep.subr.mxu0 0.0
    %5064 = vmatpush1.msra.mxu0 0.0
    %5065 = vmatprep.subr.mxu0 0.0
    %5066 = vmatpush1.msra.mxu0 0.0
    %5067 = vmatprep.subr.mxu0 0.0
    %5068 = vmatpush1.msra.mxu0 0.0
    %5069 = vmatprep.subr.mxu0 0.0
    %5070 = vmatpush1.msra.mxu0 0.0
    %5071 = vmatprep.subr.mxu0 0.0
    %5072 = vmatpush1.msra.mxu0 0.0
    %5073 = vmatprep.subr.mxu0 0.0
    %5074 = vmatpush1.msra.mxu0 0.0
    %5075 = vmatprep.subr.mxu0 0.0
    %5076 = vmatpush1.msra.mxu0 0.0
    %5077 = vmatprep.subr.mxu0 0.0
    %5078 = vmatpush1.msra.mxu0 0.0
    %5079 = vmatprep.subr.mxu0 0.0
    %5080 = vmatpush1.msra.mxu0 0.0
    %5081 = vmatprep.subr.mxu0 0.0
    %5082 = vmatpush1.msra.mxu0 0.0
    %5083 = vmatprep.subr.mxu0 0.0
    %5084 = vmatpush1.msra.mxu0 0.0
    %5085 = vmatprep.subr.mxu0 0.0
    %5086 = vmatpush1.msra.mxu0 0.0
    %5087 = vmatprep.mubr.f32.mxu0 0.0
    %5088 = vmatmul.mubr.f32.gmra.mrb[0].mxu0 %v4718
    %v5089 = vpop.f32.mrb[0].mxu0
    %v5090 = vadd.f32 0.0, %v5089
    %v5091 = vpop.f32.mrb[0].mxu0
    %v5092 = vadd.f32 0.0, %v5091
    %5093 = vdwg.mxu0
    %5094 = vmatprep.subr.mxu0 0.0
    %5095 = vmatpush1.msra.mxu0 %v1716
    %5096 = vmatprep.subr.mxu0 0.0
    %5097 = vmatpush1.msra.mxu0 %v1719
    %5098 = vmatprep.subr.mxu0 0.0
    %5099 = vmatpush1.msra.mxu0 %v1722
    %5100 = vmatprep.subr.mxu0 0.0
    %5101 = vmatpush1.msra.mxu0 %v1725
    %5102 = vmatprep.subr.mxu0 0.0
    %5103 = vmatpush1.msra.mxu0 %v1728
    %5104 = vmatprep.subr.mxu0 0.0
    %5105 = vmatpush1.msra.mxu0 %v1731
    %5106 = vmatprep.subr.mxu0 0.0
    %5107 = vmatpush1.msra.mxu0 %v1734
    %5108 = vmatprep.subr.mxu0 0.0
    %5109 = vmatpush1.msra.mxu0 %v1737
    %5110 = vmatprep.subr.mxu0 0.0
    %5111 = vmatpush1.msra.mxu0 %v1740
    %5112 = vmatprep.subr.mxu0 0.0
    %5113 = vmatpush1.msra.mxu0 %v1743
    %5114 = vmatprep.subr.mxu0 0.0
    %5115 = vmatpush1.msra.mxu0 %v1746
    %5116 = vmatprep.subr.mxu0 0.0
    %5117 = vmatpush1.msra.mxu0 %v1749
    %5118 = vmatprep.subr.mxu0 0.0
    %5119 = vmatpush1.msra.mxu0 %v1752
    %5120 = vmatprep.subr.mxu0 0.0
    %5121 = vmatpush1.msra.mxu0 %v1755
    %5122 = vmatprep.subr.mxu0 0.0
    %5123 = vmatpush1.msra.mxu0 %v1758
    %5124 = vmatprep.subr.mxu0 0.0
    %5125 = vmatpush1.msra.mxu0 %v1761
    %5126 = vmatprep.subr.mxu0 0.0
    %5127 = vmatpush1.msra.mxu0 0.0
    %5128 = vmatprep.subr.mxu0 0.0
    %5129 = vmatpush1.msra.mxu0 0.0
    %5130 = vmatprep.subr.mxu0 0.0
    %5131 = vmatpush1.msra.mxu0 0.0
    %5132 = vmatprep.subr.mxu0 0.0
    %5133 = vmatpush1.msra.mxu0 0.0
    %5134 = vmatprep.subr.mxu0 0.0
    %5135 = vmatpush1.msra.mxu0 0.0
    %5136 = vmatprep.subr.mxu0 0.0
    %5137 = vmatpush1.msra.mxu0 0.0
    %5138 = vmatprep.subr.mxu0 0.0
    %5139 = vmatpush1.msra.mxu0 0.0
    %5140 = vmatprep.subr.mxu0 0.0
    %5141 = vmatpush1.msra.mxu0 0.0
    %5142 = vmatprep.subr.mxu0 0.0
    %5143 = vmatpush1.msra.mxu0 0.0
    %5144 = vmatprep.subr.mxu0 0.0
    %5145 = vmatpush1.msra.mxu0 0.0
    %5146 = vmatprep.subr.mxu0 0.0
    %5147 = vmatpush1.msra.mxu0 0.0
    %5148 = vmatprep.subr.mxu0 0.0
    %5149 = vmatpush1.msra.mxu0 0.0
    %5150 = vmatprep.subr.mxu0 0.0
    %5151 = vmatpush1.msra.mxu0 0.0
    %5152 = vmatprep.subr.mxu0 0.0
    %5153 = vmatpush1.msra.mxu0 0.0
    %5154 = vmatprep.subr.mxu0 0.0
    %5155 = vmatpush1.msra.mxu0 0.0
    %5156 = vmatprep.subr.mxu0 0.0
    %5157 = vmatpush1.msra.mxu0 0.0
    %5158 = vmatprep.mubr.f32.mxu0 0.0
    %5159 = vmatmul.mubr.f32.gmra.mrb[0].mxu0 %v4718
    %v5160 = vpop.f32.mrb[0].mxu0
    %v5161 = vadd.f32 0.0, %v5160
    %v5162 = vpop.f32.mrb[0].mxu0
    %5163 = vdwg.mxu0
    %v5164 = vadd.f32 %v4949, %v5090
    %v5165 = vmul.f32 %v5164, 0.5
    %v5166 = vtanh.pop %v5165
    %v5167 = vadd.f32 %v5166, 1.0
    %v5168 = vmul.f32 %v5167, 0.5
    %v5169 = vadd.f32 %v4951, %v5092
    %v5170 = vmul.f32 %v5169, 0.5
    %v5171 = vtanh.pop %v5170
    %v5172 = vadd.f32 %v5171, 1.0
    %v5173 = vmul.f32 %v5172, 0.5
    %v5174 = vadd.f32 %v5161, %v1616
    %v5175 = vmul.f32 %v5168, %v5174
    %v5176 = vadd.f32 %v5020, %v5175
    %v5177 = vtanh.pop %v5176
    %v5178 = vsub.f32 1.0, %v5173
    %v5179 = vmul.f32 %v5178, %v5177
    %v5180 = vmul.f32 %v5173, %v4718
    %v5181 = vadd.f32 %v5179, %v5180
    %5182 = vst [vmem:[%s11 + $0x30] sm:$0xff] %v5181
    %5183 = vmatprep.subr.mxu0 %v1667
    %5184 = vmatpush1.msra.mxu0 %v1666
    %5185 = vmatprep.subr.mxu0 %v1670
    %5186 = vmatpush1.msra.mxu0 %v1669
    %5187 = vmatprep.subr.mxu0 %v1673
    %5188 = vmatpush1.msra.mxu0 %v1672
    %5189 = vmatprep.subr.mxu0 %v1676
    %5190 = vmatpush1.msra.mxu0 %v1675
    %5191 = vmatprep.subr.mxu0 %v1679
    %5192 = vmatpush1.msra.mxu0 %v1678
    %5193 = vmatprep.subr.mxu0 %v1682
    %5194 = vmatpush1.msra.mxu0 %v1681
    %5195 = vmatprep.subr.mxu0 %v1685
    %5196 = vmatpush1.msra.mxu0 %v1684
    %5197 = vmatprep.subr.mxu0 %v1688
    %5198 = vmatpush1.msra.mxu0 %v1687
    %5199 = vmatprep.subr.mxu0 %v1691
    %5200 = vmatpush1.msra.mxu0 %v1690
    %5201 = vmatprep.subr.mxu0 %v1694
    %5202 = vmatpush1.msra.mxu0 %v1693
    %5203 = vmatprep.subr.mxu0 %v1697
    %5204 = vmatpush1.msra.mxu0 %v1696
    %5205 = vmatprep.subr.mxu0 %v1700
    %5206 = vmatpush1.msra.mxu0 %v1699
    %5207 = vmatprep.subr.mxu0 %v1703
    %5208 = vmatpush1.msra.mxu0 %v1702
    %5209 = vmatprep.subr.mxu0 %v1706
    %5210 = vmatpush1.msra.mxu0 %v1705
    %5211 = vmatprep.subr.mxu0 %v1709
    %5212 = vmatpush1.msra.mxu0 %v1708
    %5213 = vmatprep.subr.mxu0 %v1712
    %5214 = vmatpush1.msra.mxu0 %v1711
    %5215 = vmatprep.subr.mxu0 0.0
    %5216 = vmatpush1.msra.mxu0 0.0
    %5217 = vmatprep.subr.mxu0 0.0
    %5218 = vmatpush1.msra.mxu0 0.0
    %5219 = vmatprep.subr.mxu0 0.0
    %5220 = vmatpush1.msra.mxu0 0.0
    %5221 = vmatprep.subr.mxu0 0.0
    %5222 = vmatpush1.msra.mxu0 0.0
    %5223 = vmatprep.subr.mxu0 0.0
    %5224 = vmatpush1.msra.mxu0 0.0
    %5225 = vmatprep.subr.mxu0 0.0
    %5226 = vmatpush1.msra.mxu0 0.0
    %5227 = vmatprep.subr.mxu0 0.0
    %5228 = vmatpush1.msra.mxu0 0.0
    %5229 = vmatprep.subr.mxu0 0.0
    %5230 = vmatpush1.msra.mxu0 0.0
    %5231 = vmatprep.subr.mxu0 0.0
    %5232 = vmatpush1.msra.mxu0 0.0
    %5233 = vmatprep.subr.mxu0 0.0
    %5234 = vmatpush1.msra.mxu0 0.0
    %5235 = vmatprep.subr.mxu0 0.0
    %5236 = vmatpush1.msra.mxu0 0.0
    %5237 = vmatprep.subr.mxu0 0.0
    %5238 = vmatpush1.msra.mxu0 0.0
    %5239 = vmatprep.subr.mxu0 0.0
    %5240 = vmatpush1.msra.mxu0 0.0
    %5241 = vmatprep.subr.mxu0 0.0
    %5242 = vmatpush1.msra.mxu0 0.0
    %5243 = vmatprep.subr.mxu0 0.0
    %5244 = vmatpush1.msra.mxu0 0.0
    %5245 = vmatprep.subr.mxu0 0.0
    %5246 = vmatpush1.msra.mxu0 0.0
    %5247 = vmatprep.mubr.f32.mxu0 0.0
    %5248 = vmatmul.mubr.f32.gmra.mrb[0].mxu0 %v4881
    %v5249 = vpop.f32.mrb[0].mxu0
    %v5250 = vadd.f32 %v2092, %v5249
    %v5251 = vpop.f32.mrb[0].mxu0
    %v5252 = vadd.f32 %v2096, %v5251
    %5253 = vdwg.mxu0
    %5254 = vmatprep.subr.mxu0 0.0
    %5255 = vmatpush1.msra.mxu0 %v1668
    %5256 = vmatprep.subr.mxu0 0.0
    %5257 = vmatpush1.msra.mxu0 %v1671
    %5258 = vmatprep.subr.mxu0 0.0
    %5259 = vmatpush1.msra.mxu0 %v1674
    %5260 = vmatprep.subr.mxu0 0.0
    %5261 = vmatpush1.msra.mxu0 %v1677
    %5262 = vmatprep.subr.mxu0 0.0
    %5263 = vmatpush1.msra.mxu0 %v1680
    %5264 = vmatprep.subr.mxu0 0.0
    %5265 = vmatpush1.msra.mxu0 %v1683
    %5266 = vmatprep.subr.mxu0 0.0
    %5267 = vmatpush1.msra.mxu0 %v1686
    %5268 = vmatprep.subr.mxu0 0.0
    %5269 = vmatpush1.msra.mxu0 %v1689
    %5270 = vmatprep.subr.mxu0 0.0
    %5271 = vmatpush1.msra.mxu0 %v1692
    %5272 = vmatprep.subr.mxu0 0.0
    %5273 = vmatpush1.msra.mxu0 %v1695
    %5274 = vmatprep.subr.mxu0 0.0
    %5275 = vmatpush1.msra.mxu0 %v1698
    %5276 = vmatprep.subr.mxu0 0.0
    %5277 = vmatpush1.msra.mxu0 %v1701
    %5278 = vmatprep.subr.mxu0 0.0
    %5279 = vmatpush1.msra.mxu0 %v1704
    %5280 = vmatprep.subr.mxu0 0.0
    %5281 = vmatpush1.msra.mxu0 %v1707
    %5282 = vmatprep.subr.mxu0 0.0
    %5283 = vmatpush1.msra.mxu0 %v1710
    %5284 = vmatprep.subr.mxu0 0.0
    %5285 = vmatpush1.msra.mxu0 %v1713
    %5286 = vmatprep.subr.mxu0 0.0
    %5287 = vmatpush1.msra.mxu0 0.0
    %5288 = vmatprep.subr.mxu0 0.0
    %5289 = vmatpush1.msra.mxu0 0.0
    %5290 = vmatprep.subr.mxu0 0.0
    %5291 = vmatpush1.msra.mxu0 0.0
    %5292 = vmatprep.subr.mxu0 0.0
    %5293 = vmatpush1.msra.mxu0 0.0
    %5294 = vmatprep.subr.mxu0 0.0
    %5295 = vmatpush1.msra.mxu0 0.0
    %5296 = vmatprep.subr.mxu0 0.0
    %5297 = vmatpush1.msra.mxu0 0.0
    %5298 = vmatprep.subr.mxu0 0.0
    %5299 = vmatpush1.msra.mxu0 0.0
    %5300 = vmatprep.subr.mxu0 0.0
    %5301 = vmatpush1.msra.mxu0 0.0
    %5302 = vmatprep.subr.mxu0 0.0
    %5303 = vmatpush1.msra.mxu0 0.0
    %5304 = vmatprep.subr.mxu0 0.0
    %5305 = vmatpush1.msra.mxu0 0.0
    %5306 = vmatprep.subr.mxu0 0.0
    %5307 = vmatpush1.msra.mxu0 0.0
    %5308 = vmatprep.subr.mxu0 0.0
    %5309 = vmatpush1.msra.mxu0 0.0
    %5310 = vmatprep.subr.mxu0 0.0
    %5311 = vmatpush1.msra.mxu0 0.0
    %5312 = vmatprep.subr.mxu0 0.0
    %5313 = vmatpush1.msra.mxu0 0.0
    %5314 = vmatprep.subr.mxu0 0.0
    %5315 = vmatpush1.msra.mxu0 0.0
    %5316 = vmatprep.subr.mxu0 0.0
    %5317 = vmatpush1.msra.mxu0 0.0
    %5318 = vmatprep.mubr.f32.mxu0 0.0
    %5319 = vmatmul.mubr.f32.gmra.mrb[0].mxu0 %v4881
    %v5320 = vpop.f32.mrb[0].mxu0
    %v5321 = vadd.f32 %v2100, %v5320
    %v5322 = vpop.f32.mrb[0].mxu0
    %5323 = vdwg.mxu0
    %5324 = vmatprep.subr.mxu0 %v1715
    %5325 = vmatpush1.msra.mxu0 %v1714
    %5326 = vmatprep.subr.mxu0 %v1718
    %5327 = vmatpush1.msra.mxu0 %v1717
    %5328 = vmatprep.subr.mxu0 %v1721
    %5329 = vmatpush1.msra.mxu0 %v1720
    %5330 = vmatprep.subr.mxu0 %v1724
    %5331 = vmatpush1.msra.mxu0 %v1723
    %5332 = vmatprep.subr.mxu0 %v1727
    %5333 = vmatpush1.msra.mxu0 %v1726
    %5334 = vmatprep.subr.mxu0 %v1730
    %5335 = vmatpush1.msra.mxu0 %v1729
    %5336 = vmatprep.subr.mxu0 %v1733
    %5337 = vmatpush1.msra.mxu0 %v1732
    %5338 = vmatprep.subr.mxu0 %v1736
    %5339 = vmatpush1.msra.mxu0 %v1735
    %5340 = vmatprep.subr.mxu0 %v1739
    %5341 = vmatpush1.msra.mxu0 %v1738
    %5342 = vmatprep.subr.mxu0 %v1742
    %5343 = vmatpush1.msra.mxu0 %v1741
    %5344 = vmatprep.subr.mxu0 %v1745
    %5345 = vmatpush1.msra.mxu0 %v1744
    %5346 = vmatprep.subr.mxu0 %v1748
    %5347 = vmatpush1.msra.mxu0 %v1747
    %5348 = vmatprep.subr.mxu0 %v1751
    %5349 = vmatpush1.msra.mxu0 %v1750
    %5350 = vmatprep.subr.mxu0 %v1754
    %5351 = vmatpush1.msra.mxu0 %v1753
    %5352 = vmatprep.subr.mxu0 %v1757
    %5353 = vmatpush1.msra.mxu0 %v1756
    %5354 = vmatprep.subr.mxu0 %v1760
    %5355 = vmatpush1.msra.mxu0 %v1759
    %5356 = vmatprep.subr.mxu0 0.0
    %5357 = vmatpush1.msra.mxu0 0.0
    %5358 = vmatprep.subr.mxu0 0.0
    %5359 = vmatpush1.msra.mxu0 0.0
    %5360 = vmatprep.subr.mxu0 0.0
    %5361 = vmatpush1.msra.mxu0 0.0
    %5362 = vmatprep.subr.mxu0 0.0
    %5363 = vmatpush1.msra.mxu0 0.0
    %5364 = vmatprep.subr.mxu0 0.0
    %5365 = vmatpush1.msra.mxu0 0.0
    %5366 = vmatprep.subr.mxu0 0.0
    %5367 = vmatpush1.msra.mxu0 0.0
    %5368 = vmatprep.subr.mxu0 0.0
    %5369 = vmatpush1.msra.mxu0 0.0
    %5370 = vmatprep.subr.mxu0 0.0
    %5371 = vmatpush1.msra.mxu0 0.0
    %5372 = vmatprep.subr.mxu0 0.0
    %5373 = vmatpush1.msra.mxu0 0.0
    %5374 = vmatprep.subr.mxu0 0.0
    %5375 = vmatpush1.msra.mxu0 0.0
    %5376 = vmatprep.subr.mxu0 0.0
    %5377 = vmatpush1.msra.mxu0 0.0
    %5378 = vmatprep.subr.mxu0 0.0
    %5379 = vmatpush1.msra.mxu0 0.0
    %5380 = vmatprep.subr.mxu0 0.0
    %5381 = vmatpush1.msra.mxu0 0.0
    %5382 = vmatprep.subr.mxu0 0.0
    %5383 = vmatpush1.msra.mxu0 0.0
    %5384 = vmatprep.subr.mxu0 0.0
    %5385 = vmatpush1.msra.mxu0 0.0
    %5386 = vmatprep.subr.mxu0 0.0
    %5387 = vmatpush1.msra.mxu0 0.0
    %5388 = vmatprep.mubr.f32.mxu0 0.0
    %5389 = vmatmul.mubr.f32.gmra.mrb[0].mxu0 %v5181
    %v5390 = vpop.f32.mrb[0].mxu0
    %v5391 = vadd.f32 0.0, %v5390
    %v5392 = vpop.f32.mrb[0].mxu0
    %v5393 = vadd.f32 0.0, %v5392
    %5394 = vdwg.mxu0
    %5395 = vmatprep.subr.mxu0 0.0
    %5396 = vmatpush1.msra.mxu0 %v1716
    %5397 = vmatprep.subr.mxu0 0.0
    %5398 = vmatpush1.msra.mxu0 %v1719
    %5399 = vmatprep.subr.mxu0 0.0
    %5400 = vmatpush1.msra.mxu0 %v1722
    %5401 = vmatprep.subr.mxu0 0.0
    %5402 = vmatpush1.msra.mxu0 %v1725
    %5403 = vmatprep.subr.mxu0 0.0
    %5404 = vmatpush1.msra.mxu0 %v1728
    %5405 = vmatprep.subr.mxu0 0.0
    %5406 = vmatpush1.msra.mxu0 %v1731
    %5407 = vmatprep.subr.mxu0 0.0
    %5408 = vmatpush1.msra.mxu0 %v1734
    %5409 = vmatprep.subr.mxu0 0.0
    %5410 = vmatpush1.msra.mxu0 %v1737
    %5411 = vmatprep.subr.mxu0 0.0
    %5412 = vmatpush1.msra.mxu0 %v1740
    %5413 = vmatprep.subr.mxu0 0.0
    %5414 = vmatpush1.msra.mxu0 %v1743
    %5415 = vmatprep.subr.mxu0 0.0
    %5416 = vmatpush1.msra.mxu0 %v1746
    %5417 = vmatprep.subr.mxu0 0.0
    %5418 = vmatpush1.msra.mxu0 %v1749
    %5419 = vmatprep.subr.mxu0 0.0
    %5420 = vmatpush1.msra.mxu0 %v1752
    %5421 = vmatprep.subr.mxu0 0.0
    %5422 = vmatpush1.msra.mxu0 %v1755
    %5423 = vmatprep.subr.mxu0 0.0
    %5424 = vmatpush1.msra.mxu0 %v1758
    %5425 = vmatprep.subr.mxu0 0.0
    %5426 = vmatpush1.msra.mxu0 %v1761
    %5427 = vmatprep.subr.mxu0 0.0
    %5428 = vmatpush1.msra.mxu0 0.0
    %5429 = vmatprep.subr.mxu0 0.0
    %5430 = vmatpush1.msra.mxu0 0.0
    %5431 = vmatprep.subr.mxu0 0.0
    %5432 = vmatpush1.msra.mxu0 0.0
    %5433 = vmatprep.subr.mxu0 0.0
    %5434 = vmatpush1.msra.mxu0 0.0
    %5435 = vmatprep.subr.mxu0 0.0
    %5436 = vmatpush1.msra.mxu0 0.0
    %5437 = vmatprep.subr.mxu0 0.0
    %5438 = vmatpush1.msra.mxu0 0.0
    %5439 = vmatprep.subr.mxu0 0.0
    %5440 = vmatpush1.msra.mxu0 0.0
    %5441 = vmatprep.subr.mxu0 0.0
    %5442 = vmatpush1.msra.mxu0 0.0
    %5443 = vmatprep.subr.mxu0 0.0
    %5444 = vmatpush1.msra.mxu0 0.0
    %5445 = vmatprep.subr.mxu0 0.0
    %5446 = vmatpush1.msra.mxu0 0.0
    %5447 = vmatprep.subr.mxu0 0.0
    %5448 = vmatpush1.msra.mxu0 0.0
    %5449 = vmatprep.subr.mxu0 0.0
    %5450 = vmatpush1.msra.mxu0 0.0
    %5451 = vmatprep.subr.mxu0 0.0
    %5452 = vmatpush1.msra.mxu0 0.0
    %5453 = vmatprep.subr.mxu0 0.0
    %5454 = vmatpush1.msra.mxu0 0.0
    %5455 = vmatprep.subr.mxu0 0.0
    %5456 = vmatpush1.msra.mxu0 0.0
    %5457 = vmatprep.subr.mxu0 0.0
    %5458 = vmatpush1.msra.mxu0 0.0
    %5459 = vmatprep.mubr.f32.mxu0 0.0
    %5460 = vmatmul.mubr.f32.gmra.mrb[0].mxu0 %v5181
    %v5461 = vpop.f32.mrb[0].mxu0
    %v5462 = vadd.f32 0.0, %v5461
    %v5463 = vpop.f32.mrb[0].mxu0
    %5464 = vdwg.mxu0
    %v5465 = vadd.f32 %v5250, %v5391
    %v5466 = vmul.f32 %v5465, 0.5
    %v5467 = vtanh.pop %v5466
    %v5468 = vadd.f32 %v5467, 1.0
    %v5469 = vmul.f32 %v5468, 0.5
    %v5470 = vadd.f32 %v5252, %v5393
    %v5471 = vmul.f32 %v5470, 0.5
    %v5472 = vtanh.pop %v5471
    %v5473 = vadd.f32 %v5472, 1.0
    %v5474 = vmul.f32 %v5473, 0.5
    %v5475 = vadd.f32 %v5462, %v1616
    %v5476 = vmul.f32 %v5469, %v5475
    %v5477 = vadd.f32 %v5321, %v5476
    %v5478 = vtanh.pop %v5477
    %v5479 = vsub.f32 1.0, %v5474
    %v5480 = vmul.f32 %v5479, %v5478
    %v5481 = vmul.f32 %v5474, %v5181
    %v5482 = vadd.f32 %v5480, %v5481
    %5483 = vst [vmem:[%s11 + $0x38] sm:$0xff] %v5482
    // Predicated region
    $region78: #{gru_forward.1} parent=1 // pred_check
      _
    $region79: #{gru_forward.1} parent=1 // pred_check_branch
      %5485 = sbr.rel (0) target = $region81
    $region80: #{gru_forward.1} parent=1 // pred_region
      _
    $region81: #{gru_forward.1} parent=1 // pred_fallthru
      _
    // Predicated region
    $region82: #{gru_forward.1} parent=1 // pred_check
      _
    $region83: #{gru_forward.1} parent=1 // pred_check_branch
      %5487 = sbr.rel (0) target = $region85
    $region84: #{gru_forward.1} parent=1 // pred_region
      _
    $region85: #{gru_forward.1} parent=1 // pred_fallthru
      _
    %5488 = vsyncpa [#allocation4], 1
    %5489 = vsyncpa [#allocation6], 1
    %5490 = vsyncpa [#allocation9], 1
    %5491 = vsyncpa [#allocation12], 1
    %5492 = vsyncpa [#allocation15], 1

</llo_original>
